<compile_context>
chip_gen: v7x
topology: tpu7x:2x2x1
jax: 0.10.0
libtpu: 0.0.40
codegen_flags: <defaults>
</compile_context>

<pallas_src>
import functools

import jax
import jax.numpy as jnp
from jax.experimental import pallas as pl
from jax.experimental.pallas import tpu as pltpu

NUM_GROUPS = 8          # TODO(synk): GroupNorm group count assumed (divides hidden_dim).
NEG_SLOPE = 0.1         # TODO(synk): LeakyReLU negative slope assumed.
EPS_GN = 1e-5
VMEM_LIMIT = 48 * 1024 * 1024


def _cparams(sem):
    return pltpu.CompilerParams(dimension_semantics=sem, vmem_limit_bytes=VMEM_LIMIT)


# --------------------------------------------------------------------- conv (stride 1, NHWC)
def _conv_row_kernel(k, *refs):
    """One full output row of a k x k stride-1 'valid' conv, all taps in one program.

    grid = (N, H_out); the padded input is passed k times with row-shifted BlockSpecs,
    so no tap-axis accumulation / output revisit is needed.
      refs = (x_row_0, ..., x_row_{k-1}, w_ref, b_ref, o_ref)
      x_row_dy : (W_pad, C_in)     padded input row  y + dy
      w_ref    : (k, k, C_in, C_out)
      b_ref    : (1, C_out)
      o_ref    : (W_out, C_out)
    """
    x_rows = refs[:k]
    w_ref, b_ref, o_ref = refs[k:]
    wo = o_ref.shape[0]
    w_all = w_ref[...]                                  # (k, k, C_in, C_out), tiny
    acc = jnp.zeros(o_ref.shape, jnp.float32) + b_ref[...]
    for dy in range(k):                                 # static unroll, k <= 4
        row = x_rows[dy][...]                           # (W_pad, C_in)
        for dx in range(k):
            acc = acc + jnp.dot(row[dx:dx + wo, :], w_all[dy, dx],
                                preferred_element_type=jnp.float32)
    o_ref[...] = acc                                    # single full-width store per row


def conv2d_pallas(x_pad, w, b):
    """Stride-1 'valid' conv on a pre-padded NHWC input.  w: (k, k, C_in, C_out)."""
    n, hp, wp, cin = x_pad.shape
    k = w.shape[0]
    cout = w.shape[-1]
    ho, wo = hp - k + 1, wp - k + 1

    def _row_map(dy, i, y):
        return (i, y + dy, 0, 0)

    in_specs = [pl.BlockSpec((None, None, wp, cin), functools.partial(_row_map, dy))
                for dy in range(k)]
    in_specs += [pl.BlockSpec((k, k, cin, cout), lambda i, y: (0, 0, 0, 0)),
                 pl.BlockSpec((1, cout), lambda i, y: (0, 0))]
    return pl.pallas_call(
        functools.partial(_conv_row_kernel, k),
        out_shape=jax.ShapeDtypeStruct((n, ho, wo, cout), jnp.float32),
        grid=(n, ho),
        in_specs=in_specs,
        out_specs=pl.BlockSpec((None, None, wo, cout), lambda i, y: (i, y, 0, 0)),
        compiler_params=_cparams(("parallel", "parallel")),
    )(*([x_pad] * k), w, b.reshape(1, -1))


# ----------------------------------------- fused GroupNorm / LeakyReLU / add / 1x1 proj
def _gn_act_kernel(num_groups, act_after_norm, has_residual, has_proj, *refs):
    """Per-sample GroupNorm (+ LeakyReLU) (+ residual add + LeakyReLU) (+ 1x1 proj), fused.

      x_ref : (P, C)  all pixels of one sample        g_ref/b_ref : (1, C) affine
      m_ref : (C, G)  channel->group one-hot          mt_ref      : (G, C)
      r_ref : (P, C)  optional residual
      pw/pb : (C, Co)/(1, Co) optional 1x1 projection o_ref       : (P, C or Co)
    """
    it = iter(refs)
    x_ref, g_ref, b_ref, m_ref, mt_ref = (next(it) for _ in range(5))
    r_ref = next(it) if has_residual else None
    pw_ref = next(it) if has_proj else None
    pb_ref = next(it) if has_proj else None
    o_ref = next(it)

    x = x_ref[...]
    p, c = x.shape
    cnt = float(p * (c // num_groups))

    ch_sum = jnp.sum(x, axis=0, keepdims=True)                                   # (1, C)
    ch_sqs = jnp.sum(x * x, axis=0, keepdims=True)                               # (1, C)
    g_sum = jnp.dot(ch_sum, m_ref[...], preferred_element_type=jnp.float32)      # (1, G)
    g_sqs = jnp.dot(ch_sqs, m_ref[...], preferred_element_type=jnp.float32)
    mean_g = g_sum / cnt
    var_g = g_sqs / cnt - mean_g * mean_g
    inv_g = jax.lax.rsqrt(var_g + EPS_GN)
    mean_c = jnp.dot(mean_g, mt_ref[...], preferred_element_type=jnp.float32)    # (1, C)
    inv_c = jnp.dot(inv_g, mt_ref[...], preferred_element_type=jnp.float32)

    scale = inv_c * g_ref[...]
    shift = b_ref[...] - mean_c * scale
    y = x * scale + shift
    if act_after_norm:
        y = jnp.where(y >= 0.0, y, NEG_SLOPE * y)
    if has_residual:
        y = y + r_ref[...]
        y = jnp.where(y >= 0.0, y, NEG_SLOPE * y)
    if has_proj:
        y = jnp.dot(y, pw_ref[...], preferred_element_type=jnp.float32) + pb_ref[...]
    o_ref[...] = y                                     # single full-width lane-dense store


def groupnorm_act_pallas(x, gamma, beta, act=True, residual=None,
                         proj_w=None, proj_b=None):
    """x: (N, P, C) -> (N, P, C or Cout); statistics per sample, per group over all P."""
    n, p, c = x.shape
    g = NUM_GROUPS
    m = jnp.repeat(jnp.eye(g, dtype=jnp.float32), c // g, axis=0)   # (C, G)
    mt = jnp.transpose(m)                                           # (G, C)
    cout = c if proj_w is None else proj_w.shape[1]

    samp_in = pl.BlockSpec((None, p, c), lambda i: (i, 0, 0))
    samp_out = pl.BlockSpec((None, p, cout), lambda i: (i, 0, 0))
    args = [x, gamma.reshape(1, -1), beta.reshape(1, -1), m, mt]
    in_specs = [samp_in,
                pl.BlockSpec((1, c), lambda i: (0, 0)),
                pl.BlockSpec((1, c), lambda i: (0, 0)),
                pl.BlockSpec((c, g), lambda i: (0, 0)),
                pl.BlockSpec((g, c), lambda i: (0, 0))]
    if residual is not None:
        args.append(residual)
        in_specs.append(samp_in)
    if proj_w is not None:
        args += [proj_w, proj_b.reshape(1, -1)]
        in_specs += [pl.BlockSpec((c, cout), lambda i: (0, 0)),
                     pl.BlockSpec((1, cout), lambda i: (0, 0))]
    return pl.pallas_call(
        functools.partial(_gn_act_kernel, g, act, residual is not None, proj_w is not None),
        out_shape=jax.ShapeDtypeStruct((n, p, cout), jnp.float32),
        grid=(n,),
        in_specs=in_specs,
        out_specs=samp_out,
        compiler_params=_cparams(("parallel",)),
    )(*args)


# --------------------------------------------------- separable bilinear resize (matmuls)
def _resize_kernel(a_ref, x_ref, o_ref):
    o_ref[...] = jnp.dot(a_ref[...], x_ref[...], preferred_element_type=jnp.float32)


def resize_matmul_pallas(a, x):
    """a: (L_out, L_in) interpolation matrix; x: (N, L_in, D) -> (N, L_out, D)."""
    n, lin, d = x.shape
    lout = a.shape[0]
    return pl.pallas_call(
        _resize_kernel,
        out_shape=jax.ShapeDtypeStruct((n, lout, d), jnp.float32),
        grid=(n,),
        in_specs=[pl.BlockSpec((lout, lin), lambda i: (0, 0)),
                  pl.BlockSpec((None, lin, d), lambda i: (i, 0, 0))],
        out_specs=pl.BlockSpec((None, lout, d), lambda i: (i, 0, 0)),
        compiler_params=_cparams(("parallel",)),
    )(a, x)


# --------------------------------------------------------------------------- JAX glue
def space_to_depth_stride2(x, k=7, pad=3):
    """Exact rearrangement turning a kxk stride-2 conv into a ceil(k/2) stride-1 conv."""
    n, h, w, c = x.shape
    ho = (h + 2 * pad - k) // 2 + 1
    wo = (w + 2 * pad - k) // 2 + 1
    k2 = (k + 1) // 2
    rh, rw = ho + k2 - 1, wo + k2 - 1
    xp = jnp.pad(x, ((0, 0), (pad, 2 * rh - h - pad), (pad, 2 * rw - w - pad), (0, 0)))
    planes = [xp[:, r::2, s::2, :] for r in (0, 1) for s in (0, 1)]
    return jnp.concatenate(planes, axis=-1)          # (N, rh, rw, 4C)


def rearrange_stride2_weight(w):
    """(k, k, Cin, Cout) stride-2 weights -> (k2, k2, 4*Cin, Cout) stride-1 weights."""
    k = w.shape[0]
    cin, cout = w.shape[2], w.shape[3]
    k2 = (k + 1) // 2
    w4 = jnp.zeros((k2, k2, 4, cin, cout), jnp.float32)
    for a in range(k2):
        for b_ in range(k2):
            for r in range(2):
                for s in range(2):
                    dy, dx = 2 * a + r, 2 * b_ + s
                    if dy < k and dx < k:
                        w4 = w4.at[a, b_, r * 2 + s].set(w[dy, dx])
    return w4.reshape(k2, k2, 4 * cin, cout)


def interp_matrix(n_out, n_in):
    """1-D bilinear interpolation matrix, align_corners=True (PyTorch semantics)."""
    if n_in == 1:
        return jnp.ones((n_out, 1), jnp.float32)
    if n_out == 1:
        return jnp.zeros((1, n_in), jnp.float32).at[0, 0].set(1.0)
    pos = jnp.arange(n_out, dtype=jnp.float32) * (n_in - 1) / (n_out - 1)
    j0 = jnp.clip(jnp.floor(pos).astype(jnp.int32), 0, n_in - 2)
    frac = pos - j0.astype(jnp.float32)
    a = jnp.zeros((n_out, n_in), jnp.float32)
    rows = jnp.arange(n_out)
    a = a.at[rows, j0].add(1.0 - frac)
    a = a.at[rows, j0 + 1].add(frac)
    return a


def pad_hw(x, p):
    return jnp.pad(x, ((0, 0), (p, p), (p, p), (0, 0)))


# ------------------------------------------------------------------------- forward pass
def _res_block(y, p, n, ho, wo, ch, proj_w=None, proj_b=None):
    """conv-GN-LReLU -> conv-GN -> (+identity) -> LReLU (-> optional fused 1x1 proj)."""
    identity = y
    z = conv2d_pallas(pad_hw(y, 1), p['w1'], p['b1'])
    z = groupnorm_act_pallas(z.reshape(n, ho * wo, ch), p['gamma1'], p['beta1'], act=True)
    z = conv2d_pallas(pad_hw(z.reshape(n, ho, wo, ch), 1), p['w2'], p['b2'])
    z = groupnorm_act_pallas(z.reshape(n, ho * wo, ch), p['gamma2'], p['beta2'],
                             act=False, residual=identity.reshape(n, ho * wo, ch),
                             proj_w=proj_w, proj_b=proj_b)
    return z


def image_backbone_forward(image_nchw, params):
    x = jnp.transpose(image_nchw, (0, 2, 3, 1)).astype(jnp.float32)   # NHWC
    n, h, w, _ = x.shape

    # ---- stem: Conv(7x7, stride 2, pad 3) -> GroupNorm -> LeakyReLU
    planes = space_to_depth_stride2(x, k=7, pad=3)
    y = conv2d_pallas(planes, params['stem']['w4'], params['stem']['b'])
    _, ho, wo, ch = y.shape
    y = groupnorm_act_pallas(y.reshape(n, ho * wo, ch),
                             params['stem']['gamma'], params['stem']['beta'], act=True)
    y = y.reshape(n, ho, wo, ch)

    # ---- residual conv blocks (out_proj fused into block2's final GN kernel)
    y = _res_block(y, params['block1'], n, ho, wo, ch).reshape(n, ho, wo, ch)
    cout = params['out_proj']['w'].shape[1]
    f = _res_block(y, params['block2'], n, ho, wo, ch,
                   proj_w=params['out_proj']['w'], proj_b=params['out_proj']['b'])
    f = f.reshape(n, ho, wo, cout)

    # ---- bilinear upsample to (h, w), align_corners=True: two separable matmuls
    a_h = interp_matrix(h, ho)
    a_w = interp_matrix(w, wo)
    t = resize_matmul_pallas(a_h, f.reshape(n, ho, wo * cout))          # (N, h, wo*cout)
    t = t.reshape(n, h, wo, cout).transpose(0, 2, 1, 3).reshape(n, wo, h * cout)
    t = resize_matmul_pallas(a_w, t)                                    # (N, w, h*cout)
    t = t.reshape(n, w, h, cout).transpose(0, 2, 1, 3)                  # (N, h, w, cout)
    return jnp.transpose(t, (0, 3, 1, 2))                               # NCHW


# ------------------------------------------------------------------------ params
def init_params(key, input_dim, output_dim, hidden_dim):
    ks = iter(jax.random.split(key, 8))

    def conv_w(k, kh, kw, cin, cout):
        fan_in = kh * kw * cin
        return (jax.random.normal(k, (kh, kw, cin, cout))
                / jnp.sqrt(float(fan_in))).astype(jnp.float32)

    def bias(k, c):
        return (0.01 * jax.random.normal(k, (c,))).astype(jnp.float32)

    def gn(c):
        return {'gamma': jnp.ones((c,), jnp.float32), 'beta': jnp.zeros((c,), jnp.float32)}

    stem_w7 = conv_w(next(ks), 7, 7, input_dim, hidden_dim)
    stem = {'w7': stem_w7, 'w4': rearrange_stride2_weight(stem_w7),
            'b': bias(next(ks), hidden_dim), **gn(hidden_dim)}

    def res_block(k):
        k1, k2, k3, k4 = jax.random.split(k, 4)
        g1, g2 = gn(hidden_dim), gn(hidden_dim)
        return {'w1': conv_w(k1, 3, 3, hidden_dim, hidden_dim), 'b1': bias(k2, hidden_dim),
                'gamma1': g1['gamma'], 'beta1': g1['beta'],
                'w2': conv_w(k3, 3, 3, hidden_dim, hidden_dim), 'b2': bias(k4, hidden_dim),
                'gamma2': g2['gamma'], 'beta2': g2['beta']}

    out_w = (jax.random.normal(next(ks), (hidden_dim, output_dim))
             / jnp.sqrt(float(hidden_dim))).astype(jnp.float32)
    return {'stem': stem,
            'block1': res_block(next(ks)),
            'block2': res_block(next(ks)),
            'out_proj': {'w': out_w, 'b': bias(next(ks), output_dim)}}


# ------------------------------------------------------------------ pure-JAX reference
def _leaky(x):
    return jnp.where(x >= 0.0, x, NEG_SLOPE * x)


def _conv_ref(x, w, b, stride, pad):
    out = jax.lax.conv_general_dilated(
        x, w, window_strides=(stride, stride),
        padding=((pad, pad), (pad, pad)),
        dimension_numbers=('NHWC', 'HWIO', 'NHWC'),
        precision=jax.lax.Precision.HIGHEST)
    return out + b.reshape(1, 1, 1, -1)


def _gn_ref(x, gamma, beta):
    n, h, w, c = x.shape
    g = NUM_GROUPS
    xg = x.reshape(n, h, w, g, c // g)
    mean = xg.mean(axis=(1, 2, 4), keepdims=True)
    var = ((xg - mean) ** 2).mean(axis=(1, 2, 4), keepdims=True)
    xn = ((xg - mean) * jax.lax.rsqrt(var + EPS_GN)).reshape(n, h, w, c)
    return xn * gamma.reshape(1, 1, 1, -1) + beta.reshape(1, 1, 1, -1)


def image_backbone_reference(image_nchw, params):
    x = jnp.transpose(image_nchw, (0, 2, 3, 1)).astype(jnp.float32)
    n, h, w, _ = x.shape
    y = _leaky(_gn_ref(_conv_ref(x, params['stem']['w7'], params['stem']['b'], 2, 3),
                       params['stem']['gamma'], params['stem']['beta']))
    for name in ('block1', 'block2'):
        p = params[name]
        idt = y
        z = _leaky(_gn_ref(_conv_ref(y, p['w1'], p['b1'], 1, 1), p['gamma1'], p['beta1']))
        z = _gn_ref(_conv_ref(z, p['w2'], p['b2'], 1, 1), p['gamma2'], p['beta2'])
        y = _leaky(z + idt)
    wp = params['out_proj']['w'].reshape(1, 1, *params['out_proj']['w'].shape)
    f = _conv_ref(y, wp, params['out_proj']['b'], 1, 0)
    a_h = interp_matrix(h, f.shape[1])
    a_w = interp_matrix(w, f.shape[2])
    t = jnp.einsum('hH,nHWc->nhWc', a_h, f, precision=jax.lax.Precision.HIGHEST)
    t = jnp.einsum('wW,nhWc->nhwc', a_w, t, precision=jax.lax.Precision.HIGHEST)
    return jnp.transpose(t, (0, 3, 1, 2))


# ----------------------------------------------------------------------------- main
if __name__ == "__main__":
    key = jax.random.PRNGKey(0)
    k_img, k_par = jax.random.split(key)
    batch, input_dim, hidden_dim, output_dim, hw = 2, 4, 32, 16, 16

    image = jax.random.normal(k_img, (batch, input_dim, hw, hw), dtype=jnp.float32)
    params = init_params(k_par, input_dim, output_dim, hidden_dim)

    out = jax.jit(image_backbone_forward)(image, params)
    out = jax.block_until_ready(out)

    assert out.shape == (batch, output_dim, hw, hw) and out.dtype == jnp.float32
    assert bool(jnp.all(jnp.isfinite(out)))

    ref = jax.jit(image_backbone_reference)(image, params)
    ref = jax.block_until_ready(ref)
    assert bool(jnp.allclose(out, ref, atol=2e-3, rtol=2e-3)), \
        float(jnp.max(jnp.abs(out - ref)))

    print("KERNEL_OK")
</pallas_src>

<mosaic_0001>
module attributes {stable_mosaic.version = 11 : i64} {
  func.func private @main(%arg0: i32) attributes {dimension_semantics = [#tpu.dimension_semantics<core_parallel>], iteration_bounds = array<i64: 2>, tpu.core_type = #tpu.core_type<sc_scalar_subcore>, window_params = []} {
    return
  }
}

module attributes {stable_mosaic.version = 11 : i64} {
  func.func private @main(%arg0: i32) attributes {dimension_semantics = [#tpu.dimension_semantics<core_parallel>], iteration_bounds = array<i64: 2>, tpu.core_type = #tpu.core_type<sc_scalar_subcore>, window_params = []} {
    return
  }
}

module attributes {stable_mosaic.version = 11 : i64} {
  func.func @_conv_row_kernel(%arg0: i32, %arg1: i32, %arg2: memref<1x1x10x32xf32, #tpu.memory_space<vmem>>, %arg3: memref<1x1x10x32xf32, #tpu.memory_space<vmem>>, %arg4: memref<1x1x10x32xf32, #tpu.memory_space<vmem>>, %arg5: memref<3x3x32x32xf32, #tpu.memory_space<vmem>>, %arg6: memref<1x32xf32, #tpu.memory_space<vmem>>, %arg7: memref<1x1x8x32xf32, #tpu.memory_space<vmem>>) attributes {dimension_semantics = [#tpu.dimension_semantics<parallel>, #tpu.dimension_semantics<parallel>], iteration_bounds = array<i64: 2, 8>, scalar_prefetch = 0 : i64, scratch_operands = 0 : i64, tpu.core_type = #tpu.core_type<tc>, window_params = [{transform_indices = @transform_0, window_bounds = array<i64: 1, 1, 10, 32>}, {transform_indices = @transform_1, window_bounds = array<i64: 1, 1, 10, 32>}, {transform_indices = @transform_2, window_bounds = array<i64: 1, 1, 10, 32>}, {pipeline_mode = #tpu.pipeline_mode<synchronous>, transform_indices = @transform_3, window_bounds = array<i64: 3, 3, 32, 32>}, {pipeline_mode = #tpu.pipeline_mode<synchronous>, transform_indices = @transform_4, window_bounds = array<i64: 1, 32>}, {transform_indices = @transform_5, window_bounds = array<i64: 1, 1, 8, 32>}]} {
    %c0 = arith.constant 0 : index
    %c0_0 = arith.constant 0 : index
    %c0_1 = arith.constant 0 : index
    %c0_2 = arith.constant 0 : index
    %0 = vector.load %arg5[%c0, %c0_0, %c0_1, %c0_2] : memref<3x3x32x32xf32, #tpu.memory_space<vmem>>, vector<3x3x32x32xf32>
    %cst = arith.constant 0.000000e+00 : f32
    %1 = vector.broadcast %cst : f32 to vector<8x32xf32>
    %c0_3 = arith.constant 0 : index
    %c0_4 = arith.constant 0 : index
    %2 = vector.load %arg6[%c0_3, %c0_4] : memref<1x32xf32, #tpu.memory_space<vmem>>, vector<1x32xf32>
    %3 = vector.broadcast %2 : vector<1x32xf32> to vector<8x32xf32>
    %4 = arith.addf %1, %3 : vector<8x32xf32>
    %c0_5 = arith.constant 0 : index
    %c0_6 = arith.constant 0 : index
    %c0_7 = arith.constant 0 : index
    %c0_8 = arith.constant 0 : index
    %5 = vector.load %arg2[%c0_5, %c0_6, %c0_7, %c0_8] : memref<1x1x10x32xf32, #tpu.memory_space<vmem>>, vector<1x1x10x32xf32>
    %6 = vector.shape_cast %5 : vector<1x1x10x32xf32> to vector<10x32xf32>
    %7 = vector.extract_strided_slice %6 {offsets = [0, 0], sizes = [8, 32], strides = [1, 1]} : vector<10x32xf32> to vector<8x32xf32>
    %8 = vector.extract_strided_slice %0 {offsets = [0, 0, 0, 0], sizes = [1, 1, 32, 32], strides = [1, 1, 1, 1]} : vector<3x3x32x32xf32> to vector<1x1x32x32xf32>
    %9 = vector.shape_cast %8 : vector<1x1x32x32xf32> to vector<32x32xf32>
    %cst_9 = arith.constant dense<0.000000e+00> : vector<8x32xf32>
    %10 = tpu.matmul %7, %9, %cst_9 {dimension_numbers = #tpu.dot_dimension_numbers<[1], [0], [0], [1], [0, 0, 1, 1], [], []>} : vector<8x32xf32>, vector<32x32xf32>, vector<8x32xf32> -> vector<8x32xf32>
    %11 = arith.addf %4, %10 : vector<8x32xf32>
    %12 = vector.extract_strided_slice %6 {offsets = [1, 0], sizes = [8, 32], strides = [1, 1]} : vector<10x32xf32> to vector<8x32xf32>
    %13 = vector.extract_strided_slice %0 {offsets = [0, 1, 0, 0], sizes = [1, 1, 32, 32], strides = [1, 1, 1, 1]} : vector<3x3x32x32xf32> to vector<1x1x32x32xf32>
    %14 = vector.shape_cast %13 : vector<1x1x32x32xf32> to vector<32x32xf32>
    %cst_10 = arith.constant dense<0.000000e+00> : vector<8x32xf32>
    %15 = tpu.matmul %12, %14, %cst_10 {dimension_numbers = #tpu.dot_dimension_numbers<[1], [0], [0], [1], [0, 0, 1, 1], [], []>} : vector<8x32xf32>, vector<32x32xf32>, vector<8x32xf32> -> vector<8x32xf32>
    %16 = arith.addf %11, %15 : vector<8x32xf32>
    %17 = vector.extract_strided_slice %6 {offsets = [2, 0], sizes = [8, 32], strides = [1, 1]} : vector<10x32xf32> to vector<8x32xf32>
    %18 = vector.extract_strided_slice %0 {offsets = [0, 2, 0, 0], sizes = [1, 1, 32, 32], strides = [1, 1, 1, 1]} : vector<3x3x32x32xf32> to vector<1x1x32x32xf32>
    %19 = vector.shape_cast %18 : vector<1x1x32x32xf32> to vector<32x32xf32>
    %cst_11 = arith.constant dense<0.000000e+00> : vector<8x32xf32>
    %20 = tpu.matmul %17, %19, %cst_11 {dimension_numbers = #tpu.dot_dimension_numbers<[1], [0], [0], [1], [0, 0, 1, 1], [], []>} : vector<8x32xf32>, vector<32x32xf32>, vector<8x32xf32> -> vector<8x32xf32>
    %21 = arith.addf %16, %20 : vector<8x32xf32>
    %c0_12 = arith.constant 0 : index
    %c0_13 = arith.constant 0 : index
    %c0_14 = arith.constant 0 : index
    %c0_15 = arith.constant 0 : index
    %22 = vector.load %arg3[%c0_12, %c0_13, %c0_14, %c0_15] : memref<1x1x10x32xf32, #tpu.memory_space<vmem>>, vector<1x1x10x32xf32>
    %23 = vector.shape_cast %22 : vector<1x1x10x32xf32> to vector<10x32xf32>
    %24 = vector.extract_strided_slice %23 {offsets = [0, 0], sizes = [8, 32], strides = [1, 1]} : vector<10x32xf32> to vector<8x32xf32>
    %25 = vector.extract_strided_slice %0 {offsets = [1, 0, 0, 0], sizes = [1, 1, 32, 32], strides = [1, 1, 1, 1]} : vector<3x3x32x32xf32> to vector<1x1x32x32xf32>
    %26 = vector.shape_cast %25 : vector<1x1x32x32xf32> to vector<32x32xf32>
    %cst_16 = arith.constant dense<0.000000e+00> : vector<8x32xf32>
    %27 = tpu.matmul %24, %26, %cst_16 {dimension_numbers = #tpu.dot_dimension_numbers<[1], [0], [0], [1], [0, 0, 1, 1], [], []>} : vector<8x32xf32>, vector<32x32xf32>, vector<8x32xf32> -> vector<8x32xf32>
    %28 = arith.addf %21, %27 : vector<8x32xf32>
    %29 = vector.extract_strided_slice %23 {offsets = [1, 0], sizes = [8, 32], strides = [1, 1]} : vector<10x32xf32> to vector<8x32xf32>
    %30 = vector.extract_strided_slice %0 {offsets = [1, 1, 0, 0], sizes = [1, 1, 32, 32], strides = [1, 1, 1, 1]} : vector<3x3x32x32xf32> to vector<1x1x32x32xf32>
    %31 = vector.shape_cast %30 : vector<1x1x32x32xf32> to vector<32x32xf32>
    %cst_17 = arith.constant dense<0.000000e+00> : vector<8x32xf32>
    %32 = tpu.matmul %29, %31, %cst_17 {dimension_numbers = #tpu.dot_dimension_numbers<[1], [0], [0], [1], [0, 0, 1, 1], [], []>} : vector<8x32xf32>, vector<32x32xf32>, vector<8x32xf32> -> vector<8x32xf32>
    %33 = arith.addf %28, %32 : vector<8x32xf32>
    %34 = vector.extract_strided_slice %23 {offsets = [2, 0], sizes = [8, 32], strides = [1, 1]} : vector<10x32xf32> to vector<8x32xf32>
    %35 = vector.extract_strided_slice %0 {offsets = [1, 2, 0, 0], sizes = [1, 1, 32, 32], strides = [1, 1, 1, 1]} : vector<3x3x32x32xf32> to vector<1x1x32x32xf32>
    %36 = vector.shape_cast %35 : vector<1x1x32x32xf32> to vector<32x32xf32>
    %cst_18 = arith.constant dense<0.000000e+00> : vector<8x32xf32>
    %37 = tpu.matmul %34, %36, %cst_18 {dimension_numbers = #tpu.dot_dimension_numbers<[1], [0], [0], [1], [0, 0, 1, 1], [], []>} : vector<8x32xf32>, vector<32x32xf32>, vector<8x32xf32> -> vector<8x32xf32>
    %38 = arith.addf %33, %37 : vector<8x32xf32>
    %c0_19 = arith.constant 0 : index
    %c0_20 = arith.constant 0 : index
    %c0_21 = arith.constant 0 : index
    %c0_22 = arith.constant 0 : index
    %39 = vector.load %arg4[%c0_19, %c0_20, %c0_21, %c0_22] : memref<1x1x10x32xf32, #tpu.memory_space<vmem>>, vector<1x1x10x32xf32>
    %40 = vector.shape_cast %39 : vector<1x1x10x32xf32> to vector<10x32xf32>
    %41 = vector.extract_strided_slice %40 {offsets = [0, 0], sizes = [8, 32], strides = [1, 1]} : vector<10x32xf32> to vector<8x32xf32>
    %42 = vector.extract_strided_slice %0 {offsets = [2, 0, 0, 0], sizes = [1, 1, 32, 32], strides = [1, 1, 1, 1]} : vector<3x3x32x32xf32> to vector<1x1x32x32xf32>
    %43 = vector.shape_cast %42 : vector<1x1x32x32xf32> to vector<32x32xf32>
    %cst_23 = arith.constant dense<0.000000e+00> : vector<8x32xf32>
    %44 = tpu.matmul %41, %43, %cst_23 {dimension_numbers = #tpu.dot_dimension_numbers<[1], [0], [0], [1], [0, 0, 1, 1], [], []>} : vector<8x32xf32>, vector<32x32xf32>, vector<8x32xf32> -> vector<8x32xf32>
    %45 = arith.addf %38, %44 : vector<8x32xf32>
    %46 = vector.extract_strided_slice %40 {offsets = [1, 0], sizes = [8, 32], strides = [1, 1]} : vector<10x32xf32> to vector<8x32xf32>
    %47 = vector.extract_strided_slice %0 {offsets = [2, 1, 0, 0], sizes = [1, 1, 32, 32], strides = [1, 1, 1, 1]} : vector<3x3x32x32xf32> to vector<1x1x32x32xf32>
    %48 = vector.shape_cast %47 : vector<1x1x32x32xf32> to vector<32x32xf32>
    %cst_24 = arith.constant dense<0.000000e+00> : vector<8x32xf32>
    %49 = tpu.matmul %46, %48, %cst_24 {dimension_numbers = #tpu.dot_dimension_numbers<[1], [0], [0], [1], [0, 0, 1, 1], [], []>} : vector<8x32xf32>, vector<32x32xf32>, vector<8x32xf32> -> vector<8x32xf32>
    %50 = arith.addf %45, %49 : vector<8x32xf32>
    %51 = vector.extract_strided_slice %40 {offsets = [2, 0], sizes = [8, 32], strides = [1, 1]} : vector<10x32xf32> to vector<8x32xf32>
    %52 = vector.extract_strided_slice %0 {offsets = [2, 2, 0, 0], sizes = [1, 1, 32, 32], strides = [1, 1, 1, 1]} : vector<3x3x32x32xf32> to vector<1x1x32x32xf32>
    %53 = vector.shape_cast %52 : vector<1x1x32x32xf32> to vector<32x32xf32>
    %cst_25 = arith.constant dense<0.000000e+00> : vector<8x32xf32>
    %54 = tpu.matmul %51, %53, %cst_25 {dimension_numbers = #tpu.dot_dimension_numbers<[1], [0], [0], [1], [0, 0, 1, 1], [], []>} : vector<8x32xf32>, vector<32x32xf32>, vector<8x32xf32> -> vector<8x32xf32>
    %55 = arith.addf %50, %54 : vector<8x32xf32>
    %c0_26 = arith.constant 0 : index
    %c0_27 = arith.constant 0 : index
    %c0_28 = arith.constant 0 : index
    %c0_29 = arith.constant 0 : index
    %56 = vector.load %arg7[%c0_26, %c0_27, %c0_28, %c0_29] : memref<1x1x8x32xf32, #tpu.memory_space<vmem>>, vector<1x1x8x32xf32>
    %57 = vector.shape_cast %56 : vector<1x1x8x32xf32> to vector<8x32xf32>
    %58 = vector.shape_cast %55 : vector<8x32xf32> to vector<1x1x8x32xf32>
    tpu.vector_store %arg7[%c0_26, %c0_27, %c0_28, %c0_29], %58 {strides = array<i32>} : memref<1x1x8x32xf32, #tpu.memory_space<vmem>>, vector<1x1x8x32xf32>,
    return
  }
  func.func @transform_0(%arg0: i32, %arg1: i32) -> (i32, i32, i32, i32) {
    %c0_i32 = arith.constant 0 : i32
    %0 = arith.addi %arg1, %c0_i32 : i32
    %c0_i32_0 = arith.constant 0 : i32
    %c0_i32_1 = arith.constant 0 : i32
    %c0_i32_2 = arith.constant 0 : i32
    return %arg0, %0, %c0_i32_0, %c0_i32_1 : i32, i32, i32, i32
  }
  func.func @transform_1(%arg0: i32, %arg1: i32) -> (i32, i32, i32, i32) {
    %c1_i32 = arith.constant 1 : i32
    %0 = arith.addi %arg1, %c1_i32 : i32
    %c0_i32 = arith.constant 0 : i32
    %c0_i32_0 = arith.constant 0 : i32
    %c0_i32_1 = arith.constant 0 : i32
    return %arg0, %0, %c0_i32, %c0_i32_0 : i32, i32, i32, i32
  }
  func.func @transform_2(%arg0: i32, %arg1: i32) -> (i32, i32, i32, i32) {
    %c2_i32 = arith.constant 2 : i32
    %0 = arith.addi %arg1, %c2_i32 : i32
    %c0_i32 = arith.constant 0 : i32
    %c0_i32_0 = arith.constant 0 : i32
    %c0_i32_1 = arith.constant 0 : i32
    return %arg0, %0, %c0_i32, %c0_i32_0 : i32, i32, i32, i32
  }
  func.func @transform_3(%arg0: i32, %arg1: i32) -> (i32, i32, i32, i32) {
    %c0_i32 = arith.constant 0 : i32
    %c0_i32_0 = arith.constant 0 : i32
    %c0_i32_1 = arith.constant 0 : i32
    %c0_i32_2 = arith.constant 0 : i32
    %c0_i32_3 = arith.constant 0 : i32
    return %c0_i32, %c0_i32_0, %c0_i32_1, %c0_i32_2 : i32, i32, i32, i32
  }
  func.func @transform_4(%arg0: i32, %arg1: i32) -> (i32, i32) {
    %c0_i32 = arith.constant 0 : i32
    %c0_i32_0 = arith.constant 0 : i32
    %c0_i32_1 = arith.constant 0 : i32
    return %c0_i32, %c0_i32_0 : i32, i32
  }
  func.func @transform_5(%arg0: i32, %arg1: i32) -> (i32, i32, i32, i32) {
    %c0_i32 = arith.constant 0 : i32
    %c0_i32_0 = arith.constant 0 : i32
    %c0_i32_1 = arith.constant 0 : i32
    return %arg0, %arg1, %c0_i32, %c0_i32_0 : i32, i32, i32, i32
  }
}

module attributes {stable_mosaic.version = 11 : i64} {
  func.func @_gn_act_kernel(%arg0: i32, %arg1: memref<1x64x32xf32, #tpu.memory_space<vmem>>, %arg2: memref<1x32xf32, #tpu.memory_space<vmem>>, %arg3: memref<1x32xf32, #tpu.memory_space<vmem>>, %arg4: memref<32x8xf32, #tpu.memory_space<vmem>>, %arg5: memref<8x32xf32, #tpu.memory_space<vmem>>, %arg6: memref<1x64x32xf32, #tpu.memory_space<vmem>>) attributes {dimension_semantics = [#tpu.dimension_semantics<parallel>], iteration_bounds = array<i64: 2>, scalar_prefetch = 0 : i64, scratch_operands = 0 : i64, tpu.core_type = #tpu.core_type<tc>, window_params = [{transform_indices = @transform_0, window_bounds = array<i64: 1, 64, 32>}, {pipeline_mode = #tpu.pipeline_mode<synchronous>, transform_indices = @transform_1, window_bounds = array<i64: 1, 32>}, {pipeline_mode = #tpu.pipeline_mode<synchronous>, transform_indices = @transform_2, window_bounds = array<i64: 1, 32>}, {pipeline_mode = #tpu.pipeline_mode<synchronous>, transform_indices = @transform_3, window_bounds = array<i64: 32, 8>}, {pipeline_mode = #tpu.pipeline_mode<synchronous>, transform_indices = @transform_4, window_bounds = array<i64: 8, 32>}, {transform_indices = @transform_5, window_bounds = array<i64: 1, 64, 32>}]} {
    %c0 = arith.constant 0 : index
    %c0_0 = arith.constant 0 : index
    %c0_1 = arith.constant 0 : index
    %0 = vector.load %arg1[%c0, %c0_0, %c0_1] : memref<1x64x32xf32, #tpu.memory_space<vmem>>, vector<1x64x32xf32>
    %1 = vector.shape_cast %0 : vector<1x64x32xf32> to vector<64x32xf32>
    %cst = arith.constant dense<0.000000e+00> : vector<32xf32>
    %2 = vector.multi_reduction <add>, %1, %cst [0] : vector<64x32xf32> to vector<32xf32>
    %3 = vector.shape_cast %2 : vector<32xf32> to vector<1x32xf32>
    %4 = arith.mulf %1, %1 : vector<64x32xf32>
    %cst_2 = arith.constant dense<0.000000e+00> : vector<32xf32>
    %5 = vector.multi_reduction <add>, %4, %cst_2 [0] : vector<64x32xf32> to vector<32xf32>
    %6 = vector.shape_cast %5 : vector<32xf32> to vector<1x32xf32>
    %c0_3 = arith.constant 0 : index
    %c0_4 = arith.constant 0 : index
    %7 = vector.load %arg4[%c0_3, %c0_4] : memref<32x8xf32, #tpu.memory_space<vmem>>, vector<32x8xf32>
    %cst_5 = arith.constant dense<0.000000e+00> : vector<1x8xf32>
    %8 = tpu.matmul %3, %7, %cst_5 {dimension_numbers = #tpu.dot_dimension_numbers<[1], [0], [0], [1], [0, 0, 1, 1], [], []>} : vector<1x32xf32>, vector<32x8xf32>, vector<1x8xf32> -> vector<1x8xf32>
    %c0_6 = arith.constant 0 : index
    %c0_7 = arith.constant 0 : index
    %9 = vector.load %arg4[%c0_6, %c0_7] : memref<32x8xf32, #tpu.memory_space<vmem>>, vector<32x8xf32>
    %cst_8 = arith.constant dense<0.000000e+00> : vector<1x8xf32>
    %10 = tpu.matmul %6, %9, %cst_8 {dimension_numbers = #tpu.dot_dimension_numbers<[1], [0], [0], [1], [0, 0, 1, 1], [], []>} : vector<1x32xf32>, vector<32x8xf32>, vector<1x8xf32> -> vector<1x8xf32>
    %cst_9 = arith.constant 2.560000e+02 : f32
    %11 = vector.broadcast %cst_9 : f32 to vector<1x8xf32>
    %12 = arith.divf %8, %11 : vector<1x8xf32>
    %cst_10 = arith.constant 2.560000e+02 : f32
    %13 = vector.broadcast %cst_10 : f32 to vector<1x8xf32>
    %14 = arith.divf %10, %13 : vector<1x8xf32>
    %15 = arith.mulf %12, %12 : vector<1x8xf32>
    %16 = arith.subf %14, %15 : vector<1x8xf32>
    %cst_11 = arith.constant 9.99999974E-6 : f32
    %17 = vector.broadcast %cst_11 : f32 to vector<1x8xf32>
    %18 = arith.addf %16, %17 : vector<1x8xf32>
    %19 = math.rsqrt %18 : vector<1x8xf32>
    %c0_12 = arith.constant 0 : index
    %c0_13 = arith.constant 0 : index
    %20 = vector.load %arg5[%c0_12, %c0_13] : memref<8x32xf32, #tpu.memory_space<vmem>>, vector<8x32xf32>
    %cst_14 = arith.constant dense<0.000000e+00> : vector<1x32xf32>
    %21 = tpu.matmul %12, %20, %cst_14 {dimension_numbers = #tpu.dot_dimension_numbers<[1], [0], [0], [1], [0, 0, 1, 1], [], []>} : vector<1x8xf32>, vector<8x32xf32>, vector<1x32xf32> -> vector<1x32xf32>
    %c0_15 = arith.constant 0 : index
    %c0_16 = arith.constant 0 : index
    %22 = vector.load %arg5[%c0_15, %c0_16] : memref<8x32xf32, #tpu.memory_space<vmem>>, vector<8x32xf32>
    %cst_17 = arith.constant dense<0.000000e+00> : vector<1x32xf32>
    %23 = tpu.matmul %19, %22, %cst_17 {dimension_numbers = #tpu.dot_dimension_numbers<[1], [0], [0], [1], [0, 0, 1, 1], [], []>} : vector<1x8xf32>, vector<8x32xf32>, vector<1x32xf32> -> vector<1x32xf32>
    %c0_18 = arith.constant 0 : index
    %c0_19 = arith.constant 0 : index
    %24 = vector.load %arg2[%c0_18, %c0_19] : memref<1x32xf32, #tpu.memory_space<vmem>>, vector<1x32xf32>
    %25 = arith.mulf %23, %24 : vector<1x32xf32>
    %c0_20 = arith.constant 0 : index
    %c0_21 = arith.constant 0 : index
    %26 = vector.load %arg3[%c0_20, %c0_21] : memref<1x32xf32, #tpu.memory_space<vmem>>, vector<1x32xf32>
    %27 = arith.mulf %21, %25 : vector<1x32xf32>
    %28 = arith.subf %26, %27 : vector<1x32xf32>
    %29 = vector.broadcast %25 : vector<1x32xf32> to vector<64x32xf32>
    %30 = arith.mulf %1, %29 : vector<64x32xf32>
    %31 = vector.broadcast %28 : vector<1x32xf32> to vector<64x32xf32>
    %32 = arith.addf %30, %31 : vector<64x32xf32>
    %cst_22 = arith.constant 0.000000e+00 : f32
    %33 = vector.broadcast %cst_22 : f32 to vector<64x32xf32>
    %34 = arith.cmpf oge, %32, %33 : vector<64x32xf32>
    %cst_23 = arith.constant 1.000000e-01 : f32
    %35 = vector.broadcast %cst_23 : f32 to vector<64x32xf32>
    %36 = arith.mulf %35, %32 : vector<64x32xf32>
    %37 = arith.select %34, %32, %36 : vector<64x32xi1>, vector<64x32xf32>
    %c0_24 = arith.constant 0 : index
    %c0_25 = arith.constant 0 : index
    %c0_26 = arith.constant 0 : index
    %38 = vector.load %arg6[%c0_24, %c0_25, %c0_26] : memref<1x64x32xf32, #tpu.memory_space<vmem>>, vector<1x64x32xf32>
    %39 = vector.shape_cast %38 : vector<1x64x32xf32> to vector<64x32xf32>
    %40 = vector.shape_cast %37 : vector<64x32xf32> to vector<1x64x32xf32>
    tpu.vector_store %arg6[%c0_24, %c0_25, %c0_26], %40 {strides = array<i32>} : memref<1x64x32xf32, #tpu.memory_space<vmem>>, vector<1x64x32xf32>,
    return
  }
  func.func @transform_0(%arg0: i32) -> (i32, i32, i32) {
    %c0_i32 = arith.constant 0 : i32
    %c0_i32_0 = arith.constant 0 : i32
    %c0_i32_1 = arith.constant 0 : i32
    return %arg0, %c0_i32, %c0_i32_0 : i32, i32, i32
  }
  func.func @transform_1(%arg0: i32) -> (i32, i32) {
    %c0_i32 = arith.constant 0 : i32
    %c0_i32_0 = arith.constant 0 : i32
    %c0_i32_1 = arith.constant 0 : i32
    return %c0_i32, %c0_i32_0 : i32, i32
  }
  func.func @transform_2(%arg0: i32) -> (i32, i32) {
    %c0_i32 = arith.constant 0 : i32
    %c0_i32_0 = arith.constant 0 : i32
    %c0_i32_1 = arith.constant 0 : i32
    return %c0_i32, %c0_i32_0 : i32, i32
  }
  func.func @transform_3(%arg0: i32) -> (i32, i32) {
    %c0_i32 = arith.constant 0 : i32
    %c0_i32_0 = arith.constant 0 : i32
    %c0_i32_1 = arith.constant 0 : i32
    return %c0_i32, %c0_i32_0 : i32, i32
  }
  func.func @transform_4(%arg0: i32) -> (i32, i32) {
    %c0_i32 = arith.constant 0 : i32
    %c0_i32_0 = arith.constant 0 : i32
    %c0_i32_1 = arith.constant 0 : i32
    return %c0_i32, %c0_i32_0 : i32, i32
  }
  func.func @transform_5(%arg0: i32) -> (i32, i32, i32) {
    %c0_i32 = arith.constant 0 : i32
    %c0_i32_0 = arith.constant 0 : i32
    %c0_i32_1 = arith.constant 0 : i32
    return %arg0, %c0_i32, %c0_i32_0 : i32, i32, i32
  }
}

module attributes {stable_mosaic.version = 11 : i64} {
  func.func @_conv_row_kernel(%arg0: i32, %arg1: i32, %arg2: memref<1x1x11x16xf32, #tpu.memory_space<vmem>>, %arg3: memref<1x1x11x16xf32, #tpu.memory_space<vmem>>, %arg4: memref<1x1x11x16xf32, #tpu.memory_space<vmem>>, %arg5: memref<1x1x11x16xf32, #tpu.memory_space<vmem>>, %arg6: memref<4x4x16x32xf32, #tpu.memory_space<vmem>>, %arg7: memref<1x32xf32, #tpu.memory_space<vmem>>, %arg8: memref<1x1x8x32xf32, #tpu.memory_space<vmem>>) attributes {dimension_semantics = [#tpu.dimension_semantics<parallel>, #tpu.dimension_semantics<parallel>], iteration_bounds = array<i64: 2, 8>, scalar_prefetch = 0 : i64, scratch_operands = 0 : i64, tpu.core_type = #tpu.core_type<tc>, window_params = [{transform_indices = @transform_0, window_bounds = array<i64: 1, 1, 11, 16>}, {transform_indices = @transform_1, window_bounds = array<i64: 1, 1, 11, 16>}, {transform_indices = @transform_2, window_bounds = array<i64: 1, 1, 11, 16>}, {transform_indices = @transform_3, window_bounds = array<i64: 1, 1, 11, 16>}, {pipeline_mode = #tpu.pipeline_mode<synchronous>, transform_indices = @transform_4, window_bounds = array<i64: 4, 4, 16, 32>}, {pipeline_mode = #tpu.pipeline_mode<synchronous>, transform_indices = @transform_5, window_bounds = array<i64: 1, 32>}, {transform_indices = @transform_6, window_bounds = array<i64: 1, 1, 8, 32>}]} {
    %c0 = arith.constant 0 : index
    %c0_0 = arith.constant 0 : index
    %c0_1 = arith.constant 0 : index
    %c0_2 = arith.constant 0 : index
    %0 = vector.load %arg6[%c0, %c0_0, %c0_1, %c0_2] : memref<4x4x16x32xf32, #tpu.memory_space<vmem>>, vector<4x4x16x32xf32>
    %cst = arith.constant 0.000000e+00 : f32
    %1 = vector.broadcast %cst : f32 to vector<8x32xf32>
    %c0_3 = arith.constant 0 : index
    %c0_4 = arith.constant 0 : index
    %2 = vector.load %arg7[%c0_3, %c0_4] : memref<1x32xf32, #tpu.memory_space<vmem>>, vector<1x32xf32>
    %3 = vector.broadcast %2 : vector<1x32xf32> to vector<8x32xf32>
    %4 = arith.addf %1, %3 : vector<8x32xf32>
    %c0_5 = arith.constant 0 : index
    %c0_6 = arith.constant 0 : index
    %c0_7 = arith.constant 0 : index
    %c0_8 = arith.constant 0 : index
    %5 = vector.load %arg2[%c0_5, %c0_6, %c0_7, %c0_8] : memref<1x1x11x16xf32, #tpu.memory_space<vmem>>, vector<1x1x11x16xf32>
    %6 = vector.shape_cast %5 : vector<1x1x11x16xf32> to vector<11x16xf32>
    %7 = vector.extract_strided_slice %6 {offsets = [0, 0], sizes = [8, 16], strides = [1, 1]} : vector<11x16xf32> to vector<8x16xf32>
    %8 = vector.extract_strided_slice %0 {offsets = [0, 0, 0, 0], sizes = [1, 1, 16, 32], strides = [1, 1, 1, 1]} : vector<4x4x16x32xf32> to vector<1x1x16x32xf32>
    %9 = vector.shape_cast %8 : vector<1x1x16x32xf32> to vector<16x32xf32>
    %cst_9 = arith.constant dense<0.000000e+00> : vector<8x32xf32>
    %10 = tpu.matmul %7, %9, %cst_9 {dimension_numbers = #tpu.dot_dimension_numbers<[1], [0], [0], [1], [0, 0, 1, 1], [], []>} : vector<8x16xf32>, vector<16x32xf32>, vector<8x32xf32> -> vector<8x32xf32>
    %11 = arith.addf %4, %10 : vector<8x32xf32>
    %12 = vector.extract_strided_slice %6 {offsets = [1, 0], sizes = [8, 16], strides = [1, 1]} : vector<11x16xf32> to vector<8x16xf32>
    %13 = vector.extract_strided_slice %0 {offsets = [0, 1, 0, 0], sizes = [1, 1, 16, 32], strides = [1, 1, 1, 1]} : vector<4x4x16x32xf32> to vector<1x1x16x32xf32>
    %14 = vector.shape_cast %13 : vector<1x1x16x32xf32> to vector<16x32xf32>
    %cst_10 = arith.constant dense<0.000000e+00> : vector<8x32xf32>
    %15 = tpu.matmul %12, %14, %cst_10 {dimension_numbers = #tpu.dot_dimension_numbers<[1], [0], [0], [1], [0, 0, 1, 1], [], []>} : vector<8x16xf32>, vector<16x32xf32>, vector<8x32xf32> -> vector<8x32xf32>
    %16 = arith.addf %11, %15 : vector<8x32xf32>
    %17 = vector.extract_strided_slice %6 {offsets = [2, 0], sizes = [8, 16], strides = [1, 1]} : vector<11x16xf32> to vector<8x16xf32>
    %18 = vector.extract_strided_slice %0 {offsets = [0, 2, 0, 0], sizes = [1, 1, 16, 32], strides = [1, 1, 1, 1]} : vector<4x4x16x32xf32> to vector<1x1x16x32xf32>
    %19 = vector.shape_cast %18 : vector<1x1x16x32xf32> to vector<16x32xf32>
    %cst_11 = arith.constant dense<0.000000e+00> : vector<8x32xf32>
    %20 = tpu.matmul %17, %19, %cst_11 {dimension_numbers = #tpu.dot_dimension_numbers<[1], [0], [0], [1], [0, 0, 1, 1], [], []>} : vector<8x16xf32>, vector<16x32xf32>, vector<8x32xf32> -> vector<8x32xf32>
    %21 = arith.addf %16, %20 : vector<8x32xf32>
    %22 = vector.extract_strided_slice %6 {offsets = [3, 0], sizes = [8, 16], strides = [1, 1]} : vector<11x16xf32> to vector<8x16xf32>
    %23 = vector.extract_strided_slice %0 {offsets = [0, 3, 0, 0], sizes = [1, 1, 16, 32], strides = [1, 1, 1, 1]} : vector<4x4x16x32xf32> to vector<1x1x16x32xf32>
    %24 = vector.shape_cast %23 : vector<1x1x16x32xf32> to vector<16x32xf32>
    %cst_12 = arith.constant dense<0.000000e+00> : vector<8x32xf32>
    %25 = tpu.matmul %22, %24, %cst_12 {dimension_numbers = #tpu.dot_dimension_numbers<[1], [0], [0], [1], [0, 0, 1, 1], [], []>} : vector<8x16xf32>, vector<16x32xf32>, vector<8x32xf32> -> vector<8x32xf32>
    %26 = arith.addf %21, %25 : vector<8x32xf32>
    %c0_13 = arith.constant 0 : index
    %c0_14 = arith.constant 0 : index
    %c0_15 = arith.constant 0 : index
    %c0_16 = arith.constant 0 : index
    %27 = vector.load %arg3[%c0_13, %c0_14, %c0_15, %c0_16] : memref<1x1x11x16xf32, #tpu.memory_space<vmem>>, vector<1x1x11x16xf32>
    %28 = vector.shape_cast %27 : vector<1x1x11x16xf32> to vector<11x16xf32>
    %29 = vector.extract_strided_slice %28 {offsets = [0, 0], sizes = [8, 16], strides = [1, 1]} : vector<11x16xf32> to vector<8x16xf32>
    %30 = vector.extract_strided_slice %0 {offsets = [1, 0, 0, 0], sizes = [1, 1, 16, 32], strides = [1, 1, 1, 1]} : vector<4x4x16x32xf32> to vector<1x1x16x32xf32>
    %31 = vector.shape_cast %30 : vector<1x1x16x32xf32> to vector<16x32xf32>
    %cst_17 = arith.constant dense<0.000000e+00> : vector<8x32xf32>
    %32 = tpu.matmul %29, %31, %cst_17 {dimension_numbers = #tpu.dot_dimension_numbers<[1], [0], [0], [1], [0, 0, 1, 1], [], []>} : vector<8x16xf32>, vector<16x32xf32>, vector<8x32xf32> -> vector<8x32xf32>
    %33 = arith.addf %26, %32 : vector<8x32xf32>
    %34 = vector.extract_strided_slice %28 {offsets = [1, 0], sizes = [8, 16], strides = [1, 1]} : vector<11x16xf32> to vector<8x16xf32>
    %35 = vector.extract_strided_slice %0 {offsets = [1, 1, 0, 0], sizes = [1, 1, 16, 32], strides = [1, 1, 1, 1]} : vector<4x4x16x32xf32> to vector<1x1x16x32xf32>
    %36 = vector.shape_cast %35 : vector<1x1x16x32xf32> to vector<16x32xf32>
    %cst_18 = arith.constant dense<0.000000e+00> : vector<8x32xf32>
    %37 = tpu.matmul %34, %36, %cst_18 {dimension_numbers = #tpu.dot_dimension_numbers<[1], [0], [0], [1], [0, 0, 1, 1], [], []>} : vector<8x16xf32>, vector<16x32xf32>, vector<8x32xf32> -> vector<8x32xf32>
    %38 = arith.addf %33, %37 : vector<8x32xf32>
    %39 = vector.extract_strided_slice %28 {offsets = [2, 0], sizes = [8, 16], strides = [1, 1]} : vector<11x16xf32> to vector<8x16xf32>
    %40 = vector.extract_strided_slice %0 {offsets = [1, 2, 0, 0], sizes = [1, 1, 16, 32], strides = [1, 1, 1, 1]} : vector<4x4x16x32xf32> to vector<1x1x16x32xf32>
    %41 = vector.shape_cast %40 : vector<1x1x16x32xf32> to vector<16x32xf32>
    %cst_19 = arith.constant dense<0.000000e+00> : vector<8x32xf32>
    %42 = tpu.matmul %39, %41, %cst_19 {dimension_numbers = #tpu.dot_dimension_numbers<[1], [0], [0], [1], [0, 0, 1, 1], [], []>} : vector<8x16xf32>, vector<16x32xf32>, vector<8x32xf32> -> vector<8x32xf32>
    %43 = arith.addf %38, %42 : vector<8x32xf32>
    %44 = vector.extract_strided_slice %28 {offsets = [3, 0], sizes = [8, 16], strides = [1, 1]} : vector<11x16xf32> to vector<8x16xf32>
    %45 = vector.extract_strided_slice %0 {offsets = [1, 3, 0, 0], sizes = [1, 1, 16, 32], strides = [1, 1, 1, 1]} : vector<4x4x16x32xf32> to vector<1x1x16x32xf32>
    %46 = vector.shape_cast %45 : vector<1x1x16x32xf32> to vector<16x32xf32>
    %cst_20 = arith.constant dense<0.000000e+00> : vector<8x32xf32>
    %47 = tpu.matmul %44, %46, %cst_20 {dimension_numbers = #tpu.dot_dimension_numbers<[1], [0], [0], [1], [0, 0, 1, 1], [], []>} : vector<8x16xf32>, vector<16x32xf32>, vector<8x32xf32> -> vector<8x32xf32>
    %48 = arith.addf %43, %47 : vector<8x32xf32>
    %c0_21 = arith.constant 0 : index
    %c0_22 = arith.constant 0 : index
    %c0_23 = arith.constant 0 : index
    %c0_24 = arith.constant 0 : index
    %49 = vector.load %arg4[%c0_21, %c0_22, %c0_23, %c0_24] : memref<1x1x11x16xf32, #tpu.memory_space<vmem>>, vector<1x1x11x16xf32>
    %50 = vector.shape_cast %49 : vector<1x1x11x16xf32> to vector<11x16xf32>
    %51 = vector.extract_strided_slice %50 {offsets = [0, 0], sizes = [8, 16], strides = [1, 1]} : vector<11x16xf32> to vector<8x16xf32>
    %52 = vector.extract_strided_slice %0 {offsets = [2, 0, 0, 0], sizes = [1, 1, 16, 32], strides = [1, 1, 1, 1]} : vector<4x4x16x32xf32> to vector<1x1x16x32xf32>
    %53 = vector.shape_cast %52 : vector<1x1x16x32xf32> to vector<16x32xf32>
    %cst_25 = arith.constant dense<0.000000e+00> : vector<8x32xf32>
    %54 = tpu.matmul %51, %53, %cst_25 {dimension_numbers = #tpu.dot_dimension_numbers<[1], [0], [0], [1], [0, 0, 1, 1], [], []>} : vector<8x16xf32>, vector<16x32xf32>, vector<8x32xf32> -> vector<8x32xf32>
    %55 = arith.addf %48, %54 : vector<8x32xf32>
    %56 = vector.extract_strided_slice %50 {offsets = [1, 0], sizes = [8, 16], strides = [1, 1]} : vector<11x16xf32> to vector<8x16xf32>
    %57 = vector.extract_strided_slice %0 {offsets = [2, 1, 0, 0], sizes = [1, 1, 16, 32], strides = [1, 1, 1, 1]} : vector<4x4x16x32xf32> to vector<1x1x16x32xf32>
    %58 = vector.shape_cast %57 : vector<1x1x16x32xf32> to vector<16x32xf32>
    %cst_26 = arith.constant dense<0.000000e+00> : vector<8x32xf32>
    %59 = tpu.matmul %56, %58, %cst_26 {dimension_numbers = #tpu.dot_dimension_numbers<[1], [0], [0], [1], [0, 0, 1, 1], [], []>} : vector<8x16xf32>, vector<16x32xf32>, vector<8x32xf32> -> vector<8x32xf32>
    %60 = arith.addf %55, %59 : vector<8x32xf32>
    %61 = vector.extract_strided_slice %50 {offsets = [2, 0], sizes = [8, 16], strides = [1, 1]} : vector<11x16xf32> to vector<8x16xf32>
    %62 = vector.extract_strided_slice %0 {offsets = [2, 2, 0, 0], sizes = [1, 1, 16, 32], strides = [1, 1, 1, 1]} : vector<4x4x16x32xf32> to vector<1x1x16x32xf32>
    %63 = vector.shape_cast %62 : vector<1x1x16x32xf32> to vector<16x32xf32>
    %cst_27 = arith.constant dense<0.000000e+00> : vector<8x32xf32>
    %64 = tpu.matmul %61, %63, %cst_27 {dimension_numbers = #tpu.dot_dimension_numbers<[1], [0], [0], [1], [0, 0, 1, 1], [], []>} : vector<8x16xf32>, vector<16x32xf32>, vector<8x32xf32> -> vector<8x32xf32>
    %65 = arith.addf %60, %64 : vector<8x32xf32>
    %66 = vector.extract_strided_slice %50 {offsets = [3, 0], sizes = [8, 16], strides = [1, 1]} : vector<11x16xf32> to vector<8x16xf32>
    %67 = vector.extract_strided_slice %0 {offsets = [2, 3, 0, 0], sizes = [1, 1, 16, 32], strides = [1, 1, 1, 1]} : vector<4x4x16x32xf32> to vector<1x1x16x32xf32>
    %68 = vector.shape_cast %67 : vector<1x1x16x32xf32> to vector<16x32xf32>
    %cst_28 = arith.constant dense<0.000000e+00> : vector<8x32xf32>
    %69 = tpu.matmul %66, %68, %cst_28 {dimension_numbers = #tpu.dot_dimension_numbers<[1], [0], [0], [1], [0, 0, 1, 1], [], []>} : vector<8x16xf32>, vector<16x32xf32>, vector<8x32xf32> -> vector<8x32xf32>
    %70 = arith.addf %65, %69 : vector<8x32xf32>
    %c0_29 = arith.constant 0 : index
    %c0_30 = arith.constant 0 : index
    %c0_31 = arith.constant 0 : index
    %c0_32 = arith.constant 0 : index
    %71 = vector.load %arg5[%c0_29, %c0_30, %c0_31, %c0_32] : memref<1x1x11x16xf32, #tpu.memory_space<vmem>>, vector<1x1x11x16xf32>
    %72 = vector.shape_cast %71 : vector<1x1x11x16xf32> to vector<11x16xf32>
    %73 = vector.extract_strided_slice %72 {offsets = [0, 0], sizes = [8, 16], strides = [1, 1]} : vector<11x16xf32> to vector<8x16xf32>
    %74 = vector.extract_strided_slice %0 {offsets = [3, 0, 0, 0], sizes = [1, 1, 16, 32], strides = [1, 1, 1, 1]} : vector<4x4x16x32xf32> to vector<1x1x16x32xf32>
    %75 = vector.shape_cast %74 : vector<1x1x16x32xf32> to vector<16x32xf32>
    %cst_33 = arith.constant dense<0.000000e+00> : vector<8x32xf32>
    %76 = tpu.matmul %73, %75, %cst_33 {dimension_numbers = #tpu.dot_dimension_numbers<[1], [0], [0], [1], [0, 0, 1, 1], [], []>} : vector<8x16xf32>, vector<16x32xf32>, vector<8x32xf32> -> vector<8x32xf32>
    %77 = arith.addf %70, %76 : vector<8x32xf32>
    %78 = vector.extract_strided_slice %72 {offsets = [1, 0], sizes = [8, 16], strides = [1, 1]} : vector<11x16xf32> to vector<8x16xf32>
    %79 = vector.extract_strided_slice %0 {offsets = [3, 1, 0, 0], sizes = [1, 1, 16, 32], strides = [1, 1, 1, 1]} : vector<4x4x16x32xf32> to vector<1x1x16x32xf32>
    %80 = vector.shape_cast %79 : vector<1x1x16x32xf32> to vector<16x32xf32>
    %cst_34 = arith.constant dense<0.000000e+00> : vector<8x32xf32>
    %81 = tpu.matmul %78, %80, %cst_34 {dimension_numbers = #tpu.dot_dimension_numbers<[1], [0], [0], [1], [0, 0, 1, 1], [], []>} : vector<8x16xf32>, vector<16x32xf32>, vector<8x32xf32> -> vector<8x32xf32>
    %82 = arith.addf %77, %81 : vector<8x32xf32>
    %83 = vector.extract_strided_slice %72 {offsets = [2, 0], sizes = [8, 16], strides = [1, 1]} : vector<11x16xf32> to vector<8x16xf32>
    %84 = vector.extract_strided_slice %0 {offsets = [3, 2, 0, 0], sizes = [1, 1, 16, 32], strides = [1, 1, 1, 1]} : vector<4x4x16x32xf32> to vector<1x1x16x32xf32>
    %85 = vector.shape_cast %84 : vector<1x1x16x32xf32> to vector<16x32xf32>
    %cst_35 = arith.constant dense<0.000000e+00> : vector<8x32xf32>
    %86 = tpu.matmul %83, %85, %cst_35 {dimension_numbers = #tpu.dot_dimension_numbers<[1], [0], [0], [1], [0, 0, 1, 1], [], []>} : vector<8x16xf32>, vector<16x32xf32>, vector<8x32xf32> -> vector<8x32xf32>
    %87 = arith.addf %82, %86 : vector<8x32xf32>
    %88 = vector.extract_strided_slice %72 {offsets = [3, 0], sizes = [8, 16], strides = [1, 1]} : vector<11x16xf32> to vector<8x16xf32>
    %89 = vector.extract_strided_slice %0 {offsets = [3, 3, 0, 0], sizes = [1, 1, 16, 32], strides = [1, 1, 1, 1]} : vector<4x4x16x32xf32> to vector<1x1x16x32xf32>
    %90 = vector.shape_cast %89 : vector<1x1x16x32xf32> to vector<16x32xf32>
    %cst_36 = arith.constant dense<0.000000e+00> : vector<8x32xf32>
    %91 = tpu.matmul %88, %90, %cst_36 {dimension_numbers = #tpu.dot_dimension_numbers<[1], [0], [0], [1], [0, 0, 1, 1], [], []>} : vector<8x16xf32>, vector<16x32xf32>, vector<8x32xf32> -> vector<8x32xf32>
    %92 = arith.addf %87, %91 : vector<8x32xf32>
    %c0_37 = arith.constant 0 : index
    %c0_38 = arith.constant 0 : index
    %c0_39 = arith.constant 0 : index
    %c0_40 = arith.constant 0 : index
    %93 = vector.load %arg8[%c0_37, %c0_38, %c0_39, %c0_40] : memref<1x1x8x32xf32, #tpu.memory_space<vmem>>, vector<1x1x8x32xf32>
    %94 = vector.shape_cast %93 : vector<1x1x8x32xf32> to vector<8x32xf32>
    %95 = vector.shape_cast %92 : vector<8x32xf32> to vector<1x1x8x32xf32>
    tpu.vector_store %arg8[%c0_37, %c0_38, %c0_39, %c0_40], %95 {strides = array<i32>} : memref<1x1x8x32xf32, #tpu.memory_space<vmem>>, vector<1x1x8x32xf32>,
    return
  }
  func.func @transform_0(%arg0: i32, %arg1: i32) -> (i32, i32, i32, i32) {
    %c0_i32 = arith.constant 0 : i32
    %0 = arith.addi %arg1, %c0_i32 : i32
    %c0_i32_0 = arith.constant 0 : i32
    %c0_i32_1 = arith.constant 0 : i32
    %c0_i32_2 = arith.constant 0 : i32
    return %arg0, %0, %c0_i32_0, %c0_i32_1 : i32, i32, i32, i32
  }
  func.func @transform_1(%arg0: i32, %arg1: i32) -> (i32, i32, i32, i32) {
    %c1_i32 = arith.constant 1 : i32
    %0 = arith.addi %arg1, %c1_i32 : i32
    %c0_i32 = arith.constant 0 : i32
    %c0_i32_0 = arith.constant 0 : i32
    %c0_i32_1 = arith.constant 0 : i32
    return %arg0, %0, %c0_i32, %c0_i32_0 : i32, i32, i32, i32
  }
  func.func @transform_2(%arg0: i32, %arg1: i32) -> (i32, i32, i32, i32) {
    %c2_i32 = arith.constant 2 : i32
    %0 = arith.addi %arg1, %c2_i32 : i32
    %c0_i32 = arith.constant 0 : i32
    %c0_i32_0 = arith.constant 0 : i32
    %c0_i32_1 = arith.constant 0 : i32
    return %arg0, %0, %c0_i32, %c0_i32_0 : i32, i32, i32, i32
  }
  func.func @transform_3(%arg0: i32, %arg1: i32) -> (i32, i32, i32, i32) {
    %c3_i32 = arith.constant 3 : i32
    %0 = arith.addi %arg1, %c3_i32 : i32
    %c0_i32 = arith.constant 0 : i32
    %c0_i32_0 = arith.constant 0 : i32
    %c0_i32_1 = arith.constant 0 : i32
    return %arg0, %0, %c0_i32, %c0_i32_0 : i32, i32, i32, i32
  }
  func.func @transform_4(%arg0: i32, %arg1: i32) -> (i32, i32, i32, i32) {
    %c0_i32 = arith.constant 0 : i32
    %c0_i32_0 = arith.constant 0 : i32
    %c0_i32_1 = arith.constant 0 : i32
    %c0_i32_2 = arith.constant 0 : i32
    %c0_i32_3 = arith.constant 0 : i32
    return %c0_i32, %c0_i32_0, %c0_i32_1, %c0_i32_2 : i32, i32, i32, i32
  }
  func.func @transform_5(%arg0: i32, %arg1: i32) -> (i32, i32) {
    %c0_i32 = arith.constant 0 : i32
    %c0_i32_0 = arith.constant 0 : i32
    %c0_i32_1 = arith.constant 0 : i32
    return %c0_i32, %c0_i32_0 : i32, i32
  }
  func.func @transform_6(%arg0: i32, %arg1: i32) -> (i32, i32, i32, i32) {
    %c0_i32 = arith.constant 0 : i32
    %c0_i32_0 = arith.constant 0 : i32
    %c0_i32_1 = arith.constant 0 : i32
    return %arg0, %arg1, %c0_i32, %c0_i32_0 : i32, i32, i32, i32
  }
}

module attributes {stable_mosaic.version = 11 : i64} {
  func.func @_gn_act_kernel(%arg0: i32, %arg1: memref<1x64x32xf32, #tpu.memory_space<vmem>>, %arg2: memref<1x32xf32, #tpu.memory_space<vmem>>, %arg3: memref<1x32xf32, #tpu.memory_space<vmem>>, %arg4: memref<32x8xf32, #tpu.memory_space<vmem>>, %arg5: memref<8x32xf32, #tpu.memory_space<vmem>>, %arg6: memref<1x64x32xf32, #tpu.memory_space<vmem>>, %arg7: memref<32x16xf32, #tpu.memory_space<vmem>>, %arg8: memref<1x16xf32, #tpu.memory_space<vmem>>, %arg9: memref<1x64x16xf32, #tpu.memory_space<vmem>>) attributes {dimension_semantics = [#tpu.dimension_semantics<parallel>], iteration_bounds = array<i64: 2>, scalar_prefetch = 0 : i64, scratch_operands = 0 : i64, tpu.core_type = #tpu.core_type<tc>, window_params = [{transform_indices = @transform_0, window_bounds = array<i64: 1, 64, 32>}, {pipeline_mode = #tpu.pipeline_mode<synchronous>, transform_indices = @transform_1, window_bounds = array<i64: 1, 32>}, {pipeline_mode = #tpu.pipeline_mode<synchronous>, transform_indices = @transform_2, window_bounds = array<i64: 1, 32>}, {pipeline_mode = #tpu.pipeline_mode<synchronous>, transform_indices = @transform_3, window_bounds = array<i64: 32, 8>}, {pipeline_mode = #tpu.pipeline_mode<synchronous>, transform_indices = @transform_4, window_bounds = array<i64: 8, 32>}, {transform_indices = @transform_5, window_bounds = array<i64: 1, 64, 32>}, {pipeline_mode = #tpu.pipeline_mode<synchronous>, transform_indices = @transform_6, window_bounds = array<i64: 32, 16>}, {pipeline_mode = #tpu.pipeline_mode<synchronous>, transform_indices = @transform_7, window_bounds = array<i64: 1, 16>}, {transform_indices = @transform_8, window_bounds = array<i64: 1, 64, 16>}]} {
    %c0 = arith.constant 0 : index
    %c0_0 = arith.constant 0 : index
    %c0_1 = arith.constant 0 : index
    %0 = vector.load %arg1[%c0, %c0_0, %c0_1] : memref<1x64x32xf32, #tpu.memory_space<vmem>>, vector<1x64x32xf32>
    %1 = vector.shape_cast %0 : vector<1x64x32xf32> to vector<64x32xf32>
    %cst = arith.constant dense<0.000000e+00> : vector<32xf32>
    %2 = vector.multi_reduction <add>, %1, %cst [0] : vector<64x32xf32> to vector<32xf32>
    %3 = vector.shape_cast %2 : vector<32xf32> to vector<1x32xf32>
    %4 = arith.mulf %1, %1 : vector<64x32xf32>
    %cst_2 = arith.constant dense<0.000000e+00> : vector<32xf32>
    %5 = vector.multi_reduction <add>, %4, %cst_2 [0] : vector<64x32xf32> to vector<32xf32>
    %6 = vector.shape_cast %5 : vector<32xf32> to vector<1x32xf32>
    %c0_3 = arith.constant 0 : index
    %c0_4 = arith.constant 0 : index
    %7 = vector.load %arg4[%c0_3, %c0_4] : memref<32x8xf32, #tpu.memory_space<vmem>>, vector<32x8xf32>
    %cst_5 = arith.constant dense<0.000000e+00> : vector<1x8xf32>
    %8 = tpu.matmul %3, %7, %cst_5 {dimension_numbers = #tpu.dot_dimension_numbers<[1], [0], [0], [1], [0, 0, 1, 1], [], []>} : vector<1x32xf32>, vector<32x8xf32>, vector<1x8xf32> -> vector<1x8xf32>
    %c0_6 = arith.constant 0 : index
    %c0_7 = arith.constant 0 : index
    %9 = vector.load %arg4[%c0_6, %c0_7] : memref<32x8xf32, #tpu.memory_space<vmem>>, vector<32x8xf32>
    %cst_8 = arith.constant dense<0.000000e+00> : vector<1x8xf32>
    %10 = tpu.matmul %6, %9, %cst_8 {dimension_numbers = #tpu.dot_dimension_numbers<[1], [0], [0], [1], [0, 0, 1, 1], [], []>} : vector<1x32xf32>, vector<32x8xf32>, vector<1x8xf32> -> vector<1x8xf32>
    %cst_9 = arith.constant 2.560000e+02 : f32
    %11 = vector.broadcast %cst_9 : f32 to vector<1x8xf32>
    %12 = arith.divf %8, %11 : vector<1x8xf32>
    %cst_10 = arith.constant 2.560000e+02 : f32
    %13 = vector.broadcast %cst_10 : f32 to vector<1x8xf32>
    %14 = arith.divf %10, %13 : vector<1x8xf32>
    %15 = arith.mulf %12, %12 : vector<1x8xf32>
    %16 = arith.subf %14, %15 : vector<1x8xf32>
    %cst_11 = arith.constant 9.99999974E-6 : f32
    %17 = vector.broadcast %cst_11 : f32 to vector<1x8xf32>
    %18 = arith.addf %16, %17 : vector<1x8xf32>
    %19 = math.rsqrt %18 : vector<1x8xf32>
    %c0_12 = arith.constant 0 : index
    %c0_13 = arith.constant 0 : index
    %20 = vector.load %arg5[%c0_12, %c0_13] : memref<8x32xf32, #tpu.memory_space<vmem>>, vector<8x32xf32>
    %cst_14 = arith.constant dense<0.000000e+00> : vector<1x32xf32>
    %21 = tpu.matmul %12, %20, %cst_14 {dimension_numbers = #tpu.dot_dimension_numbers<[1], [0], [0], [1], [0, 0, 1, 1], [], []>} : vector<1x8xf32>, vector<8x32xf32>, vector<1x32xf32> -> vector<1x32xf32>
    %c0_15 = arith.constant 0 : index
    %c0_16 = arith.constant 0 : index
    %22 = vector.load %arg5[%c0_15, %c0_16] : memref<8x32xf32, #tpu.memory_space<vmem>>, vector<8x32xf32>
    %cst_17 = arith.constant dense<0.000000e+00> : vector<1x32xf32>
    %23 = tpu.matmul %19, %22, %cst_17 {dimension_numbers = #tpu.dot_dimension_numbers<[1], [0], [0], [1], [0, 0, 1, 1], [], []>} : vector<1x8xf32>, vector<8x32xf32>, vector<1x32xf32> -> vector<1x32xf32>
    %c0_18 = arith.constant 0 : index
    %c0_19 = arith.constant 0 : index
    %24 = vector.load %arg2[%c0_18, %c0_19] : memref<1x32xf32, #tpu.memory_space<vmem>>, vector<1x32xf32>
    %25 = arith.mulf %23, %24 : vector<1x32xf32>
    %c0_20 = arith.constant 0 : index
    %c0_21 = arith.constant 0 : index
    %26 = vector.load %arg3[%c0_20, %c0_21] : memref<1x32xf32, #tpu.memory_space<vmem>>, vector<1x32xf32>
    %27 = arith.mulf %21, %25 : vector<1x32xf32>
    %28 = arith.subf %26, %27 : vector<1x32xf32>
    %29 = vector.broadcast %25 : vector<1x32xf32> to vector<64x32xf32>
    %30 = arith.mulf %1, %29 : vector<64x32xf32>
    %31 = vector.broadcast %28 : vector<1x32xf32> to vector<64x32xf32>
    %32 = arith.addf %30, %31 : vector<64x32xf32>
    %c0_22 = arith.constant 0 : index
    %c0_23 = arith.constant 0 : index
    %c0_24 = arith.constant 0 : index
    %33 = vector.load %arg6[%c0_22, %c0_23, %c0_24] : memref<1x64x32xf32, #tpu.memory_space<vmem>>, vector<1x64x32xf32>
    %34 = vector.shape_cast %33 : vector<1x64x32xf32> to vector<64x32xf32>
    %35 = arith.addf %32, %34 : vector<64x32xf32>
    %cst_25 = arith.constant 0.000000e+00 : f32
    %36 = vector.broadcast %cst_25 : f32 to vector<64x32xf32>
    %37 = arith.cmpf oge, %35, %36 : vector<64x32xf32>
    %cst_26 = arith.constant 1.000000e-01 : f32
    %38 = vector.broadcast %cst_26 : f32 to vector<64x32xf32>
    %39 = arith.mulf %38, %35 : vector<64x32xf32>
    %40 = arith.select %37, %35, %39 : vector<64x32xi1>, vector<64x32xf32>
    %c0_27 = arith.constant 0 : index
    %c0_28 = arith.constant 0 : index
    %41 = vector.load %arg7[%c0_27, %c0_28] : memref<32x16xf32, #tpu.memory_space<vmem>>, vector<32x16xf32>
    %cst_29 = arith.constant dense<0.000000e+00> : vector<64x16xf32>
    %42 = tpu.matmul %40, %41, %cst_29 {dimension_numbers = #tpu.dot_dimension_numbers<[1], [0], [0], [1], [0, 0, 1, 1], [], []>} : vector<64x32xf32>, vector<32x16xf32>, vector<64x16xf32> -> vector<64x16xf32>
    %c0_30 = arith.constant 0 : index
    %c0_31 = arith.constant 0 : index
    %43 = vector.load %arg8[%c0_30, %c0_31] : memref<1x16xf32, #tpu.memory_space<vmem>>, vector<1x16xf32>
    %44 = vector.broadcast %43 : vector<1x16xf32> to vector<64x16xf32>
    %45 = arith.addf %42, %44 : vector<64x16xf32>
    %c0_32 = arith.constant 0 : index
    %c0_33 = arith.constant 0 : index
    %c0_34 = arith.constant 0 : index
    %46 = vector.load %arg9[%c0_32, %c0_33, %c0_34] : memref<1x64x16xf32, #tpu.memory_space<vmem>>, vector<1x64x16xf32>
    %47 = vector.shape_cast %46 : vector<1x64x16xf32> to vector<64x16xf32>
    %48 = vector.shape_cast %45 : vector<64x16xf32> to vector<1x64x16xf32>
    tpu.vector_store %arg9[%c0_32, %c0_33, %c0_34], %48 {strides = array<i32>} : memref<1x64x16xf32, #tpu.memory_space<vmem>>, vector<1x64x16xf32>,
    return
  }
  func.func @transform_0(%arg0: i32) -> (i32, i32, i32) {
    %c0_i32 = arith.constant 0 : i32
    %c0_i32_0 = arith.constant 0 : i32
    %c0_i32_1 = arith.constant 0 : i32
    return %arg0, %c0_i32, %c0_i32_0 : i32, i32, i32
  }
  func.func @transform_1(%arg0: i32) -> (i32, i32) {
    %c0_i32 = arith.constant 0 : i32
    %c0_i32_0 = arith.constant 0 : i32
    %c0_i32_1 = arith.constant 0 : i32
    return %c0_i32, %c0_i32_0 : i32, i32
  }
  func.func @transform_2(%arg0: i32) -> (i32, i32) {
    %c0_i32 = arith.constant 0 : i32
    %c0_i32_0 = arith.constant 0 : i32
    %c0_i32_1 = arith.constant 0 : i32
    return %c0_i32, %c0_i32_0 : i32, i32
  }
  func.func @transform_3(%arg0: i32) -> (i32, i32) {
    %c0_i32 = arith.constant 0 : i32
    %c0_i32_0 = arith.constant 0 : i32
    %c0_i32_1 = arith.constant 0 : i32
    return %c0_i32, %c0_i32_0 : i32, i32
  }
  func.func @transform_4(%arg0: i32) -> (i32, i32) {
    %c0_i32 = arith.constant 0 : i32
    %c0_i32_0 = arith.constant 0 : i32
    %c0_i32_1 = arith.constant 0 : i32
    return %c0_i32, %c0_i32_0 : i32, i32
  }
  func.func @transform_5(%arg0: i32) -> (i32, i32, i32) {
    %c0_i32 = arith.constant 0 : i32
    %c0_i32_0 = arith.constant 0 : i32
    %c0_i32_1 = arith.constant 0 : i32
    return %arg0, %c0_i32, %c0_i32_0 : i32, i32, i32
  }
  func.func @transform_6(%arg0: i32) -> (i32, i32) {
    %c0_i32 = arith.constant 0 : i32
    %c0_i32_0 = arith.constant 0 : i32
    %c0_i32_1 = arith.constant 0 : i32
    return %c0_i32, %c0_i32_0 : i32, i32
  }
  func.func @transform_7(%arg0: i32) -> (i32, i32) {
    %c0_i32 = arith.constant 0 : i32
    %c0_i32_0 = arith.constant 0 : i32
    %c0_i32_1 = arith.constant 0 : i32
    return %c0_i32, %c0_i32_0 : i32, i32
  }
  func.func @transform_8(%arg0: i32) -> (i32, i32, i32) {
    %c0_i32 = arith.constant 0 : i32
    %c0_i32_0 = arith.constant 0 : i32
    %c0_i32_1 = arith.constant 0 : i32
    return %arg0, %c0_i32, %c0_i32_0 : i32, i32, i32
  }
}

module attributes {stable_mosaic.version = 11 : i64} {
  func.func @_gn_act_kernel(%arg0: i32, %arg1: memref<1x64x32xf32, #tpu.memory_space<vmem>>, %arg2: memref<1x32xf32, #tpu.memory_space<vmem>>, %arg3: memref<1x32xf32, #tpu.memory_space<vmem>>, %arg4: memref<32x8xf32, #tpu.memory_space<vmem>>, %arg5: memref<8x32xf32, #tpu.memory_space<vmem>>, %arg6: memref<1x64x32xf32, #tpu.memory_space<vmem>>, %arg7: memref<1x64x32xf32, #tpu.memory_space<vmem>>) attributes {dimension_semantics = [#tpu.dimension_semantics<parallel>], iteration_bounds = array<i64: 2>, scalar_prefetch = 0 : i64, scratch_operands = 0 : i64, tpu.core_type = #tpu.core_type<tc>, window_params = [{transform_indices = @transform_0, window_bounds = array<i64: 1, 64, 32>}, {pipeline_mode = #tpu.pipeline_mode<synchronous>, transform_indices = @transform_1, window_bounds = array<i64: 1, 32>}, {pipeline_mode = #tpu.pipeline_mode<synchronous>, transform_indices = @transform_2, window_bounds = array<i64: 1, 32>}, {pipeline_mode = #tpu.pipeline_mode<synchronous>, transform_indices = @transform_3, window_bounds = array<i64: 32, 8>}, {pipeline_mode = #tpu.pipeline_mode<synchronous>, transform_indices = @transform_4, window_bounds = array<i64: 8, 32>}, {transform_indices = @transform_5, window_bounds = array<i64: 1, 64, 32>}, {transform_indices = @transform_6, window_bounds = array<i64: 1, 64, 32>}]} {
    %c0 = arith.constant 0 : index
    %c0_0 = arith.constant 0 : index
    %c0_1 = arith.constant 0 : index
    %0 = vector.load %arg1[%c0, %c0_0, %c0_1] : memref<1x64x32xf32, #tpu.memory_space<vmem>>, vector<1x64x32xf32>
    %1 = vector.shape_cast %0 : vector<1x64x32xf32> to vector<64x32xf32>
    %cst = arith.constant dense<0.000000e+00> : vector<32xf32>
    %2 = vector.multi_reduction <add>, %1, %cst [0] : vector<64x32xf32> to vector<32xf32>
    %3 = vector.shape_cast %2 : vector<32xf32> to vector<1x32xf32>
    %4 = arith.mulf %1, %1 : vector<64x32xf32>
    %cst_2 = arith.constant dense<0.000000e+00> : vector<32xf32>
    %5 = vector.multi_reduction <add>, %4, %cst_2 [0] : vector<64x32xf32> to vector<32xf32>
    %6 = vector.shape_cast %5 : vector<32xf32> to vector<1x32xf32>
    %c0_3 = arith.constant 0 : index
    %c0_4 = arith.constant 0 : index
    %7 = vector.load %arg4[%c0_3, %c0_4] : memref<32x8xf32, #tpu.memory_space<vmem>>, vector<32x8xf32>
    %cst_5 = arith.constant dense<0.000000e+00> : vector<1x8xf32>
    %8 = tpu.matmul %3, %7, %cst_5 {dimension_numbers = #tpu.dot_dimension_numbers<[1], [0], [0], [1], [0, 0, 1, 1], [], []>} : vector<1x32xf32>, vector<32x8xf32>, vector<1x8xf32> -> vector<1x8xf32>
    %c0_6 = arith.constant 0 : index
    %c0_7 = arith.constant 0 : index
    %9 = vector.load %arg4[%c0_6, %c0_7] : memref<32x8xf32, #tpu.memory_space<vmem>>, vector<32x8xf32>
    %cst_8 = arith.constant dense<0.000000e+00> : vector<1x8xf32>
    %10 = tpu.matmul %6, %9, %cst_8 {dimension_numbers = #tpu.dot_dimension_numbers<[1], [0], [0], [1], [0, 0, 1, 1], [], []>} : vector<1x32xf32>, vector<32x8xf32>, vector<1x8xf32> -> vector<1x8xf32>
    %cst_9 = arith.constant 2.560000e+02 : f32
    %11 = vector.broadcast %cst_9 : f32 to vector<1x8xf32>
    %12 = arith.divf %8, %11 : vector<1x8xf32>
    %cst_10 = arith.constant 2.560000e+02 : f32
    %13 = vector.broadcast %cst_10 : f32 to vector<1x8xf32>
    %14 = arith.divf %10, %13 : vector<1x8xf32>
    %15 = arith.mulf %12, %12 : vector<1x8xf32>
    %16 = arith.subf %14, %15 : vector<1x8xf32>
    %cst_11 = arith.constant 9.99999974E-6 : f32
    %17 = vector.broadcast %cst_11 : f32 to vector<1x8xf32>
    %18 = arith.addf %16, %17 : vector<1x8xf32>
    %19 = math.rsqrt %18 : vector<1x8xf32>
    %c0_12 = arith.constant 0 : index
    %c0_13 = arith.constant 0 : index
    %20 = vector.load %arg5[%c0_12, %c0_13] : memref<8x32xf32, #tpu.memory_space<vmem>>, vector<8x32xf32>
    %cst_14 = arith.constant dense<0.000000e+00> : vector<1x32xf32>
    %21 = tpu.matmul %12, %20, %cst_14 {dimension_numbers = #tpu.dot_dimension_numbers<[1], [0], [0], [1], [0, 0, 1, 1], [], []>} : vector<1x8xf32>, vector<8x32xf32>, vector<1x32xf32> -> vector<1x32xf32>
    %c0_15 = arith.constant 0 : index
    %c0_16 = arith.constant 0 : index
    %22 = vector.load %arg5[%c0_15, %c0_16] : memref<8x32xf32, #tpu.memory_space<vmem>>, vector<8x32xf32>
    %cst_17 = arith.constant dense<0.000000e+00> : vector<1x32xf32>
    %23 = tpu.matmul %19, %22, %cst_17 {dimension_numbers = #tpu.dot_dimension_numbers<[1], [0], [0], [1], [0, 0, 1, 1], [], []>} : vector<1x8xf32>, vector<8x32xf32>, vector<1x32xf32> -> vector<1x32xf32>
    %c0_18 = arith.constant 0 : index
    %c0_19 = arith.constant 0 : index
    %24 = vector.load %arg2[%c0_18, %c0_19] : memref<1x32xf32, #tpu.memory_space<vmem>>, vector<1x32xf32>
    %25 = arith.mulf %23, %24 : vector<1x32xf32>
    %c0_20 = arith.constant 0 : index
    %c0_21 = arith.constant 0 : index
    %26 = vector.load %arg3[%c0_20, %c0_21] : memref<1x32xf32, #tpu.memory_space<vmem>>, vector<1x32xf32>
    %27 = arith.mulf %21, %25 : vector<1x32xf32>
    %28 = arith.subf %26, %27 : vector<1x32xf32>
    %29 = vector.broadcast %25 : vector<1x32xf32> to vector<64x32xf32>
    %30 = arith.mulf %1, %29 : vector<64x32xf32>
    %31 = vector.broadcast %28 : vector<1x32xf32> to vector<64x32xf32>
    %32 = arith.addf %30, %31 : vector<64x32xf32>
    %c0_22 = arith.constant 0 : index
    %c0_23 = arith.constant 0 : index
    %c0_24 = arith.constant 0 : index
    %33 = vector.load %arg6[%c0_22, %c0_23, %c0_24] : memref<1x64x32xf32, #tpu.memory_space<vmem>>, vector<1x64x32xf32>
    %34 = vector.shape_cast %33 : vector<1x64x32xf32> to vector<64x32xf32>
    %35 = arith.addf %32, %34 : vector<64x32xf32>
    %cst_25 = arith.constant 0.000000e+00 : f32
    %36 = vector.broadcast %cst_25 : f32 to vector<64x32xf32>
    %37 = arith.cmpf oge, %35, %36 : vector<64x32xf32>
    %cst_26 = arith.constant 1.000000e-01 : f32
    %38 = vector.broadcast %cst_26 : f32 to vector<64x32xf32>
    %39 = arith.mulf %38, %35 : vector<64x32xf32>
    %40 = arith.select %37, %35, %39 : vector<64x32xi1>, vector<64x32xf32>
    %c0_27 = arith.constant 0 : index
    %c0_28 = arith.constant 0 : index
    %c0_29 = arith.constant 0 : index
    %41 = vector.load %arg7[%c0_27, %c0_28, %c0_29] : memref<1x64x32xf32, #tpu.memory_space<vmem>>, vector<1x64x32xf32>
    %42 = vector.shape_cast %41 : vector<1x64x32xf32> to vector<64x32xf32>
    %43 = vector.shape_cast %40 : vector<64x32xf32> to vector<1x64x32xf32>
    tpu.vector_store %arg7[%c0_27, %c0_28, %c0_29], %43 {strides = array<i32>} : memref<1x64x32xf32, #tpu.memory_space<vmem>>, vector<1x64x32xf32>,
    return
  }
  func.func @transform_0(%arg0: i32) -> (i32, i32, i32) {
    %c0_i32 = arith.constant 0 : i32
    %c0_i32_0 = arith.constant 0 : i32
    %c0_i32_1 = arith.constant 0 : i32
    return %arg0, %c0_i32, %c0_i32_0 : i32, i32, i32
  }
  func.func @transform_1(%arg0: i32) -> (i32, i32) {
    %c0_i32 = arith.constant 0 : i32
    %c0_i32_0 = arith.constant 0 : i32
    %c0_i32_1 = arith.constant 0 : i32
    return %c0_i32, %c0_i32_0 : i32, i32
  }
  func.func @transform_2(%arg0: i32) -> (i32, i32) {
    %c0_i32 = arith.constant 0 : i32
    %c0_i32_0 = arith.constant 0 : i32
    %c0_i32_1 = arith.constant 0 : i32
    return %c0_i32, %c0_i32_0 : i32, i32
  }
  func.func @transform_3(%arg0: i32) -> (i32, i32) {
    %c0_i32 = arith.constant 0 : i32
    %c0_i32_0 = arith.constant 0 : i32
    %c0_i32_1 = arith.constant 0 : i32
    return %c0_i32, %c0_i32_0 : i32, i32
  }
  func.func @transform_4(%arg0: i32) -> (i32, i32) {
    %c0_i32 = arith.constant 0 : i32
    %c0_i32_0 = arith.constant 0 : i32
    %c0_i32_1 = arith.constant 0 : i32
    return %c0_i32, %c0_i32_0 : i32, i32
  }
  func.func @transform_5(%arg0: i32) -> (i32, i32, i32) {
    %c0_i32 = arith.constant 0 : i32
    %c0_i32_0 = arith.constant 0 : i32
    %c0_i32_1 = arith.constant 0 : i32
    return %arg0, %c0_i32, %c0_i32_0 : i32, i32, i32
  }
  func.func @transform_6(%arg0: i32) -> (i32, i32, i32) {
    %c0_i32 = arith.constant 0 : i32
    %c0_i32_0 = arith.constant 0 : i32
    %c0_i32_1 = arith.constant 0 : i32
    return %arg0, %c0_i32, %c0_i32_0 : i32, i32, i32
  }
}

module attributes {stable_mosaic.version = 11 : i64} {
  func.func @_resize_kernel(%arg0: i32, %arg1: memref<16x8xf32, #tpu.memory_space<vmem>>, %arg2: memref<1x8x128xf32, #tpu.memory_space<vmem>>, %arg3: memref<1x16x128xf32, #tpu.memory_space<vmem>>) attributes {dimension_semantics = [#tpu.dimension_semantics<parallel>], iteration_bounds = array<i64: 2>, scalar_prefetch = 0 : i64, scratch_operands = 0 : i64, tpu.core_type = #tpu.core_type<tc>, window_params = [{pipeline_mode = #tpu.pipeline_mode<synchronous>, transform_indices = @transform_0, window_bounds = array<i64: 16, 8>}, {transform_indices = @transform_1, window_bounds = array<i64: 1, 8, 128>}, {transform_indices = @transform_2, window_bounds = array<i64: 1, 16, 128>}]} {
    %c0 = arith.constant 0 : index
    %c0_0 = arith.constant 0 : index
    %0 = vector.load %arg1[%c0, %c0_0] : memref<16x8xf32, #tpu.memory_space<vmem>>, vector<16x8xf32>
    %c0_1 = arith.constant 0 : index
    %c0_2 = arith.constant 0 : index
    %c0_3 = arith.constant 0 : index
    %1 = vector.load %arg2[%c0_1, %c0_2, %c0_3] : memref<1x8x128xf32, #tpu.memory_space<vmem>>, vector<1x8x128xf32>
    %2 = vector.shape_cast %1 : vector<1x8x128xf32> to vector<8x128xf32>
    %cst = arith.constant dense<0.000000e+00> : vector<16x128xf32>
    %3 = tpu.matmul %0, %2, %cst {dimension_numbers = #tpu.dot_dimension_numbers<[1], [0], [0], [1], [0, 0, 1, 1], [], []>} : vector<16x8xf32>, vector<8x128xf32>, vector<16x128xf32> -> vector<16x128xf32>
    %c0_4 = arith.constant 0 : index
    %c0_5 = arith.constant 0 : index
    %c0_6 = arith.constant 0 : index
    %4 = vector.load %arg3[%c0_4, %c0_5, %c0_6] : memref<1x16x128xf32, #tpu.memory_space<vmem>>, vector<1x16x128xf32>
    %5 = vector.shape_cast %4 : vector<1x16x128xf32> to vector<16x128xf32>
    %6 = vector.shape_cast %3 : vector<16x128xf32> to vector<1x16x128xf32>
    tpu.vector_store %arg3[%c0_4, %c0_5, %c0_6], %6 {strides = array<i32>} : memref<1x16x128xf32, #tpu.memory_space<vmem>>, vector<1x16x128xf32>,
    return
  }
  func.func @transform_0(%arg0: i32) -> (i32, i32) {
    %c0_i32 = arith.constant 0 : i32
    %c0_i32_0 = arith.constant 0 : i32
    %c0_i32_1 = arith.constant 0 : i32
    return %c0_i32, %c0_i32_0 : i32, i32
  }
  func.func @transform_1(%arg0: i32) -> (i32, i32, i32) {
    %c0_i32 = arith.constant 0 : i32
    %c0_i32_0 = arith.constant 0 : i32
    %c0_i32_1 = arith.constant 0 : i32
    return %arg0, %c0_i32, %c0_i32_0 : i32, i32, i32
  }
  func.func @transform_2(%arg0: i32) -> (i32, i32, i32) {
    %c0_i32 = arith.constant 0 : i32
    %c0_i32_0 = arith.constant 0 : i32
    %c0_i32_1 = arith.constant 0 : i32
    return %arg0, %c0_i32, %c0_i32_0 : i32, i32, i32
  }
}

module attributes {stable_mosaic.version = 11 : i64} {
  func.func @_resize_kernel(%arg0: i32, %arg1: memref<16x8xf32, #tpu.memory_space<vmem>>, %arg2: memref<1x8x256xf32, #tpu.memory_space<vmem>>, %arg3: memref<1x16x256xf32, #tpu.memory_space<vmem>>) attributes {dimension_semantics = [#tpu.dimension_semantics<parallel>], iteration_bounds = array<i64: 2>, scalar_prefetch = 0 : i64, scratch_operands = 0 : i64, tpu.core_type = #tpu.core_type<tc>, window_params = [{pipeline_mode = #tpu.pipeline_mode<synchronous>, transform_indices = @transform_0, window_bounds = array<i64: 16, 8>}, {transform_indices = @transform_1, window_bounds = array<i64: 1, 8, 256>}, {transform_indices = @transform_2, window_bounds = array<i64: 1, 16, 256>}]} {
    %c0 = arith.constant 0 : index
    %c0_0 = arith.constant 0 : index
    %0 = vector.load %arg1[%c0, %c0_0] : memref<16x8xf32, #tpu.memory_space<vmem>>, vector<16x8xf32>
    %c0_1 = arith.constant 0 : index
    %c0_2 = arith.constant 0 : index
    %c0_3 = arith.constant 0 : index
    %1 = vector.load %arg2[%c0_1, %c0_2, %c0_3] : memref<1x8x256xf32, #tpu.memory_space<vmem>>, vector<1x8x256xf32>
    %2 = vector.shape_cast %1 : vector<1x8x256xf32> to vector<8x256xf32>
    %cst = arith.constant dense<0.000000e+00> : vector<16x256xf32>
    %3 = tpu.matmul %0, %2, %cst {dimension_numbers = #tpu.dot_dimension_numbers<[1], [0], [0], [1], [0, 0, 1, 1], [], []>} : vector<16x8xf32>, vector<8x256xf32>, vector<16x256xf32> -> vector<16x256xf32>
    %c0_4 = arith.constant 0 : index
    %c0_5 = arith.constant 0 : index
    %c0_6 = arith.constant 0 : index
    %4 = vector.load %arg3[%c0_4, %c0_5, %c0_6] : memref<1x16x256xf32, #tpu.memory_space<vmem>>, vector<1x16x256xf32>
    %5 = vector.shape_cast %4 : vector<1x16x256xf32> to vector<16x256xf32>
    %6 = vector.shape_cast %3 : vector<16x256xf32> to vector<1x16x256xf32>
    tpu.vector_store %arg3[%c0_4, %c0_5, %c0_6], %6 {strides = array<i32>} : memref<1x16x256xf32, #tpu.memory_space<vmem>>, vector<1x16x256xf32>,
    return
  }
  func.func @transform_0(%arg0: i32) -> (i32, i32) {
    %c0_i32 = arith.constant 0 : i32
    %c0_i32_0 = arith.constant 0 : i32
    %c0_i32_1 = arith.constant 0 : i32
    return %c0_i32, %c0_i32_0 : i32, i32
  }
  func.func @transform_1(%arg0: i32) -> (i32, i32, i32) {
    %c0_i32 = arith.constant 0 : i32
    %c0_i32_0 = arith.constant 0 : i32
    %c0_i32_1 = arith.constant 0 : i32
    return %arg0, %c0_i32, %c0_i32_0 : i32, i32, i32
  }
  func.func @transform_2(%arg0: i32) -> (i32, i32, i32) {
    %c0_i32 = arith.constant 0 : i32
    %c0_i32_0 = arith.constant 0 : i32
    %c0_i32_1 = arith.constant 0 : i32
    return %arg0, %c0_i32, %c0_i32_0 : i32, i32, i32
  }
}

</mosaic_0001>

<llo_original>
// kernel: image_backbone_forward.13
$region0: #{image_backbone_forward.13}
  #allocation0 [shape = 'u32[]', space=smem, size = 0x4, offset = 0x4, fixed_abs, tag = 'smem constant byte address 0x4 - core index']
  #allocation1 [shape = 'u32[144,128]{1,0:T(1,128)}', space=vmem, size = 0x12000, scoped, tag = 'internal scratch']
  %s0 = inlined_call_operand.vmem [shape: f32[2,64,32], index: 0, kind: input, shape index: {}]
  %s1 = inlined_call_operand.vmem [shape: f32[1,32], index: 1, kind: input, shape index: {}]
  %s2 = inlined_call_operand.vmem [shape: f32[1,32], index: 2, kind: input, shape index: {}]
  %s3 = inlined_call_operand.vmem [shape: f32[32,8], index: 3, kind: input, shape index: {}]
  %s4 = inlined_call_operand.vmem [shape: f32[8,32], index: 4, kind: input, shape index: {}]
  %s5 = inlined_call_operand.vmem [shape: f32[2,64,32], index: 5, kind: output, shape index: {}]
  %s6 = sld [smem:[#allocation0]]
  $region53: #{image_backbone_forward.13} parent=0
    _
  %s8 = ssub.s32 1, %s6
  %s9 = scalar_select 0, %s8, %s6
  loop: start=0, step=1, limit=4
  $region2: #{image_backbone_forward.13} parent=0 // loop_pre_header
    _
  $region3: #{image_backbone_forward.13} parent=0 // loop_header
    %s11 = sphi 0, %s15
    %p12 = scmp.ge.s32.totalorder %s11, 4
    %s21 = sphi 0, %s23
    %s24 = sphi 0, %s21
    %s25 = sphi 0, %s24
    %s41 = sphi 0, %s25
    %s45 = sphi 0, %s45
    %s47 = sphi 0, %s45
    %s48 = sphi 0, %s47
    %s62 = sphi 0, %s48
    %s66 = sphi 0, %s66
    %s68 = sphi 0, %s66
    %s69 = sphi 0, %s68
    %s83 = sphi 0, %s69
    %s87 = sphi 0, %s87
    %s89 = sphi 0, %s87
    %s90 = sphi 0, %s89
    %s104 = sphi 0, %s90
    %s108 = sphi 0, %s108
    %s110 = sphi 0, %s108
    %s111 = sphi 0, %s110
    %s125 = sphi 0, %s111
    %s131 = sphi 0, %s133
    %s134 = sphi 0, %s131
    %s135 = sphi 0, %s134
    %s151 = sphi 0, %s135
  $region4: #{image_backbone_forward.13} parent=0 // loop_header_branch
    %14 = sbr.rel (%p12) target = $region8
  $region5: #{image_backbone_forward.13} parent=0 // loop_body
    %s16 = ssub.s32 %s11, 1
    %s17 = ssub.s32 %s11, 2
    %s18 = sadd.s32 %s11, 1
    %s19 = ssub.s32 %s11, %s18
    %p20 = scmp.eq.s32.totalorder %s19, 0
    %s22 = sadd.s32 %s21, 1
    %s23 = scalar_select %p20, %s21, %s22
    %p26 = pneg %p20
    %p27 = scmp.eq.s32.totalorder %s11, 1
    %p28 = por %p26, %p27
    %p29 = scmp.ne.s32.totalorder %s21, %s24
    %p30 = scmp.eq.s32.totalorder %s11, 0
    %p31 = por %p29, %p30
    %p32 = scmp.ne.s32.totalorder %s21, %s24
    %p33 = scmp.eq.s32.totalorder %s16, 1
    %p34 = por %p32, %p33
    %p35 = scmp.ne.s32.totalorder %s24, %s25
    %p36 = scmp.eq.s32.totalorder %s16, 0
    %p37 = por %p35, %p36
    %p38 = scmp.ne.s32.totalorder %s24, %s25
    %p39 = scmp.eq.s32.totalorder %s17, 1
    %p40 = por %p38, %p39
    %p42 = scmp.ne.s32.totalorder %s25, %s41
    %p43 = scmp.eq.s32.totalorder %s17, 0
    %p44 = por %p42, %p43
    %s46 = sadd.s32 %s45, 1
    %p49 = scmp.eq.s32.totalorder %s11, 1
    %p50 = scmp.ne.s32.totalorder %s45, %s47
    %p51 = scmp.eq.s32.totalorder %s11, 0
    %p52 = por %p50, %p51
    %p53 = scmp.ne.s32.totalorder %s45, %s47
    %p54 = scmp.eq.s32.totalorder %s16, 1
    %p55 = por %p53, %p54
    %p56 = scmp.ne.s32.totalorder %s47, %s48
    %p57 = scmp.eq.s32.totalorder %s16, 0
    %p58 = por %p56, %p57
    %p59 = scmp.ne.s32.totalorder %s47, %s48
    %p60 = scmp.eq.s32.totalorder %s17, 1
    %p61 = por %p59, %p60
    %p63 = scmp.ne.s32.totalorder %s48, %s62
    %p64 = scmp.eq.s32.totalorder %s17, 0
    %p65 = por %p63, %p64
    %s67 = sadd.s32 %s66, 1
    %p70 = scmp.eq.s32.totalorder %s11, 1
    %p71 = scmp.ne.s32.totalorder %s66, %s68
    %p72 = scmp.eq.s32.totalorder %s11, 0
    %p73 = por %p71, %p72
    %p74 = scmp.ne.s32.totalorder %s66, %s68
    %p75 = scmp.eq.s32.totalorder %s16, 1
    %p76 = por %p74, %p75
    %p77 = scmp.ne.s32.totalorder %s68, %s69
    %p78 = scmp.eq.s32.totalorder %s16, 0
    %p79 = por %p77, %p78
    %p80 = scmp.ne.s32.totalorder %s68, %s69
    %p81 = scmp.eq.s32.totalorder %s17, 1
    %p82 = por %p80, %p81
    %p84 = scmp.ne.s32.totalorder %s69, %s83
    %p85 = scmp.eq.s32.totalorder %s17, 0
    %p86 = por %p84, %p85
    %s88 = sadd.s32 %s87, 1
    %p91 = scmp.eq.s32.totalorder %s11, 1
    %p92 = scmp.ne.s32.totalorder %s87, %s89
    %p93 = scmp.eq.s32.totalorder %s11, 0
    %p94 = por %p92, %p93
    %p95 = scmp.ne.s32.totalorder %s87, %s89
    %p96 = scmp.eq.s32.totalorder %s16, 1
    %p97 = por %p95, %p96
    %p98 = scmp.ne.s32.totalorder %s89, %s90
    %p99 = scmp.eq.s32.totalorder %s16, 0
    %p100 = por %p98, %p99
    %p101 = scmp.ne.s32.totalorder %s89, %s90
    %p102 = scmp.eq.s32.totalorder %s17, 1
    %p103 = por %p101, %p102
    %p105 = scmp.ne.s32.totalorder %s90, %s104
    %p106 = scmp.eq.s32.totalorder %s17, 0
    %p107 = por %p105, %p106
    %s109 = sadd.s32 %s108, 1
    %p112 = scmp.eq.s32.totalorder %s11, 1
    %p113 = scmp.ne.s32.totalorder %s108, %s110
    %p114 = scmp.eq.s32.totalorder %s11, 0
    %p115 = por %p113, %p114
    %p116 = scmp.ne.s32.totalorder %s108, %s110
    %p117 = scmp.eq.s32.totalorder %s16, 1
    %p118 = por %p116, %p117
    %p119 = scmp.ne.s32.totalorder %s110, %s111
    %p120 = scmp.eq.s32.totalorder %s16, 0
    %p121 = por %p119, %p120
    %p122 = scmp.ne.s32.totalorder %s110, %s111
    %p123 = scmp.eq.s32.totalorder %s17, 1
    %p124 = por %p122, %p123
    %p126 = scmp.ne.s32.totalorder %s111, %s125
    %p127 = scmp.eq.s32.totalorder %s17, 0
    %p128 = por %p126, %p127
    %s129 = ssub.s32 %s11, %s18
    %p130 = scmp.eq.s32.totalorder %s129, 0
    %s132 = sadd.s32 %s131, 1
    %s133 = scalar_select %p130, %s131, %s132
    %p136 = pneg %p130
    %p137 = scmp.eq.s32.totalorder %s11, 1
    %p138 = por %p136, %p137
    %p139 = scmp.ne.s32.totalorder %s131, %s134
    %p140 = scmp.eq.s32.totalorder %s11, 0
    %p141 = por %p139, %p140
    %p142 = scmp.ne.s32.totalorder %s131, %s134
    %p143 = scmp.eq.s32.totalorder %s16, 1
    %p144 = por %p142, %p143
    %p145 = scmp.ne.s32.totalorder %s134, %s135
    %p146 = scmp.eq.s32.totalorder %s16, 0
    %p147 = por %p145, %p146
    %p148 = scmp.ne.s32.totalorder %s134, %s135
    %p149 = scmp.eq.s32.totalorder %s17, 1
    %p150 = por %p148, %p149
    %p152 = scmp.ne.s32.totalorder %s135, %s151
    %p153 = scmp.eq.s32.totalorder %s17, 0
    %p154 = por %p152, %p153
    %p155 = scmp.le.s32.totalorder 1, %s11
    %p156 = scmp.lt.s32.totalorder %s11, 3
    %p157 = pnand %p155, %p156
    %p158 = pneg %p157
    // Predicated region
    $region9: #{image_backbone_forward.13} parent=5 // pred_check
      _
    $region10: #{image_backbone_forward.13} parent=5 // pred_check_branch
      %160 = sbr.rel (%p157) target = $region12
    $region11: #{image_backbone_forward.13} parent=5 // pred_region
      %s161 = ssub.s32 %s11, 1
      // Predicated region
      $region13: #{image_backbone_forward.13} parent=11 // pred_check
        %p162 = pneg %p58
      $region14: #{image_backbone_forward.13} parent=11 // pred_check_branch
        %164 = sbr.rel (%p162) target = $region16
      $region15: #{image_backbone_forward.13} parent=11 // pred_region
        _
      $region16: #{image_backbone_forward.13} parent=11 // pred_fallthru
        _
      // Predicated region
      $region17: #{image_backbone_forward.13} parent=11 // pred_check
        %p165 = pneg %p79
      $region18: #{image_backbone_forward.13} parent=11 // pred_check_branch
        %167 = sbr.rel (%p165) target = $region20
      $region19: #{image_backbone_forward.13} parent=11 // pred_region
        _
      $region20: #{image_backbone_forward.13} parent=11 // pred_fallthru
        _
      // Predicated region
      $region21: #{image_backbone_forward.13} parent=11 // pred_check
        %p168 = pneg %p100
      $region22: #{image_backbone_forward.13} parent=11 // pred_check_branch
        %170 = sbr.rel (%p168) target = $region24
      $region23: #{image_backbone_forward.13} parent=11 // pred_region
        _
      $region24: #{image_backbone_forward.13} parent=11 // pred_fallthru
        _
      // Predicated region
      $region25: #{image_backbone_forward.13} parent=11 // pred_check
        %p171 = pneg %p121
      $region26: #{image_backbone_forward.13} parent=11 // pred_check_branch
        %173 = sbr.rel (%p171) target = $region28
      $region27: #{image_backbone_forward.13} parent=11 // pred_region
        _
      $region28: #{image_backbone_forward.13} parent=11 // pred_fallthru
        _
    $region12: #{image_backbone_forward.13} parent=5 // pred_fallthru
      _
    %p174 = scmp.lt.s32.totalorder %s11, 2
    // Predicated region
    $region29: #{image_backbone_forward.13} parent=5 // pred_check
      %p175 = pneg %p174
    $region30: #{image_backbone_forward.13} parent=5 // pred_check_branch
      %177 = sbr.rel (%p175) target = $region32
    $region31: #{image_backbone_forward.13} parent=5 // pred_region
      // Predicated region
      $region33: #{image_backbone_forward.13} parent=31 // pred_check
        %p178 = pneg %p31
      $region34: #{image_backbone_forward.13} parent=31 // pred_check_branch
        %180 = sbr.rel (%p178) target = $region36
      $region35: #{image_backbone_forward.13} parent=31 // pred_region
        %p181 = scmp.lt.s32.totalorder %s11, 1
        %s182 = scalar_select %p181, %s11, 1
        %s183 = smul.addr %s182, 8
        %s184 = smul.addr %s183, 8
        %s185 = scalar_lea.vmem %s0, %s184
      $region36: #{image_backbone_forward.13} parent=31 // pred_fallthru
        _
    $region32: #{image_backbone_forward.13} parent=5 // pred_fallthru
      _
    %p186 = scmp.le.s32.totalorder 1, %s11
    %p187 = scmp.lt.s32.totalorder %s11, 3
    %p188 = pnand %p186, %p187
    %p189 = pneg %p188
    // Predicated region
    $region37: #{image_backbone_forward.13} parent=5 // pred_check
      _
    $region38: #{image_backbone_forward.13} parent=5 // pred_check_branch
      %191 = sbr.rel (%p188) target = $region40
    $region39: #{image_backbone_forward.13} parent=5 // pred_region
      %s192 = ssub.s32 %s11, 1
      %p193 = scmp.lt.s32.totalorder %s16, 1
      %s194 = scalar_select %p193, %s16, 1
      %s195 = smul.addr %s194, 8
      %s196 = smul.addr %s195, 8
      %s197 = scalar_lea.vmem %s0, %s196
      %p198 = pneg %p37
      %p199 = pneg %p34
      %p200 = pneg %p58
      %p201 = pneg %p55
      %p202 = pneg %p79
      %p203 = pneg %p76
      %p204 = pneg %p100
      %p205 = pneg %p97
      %p206 = pneg %p121
      %p207 = pneg %p118
      %p208 = pneg %p147
      %p209 = pneg %p144
      %p210 = scmp.lt.s32.totalorder %s16, 1
      %s211 = scalar_select %p210, %s16, 1
      %s212 = smul.addr %s211, 8
      %s213 = smul.addr %s212, 8
      %s214 = scalar_lea.vmem %s5, %s213
      %p215 = scmp.lt.s32.totalorder %s16, 1
      %s216 = scalar_select %p215, %s16, 1
      %s217 = smul.addr %s216, 8
      %s218 = smul.addr %s217, 8
      %s219 = scalar_lea.vmem %s0, %s218
      %p220 = scmp.lt.s32.totalorder %s16, 1
      %s221 = scalar_select %p220, %s16, 1
      %s222 = smul.addr %s221, 8
      %s223 = smul.addr %s222, 8
      %s224 = scalar_lea.vmem %s5, %s223
      %v225 = vld [vmem:[%s219] sm:$0xff]
      %v226 = vld [vmem:[%s219 + $0x8] sm:$0xff]
      %v227 = vld [vmem:[%s219 + $0x10] sm:$0xff]
      %v228 = vld [vmem:[%s219 + $0x18] sm:$0xff]
      %v229 = vld [vmem:[%s219 + $0x20] sm:$0xff]
      %v230 = vld [vmem:[%s219 + $0x28] sm:$0xff]
      %v231 = vld [vmem:[%s219 + $0x30] sm:$0xff]
      %v232 = vld [vmem:[%s219 + $0x38] sm:$0xff]
      %vm233 = vcmask 261120
      %v234 = vsel %vm233, %v225, 0.0
      %v235 = vsel %vm233, %v226, 0.0
      %v236 = vadd.f32 %v234, %v235
      %v237 = vsel %vm233, %v227, 0.0
      %v238 = vadd.f32 %v236, %v237
      %v239 = vsel %vm233, %v228, 0.0
      %v240 = vadd.f32 %v238, %v239
      %v241 = vsel %vm233, %v229, 0.0
      %v242 = vadd.f32 %v240, %v241
      %v243 = vsel %vm233, %v230, 0.0
      %v244 = vadd.f32 %v242, %v243
      %v245 = vsel %vm233, %v231, 0.0
      %v246 = vadd.f32 %v244, %v245
      %v247 = vsel %vm233, %v232, 0.0
      %v248 = vadd.f32 %v246, %v247
      %v249 = vrot.slane %v248, 4
      %v250 = vadd.f32 %v248, %v249
      %v251 = vrot.slane %v250, 2
      %v252 = vadd.f32 %v250, %v251
      %v253 = vrot.slane %v252, 1
      %v254 = vadd.f32 %v252, %v253
      %v255 = vmul.f32 %v225, %v225
      %v256 = vmul.f32 %v226, %v226
      %v257 = vmul.f32 %v227, %v227
      %v258 = vmul.f32 %v228, %v228
      %v259 = vmul.f32 %v229, %v229
      %v260 = vmul.f32 %v230, %v230
      %v261 = vmul.f32 %v231, %v231
      %v262 = vmul.f32 %v232, %v232
      %v263 = vsel %vm233, %v255, 0.0
      %v264 = vsel %vm233, %v256, 0.0
      %v265 = vadd.f32 %v263, %v264
      %v266 = vsel %vm233, %v257, 0.0
      %v267 = vadd.f32 %v265, %v266
      %v268 = vsel %vm233, %v258, 0.0
      %v269 = vadd.f32 %v267, %v268
      %v270 = vsel %vm233, %v259, 0.0
      %v271 = vadd.f32 %v269, %v270
      %v272 = vsel %vm233, %v260, 0.0
      %v273 = vadd.f32 %v271, %v272
      %v274 = vsel %vm233, %v261, 0.0
      %v275 = vadd.f32 %v273, %v274
      %v276 = vsel %vm233, %v262, 0.0
      %v277 = vadd.f32 %v275, %v276
      %v278 = vrot.slane %v277, 4
      %v279 = vadd.f32 %v277, %v278
      %v280 = vrot.slane %v279, 2
      %v281 = vadd.f32 %v279, %v280
      %v282 = vrot.slane %v281, 1
      %v283 = vadd.f32 %v281, %v282
      %v284 = vld [vmem:[%s3] sm:$0xff]
      %v285 = vld [vmem:[%s3 + $0x8] sm:$0xff]
      %v286 = vld [vmem:[%s3 + $0x10] sm:$0xff]
      %v287 = vld [vmem:[%s3 + $0x18] sm:$0xff]
      %v289 = vsel %vm233, %v254, 0
      %291 = vmatprep.subr.mxu0 0.0
      %292 = vmatpush1.msra.mxu0 %v284
      %293 = vmatprep.subr.mxu0 0.0
      %294 = vmatpush1.msra.mxu0 %v285
      %295 = vmatprep.subr.mxu0 0.0
      %296 = vmatpush1.msra.mxu0 %v286
      %297 = vmatprep.subr.mxu0 0.0
      %298 = vmatpush1.msra.mxu0 %v287
      %299 = vmatprep.subr.mxu0 0.0
      %300 = vmatpush1.msra.mxu0 0.0
      %301 = vmatprep.subr.mxu0 0.0
      %302 = vmatpush1.msra.mxu0 0.0
      %303 = vmatprep.subr.mxu0 0.0
      %304 = vmatpush1.msra.mxu0 0.0
      %305 = vmatprep.subr.mxu0 0.0
      %306 = vmatpush1.msra.mxu0 0.0
      %307 = vmatprep.subr.mxu0 0.0
      %308 = vmatpush1.msra.mxu0 0.0
      %309 = vmatprep.subr.mxu0 0.0
      %310 = vmatpush1.msra.mxu0 0.0
      %311 = vmatprep.subr.mxu0 0.0
      %312 = vmatpush1.msra.mxu0 0.0
      %313 = vmatprep.subr.mxu0 0.0
      %314 = vmatpush1.msra.mxu0 0.0
      %315 = vmatprep.subr.mxu0 0.0
      %316 = vmatpush1.msra.mxu0 0.0
      %317 = vmatprep.subr.mxu0 0.0
      %318 = vmatpush1.msra.mxu0 0.0
      %319 = vmatprep.subr.mxu0 0.0
      %320 = vmatpush1.msra.mxu0 0.0
      %321 = vmatprep.subr.mxu0 0.0
      %322 = vmatpush1.msra.mxu0 0.0
      %323 = vmatprep.subr.mxu0 0.0
      %324 = vmatpush1.msra.mxu0 0.0
      %325 = vmatprep.subr.mxu0 0.0
      %326 = vmatpush1.msra.mxu0 0.0
      %327 = vmatprep.subr.mxu0 0.0
      %328 = vmatpush1.msra.mxu0 0.0
      %329 = vmatprep.subr.mxu0 0.0
      %330 = vmatpush1.msra.mxu0 0.0
      %331 = vmatprep.subr.mxu0 0.0
      %332 = vmatpush1.msra.mxu0 0.0
      %333 = vmatprep.subr.mxu0 0.0
      %334 = vmatpush1.msra.mxu0 0.0
      %335 = vmatprep.subr.mxu0 0.0
      %336 = vmatpush1.msra.mxu0 0.0
      %337 = vmatprep.subr.mxu0 0.0
      %338 = vmatpush1.msra.mxu0 0.0
      %339 = vmatprep.subr.mxu0 0.0
      %340 = vmatpush1.msra.mxu0 0.0
      %341 = vmatprep.subr.mxu0 0.0
      %342 = vmatpush1.msra.mxu0 0.0
      %343 = vmatprep.subr.mxu0 0.0
      %344 = vmatpush1.msra.mxu0 0.0
      %345 = vmatprep.subr.mxu0 0.0
      %346 = vmatpush1.msra.mxu0 0.0
      %347 = vmatprep.subr.mxu0 0.0
      %348 = vmatpush1.msra.mxu0 0.0
      %349 = vmatprep.subr.mxu0 0.0
      %350 = vmatpush1.msra.mxu0 0.0
      %351 = vmatprep.subr.mxu0 0.0
      %352 = vmatpush1.msra.mxu0 0.0
      %353 = vmatprep.subr.mxu0 0.0
      %354 = vmatpush1.msra.mxu0 0.0
      %355 = vmatprep.mubr.f32.mxu0 0.0
      %356 = vmatmul.mubr.f32.gmra.mrb[0].mxu0 %v289
      %v357 = vpop.f32.mrb[0].mxu0
      %v358 = vadd.f32 0.0, %v357
      %v359 = vpop.f32.mrb[0].mxu0
      %360 = vdwg.mxu0
      %v362 = vsel %vm233, %v283, 0
      %364 = vmatprep.subr.mxu0 0.0
      %365 = vmatpush1.msra.mxu0 %v284
      %366 = vmatprep.subr.mxu0 0.0
      %367 = vmatpush1.msra.mxu0 %v285
      %368 = vmatprep.subr.mxu0 0.0
      %369 = vmatpush1.msra.mxu0 %v286
      %370 = vmatprep.subr.mxu0 0.0
      %371 = vmatpush1.msra.mxu0 %v287
      %372 = vmatprep.subr.mxu0 0.0
      %373 = vmatpush1.msra.mxu0 0.0
      %374 = vmatprep.subr.mxu0 0.0
      %375 = vmatpush1.msra.mxu0 0.0
      %376 = vmatprep.subr.mxu0 0.0
      %377 = vmatpush1.msra.mxu0 0.0
      %378 = vmatprep.subr.mxu0 0.0
      %379 = vmatpush1.msra.mxu0 0.0
      %380 = vmatprep.subr.mxu0 0.0
      %381 = vmatpush1.msra.mxu0 0.0
      %382 = vmatprep.subr.mxu0 0.0
      %383 = vmatpush1.msra.mxu0 0.0
      %384 = vmatprep.subr.mxu0 0.0
      %385 = vmatpush1.msra.mxu0 0.0
      %386 = vmatprep.subr.mxu0 0.0
      %387 = vmatpush1.msra.mxu0 0.0
      %388 = vmatprep.subr.mxu0 0.0
      %389 = vmatpush1.msra.mxu0 0.0
      %390 = vmatprep.subr.mxu0 0.0
      %391 = vmatpush1.msra.mxu0 0.0
      %392 = vmatprep.subr.mxu0 0.0
      %393 = vmatpush1.msra.mxu0 0.0
      %394 = vmatprep.subr.mxu0 0.0
      %395 = vmatpush1.msra.mxu0 0.0
      %396 = vmatprep.subr.mxu0 0.0
      %397 = vmatpush1.msra.mxu0 0.0
      %398 = vmatprep.subr.mxu0 0.0
      %399 = vmatpush1.msra.mxu0 0.0
      %400 = vmatprep.subr.mxu0 0.0
      %401 = vmatpush1.msra.mxu0 0.0
      %402 = vmatprep.subr.mxu0 0.0
      %403 = vmatpush1.msra.mxu0 0.0
      %404 = vmatprep.subr.mxu0 0.0
      %405 = vmatpush1.msra.mxu0 0.0
      %406 = vmatprep.subr.mxu0 0.0
      %407 = vmatpush1.msra.mxu0 0.0
      %408 = vmatprep.subr.mxu0 0.0
      %409 = vmatpush1.msra.mxu0 0.0
      %410 = vmatprep.subr.mxu0 0.0
      %411 = vmatpush1.msra.mxu0 0.0
      %412 = vmatprep.subr.mxu0 0.0
      %413 = vmatpush1.msra.mxu0 0.0
      %414 = vmatprep.subr.mxu0 0.0
      %415 = vmatpush1.msra.mxu0 0.0
      %416 = vmatprep.subr.mxu0 0.0
      %417 = vmatpush1.msra.mxu0 0.0
      %418 = vmatprep.subr.mxu0 0.0
      %419 = vmatpush1.msra.mxu0 0.0
      %420 = vmatprep.subr.mxu0 0.0
      %421 = vmatpush1.msra.mxu0 0.0
      %422 = vmatprep.subr.mxu0 0.0
      %423 = vmatpush1.msra.mxu0 0.0
      %424 = vmatprep.subr.mxu0 0.0
      %425 = vmatpush1.msra.mxu0 0.0
      %426 = vmatprep.subr.mxu0 0.0
      %427 = vmatpush1.msra.mxu0 0.0
      %428 = vmatprep.mubr.f32.mxu0 0.0
      %429 = vmatmul.mubr.f32.gmra.mrb[0].mxu0 %v362
      %v430 = vpop.f32.mrb[0].mxu0
      %v431 = vadd.f32 0.0, %v430
      %v432 = vpop.f32.mrb[0].mxu0
      %433 = vdwg.mxu0
      %v434 = vrcp.pop 256.0
      %v435 = vmul.f32 %v358, %v434
      %v436 = vmul.f32 %v431, %v434
      %v437 = vmul.f32 %v435, %v435
      %v438 = vsub.f32 %v436, %v437
      %v439 = vadd.f32 %v438, 1e-05
      %v440 = vrsqrt.pop %v439
      %v441 = vld [vmem:[%s4] sm:$0xff]
      %vm442 = vcmask 64512
      %v444 = vsel %vm442, %v435, 0
      %446 = vmatprep.subr.mxu0 0.0
      %447 = vmatpush1.msra.mxu0 %v441
      %448 = vmatprep.subr.mxu0 0.0
      %449 = vmatpush1.msra.mxu0 0.0
      %450 = vmatprep.subr.mxu0 0.0
      %451 = vmatpush1.msra.mxu0 0.0
      %452 = vmatprep.subr.mxu0 0.0
      %453 = vmatpush1.msra.mxu0 0.0
      %454 = vmatprep.subr.mxu0 0.0
      %455 = vmatpush1.msra.mxu0 0.0
      %456 = vmatprep.subr.mxu0 0.0
      %457 = vmatpush1.msra.mxu0 0.0
      %458 = vmatprep.subr.mxu0 0.0
      %459 = vmatpush1.msra.mxu0 0.0
      %460 = vmatprep.subr.mxu0 0.0
      %461 = vmatpush1.msra.mxu0 0.0
      %462 = vmatprep.subr.mxu0 0.0
      %463 = vmatpush1.msra.mxu0 0.0
      %464 = vmatprep.subr.mxu0 0.0
      %465 = vmatpush1.msra.mxu0 0.0
      %466 = vmatprep.subr.mxu0 0.0
      %467 = vmatpush1.msra.mxu0 0.0
      %468 = vmatprep.subr.mxu0 0.0
      %469 = vmatpush1.msra.mxu0 0.0
      %470 = vmatprep.subr.mxu0 0.0
      %471 = vmatpush1.msra.mxu0 0.0
      %472 = vmatprep.subr.mxu0 0.0
      %473 = vmatpush1.msra.mxu0 0.0
      %474 = vmatprep.subr.mxu0 0.0
      %475 = vmatpush1.msra.mxu0 0.0
      %476 = vmatprep.subr.mxu0 0.0
      %477 = vmatpush1.msra.mxu0 0.0
      %478 = vmatprep.subr.mxu0 0.0
      %479 = vmatpush1.msra.mxu0 0.0
      %480 = vmatprep.subr.mxu0 0.0
      %481 = vmatpush1.msra.mxu0 0.0
      %482 = vmatprep.subr.mxu0 0.0
      %483 = vmatpush1.msra.mxu0 0.0
      %484 = vmatprep.subr.mxu0 0.0
      %485 = vmatpush1.msra.mxu0 0.0
      %486 = vmatprep.subr.mxu0 0.0
      %487 = vmatpush1.msra.mxu0 0.0
      %488 = vmatprep.subr.mxu0 0.0
      %489 = vmatpush1.msra.mxu0 0.0
      %490 = vmatprep.subr.mxu0 0.0
      %491 = vmatpush1.msra.mxu0 0.0
      %492 = vmatprep.subr.mxu0 0.0
      %493 = vmatpush1.msra.mxu0 0.0
      %494 = vmatprep.subr.mxu0 0.0
      %495 = vmatpush1.msra.mxu0 0.0
      %496 = vmatprep.subr.mxu0 0.0
      %497 = vmatpush1.msra.mxu0 0.0
      %498 = vmatprep.subr.mxu0 0.0
      %499 = vmatpush1.msra.mxu0 0.0
      %500 = vmatprep.subr.mxu0 0.0
      %501 = vmatpush1.msra.mxu0 0.0
      %502 = vmatprep.subr.mxu0 0.0
      %503 = vmatpush1.msra.mxu0 0.0
      %504 = vmatprep.subr.mxu0 0.0
      %505 = vmatpush1.msra.mxu0 0.0
      %506 = vmatprep.subr.mxu0 0.0
      %507 = vmatpush1.msra.mxu0 0.0
      %508 = vmatprep.subr.mxu0 0.0
      %509 = vmatpush1.msra.mxu0 0.0
      %510 = vmatprep.mubr.f32.mxu0 0.0
      %511 = vmatmul.mubr.f32.gmra.mrb[0].mxu0 %v444
      %v512 = vpop.f32.mrb[0].mxu0
      %v513 = vadd.f32 0.0, %v512
      %v514 = vpop.f32.mrb[0].mxu0
      %515 = vdwg.mxu0
      %v517 = vsel %vm442, %v440, 0
      %519 = vmatprep.subr.mxu0 0.0
      %520 = vmatpush1.msra.mxu0 %v441
      %521 = vmatprep.subr.mxu0 0.0
      %522 = vmatpush1.msra.mxu0 0.0
      %523 = vmatprep.subr.mxu0 0.0
      %524 = vmatpush1.msra.mxu0 0.0
      %525 = vmatprep.subr.mxu0 0.0
      %526 = vmatpush1.msra.mxu0 0.0
      %527 = vmatprep.subr.mxu0 0.0
      %528 = vmatpush1.msra.mxu0 0.0
      %529 = vmatprep.subr.mxu0 0.0
      %530 = vmatpush1.msra.mxu0 0.0
      %531 = vmatprep.subr.mxu0 0.0
      %532 = vmatpush1.msra.mxu0 0.0
      %533 = vmatprep.subr.mxu0 0.0
      %534 = vmatpush1.msra.mxu0 0.0
      %535 = vmatprep.subr.mxu0 0.0
      %536 = vmatpush1.msra.mxu0 0.0
      %537 = vmatprep.subr.mxu0 0.0
      %538 = vmatpush1.msra.mxu0 0.0
      %539 = vmatprep.subr.mxu0 0.0
      %540 = vmatpush1.msra.mxu0 0.0
      %541 = vmatprep.subr.mxu0 0.0
      %542 = vmatpush1.msra.mxu0 0.0
      %543 = vmatprep.subr.mxu0 0.0
      %544 = vmatpush1.msra.mxu0 0.0
      %545 = vmatprep.subr.mxu0 0.0
      %546 = vmatpush1.msra.mxu0 0.0
      %547 = vmatprep.subr.mxu0 0.0
      %548 = vmatpush1.msra.mxu0 0.0
      %549 = vmatprep.subr.mxu0 0.0
      %550 = vmatpush1.msra.mxu0 0.0
      %551 = vmatprep.subr.mxu0 0.0
      %552 = vmatpush1.msra.mxu0 0.0
      %553 = vmatprep.subr.mxu0 0.0
      %554 = vmatpush1.msra.mxu0 0.0
      %555 = vmatprep.subr.mxu0 0.0
      %556 = vmatpush1.msra.mxu0 0.0
      %557 = vmatprep.subr.mxu0 0.0
      %558 = vmatpush1.msra.mxu0 0.0
      %559 = vmatprep.subr.mxu0 0.0
      %560 = vmatpush1.msra.mxu0 0.0
      %561 = vmatprep.subr.mxu0 0.0
      %562 = vmatpush1.msra.mxu0 0.0
      %563 = vmatprep.subr.mxu0 0.0
      %564 = vmatpush1.msra.mxu0 0.0
      %565 = vmatprep.subr.mxu0 0.0
      %566 = vmatpush1.msra.mxu0 0.0
      %567 = vmatprep.subr.mxu0 0.0
      %568 = vmatpush1.msra.mxu0 0.0
      %569 = vmatprep.subr.mxu0 0.0
      %570 = vmatpush1.msra.mxu0 0.0
      %571 = vmatprep.subr.mxu0 0.0
      %572 = vmatpush1.msra.mxu0 0.0
      %573 = vmatprep.subr.mxu0 0.0
      %574 = vmatpush1.msra.mxu0 0.0
      %575 = vmatprep.subr.mxu0 0.0
      %576 = vmatpush1.msra.mxu0 0.0
      %577 = vmatprep.subr.mxu0 0.0
      %578 = vmatpush1.msra.mxu0 0.0
      %579 = vmatprep.subr.mxu0 0.0
      %580 = vmatpush1.msra.mxu0 0.0
      %581 = vmatprep.subr.mxu0 0.0
      %582 = vmatpush1.msra.mxu0 0.0
      %583 = vmatprep.mubr.f32.mxu0 0.0
      %584 = vmatmul.mubr.f32.gmra.mrb[0].mxu0 %v517
      %v585 = vpop.f32.mrb[0].mxu0
      %v586 = vadd.f32 0.0, %v585
      %v587 = vpop.f32.mrb[0].mxu0
      %588 = vdwg.mxu0
      %v589 = vld [vmem:[%s1] sm:$0x1]
      %v590 = vmul.f32 %v586, %v589
      %v591 = vld [vmem:[%s2] sm:$0x1]
      %v592 = vmul.f32 %v513, %v590
      %v593 = vsub.f32 %v591, %v592
      %v594 = vlaneseq
      %v595 = vshrl.u32 %v594, 7
      %v596 = vsub.s32 0, %v595
      %v597 = vrot.slane %v590, %v596
      %v598 = vmul.f32 %v225, %v597
      %v599 = vmul.f32 %v226, %v597
      %v600 = vmul.f32 %v227, %v597
      %v601 = vmul.f32 %v228, %v597
      %v602 = vmul.f32 %v229, %v597
      %v603 = vmul.f32 %v230, %v597
      %v604 = vmul.f32 %v231, %v597
      %v605 = vmul.f32 %v232, %v597
      %v607 = vlaneseq
      %v608 = vshrl.u32 %v607, 7
      %v609 = vsub.s32 0, %v608
      %v610 = vrot.slane %v593, %v609
      %v612 = vadd.f32 %v598, %v610
      %v613 = vadd.f32 %v599, %v610
      %v614 = vadd.f32 %v600, %v610
      %v615 = vadd.f32 %v601, %v610
      %v616 = vadd.f32 %v602, %v610
      %v617 = vadd.f32 %v603, %v610
      %v618 = vadd.f32 %v604, %v610
      %v619 = vadd.f32 %v605, %v610
      %vm620 = vcmp.ge.f32.partialorder %v612, 0.0
      %vm621 = vcmp.ge.f32.partialorder %v613, 0.0
      %vm622 = vcmp.ge.f32.partialorder %v614, 0.0
      %vm623 = vcmp.ge.f32.partialorder %v615, 0.0
      %vm624 = vcmp.ge.f32.partialorder %v616, 0.0
      %vm625 = vcmp.ge.f32.partialorder %v617, 0.0
      %vm626 = vcmp.ge.f32.partialorder %v618, 0.0
      %vm627 = vcmp.ge.f32.partialorder %v619, 0.0
      %v628 = vmul.f32 %v612, 0.1
      %v629 = vmul.f32 %v613, 0.1
      %v630 = vmul.f32 %v614, 0.1
      %v631 = vmul.f32 %v615, 0.1
      %v632 = vmul.f32 %v616, 0.1
      %v633 = vmul.f32 %v617, 0.1
      %v634 = vmul.f32 %v618, 0.1
      %v635 = vmul.f32 %v619, 0.1
      %v636 = vsel %vm620, %v612, %v628
      %v637 = vsel %vm621, %v613, %v629
      %v638 = vsel %vm622, %v614, %v630
      %v639 = vsel %vm623, %v615, %v631
      %v640 = vsel %vm624, %v616, %v632
      %v641 = vsel %vm625, %v617, %v633
      %v642 = vsel %vm626, %v618, %v634
      %v643 = vsel %vm627, %v619, %v635
      %644 = vst.msk [vmem:[%s224] sm:$0xff] %vm233, %v636
      %645 = vst.msk [vmem:[%s224 + $0x8] sm:$0xff] %vm233, %v637
      %646 = vst.msk [vmem:[%s224 + $0x10] sm:$0xff] %vm233, %v638
      %647 = vst.msk [vmem:[%s224 + $0x18] sm:$0xff] %vm233, %v639
      %648 = vst.msk [vmem:[%s224 + $0x20] sm:$0xff] %vm233, %v640
      %649 = vst.msk [vmem:[%s224 + $0x28] sm:$0xff] %vm233, %v641
      %650 = vst.msk [vmem:[%s224 + $0x30] sm:$0xff] %vm233, %v642
      %651 = vst.msk [vmem:[%s224 + $0x38] sm:$0xff] %vm233, %v643
      %p652 = scmp.lt.s32.totalorder %s16, 1
      %s653 = scalar_select %p652, %s16, 1
      %s654 = smul.addr %s653, 8
      %s655 = smul.addr %s654, 8
      %s656 = scalar_lea.vmem %s5, %s655
      // Predicated region
      $region41: #{image_backbone_forward.13} parent=39 // pred_check
        %p657 = pneg %p144
      $region42: #{image_backbone_forward.13} parent=39 // pred_check_branch
        %659 = sbr.rel (%p657) target = $region44
      $region43: #{image_backbone_forward.13} parent=39 // pred_region
        _
      $region44: #{image_backbone_forward.13} parent=39 // pred_fallthru
        _
    $region40: #{image_backbone_forward.13} parent=5 // pred_fallthru
      _
    %p660 = scmp.le.s32.totalorder 2, %s11
    // Predicated region
    $region45: #{image_backbone_forward.13} parent=5 // pred_check
      %p661 = pneg %p660
    $region46: #{image_backbone_forward.13} parent=5 // pred_check_branch
      %663 = sbr.rel (%p661) target = $region48
    $region47: #{image_backbone_forward.13} parent=5 // pred_region
      %s664 = ssub.s32 %s11, 2
      // Predicated region
      $region49: #{image_backbone_forward.13} parent=47 // pred_check
        %p665 = pneg %p150
      $region50: #{image_backbone_forward.13} parent=47 // pred_check_branch
        %667 = sbr.rel (%p665) target = $region52
      $region51: #{image_backbone_forward.13} parent=47 // pred_region
        %p668 = scmp.lt.s32.totalorder %s17, 1
        %s669 = scalar_select %p668, %s17, 1
        %s670 = smul.addr %s669, 8
        %s671 = smul.addr %s670, 8
        %s672 = scalar_lea.vmem %s5, %s671
      $region52: #{image_backbone_forward.13} parent=47 // pred_fallthru
        _
    $region48: #{image_backbone_forward.13} parent=5 // pred_fallthru
      _
  $region6: #{image_backbone_forward.13} parent=0 // loop_footer
    %s15 = sadd.s32 1, %s11
  $region7: #{image_backbone_forward.13} parent=0 // loop_footer_branch
    %10 = sbr.rel target = $region3
  $region8: #{image_backbone_forward.13} parent=0 // loop_exit
    _

// kernel: image_backbone_forward.14
$region0: #{image_backbone_forward.14}
  #allocation0 [shape = 'u32[]', space=smem, size = 0x4, offset = 0x4, fixed_abs, tag = 'smem constant byte address 0x4 - core index']
  #allocation1 [shape = 'u32[144,128]{1,0:T(1,128)}', space=vmem, size = 0x12000, scoped, tag = 'internal scratch']
  %s0 = inlined_call_operand.vmem [shape: f32[2,10,10,32], index: 0, kind: input, shape index: {}, may-alias: {0,1,2}]
  %s1 = inlined_call_operand.vmem [shape: f32[2,10,10,32], index: 1, kind: input, shape index: {}, may-alias: {0,1,2}]
  %s2 = inlined_call_operand.vmem [shape: f32[2,10,10,32], index: 2, kind: input, shape index: {}, may-alias: {0,1,2}]
  %s3 = inlined_call_operand.vmem [shape: f32[3,3,32,32], index: 3, kind: input, shape index: {}]
  %s4 = inlined_call_operand.vmem [shape: f32[1,32], index: 4, kind: input, shape index: {}]
  %s5 = inlined_call_operand.vmem [shape: f32[2,8,8,32], index: 5, kind: output, shape index: {}]
  %s6 = sld [smem:[#allocation0]]
  $region53: #{image_backbone_forward.14} parent=0
    _
  %s8 = ssub.s32 1, %s6
  %s9 = scalar_select 0, %s8, %s6
  loop: start=0, step=1, limit=18
  $region2: #{image_backbone_forward.14} parent=0 // loop_pre_header
    _
  $region3: #{image_backbone_forward.14} parent=0 // loop_header
    %s11 = sphi 0, %s15
    %p12 = scmp.ge.s32.totalorder %s11, 18
    %s18 = sphi 0, %s30
    %s19 = sphi 0, %s26
    %s20 = sphi 0, %s18
    %s21 = sphi 0, %s19
    %s22 = sphi 0, %s20
    %s23 = sphi 0, %s21
    %s35 = sphi 0, %s37
    %s38 = sphi 0, %s35
    %s39 = sphi 0, %s38
    %s55 = sphi 0, %s39
    %s65 = sphi 0, %s67
    %s68 = sphi 0, %s65
    %s69 = sphi 0, %s68
    %s85 = sphi 0, %s69
    %s95 = sphi 0, %s97
    %s98 = sphi 0, %s95
    %s99 = sphi 0, %s98
    %s115 = sphi 0, %s99
    %s119 = sphi 0, %s119
    %s121 = sphi 0, %s119
    %s122 = sphi 0, %s121
    %s136 = sphi 0, %s122
    %s140 = sphi 0, %s140
    %s142 = sphi 0, %s140
    %s143 = sphi 0, %s142
    %s157 = sphi 0, %s143
    %s165 = sphi 0, %s167
    %s168 = sphi 0, %s165
    %s169 = sphi 0, %s168
    %s185 = sphi 0, %s169
  $region4: #{image_backbone_forward.14} parent=0 // loop_header_branch
    %14 = sbr.rel (%p12) target = $region8
  $region5: #{image_backbone_forward.14} parent=0 // loop_body
    %s16 = ssub.s32 %s11, 1
    %s17 = ssub.s32 %s11, 2
    %s24 = sadd.s32 1, %s19
    %p25 = scmp.ge.s32.totalorder %s24, 8
    %s26 = scalar_select %p25, 0, %s24
    %s27 = sadd.s32 1, %s18
    %s28 = scalar_select %p25, %s27, %s18
    %p29 = scmp.ge.s32.totalorder %s28, 2
    %s30 = scalar_select %p29, 0, %s28
    %s31 = ssub.s32 %s18, %s30
    %s32 = ssub.s32 %s19, %s26
    %s33 = sor.u32 %s31, %s32
    %p34 = scmp.eq.s32.totalorder %s33, 0
    %s36 = sadd.s32 %s35, 1
    %s37 = scalar_select %p34, %s35, %s36
    %p40 = pneg %p34
    %p41 = scmp.eq.s32.totalorder %s11, 15
    %p42 = por %p40, %p41
    %p43 = scmp.ne.s32.totalorder %s35, %s38
    %p44 = scmp.eq.s32.totalorder %s11, 0
    %p45 = por %p43, %p44
    %p46 = scmp.ne.s32.totalorder %s35, %s38
    %p47 = scmp.eq.s32.totalorder %s16, 15
    %p48 = por %p46, %p47
    %p49 = scmp.ne.s32.totalorder %s38, %s39
    %p50 = scmp.eq.s32.totalorder %s16, 0
    %p51 = por %p49, %p50
    %p52 = scmp.ne.s32.totalorder %s38, %s39
    %p53 = scmp.eq.s32.totalorder %s17, 15
    %p54 = por %p52, %p53
    %p56 = scmp.ne.s32.totalorder %s39, %s55
    %p57 = scmp.eq.s32.totalorder %s17, 0
    %p58 = por %p56, %p57
    %s59 = sadd.s32 %s19, 1
    %s60 = sadd.s32 %s26, 1
    %s61 = ssub.s32 %s18, %s30
    %s62 = ssub.s32 %s59, %s60
    %s63 = sor.u32 %s61, %s62
    %p64 = scmp.eq.s32.totalorder %s63, 0
    %s66 = sadd.s32 %s65, 1
    %s67 = scalar_select %p64, %s65, %s66
    %p70 = pneg %p64
    %p71 = scmp.eq.s32.totalorder %s11, 15
    %p72 = por %p70, %p71
    %p73 = scmp.ne.s32.totalorder %s65, %s68
    %p74 = scmp.eq.s32.totalorder %s11, 0
    %p75 = por %p73, %p74
    %p76 = scmp.ne.s32.totalorder %s65, %s68
    %p77 = scmp.eq.s32.totalorder %s16, 15
    %p78 = por %p76, %p77
    %p79 = scmp.ne.s32.totalorder %s68, %s69
    %p80 = scmp.eq.s32.totalorder %s16, 0
    %p81 = por %p79, %p80
    %p82 = scmp.ne.s32.totalorder %s68, %s69
    %p83 = scmp.eq.s32.totalorder %s17, 15
    %p84 = por %p82, %p83
    %p86 = scmp.ne.s32.totalorder %s69, %s85
    %p87 = scmp.eq.s32.totalorder %s17, 0
    %p88 = por %p86, %p87
    %s89 = sadd.s32 %s19, 2
    %s90 = sadd.s32 %s26, 2
    %s91 = ssub.s32 %s18, %s30
    %s92 = ssub.s32 %s89, %s90
    %s93 = sor.u32 %s91, %s92
    %p94 = scmp.eq.s32.totalorder %s93, 0
    %s96 = sadd.s32 %s95, 1
    %s97 = scalar_select %p94, %s95, %s96
    %p100 = pneg %p94
    %p101 = scmp.eq.s32.totalorder %s11, 15
    %p102 = por %p100, %p101
    %p103 = scmp.ne.s32.totalorder %s95, %s98
    %p104 = scmp.eq.s32.totalorder %s11, 0
    %p105 = por %p103, %p104
    %p106 = scmp.ne.s32.totalorder %s95, %s98
    %p107 = scmp.eq.s32.totalorder %s16, 15
    %p108 = por %p106, %p107
    %p109 = scmp.ne.s32.totalorder %s98, %s99
    %p110 = scmp.eq.s32.totalorder %s16, 0
    %p111 = por %p109, %p110
    %p112 = scmp.ne.s32.totalorder %s98, %s99
    %p113 = scmp.eq.s32.totalorder %s17, 15
    %p114 = por %p112, %p113
    %p116 = scmp.ne.s32.totalorder %s99, %s115
    %p117 = scmp.eq.s32.totalorder %s17, 0
    %p118 = por %p116, %p117
    %s120 = sadd.s32 %s119, 1
    %p123 = scmp.eq.s32.totalorder %s11, 15
    %p124 = scmp.ne.s32.totalorder %s119, %s121
    %p125 = scmp.eq.s32.totalorder %s11, 0
    %p126 = por %p124, %p125
    %p127 = scmp.ne.s32.totalorder %s119, %s121
    %p128 = scmp.eq.s32.totalorder %s16, 15
    %p129 = por %p127, %p128
    %p130 = scmp.ne.s32.totalorder %s121, %s122
    %p131 = scmp.eq.s32.totalorder %s16, 0
    %p132 = por %p130, %p131
    %p133 = scmp.ne.s32.totalorder %s121, %s122
    %p134 = scmp.eq.s32.totalorder %s17, 15
    %p135 = por %p133, %p134
    %p137 = scmp.ne.s32.totalorder %s122, %s136
    %p138 = scmp.eq.s32.totalorder %s17, 0
    %p139 = por %p137, %p138
    %s141 = sadd.s32 %s140, 1
    %p144 = scmp.eq.s32.totalorder %s11, 15
    %p145 = scmp.ne.s32.totalorder %s140, %s142
    %p146 = scmp.eq.s32.totalorder %s11, 0
    %p147 = por %p145, %p146
    %p148 = scmp.ne.s32.totalorder %s140, %s142
    %p149 = scmp.eq.s32.totalorder %s16, 15
    %p150 = por %p148, %p149
    %p151 = scmp.ne.s32.totalorder %s142, %s143
    %p152 = scmp.eq.s32.totalorder %s16, 0
    %p153 = por %p151, %p152
    %p154 = scmp.ne.s32.totalorder %s142, %s143
    %p155 = scmp.eq.s32.totalorder %s17, 15
    %p156 = por %p154, %p155
    %p158 = scmp.ne.s32.totalorder %s143, %s157
    %p159 = scmp.eq.s32.totalorder %s17, 0
    %p160 = por %p158, %p159
    %s161 = ssub.s32 %s18, %s30
    %s162 = ssub.s32 %s19, %s26
    %s163 = sor.u32 %s161, %s162
    %p164 = scmp.eq.s32.totalorder %s163, 0
    %s166 = sadd.s32 %s165, 1
    %s167 = scalar_select %p164, %s165, %s166
    %p170 = pneg %p164
    %p171 = scmp.eq.s32.totalorder %s11, 15
    %p172 = por %p170, %p171
    %p173 = scmp.ne.s32.totalorder %s165, %s168
    %p174 = scmp.eq.s32.totalorder %s11, 0
    %p175 = por %p173, %p174
    %p176 = scmp.ne.s32.totalorder %s165, %s168
    %p177 = scmp.eq.s32.totalorder %s16, 15
    %p178 = por %p176, %p177
    %p179 = scmp.ne.s32.totalorder %s168, %s169
    %p180 = scmp.eq.s32.totalorder %s16, 0
    %p181 = por %p179, %p180
    %p182 = scmp.ne.s32.totalorder %s168, %s169
    %p183 = scmp.eq.s32.totalorder %s17, 15
    %p184 = por %p182, %p183
    %p186 = scmp.ne.s32.totalorder %s169, %s185
    %p187 = scmp.eq.s32.totalorder %s17, 0
    %p188 = por %p186, %p187
    %p189 = scmp.le.s32.totalorder 1, %s11
    %p190 = scmp.lt.s32.totalorder %s11, 17
    %p191 = pnand %p189, %p190
    %p192 = pneg %p191
    // Predicated region
    $region9: #{image_backbone_forward.14} parent=5 // pred_check
      _
    $region10: #{image_backbone_forward.14} parent=5 // pred_check_branch
      %194 = sbr.rel (%p191) target = $region12
    $region11: #{image_backbone_forward.14} parent=5 // pred_region
      %s195 = ssub.s32 %s11, 1
      // Predicated region
      $region13: #{image_backbone_forward.14} parent=11 // pred_check
        %p196 = pneg %p132
      $region14: #{image_backbone_forward.14} parent=11 // pred_check_branch
        %198 = sbr.rel (%p196) target = $region16
      $region15: #{image_backbone_forward.14} parent=11 // pred_region
        _
      $region16: #{image_backbone_forward.14} parent=11 // pred_fallthru
        _
      // Predicated region
      $region17: #{image_backbone_forward.14} parent=11 // pred_check
        %p199 = pneg %p153
      $region18: #{image_backbone_forward.14} parent=11 // pred_check_branch
        %201 = sbr.rel (%p199) target = $region20
      $region19: #{image_backbone_forward.14} parent=11 // pred_region
        _
      $region20: #{image_backbone_forward.14} parent=11 // pred_fallthru
        _
    $region12: #{image_backbone_forward.14} parent=5 // pred_fallthru
      _
    %p202 = scmp.lt.s32.totalorder %s11, 16
    // Predicated region
    $region21: #{image_backbone_forward.14} parent=5 // pred_check
      %p203 = pneg %p202
    $region22: #{image_backbone_forward.14} parent=5 // pred_check_branch
      %205 = sbr.rel (%p203) target = $region24
    $region23: #{image_backbone_forward.14} parent=5 // pred_region
      // Predicated region
      $region25: #{image_backbone_forward.14} parent=23 // pred_check
        %p206 = pneg %p45
      $region26: #{image_backbone_forward.14} parent=23 // pred_check_branch
        %208 = sbr.rel (%p206) target = $region28
      $region27: #{image_backbone_forward.14} parent=23 // pred_region
        %p209 = scmp.lt.s32.totalorder %s18, 1
        %s210 = scalar_select %p209, %s18, 1
        %p211 = scmp.lt.s32.totalorder %s19, 9
        %s212 = scalar_select %p211, %s19, 9
        %s213 = smul.addr %s212, 2
        %s214 = smul.addr %s210, 20
        %s215 = sadd.s32 %s213, %s214
        %s216 = smul.addr %s215, 8
        %s217 = scalar_lea.vmem %s0, %s216
      $region28: #{image_backbone_forward.14} parent=23 // pred_fallthru
        _
      // Predicated region
      $region29: #{image_backbone_forward.14} parent=23 // pred_check
        %p218 = pneg %p75
      $region30: #{image_backbone_forward.14} parent=23 // pred_check_branch
        %220 = sbr.rel (%p218) target = $region32
      $region31: #{image_backbone_forward.14} parent=23 // pred_region
        %s221 = sadd.s32 %s19, 1
        %p222 = scmp.lt.s32.totalorder %s18, 1
        %s223 = scalar_select %p222, %s18, 1
        %p224 = scmp.lt.s32.totalorder %s221, 9
        %s225 = scalar_select %p224, %s221, 9
        %s226 = smul.addr %s225, 2
        %s227 = smul.addr %s223, 20
        %s228 = sadd.s32 %s226, %s227
        %s229 = smul.addr %s228, 8
        %s230 = scalar_lea.vmem %s1, %s229
        %s231 = sadd.s32 %s19, 1
      $region32: #{image_backbone_forward.14} parent=23 // pred_fallthru
        _
      // Predicated region
      $region33: #{image_backbone_forward.14} parent=23 // pred_check
        %p232 = pneg %p105
      $region34: #{image_backbone_forward.14} parent=23 // pred_check_branch
        %234 = sbr.rel (%p232) target = $region36
      $region35: #{image_backbone_forward.14} parent=23 // pred_region
        %s235 = sadd.s32 %s19, 2
        %p236 = scmp.lt.s32.totalorder %s18, 1
        %s237 = scalar_select %p236, %s18, 1
        %p238 = scmp.lt.s32.totalorder %s235, 9
        %s239 = scalar_select %p238, %s235, 9
        %s240 = smul.addr %s239, 2
        %s241 = smul.addr %s237, 20
        %s242 = sadd.s32 %s240, %s241
        %s243 = smul.addr %s242, 8
        %s244 = scalar_lea.vmem %s2, %s243
        %s245 = sadd.s32 %s19, 2
      $region36: #{image_backbone_forward.14} parent=23 // pred_fallthru
        _
    $region24: #{image_backbone_forward.14} parent=5 // pred_fallthru
      _
    %p246 = scmp.le.s32.totalorder 1, %s11
    %p247 = scmp.lt.s32.totalorder %s11, 17
    %p248 = pnand %p246, %p247
    %p249 = pneg %p248
    // Predicated region
    $region37: #{image_backbone_forward.14} parent=5 // pred_check
      _
    $region38: #{image_backbone_forward.14} parent=5 // pred_check_branch
      %251 = sbr.rel (%p248) target = $region40
    $region39: #{image_backbone_forward.14} parent=5 // pred_region
      %s252 = ssub.s32 %s11, 1
      %p253 = scmp.lt.s32.totalorder %s20, 1
      %s254 = scalar_select %p253, %s20, 1
      %p255 = scmp.lt.s32.totalorder %s21, 9
      %s256 = scalar_select %p255, %s21, 9
      %s257 = smul.addr %s256, 2
      %s258 = smul.addr %s254, 20
      %s259 = sadd.s32 %s257, %s258
      %s260 = smul.addr %s259, 8
      %s261 = scalar_lea.vmem %s0, %s260
      %p262 = pneg %p51
      %p263 = pneg %p48
      %s264 = sadd.s32 %s21, 1
      %p265 = scmp.lt.s32.totalorder %s20, 1
      %s266 = scalar_select %p265, %s20, 1
      %p267 = scmp.lt.s32.totalorder %s264, 9
      %s268 = scalar_select %p267, %s264, 9
      %s269 = smul.addr %s268, 2
      %s270 = smul.addr %s266, 20
      %s271 = sadd.s32 %s269, %s270
      %s272 = smul.addr %s271, 8
      %s273 = scalar_lea.vmem %s1, %s272
      %p274 = pneg %p81
      %p275 = pneg %p78
      %s276 = sadd.s32 %s21, 2
      %p277 = scmp.lt.s32.totalorder %s20, 1
      %s278 = scalar_select %p277, %s20, 1
      %p279 = scmp.lt.s32.totalorder %s276, 9
      %s280 = scalar_select %p279, %s276, 9
      %s281 = smul.addr %s280, 2
      %s282 = smul.addr %s278, 20
      %s283 = sadd.s32 %s281, %s282
      %s284 = smul.addr %s283, 8
      %s285 = scalar_lea.vmem %s2, %s284
      %p286 = pneg %p111
      %p287 = pneg %p108
      %p288 = pneg %p132
      %p289 = pneg %p129
      %p290 = pneg %p153
      %p291 = pneg %p150
      %p292 = pneg %p181
      %p293 = pneg %p178
      %p294 = scmp.lt.s32.totalorder %s20, 1
      %s295 = scalar_select %p294, %s20, 1
      %p296 = scmp.lt.s32.totalorder %s21, 7
      %s297 = scalar_select %p296, %s21, 7
      %s298 = smul.addr %s295, 8
      %s299 = sadd.s32 %s297, %s298
      %s300 = smul.addr %s299, 8
      %s301 = scalar_lea.vmem %s5, %s300
      %p302 = scmp.lt.s32.totalorder %s20, 1
      %s303 = scalar_select %p302, %s20, 1
      %p304 = scmp.lt.s32.totalorder %s21, 9
      %s305 = scalar_select %p304, %s21, 9
      %s306 = smul.addr %s305, 2
      %s307 = smul.addr %s303, 20
      %s308 = sadd.s32 %s306, %s307
      %s309 = smul.addr %s308, 8
      %s310 = scalar_lea.vmem %s0, %s309
      %s311 = sadd.s32 %s21, 1
      %p312 = scmp.lt.s32.totalorder %s20, 1
      %s313 = scalar_select %p312, %s20, 1
      %p314 = scmp.lt.s32.totalorder %s311, 9
      %s315 = scalar_select %p314, %s311, 9
      %s316 = smul.addr %s315, 2
      %s317 = smul.addr %s313, 20
      %s318 = sadd.s32 %s316, %s317
      %s319 = smul.addr %s318, 8
      %s320 = scalar_lea.vmem %s1, %s319
      %s321 = sadd.s32 %s21, 1
      %s322 = sadd.s32 %s21, 2
      %p323 = scmp.lt.s32.totalorder %s20, 1
      %s324 = scalar_select %p323, %s20, 1
      %p325 = scmp.lt.s32.totalorder %s322, 9
      %s326 = scalar_select %p325, %s322, 9
      %s327 = smul.addr %s326, 2
      %s328 = smul.addr %s324, 20
      %s329 = sadd.s32 %s327, %s328
      %s330 = smul.addr %s329, 8
      %s331 = scalar_lea.vmem %s2, %s330
      %s332 = sadd.s32 %s21, 2
      %p333 = scmp.lt.s32.totalorder %s20, 1
      %s334 = scalar_select %p333, %s20, 1
      %p335 = scmp.lt.s32.totalorder %s21, 7
      %s336 = scalar_select %p335, %s21, 7
      %s337 = smul.addr %s334, 8
      %s338 = sadd.s32 %s336, %s337
      %s339 = smul.addr %s338, 8
      %s340 = scalar_lea.vmem %s5, %s339
      %v341 = vld [vmem:[%s3] sm:$0xff]
      %v342 = vld [vmem:[%s3 + $0x8] sm:$0xff]
      %v343 = vld [vmem:[%s3 + $0x10] sm:$0xff]
      %v344 = vld [vmem:[%s3 + $0x18] sm:$0xff]
      %v345 = vld [vmem:[%s3 + $0x20] sm:$0xff]
      %v346 = vld [vmem:[%s3 + $0x28] sm:$0xff]
      %v347 = vld [vmem:[%s3 + $0x30] sm:$0xff]
      %v348 = vld [vmem:[%s3 + $0x38] sm:$0xff]
      %v349 = vld [vmem:[%s3 + $0x40] sm:$0xff]
      %v350 = vld [vmem:[%s3 + $0x48] sm:$0xff]
      %v351 = vld [vmem:[%s3 + $0x50] sm:$0xff]
      %v352 = vld [vmem:[%s3 + $0x58] sm:$0xff]
      %v353 = vld [vmem:[%s3 + $0x60] sm:$0xff]
      %v354 = vld [vmem:[%s3 + $0x68] sm:$0xff]
      %v355 = vld [vmem:[%s3 + $0x70] sm:$0xff]
      %v356 = vld [vmem:[%s3 + $0x78] sm:$0xff]
      %v357 = vld [vmem:[%s3 + $0x80] sm:$0xff]
      %v358 = vld [vmem:[%s3 + $0x88] sm:$0xff]
      %v359 = vld [vmem:[%s3 + $0x90] sm:$0xff]
      %v360 = vld [vmem:[%s3 + $0x98] sm:$0xff]
      %v361 = vld [vmem:[%s3 + $0xa0] sm:$0xff]
      %v362 = vld [vmem:[%s3 + $0xa8] sm:$0xff]
      %v363 = vld [vmem:[%s3 + $0xb0] sm:$0xff]
      %v364 = vld [vmem:[%s3 + $0xb8] sm:$0xff]
      %v365 = vld [vmem:[%s3 + $0xc0] sm:$0xff]
      %v366 = vld [vmem:[%s3 + $0xc8] sm:$0xff]
      %v367 = vld [vmem:[%s3 + $0xd0] sm:$0xff]
      %v368 = vld [vmem:[%s3 + $0xd8] sm:$0xff]
      %v369 = vld [vmem:[%s3 + $0xe0] sm:$0xff]
      %v370 = vld [vmem:[%s3 + $0xe8] sm:$0xff]
      %v371 = vld [vmem:[%s3 + $0xf0] sm:$0xff]
      %v372 = vld [vmem:[%s3 + $0xf8] sm:$0xff]
      %v373 = vld [vmem:[%s3 + $0x100] sm:$0xff]
      %v374 = vld [vmem:[%s3 + $0x108] sm:$0xff]
      %v375 = vld [vmem:[%s3 + $0x110] sm:$0xff]
      %v376 = vld [vmem:[%s3 + $0x118] sm:$0xff]
      %v377 = vld [vmem:[%s4] sm:$0x1]
      %v379 = vlaneseq
      %v380 = vshrl.u32 %v379, 7
      %v381 = vsub.s32 0, %v380
      %v382 = vrot.slane %v377, %v381
      %v384 = vadd.f32 %v382, 0.0
      %v385 = vld [vmem:[%s310] sm:$0xff]
      %v386 = vld [vmem:[%s310 + $0x8] sm:$0x3]
      %vm387 = vcmask 261120
      %v389 = vsel %vm387, %v385, 0
      %391 = vmatprep.subr.mxu0 0.0
      %392 = vmatpush1.msra.mxu0 %v341
      %393 = vmatprep.subr.mxu0 0.0
      %394 = vmatpush1.msra.mxu0 %v342
      %395 = vmatprep.subr.mxu0 0.0
      %396 = vmatpush1.msra.mxu0 %v343
      %397 = vmatprep.subr.mxu0 0.0
      %398 = vmatpush1.msra.mxu0 %v344
      %399 = vmatprep.subr.mxu0 0.0
      %400 = vmatpush1.msra.mxu0 0.0
      %401 = vmatprep.subr.mxu0 0.0
      %402 = vmatpush1.msra.mxu0 0.0
      %403 = vmatprep.subr.mxu0 0.0
      %404 = vmatpush1.msra.mxu0 0.0
      %405 = vmatprep.subr.mxu0 0.0
      %406 = vmatpush1.msra.mxu0 0.0
      %407 = vmatprep.subr.mxu0 0.0
      %408 = vmatpush1.msra.mxu0 0.0
      %409 = vmatprep.subr.mxu0 0.0
      %410 = vmatpush1.msra.mxu0 0.0
      %411 = vmatprep.subr.mxu0 0.0
      %412 = vmatpush1.msra.mxu0 0.0
      %413 = vmatprep.subr.mxu0 0.0
      %414 = vmatpush1.msra.mxu0 0.0
      %415 = vmatprep.subr.mxu0 0.0
      %416 = vmatpush1.msra.mxu0 0.0
      %417 = vmatprep.subr.mxu0 0.0
      %418 = vmatpush1.msra.mxu0 0.0
      %419 = vmatprep.subr.mxu0 0.0
      %420 = vmatpush1.msra.mxu0 0.0
      %421 = vmatprep.subr.mxu0 0.0
      %422 = vmatpush1.msra.mxu0 0.0
      %423 = vmatprep.subr.mxu0 0.0
      %424 = vmatpush1.msra.mxu0 0.0
      %425 = vmatprep.subr.mxu0 0.0
      %426 = vmatpush1.msra.mxu0 0.0
      %427 = vmatprep.subr.mxu0 0.0
      %428 = vmatpush1.msra.mxu0 0.0
      %429 = vmatprep.subr.mxu0 0.0
      %430 = vmatpush1.msra.mxu0 0.0
      %431 = vmatprep.subr.mxu0 0.0
      %432 = vmatpush1.msra.mxu0 0.0
      %433 = vmatprep.subr.mxu0 0.0
      %434 = vmatpush1.msra.mxu0 0.0
      %435 = vmatprep.subr.mxu0 0.0
      %436 = vmatpush1.msra.mxu0 0.0
      %437 = vmatprep.subr.mxu0 0.0
      %438 = vmatpush1.msra.mxu0 0.0
      %439 = vmatprep.subr.mxu0 0.0
      %440 = vmatpush1.msra.mxu0 0.0
      %441 = vmatprep.subr.mxu0 0.0
      %442 = vmatpush1.msra.mxu0 0.0
      %443 = vmatprep.subr.mxu0 0.0
      %444 = vmatpush1.msra.mxu0 0.0
      %445 = vmatprep.subr.mxu0 0.0
      %446 = vmatpush1.msra.mxu0 0.0
      %447 = vmatprep.subr.mxu0 0.0
      %448 = vmatpush1.msra.mxu0 0.0
      %449 = vmatprep.subr.mxu0 0.0
      %450 = vmatpush1.msra.mxu0 0.0
      %451 = vmatprep.subr.mxu0 0.0
      %452 = vmatpush1.msra.mxu0 0.0
      %453 = vmatprep.subr.mxu0 0.0
      %454 = vmatpush1.msra.mxu0 0.0
      %455 = vmatprep.mubr.f32.mxu0 0.0
      %456 = vmatmul.mubr.f32.gmra.mrb[0].mxu0 %v389
      %v457 = vpop.f32.mrb[0].mxu0
      %v458 = vadd.f32 0.0, %v457
      %v459 = vpop.f32.mrb[0].mxu0
      %460 = vdwg.mxu0
      %v461 = vadd.f32 %v384, %v458
      %vm463 = vcmask 1046528
      %v464 = vrot.slane %v385, 1
      %v465 = vrot.slane %v386, 1
      %v466 = vsel %vm463, %v464, %v465
      %v467 = vsel %vm387, %v466, 0
      %469 = vmatprep.subr.mxu0 0.0
      %470 = vmatpush1.msra.mxu0 %v345
      %471 = vmatprep.subr.mxu0 0.0
      %472 = vmatpush1.msra.mxu0 %v346
      %473 = vmatprep.subr.mxu0 0.0
      %474 = vmatpush1.msra.mxu0 %v347
      %475 = vmatprep.subr.mxu0 0.0
      %476 = vmatpush1.msra.mxu0 %v348
      %477 = vmatprep.subr.mxu0 0.0
      %478 = vmatpush1.msra.mxu0 0.0
      %479 = vmatprep.subr.mxu0 0.0
      %480 = vmatpush1.msra.mxu0 0.0
      %481 = vmatprep.subr.mxu0 0.0
      %482 = vmatpush1.msra.mxu0 0.0
      %483 = vmatprep.subr.mxu0 0.0
      %484 = vmatpush1.msra.mxu0 0.0
      %485 = vmatprep.subr.mxu0 0.0
      %486 = vmatpush1.msra.mxu0 0.0
      %487 = vmatprep.subr.mxu0 0.0
      %488 = vmatpush1.msra.mxu0 0.0
      %489 = vmatprep.subr.mxu0 0.0
      %490 = vmatpush1.msra.mxu0 0.0
      %491 = vmatprep.subr.mxu0 0.0
      %492 = vmatpush1.msra.mxu0 0.0
      %493 = vmatprep.subr.mxu0 0.0
      %494 = vmatpush1.msra.mxu0 0.0
      %495 = vmatprep.subr.mxu0 0.0
      %496 = vmatpush1.msra.mxu0 0.0
      %497 = vmatprep.subr.mxu0 0.0
      %498 = vmatpush1.msra.mxu0 0.0
      %499 = vmatprep.subr.mxu0 0.0
      %500 = vmatpush1.msra.mxu0 0.0
      %501 = vmatprep.subr.mxu0 0.0
      %502 = vmatpush1.msra.mxu0 0.0
      %503 = vmatprep.subr.mxu0 0.0
      %504 = vmatpush1.msra.mxu0 0.0
      %505 = vmatprep.subr.mxu0 0.0
      %506 = vmatpush1.msra.mxu0 0.0
      %507 = vmatprep.subr.mxu0 0.0
      %508 = vmatpush1.msra.mxu0 0.0
      %509 = vmatprep.subr.mxu0 0.0
      %510 = vmatpush1.msra.mxu0 0.0
      %511 = vmatprep.subr.mxu0 0.0
      %512 = vmatpush1.msra.mxu0 0.0
      %513 = vmatprep.subr.mxu0 0.0
      %514 = vmatpush1.msra.mxu0 0.0
      %515 = vmatprep.subr.mxu0 0.0
      %516 = vmatpush1.msra.mxu0 0.0
      %517 = vmatprep.subr.mxu0 0.0
      %518 = vmatpush1.msra.mxu0 0.0
      %519 = vmatprep.subr.mxu0 0.0
      %520 = vmatpush1.msra.mxu0 0.0
      %521 = vmatprep.subr.mxu0 0.0
      %522 = vmatpush1.msra.mxu0 0.0
      %523 = vmatprep.subr.mxu0 0.0
      %524 = vmatpush1.msra.mxu0 0.0
      %525 = vmatprep.subr.mxu0 0.0
      %526 = vmatpush1.msra.mxu0 0.0
      %527 = vmatprep.subr.mxu0 0.0
      %528 = vmatpush1.msra.mxu0 0.0
      %529 = vmatprep.subr.mxu0 0.0
      %530 = vmatpush1.msra.mxu0 0.0
      %531 = vmatprep.subr.mxu0 0.0
      %532 = vmatpush1.msra.mxu0 0.0
      %533 = vmatprep.mubr.f32.mxu0 0.0
      %534 = vmatmul.mubr.f32.gmra.mrb[0].mxu0 %v467
      %v535 = vpop.f32.mrb[0].mxu0
      %v536 = vadd.f32 0.0, %v535
      %v537 = vpop.f32.mrb[0].mxu0
      %538 = vdwg.mxu0
      %v539 = vadd.f32 %v461, %v536
      %vm540 = vcmask 1045504
      %v541 = vrot.slane %v385, 2
      %v542 = vrot.slane %v386, 2
      %v543 = vsel %vm540, %v541, %v542
      %v544 = vsel %vm387, %v543, 0
      %546 = vmatprep.subr.mxu0 0.0
      %547 = vmatpush1.msra.mxu0 %v349
      %548 = vmatprep.subr.mxu0 0.0
      %549 = vmatpush1.msra.mxu0 %v350
      %550 = vmatprep.subr.mxu0 0.0
      %551 = vmatpush1.msra.mxu0 %v351
      %552 = vmatprep.subr.mxu0 0.0
      %553 = vmatpush1.msra.mxu0 %v352
      %554 = vmatprep.subr.mxu0 0.0
      %555 = vmatpush1.msra.mxu0 0.0
      %556 = vmatprep.subr.mxu0 0.0
      %557 = vmatpush1.msra.mxu0 0.0
      %558 = vmatprep.subr.mxu0 0.0
      %559 = vmatpush1.msra.mxu0 0.0
      %560 = vmatprep.subr.mxu0 0.0
      %561 = vmatpush1.msra.mxu0 0.0
      %562 = vmatprep.subr.mxu0 0.0
      %563 = vmatpush1.msra.mxu0 0.0
      %564 = vmatprep.subr.mxu0 0.0
      %565 = vmatpush1.msra.mxu0 0.0
      %566 = vmatprep.subr.mxu0 0.0
      %567 = vmatpush1.msra.mxu0 0.0
      %568 = vmatprep.subr.mxu0 0.0
      %569 = vmatpush1.msra.mxu0 0.0
      %570 = vmatprep.subr.mxu0 0.0
      %571 = vmatpush1.msra.mxu0 0.0
      %572 = vmatprep.subr.mxu0 0.0
      %573 = vmatpush1.msra.mxu0 0.0
      %574 = vmatprep.subr.mxu0 0.0
      %575 = vmatpush1.msra.mxu0 0.0
      %576 = vmatprep.subr.mxu0 0.0
      %577 = vmatpush1.msra.mxu0 0.0
      %578 = vmatprep.subr.mxu0 0.0
      %579 = vmatpush1.msra.mxu0 0.0
      %580 = vmatprep.subr.mxu0 0.0
      %581 = vmatpush1.msra.mxu0 0.0
      %582 = vmatprep.subr.mxu0 0.0
      %583 = vmatpush1.msra.mxu0 0.0
      %584 = vmatprep.subr.mxu0 0.0
      %585 = vmatpush1.msra.mxu0 0.0
      %586 = vmatprep.subr.mxu0 0.0
      %587 = vmatpush1.msra.mxu0 0.0
      %588 = vmatprep.subr.mxu0 0.0
      %589 = vmatpush1.msra.mxu0 0.0
      %590 = vmatprep.subr.mxu0 0.0
      %591 = vmatpush1.msra.mxu0 0.0
      %592 = vmatprep.subr.mxu0 0.0
      %593 = vmatpush1.msra.mxu0 0.0
      %594 = vmatprep.subr.mxu0 0.0
      %595 = vmatpush1.msra.mxu0 0.0
      %596 = vmatprep.subr.mxu0 0.0
      %597 = vmatpush1.msra.mxu0 0.0
      %598 = vmatprep.subr.mxu0 0.0
      %599 = vmatpush1.msra.mxu0 0.0
      %600 = vmatprep.subr.mxu0 0.0
      %601 = vmatpush1.msra.mxu0 0.0
      %602 = vmatprep.subr.mxu0 0.0
      %603 = vmatpush1.msra.mxu0 0.0
      %604 = vmatprep.subr.mxu0 0.0
      %605 = vmatpush1.msra.mxu0 0.0
      %606 = vmatprep.subr.mxu0 0.0
      %607 = vmatpush1.msra.mxu0 0.0
      %608 = vmatprep.subr.mxu0 0.0
      %609 = vmatpush1.msra.mxu0 0.0
      %610 = vmatprep.mubr.f32.mxu0 0.0
      %611 = vmatmul.mubr.f32.gmra.mrb[0].mxu0 %v544
      %v612 = vpop.f32.mrb[0].mxu0
      %v613 = vadd.f32 0.0, %v612
      %v614 = vpop.f32.mrb[0].mxu0
      %615 = vdwg.mxu0
      %v616 = vadd.f32 %v539, %v613
      %v617 = vld [vmem:[%s320] sm:$0xff]
      %v618 = vld [vmem:[%s320 + $0x8] sm:$0x3]
      %v620 = vsel %vm387, %v617, 0
      %622 = vmatprep.subr.mxu0 0.0
      %623 = vmatpush1.msra.mxu0 %v353
      %624 = vmatprep.subr.mxu0 0.0
      %625 = vmatpush1.msra.mxu0 %v354
      %626 = vmatprep.subr.mxu0 0.0
      %627 = vmatpush1.msra.mxu0 %v355
      %628 = vmatprep.subr.mxu0 0.0
      %629 = vmatpush1.msra.mxu0 %v356
      %630 = vmatprep.subr.mxu0 0.0
      %631 = vmatpush1.msra.mxu0 0.0
      %632 = vmatprep.subr.mxu0 0.0
      %633 = vmatpush1.msra.mxu0 0.0
      %634 = vmatprep.subr.mxu0 0.0
      %635 = vmatpush1.msra.mxu0 0.0
      %636 = vmatprep.subr.mxu0 0.0
      %637 = vmatpush1.msra.mxu0 0.0
      %638 = vmatprep.subr.mxu0 0.0
      %639 = vmatpush1.msra.mxu0 0.0
      %640 = vmatprep.subr.mxu0 0.0
      %641 = vmatpush1.msra.mxu0 0.0
      %642 = vmatprep.subr.mxu0 0.0
      %643 = vmatpush1.msra.mxu0 0.0
      %644 = vmatprep.subr.mxu0 0.0
      %645 = vmatpush1.msra.mxu0 0.0
      %646 = vmatprep.subr.mxu0 0.0
      %647 = vmatpush1.msra.mxu0 0.0
      %648 = vmatprep.subr.mxu0 0.0
      %649 = vmatpush1.msra.mxu0 0.0
      %650 = vmatprep.subr.mxu0 0.0
      %651 = vmatpush1.msra.mxu0 0.0
      %652 = vmatprep.subr.mxu0 0.0
      %653 = vmatpush1.msra.mxu0 0.0
      %654 = vmatprep.subr.mxu0 0.0
      %655 = vmatpush1.msra.mxu0 0.0
      %656 = vmatprep.subr.mxu0 0.0
      %657 = vmatpush1.msra.mxu0 0.0
      %658 = vmatprep.subr.mxu0 0.0
      %659 = vmatpush1.msra.mxu0 0.0
      %660 = vmatprep.subr.mxu0 0.0
      %661 = vmatpush1.msra.mxu0 0.0
      %662 = vmatprep.subr.mxu0 0.0
      %663 = vmatpush1.msra.mxu0 0.0
      %664 = vmatprep.subr.mxu0 0.0
      %665 = vmatpush1.msra.mxu0 0.0
      %666 = vmatprep.subr.mxu0 0.0
      %667 = vmatpush1.msra.mxu0 0.0
      %668 = vmatprep.subr.mxu0 0.0
      %669 = vmatpush1.msra.mxu0 0.0
      %670 = vmatprep.subr.mxu0 0.0
      %671 = vmatpush1.msra.mxu0 0.0
      %672 = vmatprep.subr.mxu0 0.0
      %673 = vmatpush1.msra.mxu0 0.0
      %674 = vmatprep.subr.mxu0 0.0
      %675 = vmatpush1.msra.mxu0 0.0
      %676 = vmatprep.subr.mxu0 0.0
      %677 = vmatpush1.msra.mxu0 0.0
      %678 = vmatprep.subr.mxu0 0.0
      %679 = vmatpush1.msra.mxu0 0.0
      %680 = vmatprep.subr.mxu0 0.0
      %681 = vmatpush1.msra.mxu0 0.0
      %682 = vmatprep.subr.mxu0 0.0
      %683 = vmatpush1.msra.mxu0 0.0
      %684 = vmatprep.subr.mxu0 0.0
      %685 = vmatpush1.msra.mxu0 0.0
      %686 = vmatprep.mubr.f32.mxu0 0.0
      %687 = vmatmul.mubr.f32.gmra.mrb[0].mxu0 %v620
      %v688 = vpop.f32.mrb[0].mxu0
      %v689 = vadd.f32 0.0, %v688
      %v690 = vpop.f32.mrb[0].mxu0
      %691 = vdwg.mxu0
      %v692 = vadd.f32 %v616, %v689
      %v694 = vrot.slane %v617, 1
      %v695 = vrot.slane %v618, 1
      %v696 = vsel %vm463, %v694, %v695
      %v697 = vsel %vm387, %v696, 0
      %699 = vmatprep.subr.mxu0 0.0
      %700 = vmatpush1.msra.mxu0 %v357
      %701 = vmatprep.subr.mxu0 0.0
      %702 = vmatpush1.msra.mxu0 %v358
      %703 = vmatprep.subr.mxu0 0.0
      %704 = vmatpush1.msra.mxu0 %v359
      %705 = vmatprep.subr.mxu0 0.0
      %706 = vmatpush1.msra.mxu0 %v360
      %707 = vmatprep.subr.mxu0 0.0
      %708 = vmatpush1.msra.mxu0 0.0
      %709 = vmatprep.subr.mxu0 0.0
      %710 = vmatpush1.msra.mxu0 0.0
      %711 = vmatprep.subr.mxu0 0.0
      %712 = vmatpush1.msra.mxu0 0.0
      %713 = vmatprep.subr.mxu0 0.0
      %714 = vmatpush1.msra.mxu0 0.0
      %715 = vmatprep.subr.mxu0 0.0
      %716 = vmatpush1.msra.mxu0 0.0
      %717 = vmatprep.subr.mxu0 0.0
      %718 = vmatpush1.msra.mxu0 0.0
      %719 = vmatprep.subr.mxu0 0.0
      %720 = vmatpush1.msra.mxu0 0.0
      %721 = vmatprep.subr.mxu0 0.0
      %722 = vmatpush1.msra.mxu0 0.0
      %723 = vmatprep.subr.mxu0 0.0
      %724 = vmatpush1.msra.mxu0 0.0
      %725 = vmatprep.subr.mxu0 0.0
      %726 = vmatpush1.msra.mxu0 0.0
      %727 = vmatprep.subr.mxu0 0.0
      %728 = vmatpush1.msra.mxu0 0.0
      %729 = vmatprep.subr.mxu0 0.0
      %730 = vmatpush1.msra.mxu0 0.0
      %731 = vmatprep.subr.mxu0 0.0
      %732 = vmatpush1.msra.mxu0 0.0
      %733 = vmatprep.subr.mxu0 0.0
      %734 = vmatpush1.msra.mxu0 0.0
      %735 = vmatprep.subr.mxu0 0.0
      %736 = vmatpush1.msra.mxu0 0.0
      %737 = vmatprep.subr.mxu0 0.0
      %738 = vmatpush1.msra.mxu0 0.0
      %739 = vmatprep.subr.mxu0 0.0
      %740 = vmatpush1.msra.mxu0 0.0
      %741 = vmatprep.subr.mxu0 0.0
      %742 = vmatpush1.msra.mxu0 0.0
      %743 = vmatprep.subr.mxu0 0.0
      %744 = vmatpush1.msra.mxu0 0.0
      %745 = vmatprep.subr.mxu0 0.0
      %746 = vmatpush1.msra.mxu0 0.0
      %747 = vmatprep.subr.mxu0 0.0
      %748 = vmatpush1.msra.mxu0 0.0
      %749 = vmatprep.subr.mxu0 0.0
      %750 = vmatpush1.msra.mxu0 0.0
      %751 = vmatprep.subr.mxu0 0.0
      %752 = vmatpush1.msra.mxu0 0.0
      %753 = vmatprep.subr.mxu0 0.0
      %754 = vmatpush1.msra.mxu0 0.0
      %755 = vmatprep.subr.mxu0 0.0
      %756 = vmatpush1.msra.mxu0 0.0
      %757 = vmatprep.subr.mxu0 0.0
      %758 = vmatpush1.msra.mxu0 0.0
      %759 = vmatprep.subr.mxu0 0.0
      %760 = vmatpush1.msra.mxu0 0.0
      %761 = vmatprep.subr.mxu0 0.0
      %762 = vmatpush1.msra.mxu0 0.0
      %763 = vmatprep.mubr.f32.mxu0 0.0
      %764 = vmatmul.mubr.f32.gmra.mrb[0].mxu0 %v697
      %v765 = vpop.f32.mrb[0].mxu0
      %v766 = vadd.f32 0.0, %v765
      %v767 = vpop.f32.mrb[0].mxu0
      %768 = vdwg.mxu0
      %v769 = vadd.f32 %v692, %v766
      %v770 = vrot.slane %v617, 2
      %v771 = vrot.slane %v618, 2
      %v772 = vsel %vm540, %v770, %v771
      %v773 = vsel %vm387, %v772, 0
      %775 = vmatprep.subr.mxu0 0.0
      %776 = vmatpush1.msra.mxu0 %v361
      %777 = vmatprep.subr.mxu0 0.0
      %778 = vmatpush1.msra.mxu0 %v362
      %779 = vmatprep.subr.mxu0 0.0
      %780 = vmatpush1.msra.mxu0 %v363
      %781 = vmatprep.subr.mxu0 0.0
      %782 = vmatpush1.msra.mxu0 %v364
      %783 = vmatprep.subr.mxu0 0.0
      %784 = vmatpush1.msra.mxu0 0.0
      %785 = vmatprep.subr.mxu0 0.0
      %786 = vmatpush1.msra.mxu0 0.0
      %787 = vmatprep.subr.mxu0 0.0
      %788 = vmatpush1.msra.mxu0 0.0
      %789 = vmatprep.subr.mxu0 0.0
      %790 = vmatpush1.msra.mxu0 0.0
      %791 = vmatprep.subr.mxu0 0.0
      %792 = vmatpush1.msra.mxu0 0.0
      %793 = vmatprep.subr.mxu0 0.0
      %794 = vmatpush1.msra.mxu0 0.0
      %795 = vmatprep.subr.mxu0 0.0
      %796 = vmatpush1.msra.mxu0 0.0
      %797 = vmatprep.subr.mxu0 0.0
      %798 = vmatpush1.msra.mxu0 0.0
      %799 = vmatprep.subr.mxu0 0.0
      %800 = vmatpush1.msra.mxu0 0.0
      %801 = vmatprep.subr.mxu0 0.0
      %802 = vmatpush1.msra.mxu0 0.0
      %803 = vmatprep.subr.mxu0 0.0
      %804 = vmatpush1.msra.mxu0 0.0
      %805 = vmatprep.subr.mxu0 0.0
      %806 = vmatpush1.msra.mxu0 0.0
      %807 = vmatprep.subr.mxu0 0.0
      %808 = vmatpush1.msra.mxu0 0.0
      %809 = vmatprep.subr.mxu0 0.0
      %810 = vmatpush1.msra.mxu0 0.0
      %811 = vmatprep.subr.mxu0 0.0
      %812 = vmatpush1.msra.mxu0 0.0
      %813 = vmatprep.subr.mxu0 0.0
      %814 = vmatpush1.msra.mxu0 0.0
      %815 = vmatprep.subr.mxu0 0.0
      %816 = vmatpush1.msra.mxu0 0.0
      %817 = vmatprep.subr.mxu0 0.0
      %818 = vmatpush1.msra.mxu0 0.0
      %819 = vmatprep.subr.mxu0 0.0
      %820 = vmatpush1.msra.mxu0 0.0
      %821 = vmatprep.subr.mxu0 0.0
      %822 = vmatpush1.msra.mxu0 0.0
      %823 = vmatprep.subr.mxu0 0.0
      %824 = vmatpush1.msra.mxu0 0.0
      %825 = vmatprep.subr.mxu0 0.0
      %826 = vmatpush1.msra.mxu0 0.0
      %827 = vmatprep.subr.mxu0 0.0
      %828 = vmatpush1.msra.mxu0 0.0
      %829 = vmatprep.subr.mxu0 0.0
      %830 = vmatpush1.msra.mxu0 0.0
      %831 = vmatprep.subr.mxu0 0.0
      %832 = vmatpush1.msra.mxu0 0.0
      %833 = vmatprep.subr.mxu0 0.0
      %834 = vmatpush1.msra.mxu0 0.0
      %835 = vmatprep.subr.mxu0 0.0
      %836 = vmatpush1.msra.mxu0 0.0
      %837 = vmatprep.subr.mxu0 0.0
      %838 = vmatpush1.msra.mxu0 0.0
      %839 = vmatprep.mubr.f32.mxu0 0.0
      %840 = vmatmul.mubr.f32.gmra.mrb[0].mxu0 %v773
      %v841 = vpop.f32.mrb[0].mxu0
      %v842 = vadd.f32 0.0, %v841
      %v843 = vpop.f32.mrb[0].mxu0
      %844 = vdwg.mxu0
      %v845 = vadd.f32 %v769, %v842
      %v846 = vld [vmem:[%s331] sm:$0xff]
      %v847 = vld [vmem:[%s331 + $0x8] sm:$0x3]
      %v849 = vsel %vm387, %v846, 0
      %851 = vmatprep.subr.mxu0 0.0
      %852 = vmatpush1.msra.mxu0 %v365
      %853 = vmatprep.subr.mxu0 0.0
      %854 = vmatpush1.msra.mxu0 %v366
      %855 = vmatprep.subr.mxu0 0.0
      %856 = vmatpush1.msra.mxu0 %v367
      %857 = vmatprep.subr.mxu0 0.0
      %858 = vmatpush1.msra.mxu0 %v368
      %859 = vmatprep.subr.mxu0 0.0
      %860 = vmatpush1.msra.mxu0 0.0
      %861 = vmatprep.subr.mxu0 0.0
      %862 = vmatpush1.msra.mxu0 0.0
      %863 = vmatprep.subr.mxu0 0.0
      %864 = vmatpush1.msra.mxu0 0.0
      %865 = vmatprep.subr.mxu0 0.0
      %866 = vmatpush1.msra.mxu0 0.0
      %867 = vmatprep.subr.mxu0 0.0
      %868 = vmatpush1.msra.mxu0 0.0
      %869 = vmatprep.subr.mxu0 0.0
      %870 = vmatpush1.msra.mxu0 0.0
      %871 = vmatprep.subr.mxu0 0.0
      %872 = vmatpush1.msra.mxu0 0.0
      %873 = vmatprep.subr.mxu0 0.0
      %874 = vmatpush1.msra.mxu0 0.0
      %875 = vmatprep.subr.mxu0 0.0
      %876 = vmatpush1.msra.mxu0 0.0
      %877 = vmatprep.subr.mxu0 0.0
      %878 = vmatpush1.msra.mxu0 0.0
      %879 = vmatprep.subr.mxu0 0.0
      %880 = vmatpush1.msra.mxu0 0.0
      %881 = vmatprep.subr.mxu0 0.0
      %882 = vmatpush1.msra.mxu0 0.0
      %883 = vmatprep.subr.mxu0 0.0
      %884 = vmatpush1.msra.mxu0 0.0
      %885 = vmatprep.subr.mxu0 0.0
      %886 = vmatpush1.msra.mxu0 0.0
      %887 = vmatprep.subr.mxu0 0.0
      %888 = vmatpush1.msra.mxu0 0.0
      %889 = vmatprep.subr.mxu0 0.0
      %890 = vmatpush1.msra.mxu0 0.0
      %891 = vmatprep.subr.mxu0 0.0
      %892 = vmatpush1.msra.mxu0 0.0
      %893 = vmatprep.subr.mxu0 0.0
      %894 = vmatpush1.msra.mxu0 0.0
      %895 = vmatprep.subr.mxu0 0.0
      %896 = vmatpush1.msra.mxu0 0.0
      %897 = vmatprep.subr.mxu0 0.0
      %898 = vmatpush1.msra.mxu0 0.0
      %899 = vmatprep.subr.mxu0 0.0
      %900 = vmatpush1.msra.mxu0 0.0
      %901 = vmatprep.subr.mxu0 0.0
      %902 = vmatpush1.msra.mxu0 0.0
      %903 = vmatprep.subr.mxu0 0.0
      %904 = vmatpush1.msra.mxu0 0.0
      %905 = vmatprep.subr.mxu0 0.0
      %906 = vmatpush1.msra.mxu0 0.0
      %907 = vmatprep.subr.mxu0 0.0
      %908 = vmatpush1.msra.mxu0 0.0
      %909 = vmatprep.subr.mxu0 0.0
      %910 = vmatpush1.msra.mxu0 0.0
      %911 = vmatprep.subr.mxu0 0.0
      %912 = vmatpush1.msra.mxu0 0.0
      %913 = vmatprep.subr.mxu0 0.0
      %914 = vmatpush1.msra.mxu0 0.0
      %915 = vmatprep.mubr.f32.mxu0 0.0
      %916 = vmatmul.mubr.f32.gmra.mrb[0].mxu0 %v849
      %v917 = vpop.f32.mrb[0].mxu0
      %v918 = vadd.f32 0.0, %v917
      %v919 = vpop.f32.mrb[0].mxu0
      %920 = vdwg.mxu0
      %v921 = vadd.f32 %v845, %v918
      %v923 = vrot.slane %v846, 1
      %v924 = vrot.slane %v847, 1
      %v925 = vsel %vm463, %v923, %v924
      %v926 = vsel %vm387, %v925, 0
      %928 = vmatprep.subr.mxu0 0.0
      %929 = vmatpush1.msra.mxu0 %v369
      %930 = vmatprep.subr.mxu0 0.0
      %931 = vmatpush1.msra.mxu0 %v370
      %932 = vmatprep.subr.mxu0 0.0
      %933 = vmatpush1.msra.mxu0 %v371
      %934 = vmatprep.subr.mxu0 0.0
      %935 = vmatpush1.msra.mxu0 %v372
      %936 = vmatprep.subr.mxu0 0.0
      %937 = vmatpush1.msra.mxu0 0.0
      %938 = vmatprep.subr.mxu0 0.0
      %939 = vmatpush1.msra.mxu0 0.0
      %940 = vmatprep.subr.mxu0 0.0
      %941 = vmatpush1.msra.mxu0 0.0
      %942 = vmatprep.subr.mxu0 0.0
      %943 = vmatpush1.msra.mxu0 0.0
      %944 = vmatprep.subr.mxu0 0.0
      %945 = vmatpush1.msra.mxu0 0.0
      %946 = vmatprep.subr.mxu0 0.0
      %947 = vmatpush1.msra.mxu0 0.0
      %948 = vmatprep.subr.mxu0 0.0
      %949 = vmatpush1.msra.mxu0 0.0
      %950 = vmatprep.subr.mxu0 0.0
      %951 = vmatpush1.msra.mxu0 0.0
      %952 = vmatprep.subr.mxu0 0.0
      %953 = vmatpush1.msra.mxu0 0.0
      %954 = vmatprep.subr.mxu0 0.0
      %955 = vmatpush1.msra.mxu0 0.0
      %956 = vmatprep.subr.mxu0 0.0
      %957 = vmatpush1.msra.mxu0 0.0
      %958 = vmatprep.subr.mxu0 0.0
      %959 = vmatpush1.msra.mxu0 0.0
      %960 = vmatprep.subr.mxu0 0.0
      %961 = vmatpush1.msra.mxu0 0.0
      %962 = vmatprep.subr.mxu0 0.0
      %963 = vmatpush1.msra.mxu0 0.0
      %964 = vmatprep.subr.mxu0 0.0
      %965 = vmatpush1.msra.mxu0 0.0
      %966 = vmatprep.subr.mxu0 0.0
      %967 = vmatpush1.msra.mxu0 0.0
      %968 = vmatprep.subr.mxu0 0.0
      %969 = vmatpush1.msra.mxu0 0.0
      %970 = vmatprep.subr.mxu0 0.0
      %971 = vmatpush1.msra.mxu0 0.0
      %972 = vmatprep.subr.mxu0 0.0
      %973 = vmatpush1.msra.mxu0 0.0
      %974 = vmatprep.subr.mxu0 0.0
      %975 = vmatpush1.msra.mxu0 0.0
      %976 = vmatprep.subr.mxu0 0.0
      %977 = vmatpush1.msra.mxu0 0.0
      %978 = vmatprep.subr.mxu0 0.0
      %979 = vmatpush1.msra.mxu0 0.0
      %980 = vmatprep.subr.mxu0 0.0
      %981 = vmatpush1.msra.mxu0 0.0
      %982 = vmatprep.subr.mxu0 0.0
      %983 = vmatpush1.msra.mxu0 0.0
      %984 = vmatprep.subr.mxu0 0.0
      %985 = vmatpush1.msra.mxu0 0.0
      %986 = vmatprep.subr.mxu0 0.0
      %987 = vmatpush1.msra.mxu0 0.0
      %988 = vmatprep.subr.mxu0 0.0
      %989 = vmatpush1.msra.mxu0 0.0
      %990 = vmatprep.subr.mxu0 0.0
      %991 = vmatpush1.msra.mxu0 0.0
      %992 = vmatprep.mubr.f32.mxu0 0.0
      %993 = vmatmul.mubr.f32.gmra.mrb[0].mxu0 %v926
      %v994 = vpop.f32.mrb[0].mxu0
      %v995 = vadd.f32 0.0, %v994
      %v996 = vpop.f32.mrb[0].mxu0
      %997 = vdwg.mxu0
      %v998 = vadd.f32 %v921, %v995
      %v999 = vrot.slane %v846, 2
      %v1000 = vrot.slane %v847, 2
      %v1001 = vsel %vm540, %v999, %v1000
      %v1002 = vsel %vm387, %v1001, 0
      %1004 = vmatprep.subr.mxu0 0.0
      %1005 = vmatpush1.msra.mxu0 %v373
      %1006 = vmatprep.subr.mxu0 0.0
      %1007 = vmatpush1.msra.mxu0 %v374
      %1008 = vmatprep.subr.mxu0 0.0
      %1009 = vmatpush1.msra.mxu0 %v375
      %1010 = vmatprep.subr.mxu0 0.0
      %1011 = vmatpush1.msra.mxu0 %v376
      %1012 = vmatprep.subr.mxu0 0.0
      %1013 = vmatpush1.msra.mxu0 0.0
      %1014 = vmatprep.subr.mxu0 0.0
      %1015 = vmatpush1.msra.mxu0 0.0
      %1016 = vmatprep.subr.mxu0 0.0
      %1017 = vmatpush1.msra.mxu0 0.0
      %1018 = vmatprep.subr.mxu0 0.0
      %1019 = vmatpush1.msra.mxu0 0.0
      %1020 = vmatprep.subr.mxu0 0.0
      %1021 = vmatpush1.msra.mxu0 0.0
      %1022 = vmatprep.subr.mxu0 0.0
      %1023 = vmatpush1.msra.mxu0 0.0
      %1024 = vmatprep.subr.mxu0 0.0
      %1025 = vmatpush1.msra.mxu0 0.0
      %1026 = vmatprep.subr.mxu0 0.0
      %1027 = vmatpush1.msra.mxu0 0.0
      %1028 = vmatprep.subr.mxu0 0.0
      %1029 = vmatpush1.msra.mxu0 0.0
      %1030 = vmatprep.subr.mxu0 0.0
      %1031 = vmatpush1.msra.mxu0 0.0
      %1032 = vmatprep.subr.mxu0 0.0
      %1033 = vmatpush1.msra.mxu0 0.0
      %1034 = vmatprep.subr.mxu0 0.0
      %1035 = vmatpush1.msra.mxu0 0.0
      %1036 = vmatprep.subr.mxu0 0.0
      %1037 = vmatpush1.msra.mxu0 0.0
      %1038 = vmatprep.subr.mxu0 0.0
      %1039 = vmatpush1.msra.mxu0 0.0
      %1040 = vmatprep.subr.mxu0 0.0
      %1041 = vmatpush1.msra.mxu0 0.0
      %1042 = vmatprep.subr.mxu0 0.0
      %1043 = vmatpush1.msra.mxu0 0.0
      %1044 = vmatprep.subr.mxu0 0.0
      %1045 = vmatpush1.msra.mxu0 0.0
      %1046 = vmatprep.subr.mxu0 0.0
      %1047 = vmatpush1.msra.mxu0 0.0
      %1048 = vmatprep.subr.mxu0 0.0
      %1049 = vmatpush1.msra.mxu0 0.0
      %1050 = vmatprep.subr.mxu0 0.0
      %1051 = vmatpush1.msra.mxu0 0.0
      %1052 = vmatprep.subr.mxu0 0.0
      %1053 = vmatpush1.msra.mxu0 0.0
      %1054 = vmatprep.subr.mxu0 0.0
      %1055 = vmatpush1.msra.mxu0 0.0
      %1056 = vmatprep.subr.mxu0 0.0
      %1057 = vmatpush1.msra.mxu0 0.0
      %1058 = vmatprep.subr.mxu0 0.0
      %1059 = vmatpush1.msra.mxu0 0.0
      %1060 = vmatprep.subr.mxu0 0.0
      %1061 = vmatpush1.msra.mxu0 0.0
      %1062 = vmatprep.subr.mxu0 0.0
      %1063 = vmatpush1.msra.mxu0 0.0
      %1064 = vmatprep.subr.mxu0 0.0
      %1065 = vmatpush1.msra.mxu0 0.0
      %1066 = vmatprep.subr.mxu0 0.0
      %1067 = vmatpush1.msra.mxu0 0.0
      %1068 = vmatprep.mubr.f32.mxu0 0.0
      %1069 = vmatmul.mubr.f32.gmra.mrb[0].mxu0 %v1002
      %v1070 = vpop.f32.mrb[0].mxu0
      %v1071 = vadd.f32 0.0, %v1070
      %v1072 = vpop.f32.mrb[0].mxu0
      %1073 = vdwg.mxu0
      %v1074 = vadd.f32 %v998, %v1071
      %1075 = vst.msk [vmem:[%s340] sm:$0xff] %vm387, %v1074
      %p1076 = scmp.lt.s32.totalorder %s20, 1
      %s1077 = scalar_select %p1076, %s20, 1
      %p1078 = scmp.lt.s32.totalorder %s21, 7
      %s1079 = scalar_select %p1078, %s21, 7
      %s1080 = smul.addr %s1077, 8
      %s1081 = sadd.s32 %s1079, %s1080
      %s1082 = smul.addr %s1081, 8
      %s1083 = scalar_lea.vmem %s5, %s1082
      // Predicated region
      $region41: #{image_backbone_forward.14} parent=39 // pred_check
        %p1084 = pneg %p178
      $region42: #{image_backbone_forward.14} parent=39 // pred_check_branch
        %1086 = sbr.rel (%p1084) target = $region44
      $region43: #{image_backbone_forward.14} parent=39 // pred_region
        _
      $region44: #{image_backbone_forward.14} parent=39 // pred_fallthru
        _
    $region40: #{image_backbone_forward.14} parent=5 // pred_fallthru
      _
    %p1087 = scmp.le.s32.totalorder 2, %s11
    // Predicated region
    $region45: #{image_backbone_forward.14} parent=5 // pred_check
      %p1088 = pneg %p1087
    $region46: #{image_backbone_forward.14} parent=5 // pred_check_branch
      %1090 = sbr.rel (%p1088) target = $region48
    $region47: #{image_backbone_forward.14} parent=5 // pred_region
      %s1091 = ssub.s32 %s11, 2
      // Predicated region
      $region49: #{image_backbone_forward.14} parent=47 // pred_check
        %p1092 = pneg %p184
      $region50: #{image_backbone_forward.14} parent=47 // pred_check_branch
        %1094 = sbr.rel (%p1092) target = $region52
      $region51: #{image_backbone_forward.14} parent=47 // pred_region
        %p1095 = scmp.lt.s32.totalorder %s22, 1
        %s1096 = scalar_select %p1095, %s22, 1
        %p1097 = scmp.lt.s32.totalorder %s23, 7
        %s1098 = scalar_select %p1097, %s23, 7
        %s1099 = smul.addr %s1096, 8
        %s1100 = sadd.s32 %s1098, %s1099
        %s1101 = smul.addr %s1100, 8
        %s1102 = scalar_lea.vmem %s5, %s1101
      $region52: #{image_backbone_forward.14} parent=47 // pred_fallthru
        _
    $region48: #{image_backbone_forward.14} parent=5 // pred_fallthru
      _
  $region6: #{image_backbone_forward.14} parent=0 // loop_footer
    %s15 = sadd.s32 1, %s11
  $region7: #{image_backbone_forward.14} parent=0 // loop_footer_branch
    %10 = sbr.rel target = $region3
  $region8: #{image_backbone_forward.14} parent=0 // loop_exit
    _

// kernel: image_backbone_forward.12
$region0: #{image_backbone_forward.12}
  #allocation0 [shape = 'u32[]', space=smem, size = 0x4, offset = 0x4, fixed_abs, tag = 'smem constant byte address 0x4 - core index']
  #allocation1 [shape = 'u32[144,128]{1,0:T(1,128)}', space=vmem, size = 0x12000, scoped, tag = 'internal scratch']
  %s0 = inlined_call_operand.vmem [shape: f32[2,11,11,16], index: 0, kind: input, shape index: {}, may-alias: {0,1,2,3}]
  %s1 = inlined_call_operand.vmem [shape: f32[2,11,11,16], index: 1, kind: input, shape index: {}, may-alias: {0,1,2,3}]
  %s2 = inlined_call_operand.vmem [shape: f32[2,11,11,16], index: 2, kind: input, shape index: {}, may-alias: {0,1,2,3}]
  %s3 = inlined_call_operand.vmem [shape: f32[2,11,11,16], index: 3, kind: input, shape index: {}, may-alias: {0,1,2,3}]
  %s4 = inlined_call_operand.vmem [shape: f32[4,4,16,32], index: 4, kind: input, shape index: {}]
  %s5 = inlined_call_operand.vmem [shape: f32[1,32], index: 5, kind: input, shape index: {}]
  %s6 = inlined_call_operand.vmem [shape: f32[2,8,8,32], index: 6, kind: output, shape index: {}]
  %s7 = sld [smem:[#allocation0]]
  $region57: #{image_backbone_forward.12} parent=0
    _
  %s9 = ssub.s32 1, %s7
  %s10 = scalar_select 0, %s9, %s7
  loop: start=0, step=1, limit=18
  $region2: #{image_backbone_forward.12} parent=0 // loop_pre_header
    _
  $region3: #{image_backbone_forward.12} parent=0 // loop_header
    %s12 = sphi 0, %s16
    %p13 = scmp.ge.s32.totalorder %s12, 18
    %s19 = sphi 0, %s31
    %s20 = sphi 0, %s27
    %s21 = sphi 0, %s19
    %s22 = sphi 0, %s20
    %s23 = sphi 0, %s21
    %s24 = sphi 0, %s22
    %s36 = sphi 0, %s38
    %s39 = sphi 0, %s36
    %s40 = sphi 0, %s39
    %s56 = sphi 0, %s40
    %s66 = sphi 0, %s68
    %s69 = sphi 0, %s66
    %s70 = sphi 0, %s69
    %s86 = sphi 0, %s70
    %s96 = sphi 0, %s98
    %s99 = sphi 0, %s96
    %s100 = sphi 0, %s99
    %s116 = sphi 0, %s100
    %s126 = sphi 0, %s128
    %s129 = sphi 0, %s126
    %s130 = sphi 0, %s129
    %s146 = sphi 0, %s130
    %s150 = sphi 0, %s150
    %s152 = sphi 0, %s150
    %s153 = sphi 0, %s152
    %s167 = sphi 0, %s153
    %s171 = sphi 0, %s171
    %s173 = sphi 0, %s171
    %s174 = sphi 0, %s173
    %s188 = sphi 0, %s174
    %s196 = sphi 0, %s198
    %s199 = sphi 0, %s196
    %s200 = sphi 0, %s199
    %s216 = sphi 0, %s200
  $region4: #{image_backbone_forward.12} parent=0 // loop_header_branch
    %15 = sbr.rel (%p13) target = $region8
  $region5: #{image_backbone_forward.12} parent=0 // loop_body
    %s17 = ssub.s32 %s12, 1
    %s18 = ssub.s32 %s12, 2
    %s25 = sadd.s32 1, %s20
    %p26 = scmp.ge.s32.totalorder %s25, 8
    %s27 = scalar_select %p26, 0, %s25
    %s28 = sadd.s32 1, %s19
    %s29 = scalar_select %p26, %s28, %s19
    %p30 = scmp.ge.s32.totalorder %s29, 2
    %s31 = scalar_select %p30, 0, %s29
    %s32 = ssub.s32 %s19, %s31
    %s33 = ssub.s32 %s20, %s27
    %s34 = sor.u32 %s32, %s33
    %p35 = scmp.eq.s32.totalorder %s34, 0
    %s37 = sadd.s32 %s36, 1
    %s38 = scalar_select %p35, %s36, %s37
    %p41 = pneg %p35
    %p42 = scmp.eq.s32.totalorder %s12, 15
    %p43 = por %p41, %p42
    %p44 = scmp.ne.s32.totalorder %s36, %s39
    %p45 = scmp.eq.s32.totalorder %s12, 0
    %p46 = por %p44, %p45
    %p47 = scmp.ne.s32.totalorder %s36, %s39
    %p48 = scmp.eq.s32.totalorder %s17, 15
    %p49 = por %p47, %p48
    %p50 = scmp.ne.s32.totalorder %s39, %s40
    %p51 = scmp.eq.s32.totalorder %s17, 0
    %p52 = por %p50, %p51
    %p53 = scmp.ne.s32.totalorder %s39, %s40
    %p54 = scmp.eq.s32.totalorder %s18, 15
    %p55 = por %p53, %p54
    %p57 = scmp.ne.s32.totalorder %s40, %s56
    %p58 = scmp.eq.s32.totalorder %s18, 0
    %p59 = por %p57, %p58
    %s60 = sadd.s32 %s20, 1
    %s61 = sadd.s32 %s27, 1
    %s62 = ssub.s32 %s19, %s31
    %s63 = ssub.s32 %s60, %s61
    %s64 = sor.u32 %s62, %s63
    %p65 = scmp.eq.s32.totalorder %s64, 0
    %s67 = sadd.s32 %s66, 1
    %s68 = scalar_select %p65, %s66, %s67
    %p71 = pneg %p65
    %p72 = scmp.eq.s32.totalorder %s12, 15
    %p73 = por %p71, %p72
    %p74 = scmp.ne.s32.totalorder %s66, %s69
    %p75 = scmp.eq.s32.totalorder %s12, 0
    %p76 = por %p74, %p75
    %p77 = scmp.ne.s32.totalorder %s66, %s69
    %p78 = scmp.eq.s32.totalorder %s17, 15
    %p79 = por %p77, %p78
    %p80 = scmp.ne.s32.totalorder %s69, %s70
    %p81 = scmp.eq.s32.totalorder %s17, 0
    %p82 = por %p80, %p81
    %p83 = scmp.ne.s32.totalorder %s69, %s70
    %p84 = scmp.eq.s32.totalorder %s18, 15
    %p85 = por %p83, %p84
    %p87 = scmp.ne.s32.totalorder %s70, %s86
    %p88 = scmp.eq.s32.totalorder %s18, 0
    %p89 = por %p87, %p88
    %s90 = sadd.s32 %s20, 2
    %s91 = sadd.s32 %s27, 2
    %s92 = ssub.s32 %s19, %s31
    %s93 = ssub.s32 %s90, %s91
    %s94 = sor.u32 %s92, %s93
    %p95 = scmp.eq.s32.totalorder %s94, 0
    %s97 = sadd.s32 %s96, 1
    %s98 = scalar_select %p95, %s96, %s97
    %p101 = pneg %p95
    %p102 = scmp.eq.s32.totalorder %s12, 15
    %p103 = por %p101, %p102
    %p104 = scmp.ne.s32.totalorder %s96, %s99
    %p105 = scmp.eq.s32.totalorder %s12, 0
    %p106 = por %p104, %p105
    %p107 = scmp.ne.s32.totalorder %s96, %s99
    %p108 = scmp.eq.s32.totalorder %s17, 15
    %p109 = por %p107, %p108
    %p110 = scmp.ne.s32.totalorder %s99, %s100
    %p111 = scmp.eq.s32.totalorder %s17, 0
    %p112 = por %p110, %p111
    %p113 = scmp.ne.s32.totalorder %s99, %s100
    %p114 = scmp.eq.s32.totalorder %s18, 15
    %p115 = por %p113, %p114
    %p117 = scmp.ne.s32.totalorder %s100, %s116
    %p118 = scmp.eq.s32.totalorder %s18, 0
    %p119 = por %p117, %p118
    %s120 = sadd.s32 %s20, 3
    %s121 = sadd.s32 %s27, 3
    %s122 = ssub.s32 %s19, %s31
    %s123 = ssub.s32 %s120, %s121
    %s124 = sor.u32 %s122, %s123
    %p125 = scmp.eq.s32.totalorder %s124, 0
    %s127 = sadd.s32 %s126, 1
    %s128 = scalar_select %p125, %s126, %s127
    %p131 = pneg %p125
    %p132 = scmp.eq.s32.totalorder %s12, 15
    %p133 = por %p131, %p132
    %p134 = scmp.ne.s32.totalorder %s126, %s129
    %p135 = scmp.eq.s32.totalorder %s12, 0
    %p136 = por %p134, %p135
    %p137 = scmp.ne.s32.totalorder %s126, %s129
    %p138 = scmp.eq.s32.totalorder %s17, 15
    %p139 = por %p137, %p138
    %p140 = scmp.ne.s32.totalorder %s129, %s130
    %p141 = scmp.eq.s32.totalorder %s17, 0
    %p142 = por %p140, %p141
    %p143 = scmp.ne.s32.totalorder %s129, %s130
    %p144 = scmp.eq.s32.totalorder %s18, 15
    %p145 = por %p143, %p144
    %p147 = scmp.ne.s32.totalorder %s130, %s146
    %p148 = scmp.eq.s32.totalorder %s18, 0
    %p149 = por %p147, %p148
    %s151 = sadd.s32 %s150, 1
    %p154 = scmp.eq.s32.totalorder %s12, 15
    %p155 = scmp.ne.s32.totalorder %s150, %s152
    %p156 = scmp.eq.s32.totalorder %s12, 0
    %p157 = por %p155, %p156
    %p158 = scmp.ne.s32.totalorder %s150, %s152
    %p159 = scmp.eq.s32.totalorder %s17, 15
    %p160 = por %p158, %p159
    %p161 = scmp.ne.s32.totalorder %s152, %s153
    %p162 = scmp.eq.s32.totalorder %s17, 0
    %p163 = por %p161, %p162
    %p164 = scmp.ne.s32.totalorder %s152, %s153
    %p165 = scmp.eq.s32.totalorder %s18, 15
    %p166 = por %p164, %p165
    %p168 = scmp.ne.s32.totalorder %s153, %s167
    %p169 = scmp.eq.s32.totalorder %s18, 0
    %p170 = por %p168, %p169
    %s172 = sadd.s32 %s171, 1
    %p175 = scmp.eq.s32.totalorder %s12, 15
    %p176 = scmp.ne.s32.totalorder %s171, %s173
    %p177 = scmp.eq.s32.totalorder %s12, 0
    %p178 = por %p176, %p177
    %p179 = scmp.ne.s32.totalorder %s171, %s173
    %p180 = scmp.eq.s32.totalorder %s17, 15
    %p181 = por %p179, %p180
    %p182 = scmp.ne.s32.totalorder %s173, %s174
    %p183 = scmp.eq.s32.totalorder %s17, 0
    %p184 = por %p182, %p183
    %p185 = scmp.ne.s32.totalorder %s173, %s174
    %p186 = scmp.eq.s32.totalorder %s18, 15
    %p187 = por %p185, %p186
    %p189 = scmp.ne.s32.totalorder %s174, %s188
    %p190 = scmp.eq.s32.totalorder %s18, 0
    %p191 = por %p189, %p190
    %s192 = ssub.s32 %s19, %s31
    %s193 = ssub.s32 %s20, %s27
    %s194 = sor.u32 %s192, %s193
    %p195 = scmp.eq.s32.totalorder %s194, 0
    %s197 = sadd.s32 %s196, 1
    %s198 = scalar_select %p195, %s196, %s197
    %p201 = pneg %p195
    %p202 = scmp.eq.s32.totalorder %s12, 15
    %p203 = por %p201, %p202
    %p204 = scmp.ne.s32.totalorder %s196, %s199
    %p205 = scmp.eq.s32.totalorder %s12, 0
    %p206 = por %p204, %p205
    %p207 = scmp.ne.s32.totalorder %s196, %s199
    %p208 = scmp.eq.s32.totalorder %s17, 15
    %p209 = por %p207, %p208
    %p210 = scmp.ne.s32.totalorder %s199, %s200
    %p211 = scmp.eq.s32.totalorder %s17, 0
    %p212 = por %p210, %p211
    %p213 = scmp.ne.s32.totalorder %s199, %s200
    %p214 = scmp.eq.s32.totalorder %s18, 15
    %p215 = por %p213, %p214
    %p217 = scmp.ne.s32.totalorder %s200, %s216
    %p218 = scmp.eq.s32.totalorder %s18, 0
    %p219 = por %p217, %p218
    %p220 = scmp.le.s32.totalorder 1, %s12
    %p221 = scmp.lt.s32.totalorder %s12, 17
    %p222 = pnand %p220, %p221
    %p223 = pneg %p222
    // Predicated region
    $region9: #{image_backbone_forward.12} parent=5 // pred_check
      _
    $region10: #{image_backbone_forward.12} parent=5 // pred_check_branch
      %225 = sbr.rel (%p222) target = $region12
    $region11: #{image_backbone_forward.12} parent=5 // pred_region
      %s226 = ssub.s32 %s12, 1
      // Predicated region
      $region13: #{image_backbone_forward.12} parent=11 // pred_check
        %p227 = pneg %p163
      $region14: #{image_backbone_forward.12} parent=11 // pred_check_branch
        %229 = sbr.rel (%p227) target = $region16
      $region15: #{image_backbone_forward.12} parent=11 // pred_region
        _
      $region16: #{image_backbone_forward.12} parent=11 // pred_fallthru
        _
      // Predicated region
      $region17: #{image_backbone_forward.12} parent=11 // pred_check
        %p230 = pneg %p184
      $region18: #{image_backbone_forward.12} parent=11 // pred_check_branch
        %232 = sbr.rel (%p230) target = $region20
      $region19: #{image_backbone_forward.12} parent=11 // pred_region
        _
      $region20: #{image_backbone_forward.12} parent=11 // pred_fallthru
        _
    $region12: #{image_backbone_forward.12} parent=5 // pred_fallthru
      _
    %p233 = scmp.lt.s32.totalorder %s12, 16
    // Predicated region
    $region21: #{image_backbone_forward.12} parent=5 // pred_check
      %p234 = pneg %p233
    $region22: #{image_backbone_forward.12} parent=5 // pred_check_branch
      %236 = sbr.rel (%p234) target = $region24
    $region23: #{image_backbone_forward.12} parent=5 // pred_region
      // Predicated region
      $region25: #{image_backbone_forward.12} parent=23 // pred_check
        %p237 = pneg %p46
      $region26: #{image_backbone_forward.12} parent=23 // pred_check_branch
        %239 = sbr.rel (%p237) target = $region28
      $region27: #{image_backbone_forward.12} parent=23 // pred_region
        %p240 = scmp.lt.s32.totalorder %s19, 1
        %s241 = scalar_select %p240, %s19, 1
        %p242 = scmp.lt.s32.totalorder %s20, 10
        %s243 = scalar_select %p242, %s20, 10
        %s244 = smul.addr %s243, 2
        %s245 = smul.addr %s241, 22
        %s246 = sadd.s32 %s244, %s245
        %s247 = smul.addr %s246, 8
        %s248 = scalar_lea.vmem %s0, %s247
      $region28: #{image_backbone_forward.12} parent=23 // pred_fallthru
        _
      // Predicated region
      $region29: #{image_backbone_forward.12} parent=23 // pred_check
        %p249 = pneg %p76
      $region30: #{image_backbone_forward.12} parent=23 // pred_check_branch
        %251 = sbr.rel (%p249) target = $region32
      $region31: #{image_backbone_forward.12} parent=23 // pred_region
        %s252 = sadd.s32 %s20, 1
        %p253 = scmp.lt.s32.totalorder %s19, 1
        %s254 = scalar_select %p253, %s19, 1
        %p255 = scmp.lt.s32.totalorder %s252, 10
        %s256 = scalar_select %p255, %s252, 10
        %s257 = smul.addr %s256, 2
        %s258 = smul.addr %s254, 22
        %s259 = sadd.s32 %s257, %s258
        %s260 = smul.addr %s259, 8
        %s261 = scalar_lea.vmem %s1, %s260
        %s262 = sadd.s32 %s20, 1
      $region32: #{image_backbone_forward.12} parent=23 // pred_fallthru
        _
      // Predicated region
      $region33: #{image_backbone_forward.12} parent=23 // pred_check
        %p263 = pneg %p106
      $region34: #{image_backbone_forward.12} parent=23 // pred_check_branch
        %265 = sbr.rel (%p263) target = $region36
      $region35: #{image_backbone_forward.12} parent=23 // pred_region
        %s266 = sadd.s32 %s20, 2
        %p267 = scmp.lt.s32.totalorder %s19, 1
        %s268 = scalar_select %p267, %s19, 1
        %p269 = scmp.lt.s32.totalorder %s266, 10
        %s270 = scalar_select %p269, %s266, 10
        %s271 = smul.addr %s270, 2
        %s272 = smul.addr %s268, 22
        %s273 = sadd.s32 %s271, %s272
        %s274 = smul.addr %s273, 8
        %s275 = scalar_lea.vmem %s2, %s274
        %s276 = sadd.s32 %s20, 2
      $region36: #{image_backbone_forward.12} parent=23 // pred_fallthru
        _
      // Predicated region
      $region37: #{image_backbone_forward.12} parent=23 // pred_check
        %p277 = pneg %p136
      $region38: #{image_backbone_forward.12} parent=23 // pred_check_branch
        %279 = sbr.rel (%p277) target = $region40
      $region39: #{image_backbone_forward.12} parent=23 // pred_region
        %s280 = sadd.s32 %s20, 3
        %p281 = scmp.lt.s32.totalorder %s19, 1
        %s282 = scalar_select %p281, %s19, 1
        %p283 = scmp.lt.s32.totalorder %s280, 10
        %s284 = scalar_select %p283, %s280, 10
        %s285 = smul.addr %s284, 2
        %s286 = smul.addr %s282, 22
        %s287 = sadd.s32 %s285, %s286
        %s288 = smul.addr %s287, 8
        %s289 = scalar_lea.vmem %s3, %s288
        %s290 = sadd.s32 %s20, 3
      $region40: #{image_backbone_forward.12} parent=23 // pred_fallthru
        _
    $region24: #{image_backbone_forward.12} parent=5 // pred_fallthru
      _
    %p291 = scmp.le.s32.totalorder 1, %s12
    %p292 = scmp.lt.s32.totalorder %s12, 17
    %p293 = pnand %p291, %p292
    %p294 = pneg %p293
    // Predicated region
    $region41: #{image_backbone_forward.12} parent=5 // pred_check
      _
    $region42: #{image_backbone_forward.12} parent=5 // pred_check_branch
      %296 = sbr.rel (%p293) target = $region44
    $region43: #{image_backbone_forward.12} parent=5 // pred_region
      %s297 = ssub.s32 %s12, 1
      %p298 = scmp.lt.s32.totalorder %s21, 1
      %s299 = scalar_select %p298, %s21, 1
      %p300 = scmp.lt.s32.totalorder %s22, 10
      %s301 = scalar_select %p300, %s22, 10
      %s302 = smul.addr %s301, 2
      %s303 = smul.addr %s299, 22
      %s304 = sadd.s32 %s302, %s303
      %s305 = smul.addr %s304, 8
      %s306 = scalar_lea.vmem %s0, %s305
      %p307 = pneg %p52
      %p308 = pneg %p49
      %s309 = sadd.s32 %s22, 1
      %p310 = scmp.lt.s32.totalorder %s21, 1
      %s311 = scalar_select %p310, %s21, 1
      %p312 = scmp.lt.s32.totalorder %s309, 10
      %s313 = scalar_select %p312, %s309, 10
      %s314 = smul.addr %s313, 2
      %s315 = smul.addr %s311, 22
      %s316 = sadd.s32 %s314, %s315
      %s317 = smul.addr %s316, 8
      %s318 = scalar_lea.vmem %s1, %s317
      %p319 = pneg %p82
      %p320 = pneg %p79
      %s321 = sadd.s32 %s22, 2
      %p322 = scmp.lt.s32.totalorder %s21, 1
      %s323 = scalar_select %p322, %s21, 1
      %p324 = scmp.lt.s32.totalorder %s321, 10
      %s325 = scalar_select %p324, %s321, 10
      %s326 = smul.addr %s325, 2
      %s327 = smul.addr %s323, 22
      %s328 = sadd.s32 %s326, %s327
      %s329 = smul.addr %s328, 8
      %s330 = scalar_lea.vmem %s2, %s329
      %p331 = pneg %p112
      %p332 = pneg %p109
      %s333 = sadd.s32 %s22, 3
      %p334 = scmp.lt.s32.totalorder %s21, 1
      %s335 = scalar_select %p334, %s21, 1
      %p336 = scmp.lt.s32.totalorder %s333, 10
      %s337 = scalar_select %p336, %s333, 10
      %s338 = smul.addr %s337, 2
      %s339 = smul.addr %s335, 22
      %s340 = sadd.s32 %s338, %s339
      %s341 = smul.addr %s340, 8
      %s342 = scalar_lea.vmem %s3, %s341
      %p343 = pneg %p142
      %p344 = pneg %p139
      %p345 = pneg %p163
      %p346 = pneg %p160
      %p347 = pneg %p184
      %p348 = pneg %p181
      %p349 = pneg %p212
      %p350 = pneg %p209
      %p351 = scmp.lt.s32.totalorder %s21, 1
      %s352 = scalar_select %p351, %s21, 1
      %p353 = scmp.lt.s32.totalorder %s22, 7
      %s354 = scalar_select %p353, %s22, 7
      %s355 = smul.addr %s352, 8
      %s356 = sadd.s32 %s354, %s355
      %s357 = smul.addr %s356, 8
      %s358 = scalar_lea.vmem %s6, %s357
      %p359 = scmp.lt.s32.totalorder %s21, 1
      %s360 = scalar_select %p359, %s21, 1
      %p361 = scmp.lt.s32.totalorder %s22, 10
      %s362 = scalar_select %p361, %s22, 10
      %s363 = smul.addr %s362, 2
      %s364 = smul.addr %s360, 22
      %s365 = sadd.s32 %s363, %s364
      %s366 = smul.addr %s365, 8
      %s367 = scalar_lea.vmem %s0, %s366
      %s368 = sadd.s32 %s22, 1
      %p369 = scmp.lt.s32.totalorder %s21, 1
      %s370 = scalar_select %p369, %s21, 1
      %p371 = scmp.lt.s32.totalorder %s368, 10
      %s372 = scalar_select %p371, %s368, 10
      %s373 = smul.addr %s372, 2
      %s374 = smul.addr %s370, 22
      %s375 = sadd.s32 %s373, %s374
      %s376 = smul.addr %s375, 8
      %s377 = scalar_lea.vmem %s1, %s376
      %s378 = sadd.s32 %s22, 1
      %s379 = sadd.s32 %s22, 2
      %p380 = scmp.lt.s32.totalorder %s21, 1
      %s381 = scalar_select %p380, %s21, 1
      %p382 = scmp.lt.s32.totalorder %s379, 10
      %s383 = scalar_select %p382, %s379, 10
      %s384 = smul.addr %s383, 2
      %s385 = smul.addr %s381, 22
      %s386 = sadd.s32 %s384, %s385
      %s387 = smul.addr %s386, 8
      %s388 = scalar_lea.vmem %s2, %s387
      %s389 = sadd.s32 %s22, 2
      %s390 = sadd.s32 %s22, 3
      %p391 = scmp.lt.s32.totalorder %s21, 1
      %s392 = scalar_select %p391, %s21, 1
      %p393 = scmp.lt.s32.totalorder %s390, 10
      %s394 = scalar_select %p393, %s390, 10
      %s395 = smul.addr %s394, 2
      %s396 = smul.addr %s392, 22
      %s397 = sadd.s32 %s395, %s396
      %s398 = smul.addr %s397, 8
      %s399 = scalar_lea.vmem %s3, %s398
      %s400 = sadd.s32 %s22, 3
      %p401 = scmp.lt.s32.totalorder %s21, 1
      %s402 = scalar_select %p401, %s21, 1
      %p403 = scmp.lt.s32.totalorder %s22, 7
      %s404 = scalar_select %p403, %s22, 7
      %s405 = smul.addr %s402, 8
      %s406 = sadd.s32 %s404, %s405
      %s407 = smul.addr %s406, 8
      %s408 = scalar_lea.vmem %s6, %s407
      %v409 = vld [vmem:[%s4] sm:$0xff]
      %v410 = vld [vmem:[%s4 + $0x8] sm:$0xff]
      %v411 = vld [vmem:[%s4 + $0x10] sm:$0xff]
      %v412 = vld [vmem:[%s4 + $0x18] sm:$0xff]
      %v413 = vld [vmem:[%s4 + $0x20] sm:$0xff]
      %v414 = vld [vmem:[%s4 + $0x28] sm:$0xff]
      %v415 = vld [vmem:[%s4 + $0x30] sm:$0xff]
      %v416 = vld [vmem:[%s4 + $0x38] sm:$0xff]
      %v417 = vld [vmem:[%s4 + $0x40] sm:$0xff]
      %v418 = vld [vmem:[%s4 + $0x48] sm:$0xff]
      %v419 = vld [vmem:[%s4 + $0x50] sm:$0xff]
      %v420 = vld [vmem:[%s4 + $0x58] sm:$0xff]
      %v421 = vld [vmem:[%s4 + $0x60] sm:$0xff]
      %v422 = vld [vmem:[%s4 + $0x68] sm:$0xff]
      %v423 = vld [vmem:[%s4 + $0x70] sm:$0xff]
      %v424 = vld [vmem:[%s4 + $0x78] sm:$0xff]
      %v425 = vld [vmem:[%s4 + $0x80] sm:$0xff]
      %v426 = vld [vmem:[%s4 + $0x88] sm:$0xff]
      %v427 = vld [vmem:[%s4 + $0x90] sm:$0xff]
      %v428 = vld [vmem:[%s4 + $0x98] sm:$0xff]
      %v429 = vld [vmem:[%s4 + $0xa0] sm:$0xff]
      %v430 = vld [vmem:[%s4 + $0xa8] sm:$0xff]
      %v431 = vld [vmem:[%s4 + $0xb0] sm:$0xff]
      %v432 = vld [vmem:[%s4 + $0xb8] sm:$0xff]
      %v433 = vld [vmem:[%s4 + $0xc0] sm:$0xff]
      %v434 = vld [vmem:[%s4 + $0xc8] sm:$0xff]
      %v435 = vld [vmem:[%s4 + $0xd0] sm:$0xff]
      %v436 = vld [vmem:[%s4 + $0xd8] sm:$0xff]
      %v437 = vld [vmem:[%s4 + $0xe0] sm:$0xff]
      %v438 = vld [vmem:[%s4 + $0xe8] sm:$0xff]
      %v439 = vld [vmem:[%s4 + $0xf0] sm:$0xff]
      %v440 = vld [vmem:[%s4 + $0xf8] sm:$0xff]
      %v441 = vld [vmem:[%s5] sm:$0x1]
      %v443 = vlaneseq
      %v444 = vshrl.u32 %v443, 7
      %v445 = vsub.s32 0, %v444
      %v446 = vrot.slane %v441, %v445
      %v448 = vadd.f32 %v446, 0.0
      %v449 = vld [vmem:[%s367] sm:$0xff]
      %v450 = vld [vmem:[%s367 + $0x8] sm:$0x7]
      %vm451 = vcmask 130048
      %v453 = vsel %vm451, %v449, 0
      %455 = vmatprep.subr.mxu0 0.0
      %456 = vmatpush1.msra.mxu0 %v409
      %457 = vmatprep.subr.mxu0 0.0
      %458 = vmatpush1.msra.mxu0 %v410
      %459 = vmatprep.subr.mxu0 0.0
      %460 = vmatpush1.msra.mxu0 0.0
      %461 = vmatprep.subr.mxu0 0.0
      %462 = vmatpush1.msra.mxu0 0.0
      %463 = vmatprep.subr.mxu0 0.0
      %464 = vmatpush1.msra.mxu0 0.0
      %465 = vmatprep.subr.mxu0 0.0
      %466 = vmatpush1.msra.mxu0 0.0
      %467 = vmatprep.subr.mxu0 0.0
      %468 = vmatpush1.msra.mxu0 0.0
      %469 = vmatprep.subr.mxu0 0.0
      %470 = vmatpush1.msra.mxu0 0.0
      %471 = vmatprep.subr.mxu0 0.0
      %472 = vmatpush1.msra.mxu0 0.0
      %473 = vmatprep.subr.mxu0 0.0
      %474 = vmatpush1.msra.mxu0 0.0
      %475 = vmatprep.subr.mxu0 0.0
      %476 = vmatpush1.msra.mxu0 0.0
      %477 = vmatprep.subr.mxu0 0.0
      %478 = vmatpush1.msra.mxu0 0.0
      %479 = vmatprep.subr.mxu0 0.0
      %480 = vmatpush1.msra.mxu0 0.0
      %481 = vmatprep.subr.mxu0 0.0
      %482 = vmatpush1.msra.mxu0 0.0
      %483 = vmatprep.subr.mxu0 0.0
      %484 = vmatpush1.msra.mxu0 0.0
      %485 = vmatprep.subr.mxu0 0.0
      %486 = vmatpush1.msra.mxu0 0.0
      %487 = vmatprep.subr.mxu0 0.0
      %488 = vmatpush1.msra.mxu0 0.0
      %489 = vmatprep.subr.mxu0 0.0
      %490 = vmatpush1.msra.mxu0 0.0
      %491 = vmatprep.subr.mxu0 0.0
      %492 = vmatpush1.msra.mxu0 0.0
      %493 = vmatprep.subr.mxu0 0.0
      %494 = vmatpush1.msra.mxu0 0.0
      %495 = vmatprep.subr.mxu0 0.0
      %496 = vmatpush1.msra.mxu0 0.0
      %497 = vmatprep.subr.mxu0 0.0
      %498 = vmatpush1.msra.mxu0 0.0
      %499 = vmatprep.subr.mxu0 0.0
      %500 = vmatpush1.msra.mxu0 0.0
      %501 = vmatprep.subr.mxu0 0.0
      %502 = vmatpush1.msra.mxu0 0.0
      %503 = vmatprep.subr.mxu0 0.0
      %504 = vmatpush1.msra.mxu0 0.0
      %505 = vmatprep.subr.mxu0 0.0
      %506 = vmatpush1.msra.mxu0 0.0
      %507 = vmatprep.subr.mxu0 0.0
      %508 = vmatpush1.msra.mxu0 0.0
      %509 = vmatprep.subr.mxu0 0.0
      %510 = vmatpush1.msra.mxu0 0.0
      %511 = vmatprep.subr.mxu0 0.0
      %512 = vmatpush1.msra.mxu0 0.0
      %513 = vmatprep.subr.mxu0 0.0
      %514 = vmatpush1.msra.mxu0 0.0
      %515 = vmatprep.subr.mxu0 0.0
      %516 = vmatpush1.msra.mxu0 0.0
      %517 = vmatprep.subr.mxu0 0.0
      %518 = vmatpush1.msra.mxu0 0.0
      %519 = vmatprep.mubr.f32.mxu0 0.0
      %520 = vmatmul.mubr.f32.gmra.mrb[0].mxu0 %v453
      %v521 = vpop.f32.mrb[0].mxu0
      %v522 = vadd.f32 0.0, %v521
      %v523 = vpop.f32.mrb[0].mxu0
      %524 = vdwg.mxu0
      %v525 = vadd.f32 %v448, %v522
      %vm527 = vcmask 1046528
      %v528 = vrot.slane %v449, 1
      %v529 = vrot.slane %v450, 1
      %v530 = vsel %vm527, %v528, %v529
      %v531 = vsel %vm451, %v530, 0
      %533 = vmatprep.subr.mxu0 0.0
      %534 = vmatpush1.msra.mxu0 %v411
      %535 = vmatprep.subr.mxu0 0.0
      %536 = vmatpush1.msra.mxu0 %v412
      %537 = vmatprep.subr.mxu0 0.0
      %538 = vmatpush1.msra.mxu0 0.0
      %539 = vmatprep.subr.mxu0 0.0
      %540 = vmatpush1.msra.mxu0 0.0
      %541 = vmatprep.subr.mxu0 0.0
      %542 = vmatpush1.msra.mxu0 0.0
      %543 = vmatprep.subr.mxu0 0.0
      %544 = vmatpush1.msra.mxu0 0.0
      %545 = vmatprep.subr.mxu0 0.0
      %546 = vmatpush1.msra.mxu0 0.0
      %547 = vmatprep.subr.mxu0 0.0
      %548 = vmatpush1.msra.mxu0 0.0
      %549 = vmatprep.subr.mxu0 0.0
      %550 = vmatpush1.msra.mxu0 0.0
      %551 = vmatprep.subr.mxu0 0.0
      %552 = vmatpush1.msra.mxu0 0.0
      %553 = vmatprep.subr.mxu0 0.0
      %554 = vmatpush1.msra.mxu0 0.0
      %555 = vmatprep.subr.mxu0 0.0
      %556 = vmatpush1.msra.mxu0 0.0
      %557 = vmatprep.subr.mxu0 0.0
      %558 = vmatpush1.msra.mxu0 0.0
      %559 = vmatprep.subr.mxu0 0.0
      %560 = vmatpush1.msra.mxu0 0.0
      %561 = vmatprep.subr.mxu0 0.0
      %562 = vmatpush1.msra.mxu0 0.0
      %563 = vmatprep.subr.mxu0 0.0
      %564 = vmatpush1.msra.mxu0 0.0
      %565 = vmatprep.subr.mxu0 0.0
      %566 = vmatpush1.msra.mxu0 0.0
      %567 = vmatprep.subr.mxu0 0.0
      %568 = vmatpush1.msra.mxu0 0.0
      %569 = vmatprep.subr.mxu0 0.0
      %570 = vmatpush1.msra.mxu0 0.0
      %571 = vmatprep.subr.mxu0 0.0
      %572 = vmatpush1.msra.mxu0 0.0
      %573 = vmatprep.subr.mxu0 0.0
      %574 = vmatpush1.msra.mxu0 0.0
      %575 = vmatprep.subr.mxu0 0.0
      %576 = vmatpush1.msra.mxu0 0.0
      %577 = vmatprep.subr.mxu0 0.0
      %578 = vmatpush1.msra.mxu0 0.0
      %579 = vmatprep.subr.mxu0 0.0
      %580 = vmatpush1.msra.mxu0 0.0
      %581 = vmatprep.subr.mxu0 0.0
      %582 = vmatpush1.msra.mxu0 0.0
      %583 = vmatprep.subr.mxu0 0.0
      %584 = vmatpush1.msra.mxu0 0.0
      %585 = vmatprep.subr.mxu0 0.0
      %586 = vmatpush1.msra.mxu0 0.0
      %587 = vmatprep.subr.mxu0 0.0
      %588 = vmatpush1.msra.mxu0 0.0
      %589 = vmatprep.subr.mxu0 0.0
      %590 = vmatpush1.msra.mxu0 0.0
      %591 = vmatprep.subr.mxu0 0.0
      %592 = vmatpush1.msra.mxu0 0.0
      %593 = vmatprep.subr.mxu0 0.0
      %594 = vmatpush1.msra.mxu0 0.0
      %595 = vmatprep.subr.mxu0 0.0
      %596 = vmatpush1.msra.mxu0 0.0
      %597 = vmatprep.mubr.f32.mxu0 0.0
      %598 = vmatmul.mubr.f32.gmra.mrb[0].mxu0 %v531
      %v599 = vpop.f32.mrb[0].mxu0
      %v600 = vadd.f32 0.0, %v599
      %v601 = vpop.f32.mrb[0].mxu0
      %602 = vdwg.mxu0
      %v603 = vadd.f32 %v525, %v600
      %vm604 = vcmask 1045504
      %v605 = vrot.slane %v449, 2
      %v606 = vrot.slane %v450, 2
      %v607 = vsel %vm604, %v605, %v606
      %v608 = vsel %vm451, %v607, 0
      %610 = vmatprep.subr.mxu0 0.0
      %611 = vmatpush1.msra.mxu0 %v413
      %612 = vmatprep.subr.mxu0 0.0
      %613 = vmatpush1.msra.mxu0 %v414
      %614 = vmatprep.subr.mxu0 0.0
      %615 = vmatpush1.msra.mxu0 0.0
      %616 = vmatprep.subr.mxu0 0.0
      %617 = vmatpush1.msra.mxu0 0.0
      %618 = vmatprep.subr.mxu0 0.0
      %619 = vmatpush1.msra.mxu0 0.0
      %620 = vmatprep.subr.mxu0 0.0
      %621 = vmatpush1.msra.mxu0 0.0
      %622 = vmatprep.subr.mxu0 0.0
      %623 = vmatpush1.msra.mxu0 0.0
      %624 = vmatprep.subr.mxu0 0.0
      %625 = vmatpush1.msra.mxu0 0.0
      %626 = vmatprep.subr.mxu0 0.0
      %627 = vmatpush1.msra.mxu0 0.0
      %628 = vmatprep.subr.mxu0 0.0
      %629 = vmatpush1.msra.mxu0 0.0
      %630 = vmatprep.subr.mxu0 0.0
      %631 = vmatpush1.msra.mxu0 0.0
      %632 = vmatprep.subr.mxu0 0.0
      %633 = vmatpush1.msra.mxu0 0.0
      %634 = vmatprep.subr.mxu0 0.0
      %635 = vmatpush1.msra.mxu0 0.0
      %636 = vmatprep.subr.mxu0 0.0
      %637 = vmatpush1.msra.mxu0 0.0
      %638 = vmatprep.subr.mxu0 0.0
      %639 = vmatpush1.msra.mxu0 0.0
      %640 = vmatprep.subr.mxu0 0.0
      %641 = vmatpush1.msra.mxu0 0.0
      %642 = vmatprep.subr.mxu0 0.0
      %643 = vmatpush1.msra.mxu0 0.0
      %644 = vmatprep.subr.mxu0 0.0
      %645 = vmatpush1.msra.mxu0 0.0
      %646 = vmatprep.subr.mxu0 0.0
      %647 = vmatpush1.msra.mxu0 0.0
      %648 = vmatprep.subr.mxu0 0.0
      %649 = vmatpush1.msra.mxu0 0.0
      %650 = vmatprep.subr.mxu0 0.0
      %651 = vmatpush1.msra.mxu0 0.0
      %652 = vmatprep.subr.mxu0 0.0
      %653 = vmatpush1.msra.mxu0 0.0
      %654 = vmatprep.subr.mxu0 0.0
      %655 = vmatpush1.msra.mxu0 0.0
      %656 = vmatprep.subr.mxu0 0.0
      %657 = vmatpush1.msra.mxu0 0.0
      %658 = vmatprep.subr.mxu0 0.0
      %659 = vmatpush1.msra.mxu0 0.0
      %660 = vmatprep.subr.mxu0 0.0
      %661 = vmatpush1.msra.mxu0 0.0
      %662 = vmatprep.subr.mxu0 0.0
      %663 = vmatpush1.msra.mxu0 0.0
      %664 = vmatprep.subr.mxu0 0.0
      %665 = vmatpush1.msra.mxu0 0.0
      %666 = vmatprep.subr.mxu0 0.0
      %667 = vmatpush1.msra.mxu0 0.0
      %668 = vmatprep.subr.mxu0 0.0
      %669 = vmatpush1.msra.mxu0 0.0
      %670 = vmatprep.subr.mxu0 0.0
      %671 = vmatpush1.msra.mxu0 0.0
      %672 = vmatprep.subr.mxu0 0.0
      %673 = vmatpush1.msra.mxu0 0.0
      %674 = vmatprep.mubr.f32.mxu0 0.0
      %675 = vmatmul.mubr.f32.gmra.mrb[0].mxu0 %v608
      %v676 = vpop.f32.mrb[0].mxu0
      %v677 = vadd.f32 0.0, %v676
      %v678 = vpop.f32.mrb[0].mxu0
      %679 = vdwg.mxu0
      %v680 = vadd.f32 %v603, %v677
      %vm681 = vcmask 1044480
      %v682 = vrot.slane %v449, 3
      %v683 = vrot.slane %v450, 3
      %v684 = vsel %vm681, %v682, %v683
      %v685 = vsel %vm451, %v684, 0
      %687 = vmatprep.subr.mxu0 0.0
      %688 = vmatpush1.msra.mxu0 %v415
      %689 = vmatprep.subr.mxu0 0.0
      %690 = vmatpush1.msra.mxu0 %v416
      %691 = vmatprep.subr.mxu0 0.0
      %692 = vmatpush1.msra.mxu0 0.0
      %693 = vmatprep.subr.mxu0 0.0
      %694 = vmatpush1.msra.mxu0 0.0
      %695 = vmatprep.subr.mxu0 0.0
      %696 = vmatpush1.msra.mxu0 0.0
      %697 = vmatprep.subr.mxu0 0.0
      %698 = vmatpush1.msra.mxu0 0.0
      %699 = vmatprep.subr.mxu0 0.0
      %700 = vmatpush1.msra.mxu0 0.0
      %701 = vmatprep.subr.mxu0 0.0
      %702 = vmatpush1.msra.mxu0 0.0
      %703 = vmatprep.subr.mxu0 0.0
      %704 = vmatpush1.msra.mxu0 0.0
      %705 = vmatprep.subr.mxu0 0.0
      %706 = vmatpush1.msra.mxu0 0.0
      %707 = vmatprep.subr.mxu0 0.0
      %708 = vmatpush1.msra.mxu0 0.0
      %709 = vmatprep.subr.mxu0 0.0
      %710 = vmatpush1.msra.mxu0 0.0
      %711 = vmatprep.subr.mxu0 0.0
      %712 = vmatpush1.msra.mxu0 0.0
      %713 = vmatprep.subr.mxu0 0.0
      %714 = vmatpush1.msra.mxu0 0.0
      %715 = vmatprep.subr.mxu0 0.0
      %716 = vmatpush1.msra.mxu0 0.0
      %717 = vmatprep.subr.mxu0 0.0
      %718 = vmatpush1.msra.mxu0 0.0
      %719 = vmatprep.subr.mxu0 0.0
      %720 = vmatpush1.msra.mxu0 0.0
      %721 = vmatprep.subr.mxu0 0.0
      %722 = vmatpush1.msra.mxu0 0.0
      %723 = vmatprep.subr.mxu0 0.0
      %724 = vmatpush1.msra.mxu0 0.0
      %725 = vmatprep.subr.mxu0 0.0
      %726 = vmatpush1.msra.mxu0 0.0
      %727 = vmatprep.subr.mxu0 0.0
      %728 = vmatpush1.msra.mxu0 0.0
      %729 = vmatprep.subr.mxu0 0.0
      %730 = vmatpush1.msra.mxu0 0.0
      %731 = vmatprep.subr.mxu0 0.0
      %732 = vmatpush1.msra.mxu0 0.0
      %733 = vmatprep.subr.mxu0 0.0
      %734 = vmatpush1.msra.mxu0 0.0
      %735 = vmatprep.subr.mxu0 0.0
      %736 = vmatpush1.msra.mxu0 0.0
      %737 = vmatprep.subr.mxu0 0.0
      %738 = vmatpush1.msra.mxu0 0.0
      %739 = vmatprep.subr.mxu0 0.0
      %740 = vmatpush1.msra.mxu0 0.0
      %741 = vmatprep.subr.mxu0 0.0
      %742 = vmatpush1.msra.mxu0 0.0
      %743 = vmatprep.subr.mxu0 0.0
      %744 = vmatpush1.msra.mxu0 0.0
      %745 = vmatprep.subr.mxu0 0.0
      %746 = vmatpush1.msra.mxu0 0.0
      %747 = vmatprep.subr.mxu0 0.0
      %748 = vmatpush1.msra.mxu0 0.0
      %749 = vmatprep.subr.mxu0 0.0
      %750 = vmatpush1.msra.mxu0 0.0
      %751 = vmatprep.mubr.f32.mxu0 0.0
      %752 = vmatmul.mubr.f32.gmra.mrb[0].mxu0 %v685
      %v753 = vpop.f32.mrb[0].mxu0
      %v754 = vadd.f32 0.0, %v753
      %v755 = vpop.f32.mrb[0].mxu0
      %756 = vdwg.mxu0
      %v757 = vadd.f32 %v680, %v754
      %v758 = vld [vmem:[%s377] sm:$0xff]
      %v759 = vld [vmem:[%s377 + $0x8] sm:$0x7]
      %v761 = vsel %vm451, %v758, 0
      %763 = vmatprep.subr.mxu0 0.0
      %764 = vmatpush1.msra.mxu0 %v417
      %765 = vmatprep.subr.mxu0 0.0
      %766 = vmatpush1.msra.mxu0 %v418
      %767 = vmatprep.subr.mxu0 0.0
      %768 = vmatpush1.msra.mxu0 0.0
      %769 = vmatprep.subr.mxu0 0.0
      %770 = vmatpush1.msra.mxu0 0.0
      %771 = vmatprep.subr.mxu0 0.0
      %772 = vmatpush1.msra.mxu0 0.0
      %773 = vmatprep.subr.mxu0 0.0
      %774 = vmatpush1.msra.mxu0 0.0
      %775 = vmatprep.subr.mxu0 0.0
      %776 = vmatpush1.msra.mxu0 0.0
      %777 = vmatprep.subr.mxu0 0.0
      %778 = vmatpush1.msra.mxu0 0.0
      %779 = vmatprep.subr.mxu0 0.0
      %780 = vmatpush1.msra.mxu0 0.0
      %781 = vmatprep.subr.mxu0 0.0
      %782 = vmatpush1.msra.mxu0 0.0
      %783 = vmatprep.subr.mxu0 0.0
      %784 = vmatpush1.msra.mxu0 0.0
      %785 = vmatprep.subr.mxu0 0.0
      %786 = vmatpush1.msra.mxu0 0.0
      %787 = vmatprep.subr.mxu0 0.0
      %788 = vmatpush1.msra.mxu0 0.0
      %789 = vmatprep.subr.mxu0 0.0
      %790 = vmatpush1.msra.mxu0 0.0
      %791 = vmatprep.subr.mxu0 0.0
      %792 = vmatpush1.msra.mxu0 0.0
      %793 = vmatprep.subr.mxu0 0.0
      %794 = vmatpush1.msra.mxu0 0.0
      %795 = vmatprep.subr.mxu0 0.0
      %796 = vmatpush1.msra.mxu0 0.0
      %797 = vmatprep.subr.mxu0 0.0
      %798 = vmatpush1.msra.mxu0 0.0
      %799 = vmatprep.subr.mxu0 0.0
      %800 = vmatpush1.msra.mxu0 0.0
      %801 = vmatprep.subr.mxu0 0.0
      %802 = vmatpush1.msra.mxu0 0.0
      %803 = vmatprep.subr.mxu0 0.0
      %804 = vmatpush1.msra.mxu0 0.0
      %805 = vmatprep.subr.mxu0 0.0
      %806 = vmatpush1.msra.mxu0 0.0
      %807 = vmatprep.subr.mxu0 0.0
      %808 = vmatpush1.msra.mxu0 0.0
      %809 = vmatprep.subr.mxu0 0.0
      %810 = vmatpush1.msra.mxu0 0.0
      %811 = vmatprep.subr.mxu0 0.0
      %812 = vmatpush1.msra.mxu0 0.0
      %813 = vmatprep.subr.mxu0 0.0
      %814 = vmatpush1.msra.mxu0 0.0
      %815 = vmatprep.subr.mxu0 0.0
      %816 = vmatpush1.msra.mxu0 0.0
      %817 = vmatprep.subr.mxu0 0.0
      %818 = vmatpush1.msra.mxu0 0.0
      %819 = vmatprep.subr.mxu0 0.0
      %820 = vmatpush1.msra.mxu0 0.0
      %821 = vmatprep.subr.mxu0 0.0
      %822 = vmatpush1.msra.mxu0 0.0
      %823 = vmatprep.subr.mxu0 0.0
      %824 = vmatpush1.msra.mxu0 0.0
      %825 = vmatprep.subr.mxu0 0.0
      %826 = vmatpush1.msra.mxu0 0.0
      %827 = vmatprep.mubr.f32.mxu0 0.0
      %828 = vmatmul.mubr.f32.gmra.mrb[0].mxu0 %v761
      %v829 = vpop.f32.mrb[0].mxu0
      %v830 = vadd.f32 0.0, %v829
      %v831 = vpop.f32.mrb[0].mxu0
      %832 = vdwg.mxu0
      %v833 = vadd.f32 %v757, %v830
      %v835 = vrot.slane %v758, 1
      %v836 = vrot.slane %v759, 1
      %v837 = vsel %vm527, %v835, %v836
      %v838 = vsel %vm451, %v837, 0
      %840 = vmatprep.subr.mxu0 0.0
      %841 = vmatpush1.msra.mxu0 %v419
      %842 = vmatprep.subr.mxu0 0.0
      %843 = vmatpush1.msra.mxu0 %v420
      %844 = vmatprep.subr.mxu0 0.0
      %845 = vmatpush1.msra.mxu0 0.0
      %846 = vmatprep.subr.mxu0 0.0
      %847 = vmatpush1.msra.mxu0 0.0
      %848 = vmatprep.subr.mxu0 0.0
      %849 = vmatpush1.msra.mxu0 0.0
      %850 = vmatprep.subr.mxu0 0.0
      %851 = vmatpush1.msra.mxu0 0.0
      %852 = vmatprep.subr.mxu0 0.0
      %853 = vmatpush1.msra.mxu0 0.0
      %854 = vmatprep.subr.mxu0 0.0
      %855 = vmatpush1.msra.mxu0 0.0
      %856 = vmatprep.subr.mxu0 0.0
      %857 = vmatpush1.msra.mxu0 0.0
      %858 = vmatprep.subr.mxu0 0.0
      %859 = vmatpush1.msra.mxu0 0.0
      %860 = vmatprep.subr.mxu0 0.0
      %861 = vmatpush1.msra.mxu0 0.0
      %862 = vmatprep.subr.mxu0 0.0
      %863 = vmatpush1.msra.mxu0 0.0
      %864 = vmatprep.subr.mxu0 0.0
      %865 = vmatpush1.msra.mxu0 0.0
      %866 = vmatprep.subr.mxu0 0.0
      %867 = vmatpush1.msra.mxu0 0.0
      %868 = vmatprep.subr.mxu0 0.0
      %869 = vmatpush1.msra.mxu0 0.0
      %870 = vmatprep.subr.mxu0 0.0
      %871 = vmatpush1.msra.mxu0 0.0
      %872 = vmatprep.subr.mxu0 0.0
      %873 = vmatpush1.msra.mxu0 0.0
      %874 = vmatprep.subr.mxu0 0.0
      %875 = vmatpush1.msra.mxu0 0.0
      %876 = vmatprep.subr.mxu0 0.0
      %877 = vmatpush1.msra.mxu0 0.0
      %878 = vmatprep.subr.mxu0 0.0
      %879 = vmatpush1.msra.mxu0 0.0
      %880 = vmatprep.subr.mxu0 0.0
      %881 = vmatpush1.msra.mxu0 0.0
      %882 = vmatprep.subr.mxu0 0.0
      %883 = vmatpush1.msra.mxu0 0.0
      %884 = vmatprep.subr.mxu0 0.0
      %885 = vmatpush1.msra.mxu0 0.0
      %886 = vmatprep.subr.mxu0 0.0
      %887 = vmatpush1.msra.mxu0 0.0
      %888 = vmatprep.subr.mxu0 0.0
      %889 = vmatpush1.msra.mxu0 0.0
      %890 = vmatprep.subr.mxu0 0.0
      %891 = vmatpush1.msra.mxu0 0.0
      %892 = vmatprep.subr.mxu0 0.0
      %893 = vmatpush1.msra.mxu0 0.0
      %894 = vmatprep.subr.mxu0 0.0
      %895 = vmatpush1.msra.mxu0 0.0
      %896 = vmatprep.subr.mxu0 0.0
      %897 = vmatpush1.msra.mxu0 0.0
      %898 = vmatprep.subr.mxu0 0.0
      %899 = vmatpush1.msra.mxu0 0.0
      %900 = vmatprep.subr.mxu0 0.0
      %901 = vmatpush1.msra.mxu0 0.0
      %902 = vmatprep.subr.mxu0 0.0
      %903 = vmatpush1.msra.mxu0 0.0
      %904 = vmatprep.mubr.f32.mxu0 0.0
      %905 = vmatmul.mubr.f32.gmra.mrb[0].mxu0 %v838
      %v906 = vpop.f32.mrb[0].mxu0
      %v907 = vadd.f32 0.0, %v906
      %v908 = vpop.f32.mrb[0].mxu0
      %909 = vdwg.mxu0
      %v910 = vadd.f32 %v833, %v907
      %v911 = vrot.slane %v758, 2
      %v912 = vrot.slane %v759, 2
      %v913 = vsel %vm604, %v911, %v912
      %v914 = vsel %vm451, %v913, 0
      %916 = vmatprep.subr.mxu0 0.0
      %917 = vmatpush1.msra.mxu0 %v421
      %918 = vmatprep.subr.mxu0 0.0
      %919 = vmatpush1.msra.mxu0 %v422
      %920 = vmatprep.subr.mxu0 0.0
      %921 = vmatpush1.msra.mxu0 0.0
      %922 = vmatprep.subr.mxu0 0.0
      %923 = vmatpush1.msra.mxu0 0.0
      %924 = vmatprep.subr.mxu0 0.0
      %925 = vmatpush1.msra.mxu0 0.0
      %926 = vmatprep.subr.mxu0 0.0
      %927 = vmatpush1.msra.mxu0 0.0
      %928 = vmatprep.subr.mxu0 0.0
      %929 = vmatpush1.msra.mxu0 0.0
      %930 = vmatprep.subr.mxu0 0.0
      %931 = vmatpush1.msra.mxu0 0.0
      %932 = vmatprep.subr.mxu0 0.0
      %933 = vmatpush1.msra.mxu0 0.0
      %934 = vmatprep.subr.mxu0 0.0
      %935 = vmatpush1.msra.mxu0 0.0
      %936 = vmatprep.subr.mxu0 0.0
      %937 = vmatpush1.msra.mxu0 0.0
      %938 = vmatprep.subr.mxu0 0.0
      %939 = vmatpush1.msra.mxu0 0.0
      %940 = vmatprep.subr.mxu0 0.0
      %941 = vmatpush1.msra.mxu0 0.0
      %942 = vmatprep.subr.mxu0 0.0
      %943 = vmatpush1.msra.mxu0 0.0
      %944 = vmatprep.subr.mxu0 0.0
      %945 = vmatpush1.msra.mxu0 0.0
      %946 = vmatprep.subr.mxu0 0.0
      %947 = vmatpush1.msra.mxu0 0.0
      %948 = vmatprep.subr.mxu0 0.0
      %949 = vmatpush1.msra.mxu0 0.0
      %950 = vmatprep.subr.mxu0 0.0
      %951 = vmatpush1.msra.mxu0 0.0
      %952 = vmatprep.subr.mxu0 0.0
      %953 = vmatpush1.msra.mxu0 0.0
      %954 = vmatprep.subr.mxu0 0.0
      %955 = vmatpush1.msra.mxu0 0.0
      %956 = vmatprep.subr.mxu0 0.0
      %957 = vmatpush1.msra.mxu0 0.0
      %958 = vmatprep.subr.mxu0 0.0
      %959 = vmatpush1.msra.mxu0 0.0
      %960 = vmatprep.subr.mxu0 0.0
      %961 = vmatpush1.msra.mxu0 0.0
      %962 = vmatprep.subr.mxu0 0.0
      %963 = vmatpush1.msra.mxu0 0.0
      %964 = vmatprep.subr.mxu0 0.0
      %965 = vmatpush1.msra.mxu0 0.0
      %966 = vmatprep.subr.mxu0 0.0
      %967 = vmatpush1.msra.mxu0 0.0
      %968 = vmatprep.subr.mxu0 0.0
      %969 = vmatpush1.msra.mxu0 0.0
      %970 = vmatprep.subr.mxu0 0.0
      %971 = vmatpush1.msra.mxu0 0.0
      %972 = vmatprep.subr.mxu0 0.0
      %973 = vmatpush1.msra.mxu0 0.0
      %974 = vmatprep.subr.mxu0 0.0
      %975 = vmatpush1.msra.mxu0 0.0
      %976 = vmatprep.subr.mxu0 0.0
      %977 = vmatpush1.msra.mxu0 0.0
      %978 = vmatprep.subr.mxu0 0.0
      %979 = vmatpush1.msra.mxu0 0.0
      %980 = vmatprep.mubr.f32.mxu0 0.0
      %981 = vmatmul.mubr.f32.gmra.mrb[0].mxu0 %v914
      %v982 = vpop.f32.mrb[0].mxu0
      %v983 = vadd.f32 0.0, %v982
      %v984 = vpop.f32.mrb[0].mxu0
      %985 = vdwg.mxu0
      %v986 = vadd.f32 %v910, %v983
      %v987 = vrot.slane %v758, 3
      %v988 = vrot.slane %v759, 3
      %v989 = vsel %vm681, %v987, %v988
      %v990 = vsel %vm451, %v989, 0
      %992 = vmatprep.subr.mxu0 0.0
      %993 = vmatpush1.msra.mxu0 %v423
      %994 = vmatprep.subr.mxu0 0.0
      %995 = vmatpush1.msra.mxu0 %v424
      %996 = vmatprep.subr.mxu0 0.0
      %997 = vmatpush1.msra.mxu0 0.0
      %998 = vmatprep.subr.mxu0 0.0
      %999 = vmatpush1.msra.mxu0 0.0
      %1000 = vmatprep.subr.mxu0 0.0
      %1001 = vmatpush1.msra.mxu0 0.0
      %1002 = vmatprep.subr.mxu0 0.0
      %1003 = vmatpush1.msra.mxu0 0.0
      %1004 = vmatprep.subr.mxu0 0.0
      %1005 = vmatpush1.msra.mxu0 0.0
      %1006 = vmatprep.subr.mxu0 0.0
      %1007 = vmatpush1.msra.mxu0 0.0
      %1008 = vmatprep.subr.mxu0 0.0
      %1009 = vmatpush1.msra.mxu0 0.0
      %1010 = vmatprep.subr.mxu0 0.0
      %1011 = vmatpush1.msra.mxu0 0.0
      %1012 = vmatprep.subr.mxu0 0.0
      %1013 = vmatpush1.msra.mxu0 0.0
      %1014 = vmatprep.subr.mxu0 0.0
      %1015 = vmatpush1.msra.mxu0 0.0
      %1016 = vmatprep.subr.mxu0 0.0
      %1017 = vmatpush1.msra.mxu0 0.0
      %1018 = vmatprep.subr.mxu0 0.0
      %1019 = vmatpush1.msra.mxu0 0.0
      %1020 = vmatprep.subr.mxu0 0.0
      %1021 = vmatpush1.msra.mxu0 0.0
      %1022 = vmatprep.subr.mxu0 0.0
      %1023 = vmatpush1.msra.mxu0 0.0
      %1024 = vmatprep.subr.mxu0 0.0
      %1025 = vmatpush1.msra.mxu0 0.0
      %1026 = vmatprep.subr.mxu0 0.0
      %1027 = vmatpush1.msra.mxu0 0.0
      %1028 = vmatprep.subr.mxu0 0.0
      %1029 = vmatpush1.msra.mxu0 0.0
      %1030 = vmatprep.subr.mxu0 0.0
      %1031 = vmatpush1.msra.mxu0 0.0
      %1032 = vmatprep.subr.mxu0 0.0
      %1033 = vmatpush1.msra.mxu0 0.0
      %1034 = vmatprep.subr.mxu0 0.0
      %1035 = vmatpush1.msra.mxu0 0.0
      %1036 = vmatprep.subr.mxu0 0.0
      %1037 = vmatpush1.msra.mxu0 0.0
      %1038 = vmatprep.subr.mxu0 0.0
      %1039 = vmatpush1.msra.mxu0 0.0
      %1040 = vmatprep.subr.mxu0 0.0
      %1041 = vmatpush1.msra.mxu0 0.0
      %1042 = vmatprep.subr.mxu0 0.0
      %1043 = vmatpush1.msra.mxu0 0.0
      %1044 = vmatprep.subr.mxu0 0.0
      %1045 = vmatpush1.msra.mxu0 0.0
      %1046 = vmatprep.subr.mxu0 0.0
      %1047 = vmatpush1.msra.mxu0 0.0
      %1048 = vmatprep.subr.mxu0 0.0
      %1049 = vmatpush1.msra.mxu0 0.0
      %1050 = vmatprep.subr.mxu0 0.0
      %1051 = vmatpush1.msra.mxu0 0.0
      %1052 = vmatprep.subr.mxu0 0.0
      %1053 = vmatpush1.msra.mxu0 0.0
      %1054 = vmatprep.subr.mxu0 0.0
      %1055 = vmatpush1.msra.mxu0 0.0
      %1056 = vmatprep.mubr.f32.mxu0 0.0
      %1057 = vmatmul.mubr.f32.gmra.mrb[0].mxu0 %v990
      %v1058 = vpop.f32.mrb[0].mxu0
      %v1059 = vadd.f32 0.0, %v1058
      %v1060 = vpop.f32.mrb[0].mxu0
      %1061 = vdwg.mxu0
      %v1062 = vadd.f32 %v986, %v1059
      %v1063 = vld [vmem:[%s388] sm:$0xff]
      %v1064 = vld [vmem:[%s388 + $0x8] sm:$0x7]
      %v1066 = vsel %vm451, %v1063, 0
      %1068 = vmatprep.subr.mxu0 0.0
      %1069 = vmatpush1.msra.mxu0 %v425
      %1070 = vmatprep.subr.mxu0 0.0
      %1071 = vmatpush1.msra.mxu0 %v426
      %1072 = vmatprep.subr.mxu0 0.0
      %1073 = vmatpush1.msra.mxu0 0.0
      %1074 = vmatprep.subr.mxu0 0.0
      %1075 = vmatpush1.msra.mxu0 0.0
      %1076 = vmatprep.subr.mxu0 0.0
      %1077 = vmatpush1.msra.mxu0 0.0
      %1078 = vmatprep.subr.mxu0 0.0
      %1079 = vmatpush1.msra.mxu0 0.0
      %1080 = vmatprep.subr.mxu0 0.0
      %1081 = vmatpush1.msra.mxu0 0.0
      %1082 = vmatprep.subr.mxu0 0.0
      %1083 = vmatpush1.msra.mxu0 0.0
      %1084 = vmatprep.subr.mxu0 0.0
      %1085 = vmatpush1.msra.mxu0 0.0
      %1086 = vmatprep.subr.mxu0 0.0
      %1087 = vmatpush1.msra.mxu0 0.0
      %1088 = vmatprep.subr.mxu0 0.0
      %1089 = vmatpush1.msra.mxu0 0.0
      %1090 = vmatprep.subr.mxu0 0.0
      %1091 = vmatpush1.msra.mxu0 0.0
      %1092 = vmatprep.subr.mxu0 0.0
      %1093 = vmatpush1.msra.mxu0 0.0
      %1094 = vmatprep.subr.mxu0 0.0
      %1095 = vmatpush1.msra.mxu0 0.0
      %1096 = vmatprep.subr.mxu0 0.0
      %1097 = vmatpush1.msra.mxu0 0.0
      %1098 = vmatprep.subr.mxu0 0.0
      %1099 = vmatpush1.msra.mxu0 0.0
      %1100 = vmatprep.subr.mxu0 0.0
      %1101 = vmatpush1.msra.mxu0 0.0
      %1102 = vmatprep.subr.mxu0 0.0
      %1103 = vmatpush1.msra.mxu0 0.0
      %1104 = vmatprep.subr.mxu0 0.0
      %1105 = vmatpush1.msra.mxu0 0.0
      %1106 = vmatprep.subr.mxu0 0.0
      %1107 = vmatpush1.msra.mxu0 0.0
      %1108 = vmatprep.subr.mxu0 0.0
      %1109 = vmatpush1.msra.mxu0 0.0
      %1110 = vmatprep.subr.mxu0 0.0
      %1111 = vmatpush1.msra.mxu0 0.0
      %1112 = vmatprep.subr.mxu0 0.0
      %1113 = vmatpush1.msra.mxu0 0.0
      %1114 = vmatprep.subr.mxu0 0.0
      %1115 = vmatpush1.msra.mxu0 0.0
      %1116 = vmatprep.subr.mxu0 0.0
      %1117 = vmatpush1.msra.mxu0 0.0
      %1118 = vmatprep.subr.mxu0 0.0
      %1119 = vmatpush1.msra.mxu0 0.0
      %1120 = vmatprep.subr.mxu0 0.0
      %1121 = vmatpush1.msra.mxu0 0.0
      %1122 = vmatprep.subr.mxu0 0.0
      %1123 = vmatpush1.msra.mxu0 0.0
      %1124 = vmatprep.subr.mxu0 0.0
      %1125 = vmatpush1.msra.mxu0 0.0
      %1126 = vmatprep.subr.mxu0 0.0
      %1127 = vmatpush1.msra.mxu0 0.0
      %1128 = vmatprep.subr.mxu0 0.0
      %1129 = vmatpush1.msra.mxu0 0.0
      %1130 = vmatprep.subr.mxu0 0.0
      %1131 = vmatpush1.msra.mxu0 0.0
      %1132 = vmatprep.mubr.f32.mxu0 0.0
      %1133 = vmatmul.mubr.f32.gmra.mrb[0].mxu0 %v1066
      %v1134 = vpop.f32.mrb[0].mxu0
      %v1135 = vadd.f32 0.0, %v1134
      %v1136 = vpop.f32.mrb[0].mxu0
      %1137 = vdwg.mxu0
      %v1138 = vadd.f32 %v1062, %v1135
      %v1140 = vrot.slane %v1063, 1
      %v1141 = vrot.slane %v1064, 1
      %v1142 = vsel %vm527, %v1140, %v1141
      %v1143 = vsel %vm451, %v1142, 0
      %1145 = vmatprep.subr.mxu0 0.0
      %1146 = vmatpush1.msra.mxu0 %v427
      %1147 = vmatprep.subr.mxu0 0.0
      %1148 = vmatpush1.msra.mxu0 %v428
      %1149 = vmatprep.subr.mxu0 0.0
      %1150 = vmatpush1.msra.mxu0 0.0
      %1151 = vmatprep.subr.mxu0 0.0
      %1152 = vmatpush1.msra.mxu0 0.0
      %1153 = vmatprep.subr.mxu0 0.0
      %1154 = vmatpush1.msra.mxu0 0.0
      %1155 = vmatprep.subr.mxu0 0.0
      %1156 = vmatpush1.msra.mxu0 0.0
      %1157 = vmatprep.subr.mxu0 0.0
      %1158 = vmatpush1.msra.mxu0 0.0
      %1159 = vmatprep.subr.mxu0 0.0
      %1160 = vmatpush1.msra.mxu0 0.0
      %1161 = vmatprep.subr.mxu0 0.0
      %1162 = vmatpush1.msra.mxu0 0.0
      %1163 = vmatprep.subr.mxu0 0.0
      %1164 = vmatpush1.msra.mxu0 0.0
      %1165 = vmatprep.subr.mxu0 0.0
      %1166 = vmatpush1.msra.mxu0 0.0
      %1167 = vmatprep.subr.mxu0 0.0
      %1168 = vmatpush1.msra.mxu0 0.0
      %1169 = vmatprep.subr.mxu0 0.0
      %1170 = vmatpush1.msra.mxu0 0.0
      %1171 = vmatprep.subr.mxu0 0.0
      %1172 = vmatpush1.msra.mxu0 0.0
      %1173 = vmatprep.subr.mxu0 0.0
      %1174 = vmatpush1.msra.mxu0 0.0
      %1175 = vmatprep.subr.mxu0 0.0
      %1176 = vmatpush1.msra.mxu0 0.0
      %1177 = vmatprep.subr.mxu0 0.0
      %1178 = vmatpush1.msra.mxu0 0.0
      %1179 = vmatprep.subr.mxu0 0.0
      %1180 = vmatpush1.msra.mxu0 0.0
      %1181 = vmatprep.subr.mxu0 0.0
      %1182 = vmatpush1.msra.mxu0 0.0
      %1183 = vmatprep.subr.mxu0 0.0
      %1184 = vmatpush1.msra.mxu0 0.0
      %1185 = vmatprep.subr.mxu0 0.0
      %1186 = vmatpush1.msra.mxu0 0.0
      %1187 = vmatprep.subr.mxu0 0.0
      %1188 = vmatpush1.msra.mxu0 0.0
      %1189 = vmatprep.subr.mxu0 0.0
      %1190 = vmatpush1.msra.mxu0 0.0
      %1191 = vmatprep.subr.mxu0 0.0
      %1192 = vmatpush1.msra.mxu0 0.0
      %1193 = vmatprep.subr.mxu0 0.0
      %1194 = vmatpush1.msra.mxu0 0.0
      %1195 = vmatprep.subr.mxu0 0.0
      %1196 = vmatpush1.msra.mxu0 0.0
      %1197 = vmatprep.subr.mxu0 0.0
      %1198 = vmatpush1.msra.mxu0 0.0
      %1199 = vmatprep.subr.mxu0 0.0
      %1200 = vmatpush1.msra.mxu0 0.0
      %1201 = vmatprep.subr.mxu0 0.0
      %1202 = vmatpush1.msra.mxu0 0.0
      %1203 = vmatprep.subr.mxu0 0.0
      %1204 = vmatpush1.msra.mxu0 0.0
      %1205 = vmatprep.subr.mxu0 0.0
      %1206 = vmatpush1.msra.mxu0 0.0
      %1207 = vmatprep.subr.mxu0 0.0
      %1208 = vmatpush1.msra.mxu0 0.0
      %1209 = vmatprep.mubr.f32.mxu0 0.0
      %1210 = vmatmul.mubr.f32.gmra.mrb[0].mxu0 %v1143
      %v1211 = vpop.f32.mrb[0].mxu0
      %v1212 = vadd.f32 0.0, %v1211
      %v1213 = vpop.f32.mrb[0].mxu0
      %1214 = vdwg.mxu0
      %v1215 = vadd.f32 %v1138, %v1212
      %v1216 = vrot.slane %v1063, 2
      %v1217 = vrot.slane %v1064, 2
      %v1218 = vsel %vm604, %v1216, %v1217
      %v1219 = vsel %vm451, %v1218, 0
      %1221 = vmatprep.subr.mxu0 0.0
      %1222 = vmatpush1.msra.mxu0 %v429
      %1223 = vmatprep.subr.mxu0 0.0
      %1224 = vmatpush1.msra.mxu0 %v430
      %1225 = vmatprep.subr.mxu0 0.0
      %1226 = vmatpush1.msra.mxu0 0.0
      %1227 = vmatprep.subr.mxu0 0.0
      %1228 = vmatpush1.msra.mxu0 0.0
      %1229 = vmatprep.subr.mxu0 0.0
      %1230 = vmatpush1.msra.mxu0 0.0
      %1231 = vmatprep.subr.mxu0 0.0
      %1232 = vmatpush1.msra.mxu0 0.0
      %1233 = vmatprep.subr.mxu0 0.0
      %1234 = vmatpush1.msra.mxu0 0.0
      %1235 = vmatprep.subr.mxu0 0.0
      %1236 = vmatpush1.msra.mxu0 0.0
      %1237 = vmatprep.subr.mxu0 0.0
      %1238 = vmatpush1.msra.mxu0 0.0
      %1239 = vmatprep.subr.mxu0 0.0
      %1240 = vmatpush1.msra.mxu0 0.0
      %1241 = vmatprep.subr.mxu0 0.0
      %1242 = vmatpush1.msra.mxu0 0.0
      %1243 = vmatprep.subr.mxu0 0.0
      %1244 = vmatpush1.msra.mxu0 0.0
      %1245 = vmatprep.subr.mxu0 0.0
      %1246 = vmatpush1.msra.mxu0 0.0
      %1247 = vmatprep.subr.mxu0 0.0
      %1248 = vmatpush1.msra.mxu0 0.0
      %1249 = vmatprep.subr.mxu0 0.0
      %1250 = vmatpush1.msra.mxu0 0.0
      %1251 = vmatprep.subr.mxu0 0.0
      %1252 = vmatpush1.msra.mxu0 0.0
      %1253 = vmatprep.subr.mxu0 0.0
      %1254 = vmatpush1.msra.mxu0 0.0
      %1255 = vmatprep.subr.mxu0 0.0
      %1256 = vmatpush1.msra.mxu0 0.0
      %1257 = vmatprep.subr.mxu0 0.0
      %1258 = vmatpush1.msra.mxu0 0.0
      %1259 = vmatprep.subr.mxu0 0.0
      %1260 = vmatpush1.msra.mxu0 0.0
      %1261 = vmatprep.subr.mxu0 0.0
      %1262 = vmatpush1.msra.mxu0 0.0
      %1263 = vmatprep.subr.mxu0 0.0
      %1264 = vmatpush1.msra.mxu0 0.0
      %1265 = vmatprep.subr.mxu0 0.0
      %1266 = vmatpush1.msra.mxu0 0.0
      %1267 = vmatprep.subr.mxu0 0.0
      %1268 = vmatpush1.msra.mxu0 0.0
      %1269 = vmatprep.subr.mxu0 0.0
      %1270 = vmatpush1.msra.mxu0 0.0
      %1271 = vmatprep.subr.mxu0 0.0
      %1272 = vmatpush1.msra.mxu0 0.0
      %1273 = vmatprep.subr.mxu0 0.0
      %1274 = vmatpush1.msra.mxu0 0.0
      %1275 = vmatprep.subr.mxu0 0.0
      %1276 = vmatpush1.msra.mxu0 0.0
      %1277 = vmatprep.subr.mxu0 0.0
      %1278 = vmatpush1.msra.mxu0 0.0
      %1279 = vmatprep.subr.mxu0 0.0
      %1280 = vmatpush1.msra.mxu0 0.0
      %1281 = vmatprep.subr.mxu0 0.0
      %1282 = vmatpush1.msra.mxu0 0.0
      %1283 = vmatprep.subr.mxu0 0.0
      %1284 = vmatpush1.msra.mxu0 0.0
      %1285 = vmatprep.mubr.f32.mxu0 0.0
      %1286 = vmatmul.mubr.f32.gmra.mrb[0].mxu0 %v1219
      %v1287 = vpop.f32.mrb[0].mxu0
      %v1288 = vadd.f32 0.0, %v1287
      %v1289 = vpop.f32.mrb[0].mxu0
      %1290 = vdwg.mxu0
      %v1291 = vadd.f32 %v1215, %v1288
      %v1292 = vrot.slane %v1063, 3
      %v1293 = vrot.slane %v1064, 3
      %v1294 = vsel %vm681, %v1292, %v1293
      %v1295 = vsel %vm451, %v1294, 0
      %1297 = vmatprep.subr.mxu0 0.0
      %1298 = vmatpush1.msra.mxu0 %v431
      %1299 = vmatprep.subr.mxu0 0.0
      %1300 = vmatpush1.msra.mxu0 %v432
      %1301 = vmatprep.subr.mxu0 0.0
      %1302 = vmatpush1.msra.mxu0 0.0
      %1303 = vmatprep.subr.mxu0 0.0
      %1304 = vmatpush1.msra.mxu0 0.0
      %1305 = vmatprep.subr.mxu0 0.0
      %1306 = vmatpush1.msra.mxu0 0.0
      %1307 = vmatprep.subr.mxu0 0.0
      %1308 = vmatpush1.msra.mxu0 0.0
      %1309 = vmatprep.subr.mxu0 0.0
      %1310 = vmatpush1.msra.mxu0 0.0
      %1311 = vmatprep.subr.mxu0 0.0
      %1312 = vmatpush1.msra.mxu0 0.0
      %1313 = vmatprep.subr.mxu0 0.0
      %1314 = vmatpush1.msra.mxu0 0.0
      %1315 = vmatprep.subr.mxu0 0.0
      %1316 = vmatpush1.msra.mxu0 0.0
      %1317 = vmatprep.subr.mxu0 0.0
      %1318 = vmatpush1.msra.mxu0 0.0
      %1319 = vmatprep.subr.mxu0 0.0
      %1320 = vmatpush1.msra.mxu0 0.0
      %1321 = vmatprep.subr.mxu0 0.0
      %1322 = vmatpush1.msra.mxu0 0.0
      %1323 = vmatprep.subr.mxu0 0.0
      %1324 = vmatpush1.msra.mxu0 0.0
      %1325 = vmatprep.subr.mxu0 0.0
      %1326 = vmatpush1.msra.mxu0 0.0
      %1327 = vmatprep.subr.mxu0 0.0
      %1328 = vmatpush1.msra.mxu0 0.0
      %1329 = vmatprep.subr.mxu0 0.0
      %1330 = vmatpush1.msra.mxu0 0.0
      %1331 = vmatprep.subr.mxu0 0.0
      %1332 = vmatpush1.msra.mxu0 0.0
      %1333 = vmatprep.subr.mxu0 0.0
      %1334 = vmatpush1.msra.mxu0 0.0
      %1335 = vmatprep.subr.mxu0 0.0
      %1336 = vmatpush1.msra.mxu0 0.0
      %1337 = vmatprep.subr.mxu0 0.0
      %1338 = vmatpush1.msra.mxu0 0.0
      %1339 = vmatprep.subr.mxu0 0.0
      %1340 = vmatpush1.msra.mxu0 0.0
      %1341 = vmatprep.subr.mxu0 0.0
      %1342 = vmatpush1.msra.mxu0 0.0
      %1343 = vmatprep.subr.mxu0 0.0
      %1344 = vmatpush1.msra.mxu0 0.0
      %1345 = vmatprep.subr.mxu0 0.0
      %1346 = vmatpush1.msra.mxu0 0.0
      %1347 = vmatprep.subr.mxu0 0.0
      %1348 = vmatpush1.msra.mxu0 0.0
      %1349 = vmatprep.subr.mxu0 0.0
      %1350 = vmatpush1.msra.mxu0 0.0
      %1351 = vmatprep.subr.mxu0 0.0
      %1352 = vmatpush1.msra.mxu0 0.0
      %1353 = vmatprep.subr.mxu0 0.0
      %1354 = vmatpush1.msra.mxu0 0.0
      %1355 = vmatprep.subr.mxu0 0.0
      %1356 = vmatpush1.msra.mxu0 0.0
      %1357 = vmatprep.subr.mxu0 0.0
      %1358 = vmatpush1.msra.mxu0 0.0
      %1359 = vmatprep.subr.mxu0 0.0
      %1360 = vmatpush1.msra.mxu0 0.0
      %1361 = vmatprep.mubr.f32.mxu0 0.0
      %1362 = vmatmul.mubr.f32.gmra.mrb[0].mxu0 %v1295
      %v1363 = vpop.f32.mrb[0].mxu0
      %v1364 = vadd.f32 0.0, %v1363
      %v1365 = vpop.f32.mrb[0].mxu0
      %1366 = vdwg.mxu0
      %v1367 = vadd.f32 %v1291, %v1364
      %v1368 = vld [vmem:[%s399] sm:$0xff]
      %v1369 = vld [vmem:[%s399 + $0x8] sm:$0x7]
      %v1371 = vsel %vm451, %v1368, 0
      %1373 = vmatprep.subr.mxu0 0.0
      %1374 = vmatpush1.msra.mxu0 %v433
      %1375 = vmatprep.subr.mxu0 0.0
      %1376 = vmatpush1.msra.mxu0 %v434
      %1377 = vmatprep.subr.mxu0 0.0
      %1378 = vmatpush1.msra.mxu0 0.0
      %1379 = vmatprep.subr.mxu0 0.0
      %1380 = vmatpush1.msra.mxu0 0.0
      %1381 = vmatprep.subr.mxu0 0.0
      %1382 = vmatpush1.msra.mxu0 0.0
      %1383 = vmatprep.subr.mxu0 0.0
      %1384 = vmatpush1.msra.mxu0 0.0
      %1385 = vmatprep.subr.mxu0 0.0
      %1386 = vmatpush1.msra.mxu0 0.0
      %1387 = vmatprep.subr.mxu0 0.0
      %1388 = vmatpush1.msra.mxu0 0.0
      %1389 = vmatprep.subr.mxu0 0.0
      %1390 = vmatpush1.msra.mxu0 0.0
      %1391 = vmatprep.subr.mxu0 0.0
      %1392 = vmatpush1.msra.mxu0 0.0
      %1393 = vmatprep.subr.mxu0 0.0
      %1394 = vmatpush1.msra.mxu0 0.0
      %1395 = vmatprep.subr.mxu0 0.0
      %1396 = vmatpush1.msra.mxu0 0.0
      %1397 = vmatprep.subr.mxu0 0.0
      %1398 = vmatpush1.msra.mxu0 0.0
      %1399 = vmatprep.subr.mxu0 0.0
      %1400 = vmatpush1.msra.mxu0 0.0
      %1401 = vmatprep.subr.mxu0 0.0
      %1402 = vmatpush1.msra.mxu0 0.0
      %1403 = vmatprep.subr.mxu0 0.0
      %1404 = vmatpush1.msra.mxu0 0.0
      %1405 = vmatprep.subr.mxu0 0.0
      %1406 = vmatpush1.msra.mxu0 0.0
      %1407 = vmatprep.subr.mxu0 0.0
      %1408 = vmatpush1.msra.mxu0 0.0
      %1409 = vmatprep.subr.mxu0 0.0
      %1410 = vmatpush1.msra.mxu0 0.0
      %1411 = vmatprep.subr.mxu0 0.0
      %1412 = vmatpush1.msra.mxu0 0.0
      %1413 = vmatprep.subr.mxu0 0.0
      %1414 = vmatpush1.msra.mxu0 0.0
      %1415 = vmatprep.subr.mxu0 0.0
      %1416 = vmatpush1.msra.mxu0 0.0
      %1417 = vmatprep.subr.mxu0 0.0
      %1418 = vmatpush1.msra.mxu0 0.0
      %1419 = vmatprep.subr.mxu0 0.0
      %1420 = vmatpush1.msra.mxu0 0.0
      %1421 = vmatprep.subr.mxu0 0.0
      %1422 = vmatpush1.msra.mxu0 0.0
      %1423 = vmatprep.subr.mxu0 0.0
      %1424 = vmatpush1.msra.mxu0 0.0
      %1425 = vmatprep.subr.mxu0 0.0
      %1426 = vmatpush1.msra.mxu0 0.0
      %1427 = vmatprep.subr.mxu0 0.0
      %1428 = vmatpush1.msra.mxu0 0.0
      %1429 = vmatprep.subr.mxu0 0.0
      %1430 = vmatpush1.msra.mxu0 0.0
      %1431 = vmatprep.subr.mxu0 0.0
      %1432 = vmatpush1.msra.mxu0 0.0
      %1433 = vmatprep.subr.mxu0 0.0
      %1434 = vmatpush1.msra.mxu0 0.0
      %1435 = vmatprep.subr.mxu0 0.0
      %1436 = vmatpush1.msra.mxu0 0.0
      %1437 = vmatprep.mubr.f32.mxu0 0.0
      %1438 = vmatmul.mubr.f32.gmra.mrb[0].mxu0 %v1371
      %v1439 = vpop.f32.mrb[0].mxu0
      %v1440 = vadd.f32 0.0, %v1439
      %v1441 = vpop.f32.mrb[0].mxu0
      %1442 = vdwg.mxu0
      %v1443 = vadd.f32 %v1367, %v1440
      %v1445 = vrot.slane %v1368, 1
      %v1446 = vrot.slane %v1369, 1
      %v1447 = vsel %vm527, %v1445, %v1446
      %v1448 = vsel %vm451, %v1447, 0
      %1450 = vmatprep.subr.mxu0 0.0
      %1451 = vmatpush1.msra.mxu0 %v435
      %1452 = vmatprep.subr.mxu0 0.0
      %1453 = vmatpush1.msra.mxu0 %v436
      %1454 = vmatprep.subr.mxu0 0.0
      %1455 = vmatpush1.msra.mxu0 0.0
      %1456 = vmatprep.subr.mxu0 0.0
      %1457 = vmatpush1.msra.mxu0 0.0
      %1458 = vmatprep.subr.mxu0 0.0
      %1459 = vmatpush1.msra.mxu0 0.0
      %1460 = vmatprep.subr.mxu0 0.0
      %1461 = vmatpush1.msra.mxu0 0.0
      %1462 = vmatprep.subr.mxu0 0.0
      %1463 = vmatpush1.msra.mxu0 0.0
      %1464 = vmatprep.subr.mxu0 0.0
      %1465 = vmatpush1.msra.mxu0 0.0
      %1466 = vmatprep.subr.mxu0 0.0
      %1467 = vmatpush1.msra.mxu0 0.0
      %1468 = vmatprep.subr.mxu0 0.0
      %1469 = vmatpush1.msra.mxu0 0.0
      %1470 = vmatprep.subr.mxu0 0.0
      %1471 = vmatpush1.msra.mxu0 0.0
      %1472 = vmatprep.subr.mxu0 0.0
      %1473 = vmatpush1.msra.mxu0 0.0
      %1474 = vmatprep.subr.mxu0 0.0
      %1475 = vmatpush1.msra.mxu0 0.0
      %1476 = vmatprep.subr.mxu0 0.0
      %1477 = vmatpush1.msra.mxu0 0.0
      %1478 = vmatprep.subr.mxu0 0.0
      %1479 = vmatpush1.msra.mxu0 0.0
      %1480 = vmatprep.subr.mxu0 0.0
      %1481 = vmatpush1.msra.mxu0 0.0
      %1482 = vmatprep.subr.mxu0 0.0
      %1483 = vmatpush1.msra.mxu0 0.0
      %1484 = vmatprep.subr.mxu0 0.0
      %1485 = vmatpush1.msra.mxu0 0.0
      %1486 = vmatprep.subr.mxu0 0.0
      %1487 = vmatpush1.msra.mxu0 0.0
      %1488 = vmatprep.subr.mxu0 0.0
      %1489 = vmatpush1.msra.mxu0 0.0
      %1490 = vmatprep.subr.mxu0 0.0
      %1491 = vmatpush1.msra.mxu0 0.0
      %1492 = vmatprep.subr.mxu0 0.0
      %1493 = vmatpush1.msra.mxu0 0.0
      %1494 = vmatprep.subr.mxu0 0.0
      %1495 = vmatpush1.msra.mxu0 0.0
      %1496 = vmatprep.subr.mxu0 0.0
      %1497 = vmatpush1.msra.mxu0 0.0
      %1498 = vmatprep.subr.mxu0 0.0
      %1499 = vmatpush1.msra.mxu0 0.0
      %1500 = vmatprep.subr.mxu0 0.0
      %1501 = vmatpush1.msra.mxu0 0.0
      %1502 = vmatprep.subr.mxu0 0.0
      %1503 = vmatpush1.msra.mxu0 0.0
      %1504 = vmatprep.subr.mxu0 0.0
      %1505 = vmatpush1.msra.mxu0 0.0
      %1506 = vmatprep.subr.mxu0 0.0
      %1507 = vmatpush1.msra.mxu0 0.0
      %1508 = vmatprep.subr.mxu0 0.0
      %1509 = vmatpush1.msra.mxu0 0.0
      %1510 = vmatprep.subr.mxu0 0.0
      %1511 = vmatpush1.msra.mxu0 0.0
      %1512 = vmatprep.subr.mxu0 0.0
      %1513 = vmatpush1.msra.mxu0 0.0
      %1514 = vmatprep.mubr.f32.mxu0 0.0
      %1515 = vmatmul.mubr.f32.gmra.mrb[0].mxu0 %v1448
      %v1516 = vpop.f32.mrb[0].mxu0
      %v1517 = vadd.f32 0.0, %v1516
      %v1518 = vpop.f32.mrb[0].mxu0
      %1519 = vdwg.mxu0
      %v1520 = vadd.f32 %v1443, %v1517
      %v1521 = vrot.slane %v1368, 2
      %v1522 = vrot.slane %v1369, 2
      %v1523 = vsel %vm604, %v1521, %v1522
      %v1524 = vsel %vm451, %v1523, 0
      %1526 = vmatprep.subr.mxu0 0.0
      %1527 = vmatpush1.msra.mxu0 %v437
      %1528 = vmatprep.subr.mxu0 0.0
      %1529 = vmatpush1.msra.mxu0 %v438
      %1530 = vmatprep.subr.mxu0 0.0
      %1531 = vmatpush1.msra.mxu0 0.0
      %1532 = vmatprep.subr.mxu0 0.0
      %1533 = vmatpush1.msra.mxu0 0.0
      %1534 = vmatprep.subr.mxu0 0.0
      %1535 = vmatpush1.msra.mxu0 0.0
      %1536 = vmatprep.subr.mxu0 0.0
      %1537 = vmatpush1.msra.mxu0 0.0
      %1538 = vmatprep.subr.mxu0 0.0
      %1539 = vmatpush1.msra.mxu0 0.0
      %1540 = vmatprep.subr.mxu0 0.0
      %1541 = vmatpush1.msra.mxu0 0.0
      %1542 = vmatprep.subr.mxu0 0.0
      %1543 = vmatpush1.msra.mxu0 0.0
      %1544 = vmatprep.subr.mxu0 0.0
      %1545 = vmatpush1.msra.mxu0 0.0
      %1546 = vmatprep.subr.mxu0 0.0
      %1547 = vmatpush1.msra.mxu0 0.0
      %1548 = vmatprep.subr.mxu0 0.0
      %1549 = vmatpush1.msra.mxu0 0.0
      %1550 = vmatprep.subr.mxu0 0.0
      %1551 = vmatpush1.msra.mxu0 0.0
      %1552 = vmatprep.subr.mxu0 0.0
      %1553 = vmatpush1.msra.mxu0 0.0
      %1554 = vmatprep.subr.mxu0 0.0
      %1555 = vmatpush1.msra.mxu0 0.0
      %1556 = vmatprep.subr.mxu0 0.0
      %1557 = vmatpush1.msra.mxu0 0.0
      %1558 = vmatprep.subr.mxu0 0.0
      %1559 = vmatpush1.msra.mxu0 0.0
      %1560 = vmatprep.subr.mxu0 0.0
      %1561 = vmatpush1.msra.mxu0 0.0
      %1562 = vmatprep.subr.mxu0 0.0
      %1563 = vmatpush1.msra.mxu0 0.0
      %1564 = vmatprep.subr.mxu0 0.0
      %1565 = vmatpush1.msra.mxu0 0.0
      %1566 = vmatprep.subr.mxu0 0.0
      %1567 = vmatpush1.msra.mxu0 0.0
      %1568 = vmatprep.subr.mxu0 0.0
      %1569 = vmatpush1.msra.mxu0 0.0
      %1570 = vmatprep.subr.mxu0 0.0
      %1571 = vmatpush1.msra.mxu0 0.0
      %1572 = vmatprep.subr.mxu0 0.0
      %1573 = vmatpush1.msra.mxu0 0.0
      %1574 = vmatprep.subr.mxu0 0.0
      %1575 = vmatpush1.msra.mxu0 0.0
      %1576 = vmatprep.subr.mxu0 0.0
      %1577 = vmatpush1.msra.mxu0 0.0
      %1578 = vmatprep.subr.mxu0 0.0
      %1579 = vmatpush1.msra.mxu0 0.0
      %1580 = vmatprep.subr.mxu0 0.0
      %1581 = vmatpush1.msra.mxu0 0.0
      %1582 = vmatprep.subr.mxu0 0.0
      %1583 = vmatpush1.msra.mxu0 0.0
      %1584 = vmatprep.subr.mxu0 0.0
      %1585 = vmatpush1.msra.mxu0 0.0
      %1586 = vmatprep.subr.mxu0 0.0
      %1587 = vmatpush1.msra.mxu0 0.0
      %1588 = vmatprep.subr.mxu0 0.0
      %1589 = vmatpush1.msra.mxu0 0.0
      %1590 = vmatprep.mubr.f32.mxu0 0.0
      %1591 = vmatmul.mubr.f32.gmra.mrb[0].mxu0 %v1524
      %v1592 = vpop.f32.mrb[0].mxu0
      %v1593 = vadd.f32 0.0, %v1592
      %v1594 = vpop.f32.mrb[0].mxu0
      %1595 = vdwg.mxu0
      %v1596 = vadd.f32 %v1520, %v1593
      %v1597 = vrot.slane %v1368, 3
      %v1598 = vrot.slane %v1369, 3
      %v1599 = vsel %vm681, %v1597, %v1598
      %v1600 = vsel %vm451, %v1599, 0
      %1602 = vmatprep.subr.mxu0 0.0
      %1603 = vmatpush1.msra.mxu0 %v439
      %1604 = vmatprep.subr.mxu0 0.0
      %1605 = vmatpush1.msra.mxu0 %v440
      %1606 = vmatprep.subr.mxu0 0.0
      %1607 = vmatpush1.msra.mxu0 0.0
      %1608 = vmatprep.subr.mxu0 0.0
      %1609 = vmatpush1.msra.mxu0 0.0
      %1610 = vmatprep.subr.mxu0 0.0
      %1611 = vmatpush1.msra.mxu0 0.0
      %1612 = vmatprep.subr.mxu0 0.0
      %1613 = vmatpush1.msra.mxu0 0.0
      %1614 = vmatprep.subr.mxu0 0.0
      %1615 = vmatpush1.msra.mxu0 0.0
      %1616 = vmatprep.subr.mxu0 0.0
      %1617 = vmatpush1.msra.mxu0 0.0
      %1618 = vmatprep.subr.mxu0 0.0
      %1619 = vmatpush1.msra.mxu0 0.0
      %1620 = vmatprep.subr.mxu0 0.0
      %1621 = vmatpush1.msra.mxu0 0.0
      %1622 = vmatprep.subr.mxu0 0.0
      %1623 = vmatpush1.msra.mxu0 0.0
      %1624 = vmatprep.subr.mxu0 0.0
      %1625 = vmatpush1.msra.mxu0 0.0
      %1626 = vmatprep.subr.mxu0 0.0
      %1627 = vmatpush1.msra.mxu0 0.0
      %1628 = vmatprep.subr.mxu0 0.0
      %1629 = vmatpush1.msra.mxu0 0.0
      %1630 = vmatprep.subr.mxu0 0.0
      %1631 = vmatpush1.msra.mxu0 0.0
      %1632 = vmatprep.subr.mxu0 0.0
      %1633 = vmatpush1.msra.mxu0 0.0
      %1634 = vmatprep.subr.mxu0 0.0
      %1635 = vmatpush1.msra.mxu0 0.0
      %1636 = vmatprep.subr.mxu0 0.0
      %1637 = vmatpush1.msra.mxu0 0.0
      %1638 = vmatprep.subr.mxu0 0.0
      %1639 = vmatpush1.msra.mxu0 0.0
      %1640 = vmatprep.subr.mxu0 0.0
      %1641 = vmatpush1.msra.mxu0 0.0
      %1642 = vmatprep.subr.mxu0 0.0
      %1643 = vmatpush1.msra.mxu0 0.0
      %1644 = vmatprep.subr.mxu0 0.0
      %1645 = vmatpush1.msra.mxu0 0.0
      %1646 = vmatprep.subr.mxu0 0.0
      %1647 = vmatpush1.msra.mxu0 0.0
      %1648 = vmatprep.subr.mxu0 0.0
      %1649 = vmatpush1.msra.mxu0 0.0
      %1650 = vmatprep.subr.mxu0 0.0
      %1651 = vmatpush1.msra.mxu0 0.0
      %1652 = vmatprep.subr.mxu0 0.0
      %1653 = vmatpush1.msra.mxu0 0.0
      %1654 = vmatprep.subr.mxu0 0.0
      %1655 = vmatpush1.msra.mxu0 0.0
      %1656 = vmatprep.subr.mxu0 0.0
      %1657 = vmatpush1.msra.mxu0 0.0
      %1658 = vmatprep.subr.mxu0 0.0
      %1659 = vmatpush1.msra.mxu0 0.0
      %1660 = vmatprep.subr.mxu0 0.0
      %1661 = vmatpush1.msra.mxu0 0.0
      %1662 = vmatprep.subr.mxu0 0.0
      %1663 = vmatpush1.msra.mxu0 0.0
      %1664 = vmatprep.subr.mxu0 0.0
      %1665 = vmatpush1.msra.mxu0 0.0
      %1666 = vmatprep.mubr.f32.mxu0 0.0
      %1667 = vmatmul.mubr.f32.gmra.mrb[0].mxu0 %v1600
      %v1668 = vpop.f32.mrb[0].mxu0
      %v1669 = vadd.f32 0.0, %v1668
      %v1670 = vpop.f32.mrb[0].mxu0
      %1671 = vdwg.mxu0
      %v1672 = vadd.f32 %v1596, %v1669
      %vm1673 = vcmask 261120
      %1674 = vst.msk [vmem:[%s408] sm:$0xff] %vm1673, %v1672
      %p1675 = scmp.lt.s32.totalorder %s21, 1
      %s1676 = scalar_select %p1675, %s21, 1
      %p1677 = scmp.lt.s32.totalorder %s22, 7
      %s1678 = scalar_select %p1677, %s22, 7
      %s1679 = smul.addr %s1676, 8
      %s1680 = sadd.s32 %s1678, %s1679
      %s1681 = smul.addr %s1680, 8
      %s1682 = scalar_lea.vmem %s6, %s1681
      // Predicated region
      $region45: #{image_backbone_forward.12} parent=43 // pred_check
        %p1683 = pneg %p209
      $region46: #{image_backbone_forward.12} parent=43 // pred_check_branch
        %1685 = sbr.rel (%p1683) target = $region48
      $region47: #{image_backbone_forward.12} parent=43 // pred_region
        _
      $region48: #{image_backbone_forward.12} parent=43 // pred_fallthru
        _
    $region44: #{image_backbone_forward.12} parent=5 // pred_fallthru
      _
    %p1686 = scmp.le.s32.totalorder 2, %s12
    // Predicated region
    $region49: #{image_backbone_forward.12} parent=5 // pred_check
      %p1687 = pneg %p1686
    $region50: #{image_backbone_forward.12} parent=5 // pred_check_branch
      %1689 = sbr.rel (%p1687) target = $region52
    $region51: #{image_backbone_forward.12} parent=5 // pred_region
      %s1690 = ssub.s32 %s12, 2
      // Predicated region
      $region53: #{image_backbone_forward.12} parent=51 // pred_check
        %p1691 = pneg %p215
      $region54: #{image_backbone_forward.12} parent=51 // pred_check_branch
        %1693 = sbr.rel (%p1691) target = $region56
      $region55: #{image_backbone_forward.12} parent=51 // pred_region
        %p1694 = scmp.lt.s32.totalorder %s23, 1
        %s1695 = scalar_select %p1694, %s23, 1
        %p1696 = scmp.lt.s32.totalorder %s24, 7
        %s1697 = scalar_select %p1696, %s24, 7
        %s1698 = smul.addr %s1695, 8
        %s1699 = sadd.s32 %s1697, %s1698
        %s1700 = smul.addr %s1699, 8
        %s1701 = scalar_lea.vmem %s6, %s1700
      $region56: #{image_backbone_forward.12} parent=51 // pred_fallthru
        _
    $region52: #{image_backbone_forward.12} parent=5 // pred_fallthru
      _
  $region6: #{image_backbone_forward.12} parent=0 // loop_footer
    %s16 = sadd.s32 1, %s12
  $region7: #{image_backbone_forward.12} parent=0 // loop_footer_branch
    %11 = sbr.rel target = $region3
  $region8: #{image_backbone_forward.12} parent=0 // loop_exit
    _

// kernel: image_backbone_forward.21
$region0: #{image_backbone_forward.21}
  #allocation0 [shape = 'u32[]', space=smem, size = 0x4, offset = 0x4, fixed_abs, tag = 'smem constant byte address 0x4 - core index']
  #allocation1 [shape = 'u32[144,128]{1,0:T(1,128)}', space=vmem, size = 0x12000, scoped, tag = 'internal scratch']
  %s0 = inlined_call_operand.vmem [shape: f32[2,64,32], index: 0, kind: input, shape index: {}]
  %s1 = inlined_call_operand.vmem [shape: f32[1,32], index: 1, kind: input, shape index: {}]
  %s2 = inlined_call_operand.vmem [shape: f32[1,32], index: 2, kind: input, shape index: {}]
  %s3 = inlined_call_operand.vmem [shape: f32[32,8], index: 3, kind: input, shape index: {}]
  %s4 = inlined_call_operand.vmem [shape: f32[8,32], index: 4, kind: input, shape index: {}]
  %s5 = inlined_call_operand.vmem [shape: f32[2,64,32], index: 5, kind: input, shape index: {}]
  %s6 = inlined_call_operand.vmem [shape: f32[32,16], index: 6, kind: input, shape index: {}]
  %s7 = inlined_call_operand.vmem [shape: f32[1,16], index: 7, kind: input, shape index: {}]
  %s8 = inlined_call_operand.vmem [shape: f32[2,64,16], index: 8, kind: output, shape index: {}]
  %s9 = sld [smem:[#allocation0]]
  $region65: #{image_backbone_forward.21} parent=0
    _
  %s11 = ssub.s32 1, %s9
  %s12 = scalar_select 0, %s11, %s9
  loop: start=0, step=1, limit=4
  $region2: #{image_backbone_forward.21} parent=0 // loop_pre_header
    _
  $region3: #{image_backbone_forward.21} parent=0 // loop_header
    %s14 = sphi 0, %s18
    %p15 = scmp.ge.s32.totalorder %s14, 4
    %s24 = sphi 0, %s26
    %s27 = sphi 0, %s24
    %s28 = sphi 0, %s27
    %s44 = sphi 0, %s28
    %s48 = sphi 0, %s48
    %s50 = sphi 0, %s48
    %s51 = sphi 0, %s50
    %s65 = sphi 0, %s51
    %s69 = sphi 0, %s69
    %s71 = sphi 0, %s69
    %s72 = sphi 0, %s71
    %s86 = sphi 0, %s72
    %s90 = sphi 0, %s90
    %s92 = sphi 0, %s90
    %s93 = sphi 0, %s92
    %s107 = sphi 0, %s93
    %s111 = sphi 0, %s111
    %s113 = sphi 0, %s111
    %s114 = sphi 0, %s113
    %s128 = sphi 0, %s114
    %s134 = sphi 0, %s136
    %s137 = sphi 0, %s134
    %s138 = sphi 0, %s137
    %s154 = sphi 0, %s138
    %s158 = sphi 0, %s158
    %s160 = sphi 0, %s158
    %s161 = sphi 0, %s160
    %s175 = sphi 0, %s161
    %s179 = sphi 0, %s179
    %s181 = sphi 0, %s179
    %s182 = sphi 0, %s181
    %s196 = sphi 0, %s182
    %s202 = sphi 0, %s204
    %s205 = sphi 0, %s202
    %s206 = sphi 0, %s205
    %s222 = sphi 0, %s206
  $region4: #{image_backbone_forward.21} parent=0 // loop_header_branch
    %17 = sbr.rel (%p15) target = $region8
  $region5: #{image_backbone_forward.21} parent=0 // loop_body
    %s19 = ssub.s32 %s14, 1
    %s20 = ssub.s32 %s14, 2
    %s21 = sadd.s32 %s14, 1
    %s22 = ssub.s32 %s14, %s21
    %p23 = scmp.eq.s32.totalorder %s22, 0
    %s25 = sadd.s32 %s24, 1
    %s26 = scalar_select %p23, %s24, %s25
    %p29 = pneg %p23
    %p30 = scmp.eq.s32.totalorder %s14, 1
    %p31 = por %p29, %p30
    %p32 = scmp.ne.s32.totalorder %s24, %s27
    %p33 = scmp.eq.s32.totalorder %s14, 0
    %p34 = por %p32, %p33
    %p35 = scmp.ne.s32.totalorder %s24, %s27
    %p36 = scmp.eq.s32.totalorder %s19, 1
    %p37 = por %p35, %p36
    %p38 = scmp.ne.s32.totalorder %s27, %s28
    %p39 = scmp.eq.s32.totalorder %s19, 0
    %p40 = por %p38, %p39
    %p41 = scmp.ne.s32.totalorder %s27, %s28
    %p42 = scmp.eq.s32.totalorder %s20, 1
    %p43 = por %p41, %p42
    %p45 = scmp.ne.s32.totalorder %s28, %s44
    %p46 = scmp.eq.s32.totalorder %s20, 0
    %p47 = por %p45, %p46
    %s49 = sadd.s32 %s48, 1
    %p52 = scmp.eq.s32.totalorder %s14, 1
    %p53 = scmp.ne.s32.totalorder %s48, %s50
    %p54 = scmp.eq.s32.totalorder %s14, 0
    %p55 = por %p53, %p54
    %p56 = scmp.ne.s32.totalorder %s48, %s50
    %p57 = scmp.eq.s32.totalorder %s19, 1
    %p58 = por %p56, %p57
    %p59 = scmp.ne.s32.totalorder %s50, %s51
    %p60 = scmp.eq.s32.totalorder %s19, 0
    %p61 = por %p59, %p60
    %p62 = scmp.ne.s32.totalorder %s50, %s51
    %p63 = scmp.eq.s32.totalorder %s20, 1
    %p64 = por %p62, %p63
    %p66 = scmp.ne.s32.totalorder %s51, %s65
    %p67 = scmp.eq.s32.totalorder %s20, 0
    %p68 = por %p66, %p67
    %s70 = sadd.s32 %s69, 1
    %p73 = scmp.eq.s32.totalorder %s14, 1
    %p74 = scmp.ne.s32.totalorder %s69, %s71
    %p75 = scmp.eq.s32.totalorder %s14, 0
    %p76 = por %p74, %p75
    %p77 = scmp.ne.s32.totalorder %s69, %s71
    %p78 = scmp.eq.s32.totalorder %s19, 1
    %p79 = por %p77, %p78
    %p80 = scmp.ne.s32.totalorder %s71, %s72
    %p81 = scmp.eq.s32.totalorder %s19, 0
    %p82 = por %p80, %p81
    %p83 = scmp.ne.s32.totalorder %s71, %s72
    %p84 = scmp.eq.s32.totalorder %s20, 1
    %p85 = por %p83, %p84
    %p87 = scmp.ne.s32.totalorder %s72, %s86
    %p88 = scmp.eq.s32.totalorder %s20, 0
    %p89 = por %p87, %p88
    %s91 = sadd.s32 %s90, 1
    %p94 = scmp.eq.s32.totalorder %s14, 1
    %p95 = scmp.ne.s32.totalorder %s90, %s92
    %p96 = scmp.eq.s32.totalorder %s14, 0
    %p97 = por %p95, %p96
    %p98 = scmp.ne.s32.totalorder %s90, %s92
    %p99 = scmp.eq.s32.totalorder %s19, 1
    %p100 = por %p98, %p99
    %p101 = scmp.ne.s32.totalorder %s92, %s93
    %p102 = scmp.eq.s32.totalorder %s19, 0
    %p103 = por %p101, %p102
    %p104 = scmp.ne.s32.totalorder %s92, %s93
    %p105 = scmp.eq.s32.totalorder %s20, 1
    %p106 = por %p104, %p105
    %p108 = scmp.ne.s32.totalorder %s93, %s107
    %p109 = scmp.eq.s32.totalorder %s20, 0
    %p110 = por %p108, %p109
    %s112 = sadd.s32 %s111, 1
    %p115 = scmp.eq.s32.totalorder %s14, 1
    %p116 = scmp.ne.s32.totalorder %s111, %s113
    %p117 = scmp.eq.s32.totalorder %s14, 0
    %p118 = por %p116, %p117
    %p119 = scmp.ne.s32.totalorder %s111, %s113
    %p120 = scmp.eq.s32.totalorder %s19, 1
    %p121 = por %p119, %p120
    %p122 = scmp.ne.s32.totalorder %s113, %s114
    %p123 = scmp.eq.s32.totalorder %s19, 0
    %p124 = por %p122, %p123
    %p125 = scmp.ne.s32.totalorder %s113, %s114
    %p126 = scmp.eq.s32.totalorder %s20, 1
    %p127 = por %p125, %p126
    %p129 = scmp.ne.s32.totalorder %s114, %s128
    %p130 = scmp.eq.s32.totalorder %s20, 0
    %p131 = por %p129, %p130
    %s132 = ssub.s32 %s14, %s21
    %p133 = scmp.eq.s32.totalorder %s132, 0
    %s135 = sadd.s32 %s134, 1
    %s136 = scalar_select %p133, %s134, %s135
    %p139 = pneg %p133
    %p140 = scmp.eq.s32.totalorder %s14, 1
    %p141 = por %p139, %p140
    %p142 = scmp.ne.s32.totalorder %s134, %s137
    %p143 = scmp.eq.s32.totalorder %s14, 0
    %p144 = por %p142, %p143
    %p145 = scmp.ne.s32.totalorder %s134, %s137
    %p146 = scmp.eq.s32.totalorder %s19, 1
    %p147 = por %p145, %p146
    %p148 = scmp.ne.s32.totalorder %s137, %s138
    %p149 = scmp.eq.s32.totalorder %s19, 0
    %p150 = por %p148, %p149
    %p151 = scmp.ne.s32.totalorder %s137, %s138
    %p152 = scmp.eq.s32.totalorder %s20, 1
    %p153 = por %p151, %p152
    %p155 = scmp.ne.s32.totalorder %s138, %s154
    %p156 = scmp.eq.s32.totalorder %s20, 0
    %p157 = por %p155, %p156
    %s159 = sadd.s32 %s158, 1
    %p162 = scmp.eq.s32.totalorder %s14, 1
    %p163 = scmp.ne.s32.totalorder %s158, %s160
    %p164 = scmp.eq.s32.totalorder %s14, 0
    %p165 = por %p163, %p164
    %p166 = scmp.ne.s32.totalorder %s158, %s160
    %p167 = scmp.eq.s32.totalorder %s19, 1
    %p168 = por %p166, %p167
    %p169 = scmp.ne.s32.totalorder %s160, %s161
    %p170 = scmp.eq.s32.totalorder %s19, 0
    %p171 = por %p169, %p170
    %p172 = scmp.ne.s32.totalorder %s160, %s161
    %p173 = scmp.eq.s32.totalorder %s20, 1
    %p174 = por %p172, %p173
    %p176 = scmp.ne.s32.totalorder %s161, %s175
    %p177 = scmp.eq.s32.totalorder %s20, 0
    %p178 = por %p176, %p177
    %s180 = sadd.s32 %s179, 1
    %p183 = scmp.eq.s32.totalorder %s14, 1
    %p184 = scmp.ne.s32.totalorder %s179, %s181
    %p185 = scmp.eq.s32.totalorder %s14, 0
    %p186 = por %p184, %p185
    %p187 = scmp.ne.s32.totalorder %s179, %s181
    %p188 = scmp.eq.s32.totalorder %s19, 1
    %p189 = por %p187, %p188
    %p190 = scmp.ne.s32.totalorder %s181, %s182
    %p191 = scmp.eq.s32.totalorder %s19, 0
    %p192 = por %p190, %p191
    %p193 = scmp.ne.s32.totalorder %s181, %s182
    %p194 = scmp.eq.s32.totalorder %s20, 1
    %p195 = por %p193, %p194
    %p197 = scmp.ne.s32.totalorder %s182, %s196
    %p198 = scmp.eq.s32.totalorder %s20, 0
    %p199 = por %p197, %p198
    %s200 = ssub.s32 %s14, %s21
    %p201 = scmp.eq.s32.totalorder %s200, 0
    %s203 = sadd.s32 %s202, 1
    %s204 = scalar_select %p201, %s202, %s203
    %p207 = pneg %p201
    %p208 = scmp.eq.s32.totalorder %s14, 1
    %p209 = por %p207, %p208
    %p210 = scmp.ne.s32.totalorder %s202, %s205
    %p211 = scmp.eq.s32.totalorder %s14, 0
    %p212 = por %p210, %p211
    %p213 = scmp.ne.s32.totalorder %s202, %s205
    %p214 = scmp.eq.s32.totalorder %s19, 1
    %p215 = por %p213, %p214
    %p216 = scmp.ne.s32.totalorder %s205, %s206
    %p217 = scmp.eq.s32.totalorder %s19, 0
    %p218 = por %p216, %p217
    %p219 = scmp.ne.s32.totalorder %s205, %s206
    %p220 = scmp.eq.s32.totalorder %s20, 1
    %p221 = por %p219, %p220
    %p223 = scmp.ne.s32.totalorder %s206, %s222
    %p224 = scmp.eq.s32.totalorder %s20, 0
    %p225 = por %p223, %p224
    %p226 = scmp.le.s32.totalorder 1, %s14
    %p227 = scmp.lt.s32.totalorder %s14, 3
    %p228 = pnand %p226, %p227
    %p229 = pneg %p228
    // Predicated region
    $region9: #{image_backbone_forward.21} parent=5 // pred_check
      _
    $region10: #{image_backbone_forward.21} parent=5 // pred_check_branch
      %231 = sbr.rel (%p228) target = $region12
    $region11: #{image_backbone_forward.21} parent=5 // pred_region
      %s232 = ssub.s32 %s14, 1
      // Predicated region
      $region13: #{image_backbone_forward.21} parent=11 // pred_check
        %p233 = pneg %p61
      $region14: #{image_backbone_forward.21} parent=11 // pred_check_branch
        %235 = sbr.rel (%p233) target = $region16
      $region15: #{image_backbone_forward.21} parent=11 // pred_region
        _
      $region16: #{image_backbone_forward.21} parent=11 // pred_fallthru
        _
      // Predicated region
      $region17: #{image_backbone_forward.21} parent=11 // pred_check
        %p236 = pneg %p82
      $region18: #{image_backbone_forward.21} parent=11 // pred_check_branch
        %238 = sbr.rel (%p236) target = $region20
      $region19: #{image_backbone_forward.21} parent=11 // pred_region
        _
      $region20: #{image_backbone_forward.21} parent=11 // pred_fallthru
        _
      // Predicated region
      $region21: #{image_backbone_forward.21} parent=11 // pred_check
        %p239 = pneg %p103
      $region22: #{image_backbone_forward.21} parent=11 // pred_check_branch
        %241 = sbr.rel (%p239) target = $region24
      $region23: #{image_backbone_forward.21} parent=11 // pred_region
        _
      $region24: #{image_backbone_forward.21} parent=11 // pred_fallthru
        _
      // Predicated region
      $region25: #{image_backbone_forward.21} parent=11 // pred_check
        %p242 = pneg %p124
      $region26: #{image_backbone_forward.21} parent=11 // pred_check_branch
        %244 = sbr.rel (%p242) target = $region28
      $region27: #{image_backbone_forward.21} parent=11 // pred_region
        _
      $region28: #{image_backbone_forward.21} parent=11 // pred_fallthru
        _
      // Predicated region
      $region29: #{image_backbone_forward.21} parent=11 // pred_check
        %p245 = pneg %p171
      $region30: #{image_backbone_forward.21} parent=11 // pred_check_branch
        %247 = sbr.rel (%p245) target = $region32
      $region31: #{image_backbone_forward.21} parent=11 // pred_region
        _
      $region32: #{image_backbone_forward.21} parent=11 // pred_fallthru
        _
      // Predicated region
      $region33: #{image_backbone_forward.21} parent=11 // pred_check
        %p248 = pneg %p192
      $region34: #{image_backbone_forward.21} parent=11 // pred_check_branch
        %250 = sbr.rel (%p248) target = $region36
      $region35: #{image_backbone_forward.21} parent=11 // pred_region
        _
      $region36: #{image_backbone_forward.21} parent=11 // pred_fallthru
        _
    $region12: #{image_backbone_forward.21} parent=5 // pred_fallthru
      _
    %p251 = scmp.lt.s32.totalorder %s14, 2
    // Predicated region
    $region37: #{image_backbone_forward.21} parent=5 // pred_check
      %p252 = pneg %p251
    $region38: #{image_backbone_forward.21} parent=5 // pred_check_branch
      %254 = sbr.rel (%p252) target = $region40
    $region39: #{image_backbone_forward.21} parent=5 // pred_region
      // Predicated region
      $region41: #{image_backbone_forward.21} parent=39 // pred_check
        %p255 = pneg %p34
      $region42: #{image_backbone_forward.21} parent=39 // pred_check_branch
        %257 = sbr.rel (%p255) target = $region44
      $region43: #{image_backbone_forward.21} parent=39 // pred_region
        %p258 = scmp.lt.s32.totalorder %s14, 1
        %s259 = scalar_select %p258, %s14, 1
        %s260 = smul.addr %s259, 8
        %s261 = smul.addr %s260, 8
        %s262 = scalar_lea.vmem %s0, %s261
      $region44: #{image_backbone_forward.21} parent=39 // pred_fallthru
        _
      // Predicated region
      $region45: #{image_backbone_forward.21} parent=39 // pred_check
        %p263 = pneg %p144
      $region46: #{image_backbone_forward.21} parent=39 // pred_check_branch
        %265 = sbr.rel (%p263) target = $region48
      $region47: #{image_backbone_forward.21} parent=39 // pred_region
        %p266 = scmp.lt.s32.totalorder %s14, 1
        %s267 = scalar_select %p266, %s14, 1
        %s268 = smul.addr %s267, 8
        %s269 = smul.addr %s268, 8
        %s270 = scalar_lea.vmem %s5, %s269
      $region48: #{image_backbone_forward.21} parent=39 // pred_fallthru
        _
    $region40: #{image_backbone_forward.21} parent=5 // pred_fallthru
      _
    %p271 = scmp.le.s32.totalorder 1, %s14
    %p272 = scmp.lt.s32.totalorder %s14, 3
    %p273 = pnand %p271, %p272
    %p274 = pneg %p273
    // Predicated region
    $region49: #{image_backbone_forward.21} parent=5 // pred_check
      _
    $region50: #{image_backbone_forward.21} parent=5 // pred_check_branch
      %276 = sbr.rel (%p273) target = $region52
    $region51: #{image_backbone_forward.21} parent=5 // pred_region
      %s277 = ssub.s32 %s14, 1
      %p278 = scmp.lt.s32.totalorder %s19, 1
      %s279 = scalar_select %p278, %s19, 1
      %s280 = smul.addr %s279, 8
      %s281 = smul.addr %s280, 8
      %s282 = scalar_lea.vmem %s0, %s281
      %p283 = pneg %p40
      %p284 = pneg %p37
      %p285 = pneg %p61
      %p286 = pneg %p58
      %p287 = pneg %p82
      %p288 = pneg %p79
      %p289 = pneg %p103
      %p290 = pneg %p100
      %p291 = pneg %p124
      %p292 = pneg %p121
      %p293 = scmp.lt.s32.totalorder %s19, 1
      %s294 = scalar_select %p293, %s19, 1
      %s295 = smul.addr %s294, 8
      %s296 = smul.addr %s295, 8
      %s297 = scalar_lea.vmem %s5, %s296
      %p298 = pneg %p150
      %p299 = pneg %p147
      %p300 = pneg %p171
      %p301 = pneg %p168
      %p302 = pneg %p192
      %p303 = pneg %p189
      %p304 = pneg %p218
      %p305 = pneg %p215
      %p306 = scmp.lt.s32.totalorder %s19, 1
      %s307 = scalar_select %p306, %s19, 1
      %s308 = smul.addr %s307, 8
      %s309 = smul.addr %s308, 8
      %s310 = scalar_lea.vmem %s8, %s309
      %p311 = scmp.lt.s32.totalorder %s19, 1
      %s312 = scalar_select %p311, %s19, 1
      %s313 = smul.addr %s312, 8
      %s314 = smul.addr %s313, 8
      %s315 = scalar_lea.vmem %s0, %s314
      %p316 = scmp.lt.s32.totalorder %s19, 1
      %s317 = scalar_select %p316, %s19, 1
      %s318 = smul.addr %s317, 8
      %s319 = smul.addr %s318, 8
      %s320 = scalar_lea.vmem %s5, %s319
      %p321 = scmp.lt.s32.totalorder %s19, 1
      %s322 = scalar_select %p321, %s19, 1
      %s323 = smul.addr %s322, 8
      %s324 = smul.addr %s323, 8
      %s325 = scalar_lea.vmem %s8, %s324
      %v326 = vld [vmem:[%s315] sm:$0xff]
      %v327 = vld [vmem:[%s315 + $0x8] sm:$0xff]
      %v328 = vld [vmem:[%s315 + $0x10] sm:$0xff]
      %v329 = vld [vmem:[%s315 + $0x18] sm:$0xff]
      %v330 = vld [vmem:[%s315 + $0x20] sm:$0xff]
      %v331 = vld [vmem:[%s315 + $0x28] sm:$0xff]
      %v332 = vld [vmem:[%s315 + $0x30] sm:$0xff]
      %v333 = vld [vmem:[%s315 + $0x38] sm:$0xff]
      %vm334 = vcmask 261120
      %v335 = vsel %vm334, %v326, 0.0
      %v336 = vsel %vm334, %v327, 0.0
      %v337 = vadd.f32 %v335, %v336
      %v338 = vsel %vm334, %v328, 0.0
      %v339 = vadd.f32 %v337, %v338
      %v340 = vsel %vm334, %v329, 0.0
      %v341 = vadd.f32 %v339, %v340
      %v342 = vsel %vm334, %v330, 0.0
      %v343 = vadd.f32 %v341, %v342
      %v344 = vsel %vm334, %v331, 0.0
      %v345 = vadd.f32 %v343, %v344
      %v346 = vsel %vm334, %v332, 0.0
      %v347 = vadd.f32 %v345, %v346
      %v348 = vsel %vm334, %v333, 0.0
      %v349 = vadd.f32 %v347, %v348
      %v350 = vrot.slane %v349, 4
      %v351 = vadd.f32 %v349, %v350
      %v352 = vrot.slane %v351, 2
      %v353 = vadd.f32 %v351, %v352
      %v354 = vrot.slane %v353, 1
      %v355 = vadd.f32 %v353, %v354
      %v356 = vmul.f32 %v326, %v326
      %v357 = vmul.f32 %v327, %v327
      %v358 = vmul.f32 %v328, %v328
      %v359 = vmul.f32 %v329, %v329
      %v360 = vmul.f32 %v330, %v330
      %v361 = vmul.f32 %v331, %v331
      %v362 = vmul.f32 %v332, %v332
      %v363 = vmul.f32 %v333, %v333
      %v364 = vsel %vm334, %v356, 0.0
      %v365 = vsel %vm334, %v357, 0.0
      %v366 = vadd.f32 %v364, %v365
      %v367 = vsel %vm334, %v358, 0.0
      %v368 = vadd.f32 %v366, %v367
      %v369 = vsel %vm334, %v359, 0.0
      %v370 = vadd.f32 %v368, %v369
      %v371 = vsel %vm334, %v360, 0.0
      %v372 = vadd.f32 %v370, %v371
      %v373 = vsel %vm334, %v361, 0.0
      %v374 = vadd.f32 %v372, %v373
      %v375 = vsel %vm334, %v362, 0.0
      %v376 = vadd.f32 %v374, %v375
      %v377 = vsel %vm334, %v363, 0.0
      %v378 = vadd.f32 %v376, %v377
      %v379 = vrot.slane %v378, 4
      %v380 = vadd.f32 %v378, %v379
      %v381 = vrot.slane %v380, 2
      %v382 = vadd.f32 %v380, %v381
      %v383 = vrot.slane %v382, 1
      %v384 = vadd.f32 %v382, %v383
      %v385 = vld [vmem:[%s3] sm:$0xff]
      %v386 = vld [vmem:[%s3 + $0x8] sm:$0xff]
      %v387 = vld [vmem:[%s3 + $0x10] sm:$0xff]
      %v388 = vld [vmem:[%s3 + $0x18] sm:$0xff]
      %v390 = vsel %vm334, %v355, 0
      %392 = vmatprep.subr.mxu0 0.0
      %393 = vmatpush1.msra.mxu0 %v385
      %394 = vmatprep.subr.mxu0 0.0
      %395 = vmatpush1.msra.mxu0 %v386
      %396 = vmatprep.subr.mxu0 0.0
      %397 = vmatpush1.msra.mxu0 %v387
      %398 = vmatprep.subr.mxu0 0.0
      %399 = vmatpush1.msra.mxu0 %v388
      %400 = vmatprep.subr.mxu0 0.0
      %401 = vmatpush1.msra.mxu0 0.0
      %402 = vmatprep.subr.mxu0 0.0
      %403 = vmatpush1.msra.mxu0 0.0
      %404 = vmatprep.subr.mxu0 0.0
      %405 = vmatpush1.msra.mxu0 0.0
      %406 = vmatprep.subr.mxu0 0.0
      %407 = vmatpush1.msra.mxu0 0.0
      %408 = vmatprep.subr.mxu0 0.0
      %409 = vmatpush1.msra.mxu0 0.0
      %410 = vmatprep.subr.mxu0 0.0
      %411 = vmatpush1.msra.mxu0 0.0
      %412 = vmatprep.subr.mxu0 0.0
      %413 = vmatpush1.msra.mxu0 0.0
      %414 = vmatprep.subr.mxu0 0.0
      %415 = vmatpush1.msra.mxu0 0.0
      %416 = vmatprep.subr.mxu0 0.0
      %417 = vmatpush1.msra.mxu0 0.0
      %418 = vmatprep.subr.mxu0 0.0
      %419 = vmatpush1.msra.mxu0 0.0
      %420 = vmatprep.subr.mxu0 0.0
      %421 = vmatpush1.msra.mxu0 0.0
      %422 = vmatprep.subr.mxu0 0.0
      %423 = vmatpush1.msra.mxu0 0.0
      %424 = vmatprep.subr.mxu0 0.0
      %425 = vmatpush1.msra.mxu0 0.0
      %426 = vmatprep.subr.mxu0 0.0
      %427 = vmatpush1.msra.mxu0 0.0
      %428 = vmatprep.subr.mxu0 0.0
      %429 = vmatpush1.msra.mxu0 0.0
      %430 = vmatprep.subr.mxu0 0.0
      %431 = vmatpush1.msra.mxu0 0.0
      %432 = vmatprep.subr.mxu0 0.0
      %433 = vmatpush1.msra.mxu0 0.0
      %434 = vmatprep.subr.mxu0 0.0
      %435 = vmatpush1.msra.mxu0 0.0
      %436 = vmatprep.subr.mxu0 0.0
      %437 = vmatpush1.msra.mxu0 0.0
      %438 = vmatprep.subr.mxu0 0.0
      %439 = vmatpush1.msra.mxu0 0.0
      %440 = vmatprep.subr.mxu0 0.0
      %441 = vmatpush1.msra.mxu0 0.0
      %442 = vmatprep.subr.mxu0 0.0
      %443 = vmatpush1.msra.mxu0 0.0
      %444 = vmatprep.subr.mxu0 0.0
      %445 = vmatpush1.msra.mxu0 0.0
      %446 = vmatprep.subr.mxu0 0.0
      %447 = vmatpush1.msra.mxu0 0.0
      %448 = vmatprep.subr.mxu0 0.0
      %449 = vmatpush1.msra.mxu0 0.0
      %450 = vmatprep.subr.mxu0 0.0
      %451 = vmatpush1.msra.mxu0 0.0
      %452 = vmatprep.subr.mxu0 0.0
      %453 = vmatpush1.msra.mxu0 0.0
      %454 = vmatprep.subr.mxu0 0.0
      %455 = vmatpush1.msra.mxu0 0.0
      %456 = vmatprep.mubr.f32.mxu0 0.0
      %457 = vmatmul.mubr.f32.gmra.mrb[0].mxu0 %v390
      %v458 = vpop.f32.mrb[0].mxu0
      %v459 = vadd.f32 0.0, %v458
      %v460 = vpop.f32.mrb[0].mxu0
      %461 = vdwg.mxu0
      %v463 = vsel %vm334, %v384, 0
      %465 = vmatprep.subr.mxu0 0.0
      %466 = vmatpush1.msra.mxu0 %v385
      %467 = vmatprep.subr.mxu0 0.0
      %468 = vmatpush1.msra.mxu0 %v386
      %469 = vmatprep.subr.mxu0 0.0
      %470 = vmatpush1.msra.mxu0 %v387
      %471 = vmatprep.subr.mxu0 0.0
      %472 = vmatpush1.msra.mxu0 %v388
      %473 = vmatprep.subr.mxu0 0.0
      %474 = vmatpush1.msra.mxu0 0.0
      %475 = vmatprep.subr.mxu0 0.0
      %476 = vmatpush1.msra.mxu0 0.0
      %477 = vmatprep.subr.mxu0 0.0
      %478 = vmatpush1.msra.mxu0 0.0
      %479 = vmatprep.subr.mxu0 0.0
      %480 = vmatpush1.msra.mxu0 0.0
      %481 = vmatprep.subr.mxu0 0.0
      %482 = vmatpush1.msra.mxu0 0.0
      %483 = vmatprep.subr.mxu0 0.0
      %484 = vmatpush1.msra.mxu0 0.0
      %485 = vmatprep.subr.mxu0 0.0
      %486 = vmatpush1.msra.mxu0 0.0
      %487 = vmatprep.subr.mxu0 0.0
      %488 = vmatpush1.msra.mxu0 0.0
      %489 = vmatprep.subr.mxu0 0.0
      %490 = vmatpush1.msra.mxu0 0.0
      %491 = vmatprep.subr.mxu0 0.0
      %492 = vmatpush1.msra.mxu0 0.0
      %493 = vmatprep.subr.mxu0 0.0
      %494 = vmatpush1.msra.mxu0 0.0
      %495 = vmatprep.subr.mxu0 0.0
      %496 = vmatpush1.msra.mxu0 0.0
      %497 = vmatprep.subr.mxu0 0.0
      %498 = vmatpush1.msra.mxu0 0.0
      %499 = vmatprep.subr.mxu0 0.0
      %500 = vmatpush1.msra.mxu0 0.0
      %501 = vmatprep.subr.mxu0 0.0
      %502 = vmatpush1.msra.mxu0 0.0
      %503 = vmatprep.subr.mxu0 0.0
      %504 = vmatpush1.msra.mxu0 0.0
      %505 = vmatprep.subr.mxu0 0.0
      %506 = vmatpush1.msra.mxu0 0.0
      %507 = vmatprep.subr.mxu0 0.0
      %508 = vmatpush1.msra.mxu0 0.0
      %509 = vmatprep.subr.mxu0 0.0
      %510 = vmatpush1.msra.mxu0 0.0
      %511 = vmatprep.subr.mxu0 0.0
      %512 = vmatpush1.msra.mxu0 0.0
      %513 = vmatprep.subr.mxu0 0.0
      %514 = vmatpush1.msra.mxu0 0.0
      %515 = vmatprep.subr.mxu0 0.0
      %516 = vmatpush1.msra.mxu0 0.0
      %517 = vmatprep.subr.mxu0 0.0
      %518 = vmatpush1.msra.mxu0 0.0
      %519 = vmatprep.subr.mxu0 0.0
      %520 = vmatpush1.msra.mxu0 0.0
      %521 = vmatprep.subr.mxu0 0.0
      %522 = vmatpush1.msra.mxu0 0.0
      %523 = vmatprep.subr.mxu0 0.0
      %524 = vmatpush1.msra.mxu0 0.0
      %525 = vmatprep.subr.mxu0 0.0
      %526 = vmatpush1.msra.mxu0 0.0
      %527 = vmatprep.subr.mxu0 0.0
      %528 = vmatpush1.msra.mxu0 0.0
      %529 = vmatprep.mubr.f32.mxu0 0.0
      %530 = vmatmul.mubr.f32.gmra.mrb[0].mxu0 %v463
      %v531 = vpop.f32.mrb[0].mxu0
      %v532 = vadd.f32 0.0, %v531
      %v533 = vpop.f32.mrb[0].mxu0
      %534 = vdwg.mxu0
      %v535 = vrcp.pop 256.0
      %v536 = vmul.f32 %v459, %v535
      %v537 = vmul.f32 %v532, %v535
      %v538 = vmul.f32 %v536, %v536
      %v539 = vsub.f32 %v537, %v538
      %v540 = vadd.f32 %v539, 1e-05
      %v541 = vrsqrt.pop %v540
      %v542 = vld [vmem:[%s4] sm:$0xff]
      %vm543 = vcmask 64512
      %v545 = vsel %vm543, %v536, 0
      %547 = vmatprep.subr.mxu0 0.0
      %548 = vmatpush1.msra.mxu0 %v542
      %549 = vmatprep.subr.mxu0 0.0
      %550 = vmatpush1.msra.mxu0 0.0
      %551 = vmatprep.subr.mxu0 0.0
      %552 = vmatpush1.msra.mxu0 0.0
      %553 = vmatprep.subr.mxu0 0.0
      %554 = vmatpush1.msra.mxu0 0.0
      %555 = vmatprep.subr.mxu0 0.0
      %556 = vmatpush1.msra.mxu0 0.0
      %557 = vmatprep.subr.mxu0 0.0
      %558 = vmatpush1.msra.mxu0 0.0
      %559 = vmatprep.subr.mxu0 0.0
      %560 = vmatpush1.msra.mxu0 0.0
      %561 = vmatprep.subr.mxu0 0.0
      %562 = vmatpush1.msra.mxu0 0.0
      %563 = vmatprep.subr.mxu0 0.0
      %564 = vmatpush1.msra.mxu0 0.0
      %565 = vmatprep.subr.mxu0 0.0
      %566 = vmatpush1.msra.mxu0 0.0
      %567 = vmatprep.subr.mxu0 0.0
      %568 = vmatpush1.msra.mxu0 0.0
      %569 = vmatprep.subr.mxu0 0.0
      %570 = vmatpush1.msra.mxu0 0.0
      %571 = vmatprep.subr.mxu0 0.0
      %572 = vmatpush1.msra.mxu0 0.0
      %573 = vmatprep.subr.mxu0 0.0
      %574 = vmatpush1.msra.mxu0 0.0
      %575 = vmatprep.subr.mxu0 0.0
      %576 = vmatpush1.msra.mxu0 0.0
      %577 = vmatprep.subr.mxu0 0.0
      %578 = vmatpush1.msra.mxu0 0.0
      %579 = vmatprep.subr.mxu0 0.0
      %580 = vmatpush1.msra.mxu0 0.0
      %581 = vmatprep.subr.mxu0 0.0
      %582 = vmatpush1.msra.mxu0 0.0
      %583 = vmatprep.subr.mxu0 0.0
      %584 = vmatpush1.msra.mxu0 0.0
      %585 = vmatprep.subr.mxu0 0.0
      %586 = vmatpush1.msra.mxu0 0.0
      %587 = vmatprep.subr.mxu0 0.0
      %588 = vmatpush1.msra.mxu0 0.0
      %589 = vmatprep.subr.mxu0 0.0
      %590 = vmatpush1.msra.mxu0 0.0
      %591 = vmatprep.subr.mxu0 0.0
      %592 = vmatpush1.msra.mxu0 0.0
      %593 = vmatprep.subr.mxu0 0.0
      %594 = vmatpush1.msra.mxu0 0.0
      %595 = vmatprep.subr.mxu0 0.0
      %596 = vmatpush1.msra.mxu0 0.0
      %597 = vmatprep.subr.mxu0 0.0
      %598 = vmatpush1.msra.mxu0 0.0
      %599 = vmatprep.subr.mxu0 0.0
      %600 = vmatpush1.msra.mxu0 0.0
      %601 = vmatprep.subr.mxu0 0.0
      %602 = vmatpush1.msra.mxu0 0.0
      %603 = vmatprep.subr.mxu0 0.0
      %604 = vmatpush1.msra.mxu0 0.0
      %605 = vmatprep.subr.mxu0 0.0
      %606 = vmatpush1.msra.mxu0 0.0
      %607 = vmatprep.subr.mxu0 0.0
      %608 = vmatpush1.msra.mxu0 0.0
      %609 = vmatprep.subr.mxu0 0.0
      %610 = vmatpush1.msra.mxu0 0.0
      %611 = vmatprep.mubr.f32.mxu0 0.0
      %612 = vmatmul.mubr.f32.gmra.mrb[0].mxu0 %v545
      %v613 = vpop.f32.mrb[0].mxu0
      %v614 = vadd.f32 0.0, %v613
      %v615 = vpop.f32.mrb[0].mxu0
      %616 = vdwg.mxu0
      %v618 = vsel %vm543, %v541, 0
      %620 = vmatprep.subr.mxu0 0.0
      %621 = vmatpush1.msra.mxu0 %v542
      %622 = vmatprep.subr.mxu0 0.0
      %623 = vmatpush1.msra.mxu0 0.0
      %624 = vmatprep.subr.mxu0 0.0
      %625 = vmatpush1.msra.mxu0 0.0
      %626 = vmatprep.subr.mxu0 0.0
      %627 = vmatpush1.msra.mxu0 0.0
      %628 = vmatprep.subr.mxu0 0.0
      %629 = vmatpush1.msra.mxu0 0.0
      %630 = vmatprep.subr.mxu0 0.0
      %631 = vmatpush1.msra.mxu0 0.0
      %632 = vmatprep.subr.mxu0 0.0
      %633 = vmatpush1.msra.mxu0 0.0
      %634 = vmatprep.subr.mxu0 0.0
      %635 = vmatpush1.msra.mxu0 0.0
      %636 = vmatprep.subr.mxu0 0.0
      %637 = vmatpush1.msra.mxu0 0.0
      %638 = vmatprep.subr.mxu0 0.0
      %639 = vmatpush1.msra.mxu0 0.0
      %640 = vmatprep.subr.mxu0 0.0
      %641 = vmatpush1.msra.mxu0 0.0
      %642 = vmatprep.subr.mxu0 0.0
      %643 = vmatpush1.msra.mxu0 0.0
      %644 = vmatprep.subr.mxu0 0.0
      %645 = vmatpush1.msra.mxu0 0.0
      %646 = vmatprep.subr.mxu0 0.0
      %647 = vmatpush1.msra.mxu0 0.0
      %648 = vmatprep.subr.mxu0 0.0
      %649 = vmatpush1.msra.mxu0 0.0
      %650 = vmatprep.subr.mxu0 0.0
      %651 = vmatpush1.msra.mxu0 0.0
      %652 = vmatprep.subr.mxu0 0.0
      %653 = vmatpush1.msra.mxu0 0.0
      %654 = vmatprep.subr.mxu0 0.0
      %655 = vmatpush1.msra.mxu0 0.0
      %656 = vmatprep.subr.mxu0 0.0
      %657 = vmatpush1.msra.mxu0 0.0
      %658 = vmatprep.subr.mxu0 0.0
      %659 = vmatpush1.msra.mxu0 0.0
      %660 = vmatprep.subr.mxu0 0.0
      %661 = vmatpush1.msra.mxu0 0.0
      %662 = vmatprep.subr.mxu0 0.0
      %663 = vmatpush1.msra.mxu0 0.0
      %664 = vmatprep.subr.mxu0 0.0
      %665 = vmatpush1.msra.mxu0 0.0
      %666 = vmatprep.subr.mxu0 0.0
      %667 = vmatpush1.msra.mxu0 0.0
      %668 = vmatprep.subr.mxu0 0.0
      %669 = vmatpush1.msra.mxu0 0.0
      %670 = vmatprep.subr.mxu0 0.0
      %671 = vmatpush1.msra.mxu0 0.0
      %672 = vmatprep.subr.mxu0 0.0
      %673 = vmatpush1.msra.mxu0 0.0
      %674 = vmatprep.subr.mxu0 0.0
      %675 = vmatpush1.msra.mxu0 0.0
      %676 = vmatprep.subr.mxu0 0.0
      %677 = vmatpush1.msra.mxu0 0.0
      %678 = vmatprep.subr.mxu0 0.0
      %679 = vmatpush1.msra.mxu0 0.0
      %680 = vmatprep.subr.mxu0 0.0
      %681 = vmatpush1.msra.mxu0 0.0
      %682 = vmatprep.subr.mxu0 0.0
      %683 = vmatpush1.msra.mxu0 0.0
      %684 = vmatprep.mubr.f32.mxu0 0.0
      %685 = vmatmul.mubr.f32.gmra.mrb[0].mxu0 %v618
      %v686 = vpop.f32.mrb[0].mxu0
      %v687 = vadd.f32 0.0, %v686
      %v688 = vpop.f32.mrb[0].mxu0
      %689 = vdwg.mxu0
      %v690 = vld [vmem:[%s1] sm:$0x1]
      %v691 = vmul.f32 %v687, %v690
      %v692 = vld [vmem:[%s2] sm:$0x1]
      %v693 = vmul.f32 %v614, %v691
      %v694 = vsub.f32 %v692, %v693
      %v695 = vlaneseq
      %v696 = vshrl.u32 %v695, 7
      %v697 = vsub.s32 0, %v696
      %v698 = vrot.slane %v691, %v697
      %v699 = vmul.f32 %v326, %v698
      %v700 = vmul.f32 %v327, %v698
      %v701 = vmul.f32 %v328, %v698
      %v702 = vmul.f32 %v329, %v698
      %v703 = vmul.f32 %v330, %v698
      %v704 = vmul.f32 %v331, %v698
      %v705 = vmul.f32 %v332, %v698
      %v706 = vmul.f32 %v333, %v698
      %v708 = vlaneseq
      %v709 = vshrl.u32 %v708, 7
      %v710 = vsub.s32 0, %v709
      %v711 = vrot.slane %v694, %v710
      %v713 = vadd.f32 %v699, %v711
      %v714 = vadd.f32 %v700, %v711
      %v715 = vadd.f32 %v701, %v711
      %v716 = vadd.f32 %v702, %v711
      %v717 = vadd.f32 %v703, %v711
      %v718 = vadd.f32 %v704, %v711
      %v719 = vadd.f32 %v705, %v711
      %v720 = vadd.f32 %v706, %v711
      %v721 = vld [vmem:[%s320] sm:$0xff]
      %v722 = vld [vmem:[%s320 + $0x8] sm:$0xff]
      %v723 = vld [vmem:[%s320 + $0x10] sm:$0xff]
      %v724 = vld [vmem:[%s320 + $0x18] sm:$0xff]
      %v725 = vld [vmem:[%s320 + $0x20] sm:$0xff]
      %v726 = vld [vmem:[%s320 + $0x28] sm:$0xff]
      %v727 = vld [vmem:[%s320 + $0x30] sm:$0xff]
      %v728 = vld [vmem:[%s320 + $0x38] sm:$0xff]
      %v729 = vadd.f32 %v713, %v721
      %v730 = vadd.f32 %v714, %v722
      %v731 = vadd.f32 %v715, %v723
      %v732 = vadd.f32 %v716, %v724
      %v733 = vadd.f32 %v717, %v725
      %v734 = vadd.f32 %v718, %v726
      %v735 = vadd.f32 %v719, %v727
      %v736 = vadd.f32 %v720, %v728
      %vm737 = vcmp.ge.f32.partialorder %v729, 0.0
      %vm738 = vcmp.ge.f32.partialorder %v730, 0.0
      %vm739 = vcmp.ge.f32.partialorder %v731, 0.0
      %vm740 = vcmp.ge.f32.partialorder %v732, 0.0
      %vm741 = vcmp.ge.f32.partialorder %v733, 0.0
      %vm742 = vcmp.ge.f32.partialorder %v734, 0.0
      %vm743 = vcmp.ge.f32.partialorder %v735, 0.0
      %vm744 = vcmp.ge.f32.partialorder %v736, 0.0
      %v745 = vmul.f32 %v729, 0.1
      %v746 = vmul.f32 %v730, 0.1
      %v747 = vmul.f32 %v731, 0.1
      %v748 = vmul.f32 %v732, 0.1
      %v749 = vmul.f32 %v733, 0.1
      %v750 = vmul.f32 %v734, 0.1
      %v751 = vmul.f32 %v735, 0.1
      %v752 = vmul.f32 %v736, 0.1
      %v753 = vsel %vm737, %v729, %v745
      %v754 = vsel %vm738, %v730, %v746
      %v755 = vsel %vm739, %v731, %v747
      %v756 = vsel %vm740, %v732, %v748
      %v757 = vsel %vm741, %v733, %v749
      %v758 = vsel %vm742, %v734, %v750
      %v759 = vsel %vm743, %v735, %v751
      %v760 = vsel %vm744, %v736, %v752
      %v761 = vld [vmem:[%s6] sm:$0xff]
      %v762 = vld [vmem:[%s6 + $0x8] sm:$0xff]
      %v763 = vld [vmem:[%s6 + $0x10] sm:$0xff]
      %v764 = vld [vmem:[%s6 + $0x18] sm:$0xff]
      %v765 = vld [vmem:[%s7] sm:$0x1]
      %v767 = vlaneseq
      %v768 = vshrl.u32 %v767, 7
      %v769 = vsub.s32 0, %v768
      %v770 = vrot.slane %v765, %v769
      %v773 = vsel %vm334, %v753, 0
      %v776 = vsel %vm334, %v754, 0
      %v779 = vsel %vm334, %v755, 0
      %v782 = vsel %vm334, %v756, 0
      %v785 = vsel %vm334, %v757, 0
      %v788 = vsel %vm334, %v758, 0
      %v791 = vsel %vm334, %v759, 0
      %v794 = vsel %vm334, %v760, 0
      %796 = vmatprep.subr.mxu0 0.0
      %797 = vmatpush1.msra.mxu0 %v761
      %798 = vmatprep.subr.mxu0 0.0
      %799 = vmatpush1.msra.mxu0 %v762
      %800 = vmatprep.subr.mxu0 0.0
      %801 = vmatpush1.msra.mxu0 %v763
      %802 = vmatprep.subr.mxu0 0.0
      %803 = vmatpush1.msra.mxu0 %v764
      %804 = vmatprep.subr.mxu0 0.0
      %805 = vmatpush1.msra.mxu0 0.0
      %806 = vmatprep.subr.mxu0 0.0
      %807 = vmatpush1.msra.mxu0 0.0
      %808 = vmatprep.subr.mxu0 0.0
      %809 = vmatpush1.msra.mxu0 0.0
      %810 = vmatprep.subr.mxu0 0.0
      %811 = vmatpush1.msra.mxu0 0.0
      %812 = vmatprep.subr.mxu0 0.0
      %813 = vmatpush1.msra.mxu0 0.0
      %814 = vmatprep.subr.mxu0 0.0
      %815 = vmatpush1.msra.mxu0 0.0
      %816 = vmatprep.subr.mxu0 0.0
      %817 = vmatpush1.msra.mxu0 0.0
      %818 = vmatprep.subr.mxu0 0.0
      %819 = vmatpush1.msra.mxu0 0.0
      %820 = vmatprep.subr.mxu0 0.0
      %821 = vmatpush1.msra.mxu0 0.0
      %822 = vmatprep.subr.mxu0 0.0
      %823 = vmatpush1.msra.mxu0 0.0
      %824 = vmatprep.subr.mxu0 0.0
      %825 = vmatpush1.msra.mxu0 0.0
      %826 = vmatprep.subr.mxu0 0.0
      %827 = vmatpush1.msra.mxu0 0.0
      %828 = vmatprep.subr.mxu0 0.0
      %829 = vmatpush1.msra.mxu0 0.0
      %830 = vmatprep.subr.mxu0 0.0
      %831 = vmatpush1.msra.mxu0 0.0
      %832 = vmatprep.subr.mxu0 0.0
      %833 = vmatpush1.msra.mxu0 0.0
      %834 = vmatprep.subr.mxu0 0.0
      %835 = vmatpush1.msra.mxu0 0.0
      %836 = vmatprep.subr.mxu0 0.0
      %837 = vmatpush1.msra.mxu0 0.0
      %838 = vmatprep.subr.mxu0 0.0
      %839 = vmatpush1.msra.mxu0 0.0
      %840 = vmatprep.subr.mxu0 0.0
      %841 = vmatpush1.msra.mxu0 0.0
      %842 = vmatprep.subr.mxu0 0.0
      %843 = vmatpush1.msra.mxu0 0.0
      %844 = vmatprep.subr.mxu0 0.0
      %845 = vmatpush1.msra.mxu0 0.0
      %846 = vmatprep.subr.mxu0 0.0
      %847 = vmatpush1.msra.mxu0 0.0
      %848 = vmatprep.subr.mxu0 0.0
      %849 = vmatpush1.msra.mxu0 0.0
      %850 = vmatprep.subr.mxu0 0.0
      %851 = vmatpush1.msra.mxu0 0.0
      %852 = vmatprep.subr.mxu0 0.0
      %853 = vmatpush1.msra.mxu0 0.0
      %854 = vmatprep.subr.mxu0 0.0
      %855 = vmatpush1.msra.mxu0 0.0
      %856 = vmatprep.subr.mxu0 0.0
      %857 = vmatpush1.msra.mxu0 0.0
      %858 = vmatprep.subr.mxu0 0.0
      %859 = vmatpush1.msra.mxu0 0.0
      %860 = vmatprep.mubr.f32.mxu0 0.0
      %861 = vmatmul.mubr.f32.gmra.mrb[0].mxu0 %v773
      %v862 = vpop.f32.mrb[0].mxu0
      %v863 = vadd.f32 %v770, %v862
      %v864 = vpop.f32.mrb[0].mxu0
      %865 = vmatprep.mubr.f32.mxu0 0.0
      %866 = vmatmul.mubr.f32.gmra.mrb[0].mxu0 %v776
      %v867 = vpop.f32.mrb[0].mxu0
      %v868 = vadd.f32 %v770, %v867
      %v869 = vpop.f32.mrb[0].mxu0
      %870 = vmatprep.mubr.f32.mxu0 0.0
      %871 = vmatmul.mubr.f32.gmra.mrb[0].mxu0 %v779
      %v872 = vpop.f32.mrb[0].mxu0
      %v873 = vadd.f32 %v770, %v872
      %v874 = vpop.f32.mrb[0].mxu0
      %875 = vmatprep.mubr.f32.mxu0 0.0
      %876 = vmatmul.mubr.f32.gmra.mrb[0].mxu0 %v782
      %v877 = vpop.f32.mrb[0].mxu0
      %v878 = vadd.f32 %v770, %v877
      %v879 = vpop.f32.mrb[0].mxu0
      %880 = vmatprep.mubr.f32.mxu0 0.0
      %881 = vmatmul.mubr.f32.gmra.mrb[0].mxu0 %v785
      %v882 = vpop.f32.mrb[0].mxu0
      %v883 = vadd.f32 %v770, %v882
      %v884 = vpop.f32.mrb[0].mxu0
      %885 = vmatprep.mubr.f32.mxu0 0.0
      %886 = vmatmul.mubr.f32.gmra.mrb[0].mxu0 %v788
      %v887 = vpop.f32.mrb[0].mxu0
      %v888 = vadd.f32 %v770, %v887
      %v889 = vpop.f32.mrb[0].mxu0
      %890 = vmatprep.mubr.f32.mxu0 0.0
      %891 = vmatmul.mubr.f32.gmra.mrb[0].mxu0 %v791
      %v892 = vpop.f32.mrb[0].mxu0
      %v893 = vadd.f32 %v770, %v892
      %v894 = vpop.f32.mrb[0].mxu0
      %895 = vmatprep.mubr.f32.mxu0 0.0
      %896 = vmatmul.mubr.f32.gmra.mrb[0].mxu0 %v794
      %v897 = vpop.f32.mrb[0].mxu0
      %v898 = vadd.f32 %v770, %v897
      %v899 = vpop.f32.mrb[0].mxu0
      %900 = vdwg.mxu0
      %vm901 = vcmask 130048
      %902 = vst.msk [vmem:[%s325] sm:$0xff] %vm901, %v863
      %903 = vst.msk [vmem:[%s325 + $0x8] sm:$0xff] %vm901, %v868
      %904 = vst.msk [vmem:[%s325 + $0x10] sm:$0xff] %vm901, %v873
      %905 = vst.msk [vmem:[%s325 + $0x18] sm:$0xff] %vm901, %v878
      %906 = vst.msk [vmem:[%s325 + $0x20] sm:$0xff] %vm901, %v883
      %907 = vst.msk [vmem:[%s325 + $0x28] sm:$0xff] %vm901, %v888
      %908 = vst.msk [vmem:[%s325 + $0x30] sm:$0xff] %vm901, %v893
      %909 = vst.msk [vmem:[%s325 + $0x38] sm:$0xff] %vm901, %v898
      %p910 = scmp.lt.s32.totalorder %s19, 1
      %s911 = scalar_select %p910, %s19, 1
      %s912 = smul.addr %s911, 8
      %s913 = smul.addr %s912, 8
      %s914 = scalar_lea.vmem %s8, %s913
      // Predicated region
      $region53: #{image_backbone_forward.21} parent=51 // pred_check
        %p915 = pneg %p215
      $region54: #{image_backbone_forward.21} parent=51 // pred_check_branch
        %917 = sbr.rel (%p915) target = $region56
      $region55: #{image_backbone_forward.21} parent=51 // pred_region
        _
      $region56: #{image_backbone_forward.21} parent=51 // pred_fallthru
        _
    $region52: #{image_backbone_forward.21} parent=5 // pred_fallthru
      _
    %p918 = scmp.le.s32.totalorder 2, %s14
    // Predicated region
    $region57: #{image_backbone_forward.21} parent=5 // pred_check
      %p919 = pneg %p918
    $region58: #{image_backbone_forward.21} parent=5 // pred_check_branch
      %921 = sbr.rel (%p919) target = $region60
    $region59: #{image_backbone_forward.21} parent=5 // pred_region
      %s922 = ssub.s32 %s14, 2
      // Predicated region
      $region61: #{image_backbone_forward.21} parent=59 // pred_check
        %p923 = pneg %p221
      $region62: #{image_backbone_forward.21} parent=59 // pred_check_branch
        %925 = sbr.rel (%p923) target = $region64
      $region63: #{image_backbone_forward.21} parent=59 // pred_region
        %p926 = scmp.lt.s32.totalorder %s20, 1
        %s927 = scalar_select %p926, %s20, 1
        %s928 = smul.addr %s927, 8
        %s929 = smul.addr %s928, 8
        %s930 = scalar_lea.vmem %s8, %s929
      $region64: #{image_backbone_forward.21} parent=59 // pred_fallthru
        _
    $region60: #{image_backbone_forward.21} parent=5 // pred_fallthru
      _
  $region6: #{image_backbone_forward.21} parent=0 // loop_footer
    %s18 = sadd.s32 1, %s14
  $region7: #{image_backbone_forward.21} parent=0 // loop_footer_branch
    %13 = sbr.rel target = $region3
  $region8: #{image_backbone_forward.21} parent=0 // loop_exit
    _

// kernel: image_backbone_forward.22
$region0: #{image_backbone_forward.22}
  #allocation0 [shape = 'u32[]', space=smem, size = 0x4, offset = 0x4, fixed_abs, tag = 'smem constant byte address 0x4 - core index']
  #allocation1 [shape = 'u32[144,128]{1,0:T(1,128)}', space=vmem, size = 0x12000, scoped, tag = 'internal scratch']
  %s0 = inlined_call_operand.vmem [shape: f32[16,8], index: 0, kind: input, shape index: {}]
  %s1 = inlined_call_operand.vmem [shape: f32[2,8,128], index: 1, kind: input, shape index: {}]
  %s2 = inlined_call_operand.vmem [shape: f32[2,16,128], index: 2, kind: output, shape index: {}]
  %s3 = sld [smem:[#allocation0]]
  $region41: #{image_backbone_forward.22} parent=0
    _
  %s5 = ssub.s32 1, %s3
  %s6 = scalar_select 0, %s5, %s3
  loop: start=0, step=1, limit=4
  $region2: #{image_backbone_forward.22} parent=0 // loop_pre_header
    _
  $region3: #{image_backbone_forward.22} parent=0 // loop_header
    %s8 = sphi 0, %s12
    %p9 = scmp.ge.s32.totalorder %s8, 4
    %s16 = sphi 0, %s16
    %s18 = sphi 0, %s16
    %s19 = sphi 0, %s18
    %s33 = sphi 0, %s19
    %s39 = sphi 0, %s41
    %s42 = sphi 0, %s39
    %s43 = sphi 0, %s42
    %s59 = sphi 0, %s43
    %s65 = sphi 0, %s67
    %s68 = sphi 0, %s65
    %s69 = sphi 0, %s68
    %s85 = sphi 0, %s69
  $region4: #{image_backbone_forward.22} parent=0 // loop_header_branch
    %11 = sbr.rel (%p9) target = $region8
  $region5: #{image_backbone_forward.22} parent=0 // loop_body
    %s13 = ssub.s32 %s8, 1
    %s14 = ssub.s32 %s8, 2
    %s15 = sadd.s32 %s8, 1
    %s17 = sadd.s32 %s16, 1
    %p20 = scmp.eq.s32.totalorder %s8, 1
    %p21 = scmp.ne.s32.totalorder %s16, %s18
    %p22 = scmp.eq.s32.totalorder %s8, 0
    %p23 = por %p21, %p22
    %p24 = scmp.ne.s32.totalorder %s16, %s18
    %p25 = scmp.eq.s32.totalorder %s13, 1
    %p26 = por %p24, %p25
    %p27 = scmp.ne.s32.totalorder %s18, %s19
    %p28 = scmp.eq.s32.totalorder %s13, 0
    %p29 = por %p27, %p28
    %p30 = scmp.ne.s32.totalorder %s18, %s19
    %p31 = scmp.eq.s32.totalorder %s14, 1
    %p32 = por %p30, %p31
    %p34 = scmp.ne.s32.totalorder %s19, %s33
    %p35 = scmp.eq.s32.totalorder %s14, 0
    %p36 = por %p34, %p35
    %s37 = ssub.s32 %s8, %s15
    %p38 = scmp.eq.s32.totalorder %s37, 0
    %s40 = sadd.s32 %s39, 1
    %s41 = scalar_select %p38, %s39, %s40
    %p44 = pneg %p38
    %p45 = scmp.eq.s32.totalorder %s8, 1
    %p46 = por %p44, %p45
    %p47 = scmp.ne.s32.totalorder %s39, %s42
    %p48 = scmp.eq.s32.totalorder %s8, 0
    %p49 = por %p47, %p48
    %p50 = scmp.ne.s32.totalorder %s39, %s42
    %p51 = scmp.eq.s32.totalorder %s13, 1
    %p52 = por %p50, %p51
    %p53 = scmp.ne.s32.totalorder %s42, %s43
    %p54 = scmp.eq.s32.totalorder %s13, 0
    %p55 = por %p53, %p54
    %p56 = scmp.ne.s32.totalorder %s42, %s43
    %p57 = scmp.eq.s32.totalorder %s14, 1
    %p58 = por %p56, %p57
    %p60 = scmp.ne.s32.totalorder %s43, %s59
    %p61 = scmp.eq.s32.totalorder %s14, 0
    %p62 = por %p60, %p61
    %s63 = ssub.s32 %s8, %s15
    %p64 = scmp.eq.s32.totalorder %s63, 0
    %s66 = sadd.s32 %s65, 1
    %s67 = scalar_select %p64, %s65, %s66
    %p70 = pneg %p64
    %p71 = scmp.eq.s32.totalorder %s8, 1
    %p72 = por %p70, %p71
    %p73 = scmp.ne.s32.totalorder %s65, %s68
    %p74 = scmp.eq.s32.totalorder %s8, 0
    %p75 = por %p73, %p74
    %p76 = scmp.ne.s32.totalorder %s65, %s68
    %p77 = scmp.eq.s32.totalorder %s13, 1
    %p78 = por %p76, %p77
    %p79 = scmp.ne.s32.totalorder %s68, %s69
    %p80 = scmp.eq.s32.totalorder %s13, 0
    %p81 = por %p79, %p80
    %p82 = scmp.ne.s32.totalorder %s68, %s69
    %p83 = scmp.eq.s32.totalorder %s14, 1
    %p84 = por %p82, %p83
    %p86 = scmp.ne.s32.totalorder %s69, %s85
    %p87 = scmp.eq.s32.totalorder %s14, 0
    %p88 = por %p86, %p87
    %p89 = scmp.le.s32.totalorder 1, %s8
    %p90 = scmp.lt.s32.totalorder %s8, 3
    %p91 = pnand %p89, %p90
    %p92 = pneg %p91
    // Predicated region
    $region9: #{image_backbone_forward.22} parent=5 // pred_check
      _
    $region10: #{image_backbone_forward.22} parent=5 // pred_check_branch
      %94 = sbr.rel (%p91) target = $region12
    $region11: #{image_backbone_forward.22} parent=5 // pred_region
      %s95 = ssub.s32 %s8, 1
      // Predicated region
      $region13: #{image_backbone_forward.22} parent=11 // pred_check
        %p96 = pneg %p29
      $region14: #{image_backbone_forward.22} parent=11 // pred_check_branch
        %98 = sbr.rel (%p96) target = $region16
      $region15: #{image_backbone_forward.22} parent=11 // pred_region
        _
      $region16: #{image_backbone_forward.22} parent=11 // pred_fallthru
        _
    $region12: #{image_backbone_forward.22} parent=5 // pred_fallthru
      _
    %p99 = scmp.lt.s32.totalorder %s8, 2
    // Predicated region
    $region17: #{image_backbone_forward.22} parent=5 // pred_check
      %p100 = pneg %p99
    $region18: #{image_backbone_forward.22} parent=5 // pred_check_branch
      %102 = sbr.rel (%p100) target = $region20
    $region19: #{image_backbone_forward.22} parent=5 // pred_region
      // Predicated region
      $region21: #{image_backbone_forward.22} parent=19 // pred_check
        %p103 = pneg %p49
      $region22: #{image_backbone_forward.22} parent=19 // pred_check_branch
        %105 = sbr.rel (%p103) target = $region24
      $region23: #{image_backbone_forward.22} parent=19 // pred_region
        %p106 = scmp.lt.s32.totalorder %s8, 1
        %s107 = scalar_select %p106, %s8, 1
        %s108 = smul.addr %s107, 8
        %s109 = scalar_lea.vmem %s1, %s108
      $region24: #{image_backbone_forward.22} parent=19 // pred_fallthru
        _
    $region20: #{image_backbone_forward.22} parent=5 // pred_fallthru
      _
    %p110 = scmp.le.s32.totalorder 1, %s8
    %p111 = scmp.lt.s32.totalorder %s8, 3
    %p112 = pnand %p110, %p111
    %p113 = pneg %p112
    // Predicated region
    $region25: #{image_backbone_forward.22} parent=5 // pred_check
      _
    $region26: #{image_backbone_forward.22} parent=5 // pred_check_branch
      %115 = sbr.rel (%p112) target = $region28
    $region27: #{image_backbone_forward.22} parent=5 // pred_region
      %s116 = ssub.s32 %s8, 1
      %p117 = pneg %p29
      %p118 = pneg %p26
      %p119 = scmp.lt.s32.totalorder %s13, 1
      %s120 = scalar_select %p119, %s13, 1
      %s121 = smul.addr %s120, 8
      %s122 = scalar_lea.vmem %s1, %s121
      %p123 = pneg %p55
      %p124 = pneg %p52
      %p125 = pneg %p81
      %p126 = pneg %p78
      %p127 = scmp.lt.s32.totalorder %s13, 1
      %s128 = scalar_select %p127, %s13, 1
      %s129 = smul.addr %s128, 2
      %s130 = smul.addr %s129, 8
      %s131 = scalar_lea.vmem %s2, %s130
      %p132 = scmp.lt.s32.totalorder %s13, 1
      %s133 = scalar_select %p132, %s13, 1
      %s134 = smul.addr %s133, 8
      %s135 = scalar_lea.vmem %s1, %s134
      %p136 = scmp.lt.s32.totalorder %s13, 1
      %s137 = scalar_select %p136, %s13, 1
      %s138 = smul.addr %s137, 2
      %s139 = smul.addr %s138, 8
      %s140 = scalar_lea.vmem %s2, %s139
      %v141 = vld [vmem:[%s0] sm:$0xff]
      %v142 = vld [vmem:[%s0 + $0x8] sm:$0xff]
      %v143 = vld [vmem:[%s135] sm:$0xff]
      %vm144 = vcmask 64512
      %v146 = vsel %vm144, %v141, 0
      %v149 = vsel %vm144, %v142, 0
      %151 = vmatprep.subr.mxu0 0.0
      %152 = vmatpush1.msra.mxu0 %v143
      %153 = vmatprep.subr.mxu0 0.0
      %154 = vmatpush1.msra.mxu0 0.0
      %155 = vmatprep.subr.mxu0 0.0
      %156 = vmatpush1.msra.mxu0 0.0
      %157 = vmatprep.subr.mxu0 0.0
      %158 = vmatpush1.msra.mxu0 0.0
      %159 = vmatprep.subr.mxu0 0.0
      %160 = vmatpush1.msra.mxu0 0.0
      %161 = vmatprep.subr.mxu0 0.0
      %162 = vmatpush1.msra.mxu0 0.0
      %163 = vmatprep.subr.mxu0 0.0
      %164 = vmatpush1.msra.mxu0 0.0
      %165 = vmatprep.subr.mxu0 0.0
      %166 = vmatpush1.msra.mxu0 0.0
      %167 = vmatprep.subr.mxu0 0.0
      %168 = vmatpush1.msra.mxu0 0.0
      %169 = vmatprep.subr.mxu0 0.0
      %170 = vmatpush1.msra.mxu0 0.0
      %171 = vmatprep.subr.mxu0 0.0
      %172 = vmatpush1.msra.mxu0 0.0
      %173 = vmatprep.subr.mxu0 0.0
      %174 = vmatpush1.msra.mxu0 0.0
      %175 = vmatprep.subr.mxu0 0.0
      %176 = vmatpush1.msra.mxu0 0.0
      %177 = vmatprep.subr.mxu0 0.0
      %178 = vmatpush1.msra.mxu0 0.0
      %179 = vmatprep.subr.mxu0 0.0
      %180 = vmatpush1.msra.mxu0 0.0
      %181 = vmatprep.subr.mxu0 0.0
      %182 = vmatpush1.msra.mxu0 0.0
      %183 = vmatprep.subr.mxu0 0.0
      %184 = vmatpush1.msra.mxu0 0.0
      %185 = vmatprep.subr.mxu0 0.0
      %186 = vmatpush1.msra.mxu0 0.0
      %187 = vmatprep.subr.mxu0 0.0
      %188 = vmatpush1.msra.mxu0 0.0
      %189 = vmatprep.subr.mxu0 0.0
      %190 = vmatpush1.msra.mxu0 0.0
      %191 = vmatprep.subr.mxu0 0.0
      %192 = vmatpush1.msra.mxu0 0.0
      %193 = vmatprep.subr.mxu0 0.0
      %194 = vmatpush1.msra.mxu0 0.0
      %195 = vmatprep.subr.mxu0 0.0
      %196 = vmatpush1.msra.mxu0 0.0
      %197 = vmatprep.subr.mxu0 0.0
      %198 = vmatpush1.msra.mxu0 0.0
      %199 = vmatprep.subr.mxu0 0.0
      %200 = vmatpush1.msra.mxu0 0.0
      %201 = vmatprep.subr.mxu0 0.0
      %202 = vmatpush1.msra.mxu0 0.0
      %203 = vmatprep.subr.mxu0 0.0
      %204 = vmatpush1.msra.mxu0 0.0
      %205 = vmatprep.subr.mxu0 0.0
      %206 = vmatpush1.msra.mxu0 0.0
      %207 = vmatprep.subr.mxu0 0.0
      %208 = vmatpush1.msra.mxu0 0.0
      %209 = vmatprep.subr.mxu0 0.0
      %210 = vmatpush1.msra.mxu0 0.0
      %211 = vmatprep.subr.mxu0 0.0
      %212 = vmatpush1.msra.mxu0 0.0
      %213 = vmatprep.subr.mxu0 0.0
      %214 = vmatpush1.msra.mxu0 0.0
      %215 = vmatprep.mubr.f32.mxu0 0.0
      %216 = vmatmul.mubr.f32.gmra.mrb[0].mxu0 %v146
      %v217 = vpop.f32.mrb[0].mxu0
      %v218 = vadd.f32 0.0, %v217
      %v219 = vpop.f32.mrb[0].mxu0
      %220 = vmatprep.mubr.f32.mxu0 0.0
      %221 = vmatmul.mubr.f32.gmra.mrb[0].mxu0 %v149
      %v222 = vpop.f32.mrb[0].mxu0
      %v223 = vadd.f32 0.0, %v222
      %v224 = vpop.f32.mrb[0].mxu0
      %225 = vdwg.mxu0
      %226 = vst [vmem:[%s140] sm:$0xff] %v218
      %227 = vst [vmem:[%s140 + $0x8] sm:$0xff] %v223
      %p228 = scmp.lt.s32.totalorder %s13, 1
      %s229 = scalar_select %p228, %s13, 1
      %s230 = smul.addr %s229, 2
      %s231 = smul.addr %s230, 8
      %s232 = scalar_lea.vmem %s2, %s231
      // Predicated region
      $region29: #{image_backbone_forward.22} parent=27 // pred_check
        %p233 = pneg %p78
      $region30: #{image_backbone_forward.22} parent=27 // pred_check_branch
        %235 = sbr.rel (%p233) target = $region32
      $region31: #{image_backbone_forward.22} parent=27 // pred_region
        _
      $region32: #{image_backbone_forward.22} parent=27 // pred_fallthru
        _
    $region28: #{image_backbone_forward.22} parent=5 // pred_fallthru
      _
    %p236 = scmp.le.s32.totalorder 2, %s8
    // Predicated region
    $region33: #{image_backbone_forward.22} parent=5 // pred_check
      %p237 = pneg %p236
    $region34: #{image_backbone_forward.22} parent=5 // pred_check_branch
      %239 = sbr.rel (%p237) target = $region36
    $region35: #{image_backbone_forward.22} parent=5 // pred_region
      %s240 = ssub.s32 %s8, 2
      // Predicated region
      $region37: #{image_backbone_forward.22} parent=35 // pred_check
        %p241 = pneg %p84
      $region38: #{image_backbone_forward.22} parent=35 // pred_check_branch
        %243 = sbr.rel (%p241) target = $region40
      $region39: #{image_backbone_forward.22} parent=35 // pred_region
        %p244 = scmp.lt.s32.totalorder %s14, 1
        %s245 = scalar_select %p244, %s14, 1
        %s246 = smul.addr %s245, 2
        %s247 = smul.addr %s246, 8
        %s248 = scalar_lea.vmem %s2, %s247
      $region40: #{image_backbone_forward.22} parent=35 // pred_fallthru
        _
    $region36: #{image_backbone_forward.22} parent=5 // pred_fallthru
      _
  $region6: #{image_backbone_forward.22} parent=0 // loop_footer
    %s12 = sadd.s32 1, %s8
  $region7: #{image_backbone_forward.22} parent=0 // loop_footer_branch
    %7 = sbr.rel target = $region3
  $region8: #{image_backbone_forward.22} parent=0 // loop_exit
    _

// kernel: image_backbone_forward.17
$region0: #{image_backbone_forward.17}
  #allocation0 [shape = 'u32[]', space=smem, size = 0x4, offset = 0x4, fixed_abs, tag = 'smem constant byte address 0x4 - core index']
  #allocation1 [shape = 'u32[144,128]{1,0:T(1,128)}', space=vmem, size = 0x12000, scoped, tag = 'internal scratch']
  %s0 = inlined_call_operand.vmem [shape: f32[2,64,32], index: 0, kind: input, shape index: {}]
  %s1 = inlined_call_operand.vmem [shape: f32[1,32], index: 1, kind: input, shape index: {}]
  %s2 = inlined_call_operand.vmem [shape: f32[1,32], index: 2, kind: input, shape index: {}]
  %s3 = inlined_call_operand.vmem [shape: f32[32,8], index: 3, kind: input, shape index: {}]
  %s4 = inlined_call_operand.vmem [shape: f32[8,32], index: 4, kind: input, shape index: {}]
  %s5 = inlined_call_operand.vmem [shape: f32[2,64,32], index: 5, kind: input, shape index: {}]
  %s6 = inlined_call_operand.vmem [shape: f32[2,64,32], index: 6, kind: output, shape index: {}]
  %s7 = sld [smem:[#allocation0]]
  $region57: #{image_backbone_forward.17} parent=0
    _
  %s9 = ssub.s32 1, %s7
  %s10 = scalar_select 0, %s9, %s7
  loop: start=0, step=1, limit=4
  $region2: #{image_backbone_forward.17} parent=0 // loop_pre_header
    _
  $region3: #{image_backbone_forward.17} parent=0 // loop_header
    %s12 = sphi 0, %s16
    %p13 = scmp.ge.s32.totalorder %s12, 4
    %s22 = sphi 0, %s24
    %s25 = sphi 0, %s22
    %s26 = sphi 0, %s25
    %s42 = sphi 0, %s26
    %s46 = sphi 0, %s46
    %s48 = sphi 0, %s46
    %s49 = sphi 0, %s48
    %s63 = sphi 0, %s49
    %s67 = sphi 0, %s67
    %s69 = sphi 0, %s67
    %s70 = sphi 0, %s69
    %s84 = sphi 0, %s70
    %s88 = sphi 0, %s88
    %s90 = sphi 0, %s88
    %s91 = sphi 0, %s90
    %s105 = sphi 0, %s91
    %s109 = sphi 0, %s109
    %s111 = sphi 0, %s109
    %s112 = sphi 0, %s111
    %s126 = sphi 0, %s112
    %s132 = sphi 0, %s134
    %s135 = sphi 0, %s132
    %s136 = sphi 0, %s135
    %s152 = sphi 0, %s136
    %s158 = sphi 0, %s160
    %s161 = sphi 0, %s158
    %s162 = sphi 0, %s161
    %s178 = sphi 0, %s162
  $region4: #{image_backbone_forward.17} parent=0 // loop_header_branch
    %15 = sbr.rel (%p13) target = $region8
  $region5: #{image_backbone_forward.17} parent=0 // loop_body
    %s17 = ssub.s32 %s12, 1
    %s18 = ssub.s32 %s12, 2
    %s19 = sadd.s32 %s12, 1
    %s20 = ssub.s32 %s12, %s19
    %p21 = scmp.eq.s32.totalorder %s20, 0
    %s23 = sadd.s32 %s22, 1
    %s24 = scalar_select %p21, %s22, %s23
    %p27 = pneg %p21
    %p28 = scmp.eq.s32.totalorder %s12, 1
    %p29 = por %p27, %p28
    %p30 = scmp.ne.s32.totalorder %s22, %s25
    %p31 = scmp.eq.s32.totalorder %s12, 0
    %p32 = por %p30, %p31
    %p33 = scmp.ne.s32.totalorder %s22, %s25
    %p34 = scmp.eq.s32.totalorder %s17, 1
    %p35 = por %p33, %p34
    %p36 = scmp.ne.s32.totalorder %s25, %s26
    %p37 = scmp.eq.s32.totalorder %s17, 0
    %p38 = por %p36, %p37
    %p39 = scmp.ne.s32.totalorder %s25, %s26
    %p40 = scmp.eq.s32.totalorder %s18, 1
    %p41 = por %p39, %p40
    %p43 = scmp.ne.s32.totalorder %s26, %s42
    %p44 = scmp.eq.s32.totalorder %s18, 0
    %p45 = por %p43, %p44
    %s47 = sadd.s32 %s46, 1
    %p50 = scmp.eq.s32.totalorder %s12, 1
    %p51 = scmp.ne.s32.totalorder %s46, %s48
    %p52 = scmp.eq.s32.totalorder %s12, 0
    %p53 = por %p51, %p52
    %p54 = scmp.ne.s32.totalorder %s46, %s48
    %p55 = scmp.eq.s32.totalorder %s17, 1
    %p56 = por %p54, %p55
    %p57 = scmp.ne.s32.totalorder %s48, %s49
    %p58 = scmp.eq.s32.totalorder %s17, 0
    %p59 = por %p57, %p58
    %p60 = scmp.ne.s32.totalorder %s48, %s49
    %p61 = scmp.eq.s32.totalorder %s18, 1
    %p62 = por %p60, %p61
    %p64 = scmp.ne.s32.totalorder %s49, %s63
    %p65 = scmp.eq.s32.totalorder %s18, 0
    %p66 = por %p64, %p65
    %s68 = sadd.s32 %s67, 1
    %p71 = scmp.eq.s32.totalorder %s12, 1
    %p72 = scmp.ne.s32.totalorder %s67, %s69
    %p73 = scmp.eq.s32.totalorder %s12, 0
    %p74 = por %p72, %p73
    %p75 = scmp.ne.s32.totalorder %s67, %s69
    %p76 = scmp.eq.s32.totalorder %s17, 1
    %p77 = por %p75, %p76
    %p78 = scmp.ne.s32.totalorder %s69, %s70
    %p79 = scmp.eq.s32.totalorder %s17, 0
    %p80 = por %p78, %p79
    %p81 = scmp.ne.s32.totalorder %s69, %s70
    %p82 = scmp.eq.s32.totalorder %s18, 1
    %p83 = por %p81, %p82
    %p85 = scmp.ne.s32.totalorder %s70, %s84
    %p86 = scmp.eq.s32.totalorder %s18, 0
    %p87 = por %p85, %p86
    %s89 = sadd.s32 %s88, 1
    %p92 = scmp.eq.s32.totalorder %s12, 1
    %p93 = scmp.ne.s32.totalorder %s88, %s90
    %p94 = scmp.eq.s32.totalorder %s12, 0
    %p95 = por %p93, %p94
    %p96 = scmp.ne.s32.totalorder %s88, %s90
    %p97 = scmp.eq.s32.totalorder %s17, 1
    %p98 = por %p96, %p97
    %p99 = scmp.ne.s32.totalorder %s90, %s91
    %p100 = scmp.eq.s32.totalorder %s17, 0
    %p101 = por %p99, %p100
    %p102 = scmp.ne.s32.totalorder %s90, %s91
    %p103 = scmp.eq.s32.totalorder %s18, 1
    %p104 = por %p102, %p103
    %p106 = scmp.ne.s32.totalorder %s91, %s105
    %p107 = scmp.eq.s32.totalorder %s18, 0
    %p108 = por %p106, %p107
    %s110 = sadd.s32 %s109, 1
    %p113 = scmp.eq.s32.totalorder %s12, 1
    %p114 = scmp.ne.s32.totalorder %s109, %s111
    %p115 = scmp.eq.s32.totalorder %s12, 0
    %p116 = por %p114, %p115
    %p117 = scmp.ne.s32.totalorder %s109, %s111
    %p118 = scmp.eq.s32.totalorder %s17, 1
    %p119 = por %p117, %p118
    %p120 = scmp.ne.s32.totalorder %s111, %s112
    %p121 = scmp.eq.s32.totalorder %s17, 0
    %p122 = por %p120, %p121
    %p123 = scmp.ne.s32.totalorder %s111, %s112
    %p124 = scmp.eq.s32.totalorder %s18, 1
    %p125 = por %p123, %p124
    %p127 = scmp.ne.s32.totalorder %s112, %s126
    %p128 = scmp.eq.s32.totalorder %s18, 0
    %p129 = por %p127, %p128
    %s130 = ssub.s32 %s12, %s19
    %p131 = scmp.eq.s32.totalorder %s130, 0
    %s133 = sadd.s32 %s132, 1
    %s134 = scalar_select %p131, %s132, %s133
    %p137 = pneg %p131
    %p138 = scmp.eq.s32.totalorder %s12, 1
    %p139 = por %p137, %p138
    %p140 = scmp.ne.s32.totalorder %s132, %s135
    %p141 = scmp.eq.s32.totalorder %s12, 0
    %p142 = por %p140, %p141
    %p143 = scmp.ne.s32.totalorder %s132, %s135
    %p144 = scmp.eq.s32.totalorder %s17, 1
    %p145 = por %p143, %p144
    %p146 = scmp.ne.s32.totalorder %s135, %s136
    %p147 = scmp.eq.s32.totalorder %s17, 0
    %p148 = por %p146, %p147
    %p149 = scmp.ne.s32.totalorder %s135, %s136
    %p150 = scmp.eq.s32.totalorder %s18, 1
    %p151 = por %p149, %p150
    %p153 = scmp.ne.s32.totalorder %s136, %s152
    %p154 = scmp.eq.s32.totalorder %s18, 0
    %p155 = por %p153, %p154
    %s156 = ssub.s32 %s12, %s19
    %p157 = scmp.eq.s32.totalorder %s156, 0
    %s159 = sadd.s32 %s158, 1
    %s160 = scalar_select %p157, %s158, %s159
    %p163 = pneg %p157
    %p164 = scmp.eq.s32.totalorder %s12, 1
    %p165 = por %p163, %p164
    %p166 = scmp.ne.s32.totalorder %s158, %s161
    %p167 = scmp.eq.s32.totalorder %s12, 0
    %p168 = por %p166, %p167
    %p169 = scmp.ne.s32.totalorder %s158, %s161
    %p170 = scmp.eq.s32.totalorder %s17, 1
    %p171 = por %p169, %p170
    %p172 = scmp.ne.s32.totalorder %s161, %s162
    %p173 = scmp.eq.s32.totalorder %s17, 0
    %p174 = por %p172, %p173
    %p175 = scmp.ne.s32.totalorder %s161, %s162
    %p176 = scmp.eq.s32.totalorder %s18, 1
    %p177 = por %p175, %p176
    %p179 = scmp.ne.s32.totalorder %s162, %s178
    %p180 = scmp.eq.s32.totalorder %s18, 0
    %p181 = por %p179, %p180
    %p182 = scmp.le.s32.totalorder 1, %s12
    %p183 = scmp.lt.s32.totalorder %s12, 3
    %p184 = pnand %p182, %p183
    %p185 = pneg %p184
    // Predicated region
    $region9: #{image_backbone_forward.17} parent=5 // pred_check
      _
    $region10: #{image_backbone_forward.17} parent=5 // pred_check_branch
      %187 = sbr.rel (%p184) target = $region12
    $region11: #{image_backbone_forward.17} parent=5 // pred_region
      %s188 = ssub.s32 %s12, 1
      // Predicated region
      $region13: #{image_backbone_forward.17} parent=11 // pred_check
        %p189 = pneg %p59
      $region14: #{image_backbone_forward.17} parent=11 // pred_check_branch
        %191 = sbr.rel (%p189) target = $region16
      $region15: #{image_backbone_forward.17} parent=11 // pred_region
        _
      $region16: #{image_backbone_forward.17} parent=11 // pred_fallthru
        _
      // Predicated region
      $region17: #{image_backbone_forward.17} parent=11 // pred_check
        %p192 = pneg %p80
      $region18: #{image_backbone_forward.17} parent=11 // pred_check_branch
        %194 = sbr.rel (%p192) target = $region20
      $region19: #{image_backbone_forward.17} parent=11 // pred_region
        _
      $region20: #{image_backbone_forward.17} parent=11 // pred_fallthru
        _
      // Predicated region
      $region21: #{image_backbone_forward.17} parent=11 // pred_check
        %p195 = pneg %p101
      $region22: #{image_backbone_forward.17} parent=11 // pred_check_branch
        %197 = sbr.rel (%p195) target = $region24
      $region23: #{image_backbone_forward.17} parent=11 // pred_region
        _
      $region24: #{image_backbone_forward.17} parent=11 // pred_fallthru
        _
      // Predicated region
      $region25: #{image_backbone_forward.17} parent=11 // pred_check
        %p198 = pneg %p122
      $region26: #{image_backbone_forward.17} parent=11 // pred_check_branch
        %200 = sbr.rel (%p198) target = $region28
      $region27: #{image_backbone_forward.17} parent=11 // pred_region
        _
      $region28: #{image_backbone_forward.17} parent=11 // pred_fallthru
        _
    $region12: #{image_backbone_forward.17} parent=5 // pred_fallthru
      _
    %p201 = scmp.lt.s32.totalorder %s12, 2
    // Predicated region
    $region29: #{image_backbone_forward.17} parent=5 // pred_check
      %p202 = pneg %p201
    $region30: #{image_backbone_forward.17} parent=5 // pred_check_branch
      %204 = sbr.rel (%p202) target = $region32
    $region31: #{image_backbone_forward.17} parent=5 // pred_region
      // Predicated region
      $region33: #{image_backbone_forward.17} parent=31 // pred_check
        %p205 = pneg %p32
      $region34: #{image_backbone_forward.17} parent=31 // pred_check_branch
        %207 = sbr.rel (%p205) target = $region36
      $region35: #{image_backbone_forward.17} parent=31 // pred_region
        %p208 = scmp.lt.s32.totalorder %s12, 1
        %s209 = scalar_select %p208, %s12, 1
        %s210 = smul.addr %s209, 8
        %s211 = smul.addr %s210, 8
        %s212 = scalar_lea.vmem %s0, %s211
      $region36: #{image_backbone_forward.17} parent=31 // pred_fallthru
        _
      // Predicated region
      $region37: #{image_backbone_forward.17} parent=31 // pred_check
        %p213 = pneg %p142
      $region38: #{image_backbone_forward.17} parent=31 // pred_check_branch
        %215 = sbr.rel (%p213) target = $region40
      $region39: #{image_backbone_forward.17} parent=31 // pred_region
        %p216 = scmp.lt.s32.totalorder %s12, 1
        %s217 = scalar_select %p216, %s12, 1
        %s218 = smul.addr %s217, 8
        %s219 = smul.addr %s218, 8
        %s220 = scalar_lea.vmem %s5, %s219
      $region40: #{image_backbone_forward.17} parent=31 // pred_fallthru
        _
    $region32: #{image_backbone_forward.17} parent=5 // pred_fallthru
      _
    %p221 = scmp.le.s32.totalorder 1, %s12
    %p222 = scmp.lt.s32.totalorder %s12, 3
    %p223 = pnand %p221, %p222
    %p224 = pneg %p223
    // Predicated region
    $region41: #{image_backbone_forward.17} parent=5 // pred_check
      _
    $region42: #{image_backbone_forward.17} parent=5 // pred_check_branch
      %226 = sbr.rel (%p223) target = $region44
    $region43: #{image_backbone_forward.17} parent=5 // pred_region
      %s227 = ssub.s32 %s12, 1
      %p228 = scmp.lt.s32.totalorder %s17, 1
      %s229 = scalar_select %p228, %s17, 1
      %s230 = smul.addr %s229, 8
      %s231 = smul.addr %s230, 8
      %s232 = scalar_lea.vmem %s0, %s231
      %p233 = pneg %p38
      %p234 = pneg %p35
      %p235 = pneg %p59
      %p236 = pneg %p56
      %p237 = pneg %p80
      %p238 = pneg %p77
      %p239 = pneg %p101
      %p240 = pneg %p98
      %p241 = pneg %p122
      %p242 = pneg %p119
      %p243 = scmp.lt.s32.totalorder %s17, 1
      %s244 = scalar_select %p243, %s17, 1
      %s245 = smul.addr %s244, 8
      %s246 = smul.addr %s245, 8
      %s247 = scalar_lea.vmem %s5, %s246
      %p248 = pneg %p148
      %p249 = pneg %p145
      %p250 = pneg %p174
      %p251 = pneg %p171
      %p252 = scmp.lt.s32.totalorder %s17, 1
      %s253 = scalar_select %p252, %s17, 1
      %s254 = smul.addr %s253, 8
      %s255 = smul.addr %s254, 8
      %s256 = scalar_lea.vmem %s6, %s255
      %p257 = scmp.lt.s32.totalorder %s17, 1
      %s258 = scalar_select %p257, %s17, 1
      %s259 = smul.addr %s258, 8
      %s260 = smul.addr %s259, 8
      %s261 = scalar_lea.vmem %s0, %s260
      %p262 = scmp.lt.s32.totalorder %s17, 1
      %s263 = scalar_select %p262, %s17, 1
      %s264 = smul.addr %s263, 8
      %s265 = smul.addr %s264, 8
      %s266 = scalar_lea.vmem %s5, %s265
      %p267 = scmp.lt.s32.totalorder %s17, 1
      %s268 = scalar_select %p267, %s17, 1
      %s269 = smul.addr %s268, 8
      %s270 = smul.addr %s269, 8
      %s271 = scalar_lea.vmem %s6, %s270
      %v272 = vld [vmem:[%s261] sm:$0xff]
      %v273 = vld [vmem:[%s261 + $0x8] sm:$0xff]
      %v274 = vld [vmem:[%s261 + $0x10] sm:$0xff]
      %v275 = vld [vmem:[%s261 + $0x18] sm:$0xff]
      %v276 = vld [vmem:[%s261 + $0x20] sm:$0xff]
      %v277 = vld [vmem:[%s261 + $0x28] sm:$0xff]
      %v278 = vld [vmem:[%s261 + $0x30] sm:$0xff]
      %v279 = vld [vmem:[%s261 + $0x38] sm:$0xff]
      %vm280 = vcmask 261120
      %v281 = vsel %vm280, %v272, 0.0
      %v282 = vsel %vm280, %v273, 0.0
      %v283 = vadd.f32 %v281, %v282
      %v284 = vsel %vm280, %v274, 0.0
      %v285 = vadd.f32 %v283, %v284
      %v286 = vsel %vm280, %v275, 0.0
      %v287 = vadd.f32 %v285, %v286
      %v288 = vsel %vm280, %v276, 0.0
      %v289 = vadd.f32 %v287, %v288
      %v290 = vsel %vm280, %v277, 0.0
      %v291 = vadd.f32 %v289, %v290
      %v292 = vsel %vm280, %v278, 0.0
      %v293 = vadd.f32 %v291, %v292
      %v294 = vsel %vm280, %v279, 0.0
      %v295 = vadd.f32 %v293, %v294
      %v296 = vrot.slane %v295, 4
      %v297 = vadd.f32 %v295, %v296
      %v298 = vrot.slane %v297, 2
      %v299 = vadd.f32 %v297, %v298
      %v300 = vrot.slane %v299, 1
      %v301 = vadd.f32 %v299, %v300
      %v302 = vmul.f32 %v272, %v272
      %v303 = vmul.f32 %v273, %v273
      %v304 = vmul.f32 %v274, %v274
      %v305 = vmul.f32 %v275, %v275
      %v306 = vmul.f32 %v276, %v276
      %v307 = vmul.f32 %v277, %v277
      %v308 = vmul.f32 %v278, %v278
      %v309 = vmul.f32 %v279, %v279
      %v310 = vsel %vm280, %v302, 0.0
      %v311 = vsel %vm280, %v303, 0.0
      %v312 = vadd.f32 %v310, %v311
      %v313 = vsel %vm280, %v304, 0.0
      %v314 = vadd.f32 %v312, %v313
      %v315 = vsel %vm280, %v305, 0.0
      %v316 = vadd.f32 %v314, %v315
      %v317 = vsel %vm280, %v306, 0.0
      %v318 = vadd.f32 %v316, %v317
      %v319 = vsel %vm280, %v307, 0.0
      %v320 = vadd.f32 %v318, %v319
      %v321 = vsel %vm280, %v308, 0.0
      %v322 = vadd.f32 %v320, %v321
      %v323 = vsel %vm280, %v309, 0.0
      %v324 = vadd.f32 %v322, %v323
      %v325 = vrot.slane %v324, 4
      %v326 = vadd.f32 %v324, %v325
      %v327 = vrot.slane %v326, 2
      %v328 = vadd.f32 %v326, %v327
      %v329 = vrot.slane %v328, 1
      %v330 = vadd.f32 %v328, %v329
      %v331 = vld [vmem:[%s3] sm:$0xff]
      %v332 = vld [vmem:[%s3 + $0x8] sm:$0xff]
      %v333 = vld [vmem:[%s3 + $0x10] sm:$0xff]
      %v334 = vld [vmem:[%s3 + $0x18] sm:$0xff]
      %v336 = vsel %vm280, %v301, 0
      %338 = vmatprep.subr.mxu0 0.0
      %339 = vmatpush1.msra.mxu0 %v331
      %340 = vmatprep.subr.mxu0 0.0
      %341 = vmatpush1.msra.mxu0 %v332
      %342 = vmatprep.subr.mxu0 0.0
      %343 = vmatpush1.msra.mxu0 %v333
      %344 = vmatprep.subr.mxu0 0.0
      %345 = vmatpush1.msra.mxu0 %v334
      %346 = vmatprep.subr.mxu0 0.0
      %347 = vmatpush1.msra.mxu0 0.0
      %348 = vmatprep.subr.mxu0 0.0
      %349 = vmatpush1.msra.mxu0 0.0
      %350 = vmatprep.subr.mxu0 0.0
      %351 = vmatpush1.msra.mxu0 0.0
      %352 = vmatprep.subr.mxu0 0.0
      %353 = vmatpush1.msra.mxu0 0.0
      %354 = vmatprep.subr.mxu0 0.0
      %355 = vmatpush1.msra.mxu0 0.0
      %356 = vmatprep.subr.mxu0 0.0
      %357 = vmatpush1.msra.mxu0 0.0
      %358 = vmatprep.subr.mxu0 0.0
      %359 = vmatpush1.msra.mxu0 0.0
      %360 = vmatprep.subr.mxu0 0.0
      %361 = vmatpush1.msra.mxu0 0.0
      %362 = vmatprep.subr.mxu0 0.0
      %363 = vmatpush1.msra.mxu0 0.0
      %364 = vmatprep.subr.mxu0 0.0
      %365 = vmatpush1.msra.mxu0 0.0
      %366 = vmatprep.subr.mxu0 0.0
      %367 = vmatpush1.msra.mxu0 0.0
      %368 = vmatprep.subr.mxu0 0.0
      %369 = vmatpush1.msra.mxu0 0.0
      %370 = vmatprep.subr.mxu0 0.0
      %371 = vmatpush1.msra.mxu0 0.0
      %372 = vmatprep.subr.mxu0 0.0
      %373 = vmatpush1.msra.mxu0 0.0
      %374 = vmatprep.subr.mxu0 0.0
      %375 = vmatpush1.msra.mxu0 0.0
      %376 = vmatprep.subr.mxu0 0.0
      %377 = vmatpush1.msra.mxu0 0.0
      %378 = vmatprep.subr.mxu0 0.0
      %379 = vmatpush1.msra.mxu0 0.0
      %380 = vmatprep.subr.mxu0 0.0
      %381 = vmatpush1.msra.mxu0 0.0
      %382 = vmatprep.subr.mxu0 0.0
      %383 = vmatpush1.msra.mxu0 0.0
      %384 = vmatprep.subr.mxu0 0.0
      %385 = vmatpush1.msra.mxu0 0.0
      %386 = vmatprep.subr.mxu0 0.0
      %387 = vmatpush1.msra.mxu0 0.0
      %388 = vmatprep.subr.mxu0 0.0
      %389 = vmatpush1.msra.mxu0 0.0
      %390 = vmatprep.subr.mxu0 0.0
      %391 = vmatpush1.msra.mxu0 0.0
      %392 = vmatprep.subr.mxu0 0.0
      %393 = vmatpush1.msra.mxu0 0.0
      %394 = vmatprep.subr.mxu0 0.0
      %395 = vmatpush1.msra.mxu0 0.0
      %396 = vmatprep.subr.mxu0 0.0
      %397 = vmatpush1.msra.mxu0 0.0
      %398 = vmatprep.subr.mxu0 0.0
      %399 = vmatpush1.msra.mxu0 0.0
      %400 = vmatprep.subr.mxu0 0.0
      %401 = vmatpush1.msra.mxu0 0.0
      %402 = vmatprep.mubr.f32.mxu0 0.0
      %403 = vmatmul.mubr.f32.gmra.mrb[0].mxu0 %v336
      %v404 = vpop.f32.mrb[0].mxu0
      %v405 = vadd.f32 0.0, %v404
      %v406 = vpop.f32.mrb[0].mxu0
      %407 = vdwg.mxu0
      %v409 = vsel %vm280, %v330, 0
      %411 = vmatprep.subr.mxu0 0.0
      %412 = vmatpush1.msra.mxu0 %v331
      %413 = vmatprep.subr.mxu0 0.0
      %414 = vmatpush1.msra.mxu0 %v332
      %415 = vmatprep.subr.mxu0 0.0
      %416 = vmatpush1.msra.mxu0 %v333
      %417 = vmatprep.subr.mxu0 0.0
      %418 = vmatpush1.msra.mxu0 %v334
      %419 = vmatprep.subr.mxu0 0.0
      %420 = vmatpush1.msra.mxu0 0.0
      %421 = vmatprep.subr.mxu0 0.0
      %422 = vmatpush1.msra.mxu0 0.0
      %423 = vmatprep.subr.mxu0 0.0
      %424 = vmatpush1.msra.mxu0 0.0
      %425 = vmatprep.subr.mxu0 0.0
      %426 = vmatpush1.msra.mxu0 0.0
      %427 = vmatprep.subr.mxu0 0.0
      %428 = vmatpush1.msra.mxu0 0.0
      %429 = vmatprep.subr.mxu0 0.0
      %430 = vmatpush1.msra.mxu0 0.0
      %431 = vmatprep.subr.mxu0 0.0
      %432 = vmatpush1.msra.mxu0 0.0
      %433 = vmatprep.subr.mxu0 0.0
      %434 = vmatpush1.msra.mxu0 0.0
      %435 = vmatprep.subr.mxu0 0.0
      %436 = vmatpush1.msra.mxu0 0.0
      %437 = vmatprep.subr.mxu0 0.0
      %438 = vmatpush1.msra.mxu0 0.0
      %439 = vmatprep.subr.mxu0 0.0
      %440 = vmatpush1.msra.mxu0 0.0
      %441 = vmatprep.subr.mxu0 0.0
      %442 = vmatpush1.msra.mxu0 0.0
      %443 = vmatprep.subr.mxu0 0.0
      %444 = vmatpush1.msra.mxu0 0.0
      %445 = vmatprep.subr.mxu0 0.0
      %446 = vmatpush1.msra.mxu0 0.0
      %447 = vmatprep.subr.mxu0 0.0
      %448 = vmatpush1.msra.mxu0 0.0
      %449 = vmatprep.subr.mxu0 0.0
      %450 = vmatpush1.msra.mxu0 0.0
      %451 = vmatprep.subr.mxu0 0.0
      %452 = vmatpush1.msra.mxu0 0.0
      %453 = vmatprep.subr.mxu0 0.0
      %454 = vmatpush1.msra.mxu0 0.0
      %455 = vmatprep.subr.mxu0 0.0
      %456 = vmatpush1.msra.mxu0 0.0
      %457 = vmatprep.subr.mxu0 0.0
      %458 = vmatpush1.msra.mxu0 0.0
      %459 = vmatprep.subr.mxu0 0.0
      %460 = vmatpush1.msra.mxu0 0.0
      %461 = vmatprep.subr.mxu0 0.0
      %462 = vmatpush1.msra.mxu0 0.0
      %463 = vmatprep.subr.mxu0 0.0
      %464 = vmatpush1.msra.mxu0 0.0
      %465 = vmatprep.subr.mxu0 0.0
      %466 = vmatpush1.msra.mxu0 0.0
      %467 = vmatprep.subr.mxu0 0.0
      %468 = vmatpush1.msra.mxu0 0.0
      %469 = vmatprep.subr.mxu0 0.0
      %470 = vmatpush1.msra.mxu0 0.0
      %471 = vmatprep.subr.mxu0 0.0
      %472 = vmatpush1.msra.mxu0 0.0
      %473 = vmatprep.subr.mxu0 0.0
      %474 = vmatpush1.msra.mxu0 0.0
      %475 = vmatprep.mubr.f32.mxu0 0.0
      %476 = vmatmul.mubr.f32.gmra.mrb[0].mxu0 %v409
      %v477 = vpop.f32.mrb[0].mxu0
      %v478 = vadd.f32 0.0, %v477
      %v479 = vpop.f32.mrb[0].mxu0
      %480 = vdwg.mxu0
      %v481 = vrcp.pop 256.0
      %v482 = vmul.f32 %v405, %v481
      %v483 = vmul.f32 %v478, %v481
      %v484 = vmul.f32 %v482, %v482
      %v485 = vsub.f32 %v483, %v484
      %v486 = vadd.f32 %v485, 1e-05
      %v487 = vrsqrt.pop %v486
      %v488 = vld [vmem:[%s4] sm:$0xff]
      %vm489 = vcmask 64512
      %v491 = vsel %vm489, %v482, 0
      %493 = vmatprep.subr.mxu0 0.0
      %494 = vmatpush1.msra.mxu0 %v488
      %495 = vmatprep.subr.mxu0 0.0
      %496 = vmatpush1.msra.mxu0 0.0
      %497 = vmatprep.subr.mxu0 0.0
      %498 = vmatpush1.msra.mxu0 0.0
      %499 = vmatprep.subr.mxu0 0.0
      %500 = vmatpush1.msra.mxu0 0.0
      %501 = vmatprep.subr.mxu0 0.0
      %502 = vmatpush1.msra.mxu0 0.0
      %503 = vmatprep.subr.mxu0 0.0
      %504 = vmatpush1.msra.mxu0 0.0
      %505 = vmatprep.subr.mxu0 0.0
      %506 = vmatpush1.msra.mxu0 0.0
      %507 = vmatprep.subr.mxu0 0.0
      %508 = vmatpush1.msra.mxu0 0.0
      %509 = vmatprep.subr.mxu0 0.0
      %510 = vmatpush1.msra.mxu0 0.0
      %511 = vmatprep.subr.mxu0 0.0
      %512 = vmatpush1.msra.mxu0 0.0
      %513 = vmatprep.subr.mxu0 0.0
      %514 = vmatpush1.msra.mxu0 0.0
      %515 = vmatprep.subr.mxu0 0.0
      %516 = vmatpush1.msra.mxu0 0.0
      %517 = vmatprep.subr.mxu0 0.0
      %518 = vmatpush1.msra.mxu0 0.0
      %519 = vmatprep.subr.mxu0 0.0
      %520 = vmatpush1.msra.mxu0 0.0
      %521 = vmatprep.subr.mxu0 0.0
      %522 = vmatpush1.msra.mxu0 0.0
      %523 = vmatprep.subr.mxu0 0.0
      %524 = vmatpush1.msra.mxu0 0.0
      %525 = vmatprep.subr.mxu0 0.0
      %526 = vmatpush1.msra.mxu0 0.0
      %527 = vmatprep.subr.mxu0 0.0
      %528 = vmatpush1.msra.mxu0 0.0
      %529 = vmatprep.subr.mxu0 0.0
      %530 = vmatpush1.msra.mxu0 0.0
      %531 = vmatprep.subr.mxu0 0.0
      %532 = vmatpush1.msra.mxu0 0.0
      %533 = vmatprep.subr.mxu0 0.0
      %534 = vmatpush1.msra.mxu0 0.0
      %535 = vmatprep.subr.mxu0 0.0
      %536 = vmatpush1.msra.mxu0 0.0
      %537 = vmatprep.subr.mxu0 0.0
      %538 = vmatpush1.msra.mxu0 0.0
      %539 = vmatprep.subr.mxu0 0.0
      %540 = vmatpush1.msra.mxu0 0.0
      %541 = vmatprep.subr.mxu0 0.0
      %542 = vmatpush1.msra.mxu0 0.0
      %543 = vmatprep.subr.mxu0 0.0
      %544 = vmatpush1.msra.mxu0 0.0
      %545 = vmatprep.subr.mxu0 0.0
      %546 = vmatpush1.msra.mxu0 0.0
      %547 = vmatprep.subr.mxu0 0.0
      %548 = vmatpush1.msra.mxu0 0.0
      %549 = vmatprep.subr.mxu0 0.0
      %550 = vmatpush1.msra.mxu0 0.0
      %551 = vmatprep.subr.mxu0 0.0
      %552 = vmatpush1.msra.mxu0 0.0
      %553 = vmatprep.subr.mxu0 0.0
      %554 = vmatpush1.msra.mxu0 0.0
      %555 = vmatprep.subr.mxu0 0.0
      %556 = vmatpush1.msra.mxu0 0.0
      %557 = vmatprep.mubr.f32.mxu0 0.0
      %558 = vmatmul.mubr.f32.gmra.mrb[0].mxu0 %v491
      %v559 = vpop.f32.mrb[0].mxu0
      %v560 = vadd.f32 0.0, %v559
      %v561 = vpop.f32.mrb[0].mxu0
      %562 = vdwg.mxu0
      %v564 = vsel %vm489, %v487, 0
      %566 = vmatprep.subr.mxu0 0.0
      %567 = vmatpush1.msra.mxu0 %v488
      %568 = vmatprep.subr.mxu0 0.0
      %569 = vmatpush1.msra.mxu0 0.0
      %570 = vmatprep.subr.mxu0 0.0
      %571 = vmatpush1.msra.mxu0 0.0
      %572 = vmatprep.subr.mxu0 0.0
      %573 = vmatpush1.msra.mxu0 0.0
      %574 = vmatprep.subr.mxu0 0.0
      %575 = vmatpush1.msra.mxu0 0.0
      %576 = vmatprep.subr.mxu0 0.0
      %577 = vmatpush1.msra.mxu0 0.0
      %578 = vmatprep.subr.mxu0 0.0
      %579 = vmatpush1.msra.mxu0 0.0
      %580 = vmatprep.subr.mxu0 0.0
      %581 = vmatpush1.msra.mxu0 0.0
      %582 = vmatprep.subr.mxu0 0.0
      %583 = vmatpush1.msra.mxu0 0.0
      %584 = vmatprep.subr.mxu0 0.0
      %585 = vmatpush1.msra.mxu0 0.0
      %586 = vmatprep.subr.mxu0 0.0
      %587 = vmatpush1.msra.mxu0 0.0
      %588 = vmatprep.subr.mxu0 0.0
      %589 = vmatpush1.msra.mxu0 0.0
      %590 = vmatprep.subr.mxu0 0.0
      %591 = vmatpush1.msra.mxu0 0.0
      %592 = vmatprep.subr.mxu0 0.0
      %593 = vmatpush1.msra.mxu0 0.0
      %594 = vmatprep.subr.mxu0 0.0
      %595 = vmatpush1.msra.mxu0 0.0
      %596 = vmatprep.subr.mxu0 0.0
      %597 = vmatpush1.msra.mxu0 0.0
      %598 = vmatprep.subr.mxu0 0.0
      %599 = vmatpush1.msra.mxu0 0.0
      %600 = vmatprep.subr.mxu0 0.0
      %601 = vmatpush1.msra.mxu0 0.0
      %602 = vmatprep.subr.mxu0 0.0
      %603 = vmatpush1.msra.mxu0 0.0
      %604 = vmatprep.subr.mxu0 0.0
      %605 = vmatpush1.msra.mxu0 0.0
      %606 = vmatprep.subr.mxu0 0.0
      %607 = vmatpush1.msra.mxu0 0.0
      %608 = vmatprep.subr.mxu0 0.0
      %609 = vmatpush1.msra.mxu0 0.0
      %610 = vmatprep.subr.mxu0 0.0
      %611 = vmatpush1.msra.mxu0 0.0
      %612 = vmatprep.subr.mxu0 0.0
      %613 = vmatpush1.msra.mxu0 0.0
      %614 = vmatprep.subr.mxu0 0.0
      %615 = vmatpush1.msra.mxu0 0.0
      %616 = vmatprep.subr.mxu0 0.0
      %617 = vmatpush1.msra.mxu0 0.0
      %618 = vmatprep.subr.mxu0 0.0
      %619 = vmatpush1.msra.mxu0 0.0
      %620 = vmatprep.subr.mxu0 0.0
      %621 = vmatpush1.msra.mxu0 0.0
      %622 = vmatprep.subr.mxu0 0.0
      %623 = vmatpush1.msra.mxu0 0.0
      %624 = vmatprep.subr.mxu0 0.0
      %625 = vmatpush1.msra.mxu0 0.0
      %626 = vmatprep.subr.mxu0 0.0
      %627 = vmatpush1.msra.mxu0 0.0
      %628 = vmatprep.subr.mxu0 0.0
      %629 = vmatpush1.msra.mxu0 0.0
      %630 = vmatprep.mubr.f32.mxu0 0.0
      %631 = vmatmul.mubr.f32.gmra.mrb[0].mxu0 %v564
      %v632 = vpop.f32.mrb[0].mxu0
      %v633 = vadd.f32 0.0, %v632
      %v634 = vpop.f32.mrb[0].mxu0
      %635 = vdwg.mxu0
      %v636 = vld [vmem:[%s1] sm:$0x1]
      %v637 = vmul.f32 %v633, %v636
      %v638 = vld [vmem:[%s2] sm:$0x1]
      %v639 = vmul.f32 %v560, %v637
      %v640 = vsub.f32 %v638, %v639
      %v641 = vlaneseq
      %v642 = vshrl.u32 %v641, 7
      %v643 = vsub.s32 0, %v642
      %v644 = vrot.slane %v637, %v643
      %v645 = vmul.f32 %v272, %v644
      %v646 = vmul.f32 %v273, %v644
      %v647 = vmul.f32 %v274, %v644
      %v648 = vmul.f32 %v275, %v644
      %v649 = vmul.f32 %v276, %v644
      %v650 = vmul.f32 %v277, %v644
      %v651 = vmul.f32 %v278, %v644
      %v652 = vmul.f32 %v279, %v644
      %v654 = vlaneseq
      %v655 = vshrl.u32 %v654, 7
      %v656 = vsub.s32 0, %v655
      %v657 = vrot.slane %v640, %v656
      %v659 = vadd.f32 %v645, %v657
      %v660 = vadd.f32 %v646, %v657
      %v661 = vadd.f32 %v647, %v657
      %v662 = vadd.f32 %v648, %v657
      %v663 = vadd.f32 %v649, %v657
      %v664 = vadd.f32 %v650, %v657
      %v665 = vadd.f32 %v651, %v657
      %v666 = vadd.f32 %v652, %v657
      %v667 = vld [vmem:[%s266] sm:$0xff]
      %v668 = vld [vmem:[%s266 + $0x8] sm:$0xff]
      %v669 = vld [vmem:[%s266 + $0x10] sm:$0xff]
      %v670 = vld [vmem:[%s266 + $0x18] sm:$0xff]
      %v671 = vld [vmem:[%s266 + $0x20] sm:$0xff]
      %v672 = vld [vmem:[%s266 + $0x28] sm:$0xff]
      %v673 = vld [vmem:[%s266 + $0x30] sm:$0xff]
      %v674 = vld [vmem:[%s266 + $0x38] sm:$0xff]
      %v675 = vadd.f32 %v659, %v667
      %v676 = vadd.f32 %v660, %v668
      %v677 = vadd.f32 %v661, %v669
      %v678 = vadd.f32 %v662, %v670
      %v679 = vadd.f32 %v663, %v671
      %v680 = vadd.f32 %v664, %v672
      %v681 = vadd.f32 %v665, %v673
      %v682 = vadd.f32 %v666, %v674
      %vm683 = vcmp.ge.f32.partialorder %v675, 0.0
      %vm684 = vcmp.ge.f32.partialorder %v676, 0.0
      %vm685 = vcmp.ge.f32.partialorder %v677, 0.0
      %vm686 = vcmp.ge.f32.partialorder %v678, 0.0
      %vm687 = vcmp.ge.f32.partialorder %v679, 0.0
      %vm688 = vcmp.ge.f32.partialorder %v680, 0.0
      %vm689 = vcmp.ge.f32.partialorder %v681, 0.0
      %vm690 = vcmp.ge.f32.partialorder %v682, 0.0
      %v691 = vmul.f32 %v675, 0.1
      %v692 = vmul.f32 %v676, 0.1
      %v693 = vmul.f32 %v677, 0.1
      %v694 = vmul.f32 %v678, 0.1
      %v695 = vmul.f32 %v679, 0.1
      %v696 = vmul.f32 %v680, 0.1
      %v697 = vmul.f32 %v681, 0.1
      %v698 = vmul.f32 %v682, 0.1
      %v699 = vsel %vm683, %v675, %v691
      %v700 = vsel %vm684, %v676, %v692
      %v701 = vsel %vm685, %v677, %v693
      %v702 = vsel %vm686, %v678, %v694
      %v703 = vsel %vm687, %v679, %v695
      %v704 = vsel %vm688, %v680, %v696
      %v705 = vsel %vm689, %v681, %v697
      %v706 = vsel %vm690, %v682, %v698
      %707 = vst.msk [vmem:[%s271] sm:$0xff] %vm280, %v699
      %708 = vst.msk [vmem:[%s271 + $0x8] sm:$0xff] %vm280, %v700
      %709 = vst.msk [vmem:[%s271 + $0x10] sm:$0xff] %vm280, %v701
      %710 = vst.msk [vmem:[%s271 + $0x18] sm:$0xff] %vm280, %v702
      %711 = vst.msk [vmem:[%s271 + $0x20] sm:$0xff] %vm280, %v703
      %712 = vst.msk [vmem:[%s271 + $0x28] sm:$0xff] %vm280, %v704
      %713 = vst.msk [vmem:[%s271 + $0x30] sm:$0xff] %vm280, %v705
      %714 = vst.msk [vmem:[%s271 + $0x38] sm:$0xff] %vm280, %v706
      %p715 = scmp.lt.s32.totalorder %s17, 1
      %s716 = scalar_select %p715, %s17, 1
      %s717 = smul.addr %s716, 8
      %s718 = smul.addr %s717, 8
      %s719 = scalar_lea.vmem %s6, %s718
      // Predicated region
      $region45: #{image_backbone_forward.17} parent=43 // pred_check
        %p720 = pneg %p171
      $region46: #{image_backbone_forward.17} parent=43 // pred_check_branch
        %722 = sbr.rel (%p720) target = $region48
      $region47: #{image_backbone_forward.17} parent=43 // pred_region
        _
      $region48: #{image_backbone_forward.17} parent=43 // pred_fallthru
        _
    $region44: #{image_backbone_forward.17} parent=5 // pred_fallthru
      _
    %p723 = scmp.le.s32.totalorder 2, %s12
    // Predicated region
    $region49: #{image_backbone_forward.17} parent=5 // pred_check
      %p724 = pneg %p723
    $region50: #{image_backbone_forward.17} parent=5 // pred_check_branch
      %726 = sbr.rel (%p724) target = $region52
    $region51: #{image_backbone_forward.17} parent=5 // pred_region
      %s727 = ssub.s32 %s12, 2
      // Predicated region
      $region53: #{image_backbone_forward.17} parent=51 // pred_check
        %p728 = pneg %p177
      $region54: #{image_backbone_forward.17} parent=51 // pred_check_branch
        %730 = sbr.rel (%p728) target = $region56
      $region55: #{image_backbone_forward.17} parent=51 // pred_region
        %p731 = scmp.lt.s32.totalorder %s18, 1
        %s732 = scalar_select %p731, %s18, 1
        %s733 = smul.addr %s732, 8
        %s734 = smul.addr %s733, 8
        %s735 = scalar_lea.vmem %s6, %s734
      $region56: #{image_backbone_forward.17} parent=51 // pred_fallthru
        _
    $region52: #{image_backbone_forward.17} parent=5 // pred_fallthru
      _
  $region6: #{image_backbone_forward.17} parent=0 // loop_footer
    %s16 = sadd.s32 1, %s12
  $region7: #{image_backbone_forward.17} parent=0 // loop_footer_branch
    %11 = sbr.rel target = $region3
  $region8: #{image_backbone_forward.17} parent=0 // loop_exit
    _

// kernel: image_backbone_forward.23
$region0: #{image_backbone_forward.23}
  #allocation0 [shape = 'u32[]', space=smem, size = 0x4, offset = 0x4, fixed_abs, tag = 'smem constant byte address 0x4 - core index']
  #allocation1 [shape = 'u32[144,128]{1,0:T(1,128)}', space=vmem, size = 0x12000, scoped, tag = 'internal scratch']
  %s0 = inlined_call_operand.vmem [shape: f32[16,8], index: 0, kind: input, shape index: {}]
  %s1 = inlined_call_operand.vmem [shape: f32[2,8,256], index: 1, kind: input, shape index: {}]
  %s2 = inlined_call_operand.vmem [shape: f32[2,16,256], index: 2, kind: output, shape index: {}]
  %s3 = sld [smem:[#allocation0]]
  $region41: #{image_backbone_forward.23} parent=0
    _
  %s5 = ssub.s32 1, %s3
  %s6 = scalar_select 0, %s5, %s3
  loop: start=0, step=1, limit=4
  $region2: #{image_backbone_forward.23} parent=0 // loop_pre_header
    _
  $region3: #{image_backbone_forward.23} parent=0 // loop_header
    %s8 = sphi 0, %s12
    %p9 = scmp.ge.s32.totalorder %s8, 4
    %s16 = sphi 0, %s16
    %s18 = sphi 0, %s16
    %s19 = sphi 0, %s18
    %s33 = sphi 0, %s19
    %s39 = sphi 0, %s41
    %s42 = sphi 0, %s39
    %s43 = sphi 0, %s42
    %s59 = sphi 0, %s43
    %s65 = sphi 0, %s67
    %s68 = sphi 0, %s65
    %s69 = sphi 0, %s68
    %s85 = sphi 0, %s69
  $region4: #{image_backbone_forward.23} parent=0 // loop_header_branch
    %11 = sbr.rel (%p9) target = $region8
  $region5: #{image_backbone_forward.23} parent=0 // loop_body
    %s13 = ssub.s32 %s8, 1
    %s14 = ssub.s32 %s8, 2
    %s15 = sadd.s32 %s8, 1
    %s17 = sadd.s32 %s16, 1
    %p20 = scmp.eq.s32.totalorder %s8, 1
    %p21 = scmp.ne.s32.totalorder %s16, %s18
    %p22 = scmp.eq.s32.totalorder %s8, 0
    %p23 = por %p21, %p22
    %p24 = scmp.ne.s32.totalorder %s16, %s18
    %p25 = scmp.eq.s32.totalorder %s13, 1
    %p26 = por %p24, %p25
    %p27 = scmp.ne.s32.totalorder %s18, %s19
    %p28 = scmp.eq.s32.totalorder %s13, 0
    %p29 = por %p27, %p28
    %p30 = scmp.ne.s32.totalorder %s18, %s19
    %p31 = scmp.eq.s32.totalorder %s14, 1
    %p32 = por %p30, %p31
    %p34 = scmp.ne.s32.totalorder %s19, %s33
    %p35 = scmp.eq.s32.totalorder %s14, 0
    %p36 = por %p34, %p35
    %s37 = ssub.s32 %s8, %s15
    %p38 = scmp.eq.s32.totalorder %s37, 0
    %s40 = sadd.s32 %s39, 1
    %s41 = scalar_select %p38, %s39, %s40
    %p44 = pneg %p38
    %p45 = scmp.eq.s32.totalorder %s8, 1
    %p46 = por %p44, %p45
    %p47 = scmp.ne.s32.totalorder %s39, %s42
    %p48 = scmp.eq.s32.totalorder %s8, 0
    %p49 = por %p47, %p48
    %p50 = scmp.ne.s32.totalorder %s39, %s42
    %p51 = scmp.eq.s32.totalorder %s13, 1
    %p52 = por %p50, %p51
    %p53 = scmp.ne.s32.totalorder %s42, %s43
    %p54 = scmp.eq.s32.totalorder %s13, 0
    %p55 = por %p53, %p54
    %p56 = scmp.ne.s32.totalorder %s42, %s43
    %p57 = scmp.eq.s32.totalorder %s14, 1
    %p58 = por %p56, %p57
    %p60 = scmp.ne.s32.totalorder %s43, %s59
    %p61 = scmp.eq.s32.totalorder %s14, 0
    %p62 = por %p60, %p61
    %s63 = ssub.s32 %s8, %s15
    %p64 = scmp.eq.s32.totalorder %s63, 0
    %s66 = sadd.s32 %s65, 1
    %s67 = scalar_select %p64, %s65, %s66
    %p70 = pneg %p64
    %p71 = scmp.eq.s32.totalorder %s8, 1
    %p72 = por %p70, %p71
    %p73 = scmp.ne.s32.totalorder %s65, %s68
    %p74 = scmp.eq.s32.totalorder %s8, 0
    %p75 = por %p73, %p74
    %p76 = scmp.ne.s32.totalorder %s65, %s68
    %p77 = scmp.eq.s32.totalorder %s13, 1
    %p78 = por %p76, %p77
    %p79 = scmp.ne.s32.totalorder %s68, %s69
    %p80 = scmp.eq.s32.totalorder %s13, 0
    %p81 = por %p79, %p80
    %p82 = scmp.ne.s32.totalorder %s68, %s69
    %p83 = scmp.eq.s32.totalorder %s14, 1
    %p84 = por %p82, %p83
    %p86 = scmp.ne.s32.totalorder %s69, %s85
    %p87 = scmp.eq.s32.totalorder %s14, 0
    %p88 = por %p86, %p87
    %p89 = scmp.le.s32.totalorder 1, %s8
    %p90 = scmp.lt.s32.totalorder %s8, 3
    %p91 = pnand %p89, %p90
    %p92 = pneg %p91
    // Predicated region
    $region9: #{image_backbone_forward.23} parent=5 // pred_check
      _
    $region10: #{image_backbone_forward.23} parent=5 // pred_check_branch
      %94 = sbr.rel (%p91) target = $region12
    $region11: #{image_backbone_forward.23} parent=5 // pred_region
      %s95 = ssub.s32 %s8, 1
      // Predicated region
      $region13: #{image_backbone_forward.23} parent=11 // pred_check
        %p96 = pneg %p29
      $region14: #{image_backbone_forward.23} parent=11 // pred_check_branch
        %98 = sbr.rel (%p96) target = $region16
      $region15: #{image_backbone_forward.23} parent=11 // pred_region
        _
      $region16: #{image_backbone_forward.23} parent=11 // pred_fallthru
        _
    $region12: #{image_backbone_forward.23} parent=5 // pred_fallthru
      _
    %p99 = scmp.lt.s32.totalorder %s8, 2
    // Predicated region
    $region17: #{image_backbone_forward.23} parent=5 // pred_check
      %p100 = pneg %p99
    $region18: #{image_backbone_forward.23} parent=5 // pred_check_branch
      %102 = sbr.rel (%p100) target = $region20
    $region19: #{image_backbone_forward.23} parent=5 // pred_region
      // Predicated region
      $region21: #{image_backbone_forward.23} parent=19 // pred_check
        %p103 = pneg %p49
      $region22: #{image_backbone_forward.23} parent=19 // pred_check_branch
        %105 = sbr.rel (%p103) target = $region24
      $region23: #{image_backbone_forward.23} parent=19 // pred_region
        %p106 = scmp.lt.s32.totalorder %s8, 1
        %s107 = scalar_select %p106, %s8, 1
        %s108 = smul.addr %s107, 2
        %s109 = smul.addr %s108, 8
        %s110 = scalar_lea.vmem %s1, %s109
      $region24: #{image_backbone_forward.23} parent=19 // pred_fallthru
        _
    $region20: #{image_backbone_forward.23} parent=5 // pred_fallthru
      _
    %p111 = scmp.le.s32.totalorder 1, %s8
    %p112 = scmp.lt.s32.totalorder %s8, 3
    %p113 = pnand %p111, %p112
    %p114 = pneg %p113
    // Predicated region
    $region25: #{image_backbone_forward.23} parent=5 // pred_check
      _
    $region26: #{image_backbone_forward.23} parent=5 // pred_check_branch
      %116 = sbr.rel (%p113) target = $region28
    $region27: #{image_backbone_forward.23} parent=5 // pred_region
      %s117 = ssub.s32 %s8, 1
      %p118 = pneg %p29
      %p119 = pneg %p26
      %p120 = scmp.lt.s32.totalorder %s13, 1
      %s121 = scalar_select %p120, %s13, 1
      %s122 = smul.addr %s121, 2
      %s123 = smul.addr %s122, 8
      %s124 = scalar_lea.vmem %s1, %s123
      %p125 = pneg %p55
      %p126 = pneg %p52
      %p127 = pneg %p81
      %p128 = pneg %p78
      %p129 = scmp.lt.s32.totalorder %s13, 1
      %s130 = scalar_select %p129, %s13, 1
      %s131 = smul.addr %s130, 4
      %s132 = smul.addr %s131, 8
      %s133 = scalar_lea.vmem %s2, %s132
      %p134 = scmp.lt.s32.totalorder %s13, 1
      %s135 = scalar_select %p134, %s13, 1
      %s136 = smul.addr %s135, 2
      %s137 = smul.addr %s136, 8
      %s138 = scalar_lea.vmem %s1, %s137
      %p139 = scmp.lt.s32.totalorder %s13, 1
      %s140 = scalar_select %p139, %s13, 1
      %s141 = smul.addr %s140, 4
      %s142 = smul.addr %s141, 8
      %s143 = scalar_lea.vmem %s2, %s142
      %v144 = vld [vmem:[%s0] sm:$0xff]
      %v145 = vld [vmem:[%s0 + $0x8] sm:$0xff]
      %v146 = vld [vmem:[%s138] sm:$0xff]
      %v147 = vld [vmem:[%s138 + $0x8] sm:$0xff]
      %vm148 = vcmask 64512
      %v150 = vsel %vm148, %v144, 0
      %v153 = vsel %vm148, %v145, 0
      %155 = vmatprep.subr.mxu0 %v147
      %156 = vmatpush1.msra.mxu0 %v146
      %157 = vmatprep.subr.mxu0 0.0
      %158 = vmatpush1.msra.mxu0 0.0
      %159 = vmatprep.subr.mxu0 0.0
      %160 = vmatpush1.msra.mxu0 0.0
      %161 = vmatprep.subr.mxu0 0.0
      %162 = vmatpush1.msra.mxu0 0.0
      %163 = vmatprep.subr.mxu0 0.0
      %164 = vmatpush1.msra.mxu0 0.0
      %165 = vmatprep.subr.mxu0 0.0
      %166 = vmatpush1.msra.mxu0 0.0
      %167 = vmatprep.subr.mxu0 0.0
      %168 = vmatpush1.msra.mxu0 0.0
      %169 = vmatprep.subr.mxu0 0.0
      %170 = vmatpush1.msra.mxu0 0.0
      %171 = vmatprep.subr.mxu0 0.0
      %172 = vmatpush1.msra.mxu0 0.0
      %173 = vmatprep.subr.mxu0 0.0
      %174 = vmatpush1.msra.mxu0 0.0
      %175 = vmatprep.subr.mxu0 0.0
      %176 = vmatpush1.msra.mxu0 0.0
      %177 = vmatprep.subr.mxu0 0.0
      %178 = vmatpush1.msra.mxu0 0.0
      %179 = vmatprep.subr.mxu0 0.0
      %180 = vmatpush1.msra.mxu0 0.0
      %181 = vmatprep.subr.mxu0 0.0
      %182 = vmatpush1.msra.mxu0 0.0
      %183 = vmatprep.subr.mxu0 0.0
      %184 = vmatpush1.msra.mxu0 0.0
      %185 = vmatprep.subr.mxu0 0.0
      %186 = vmatpush1.msra.mxu0 0.0
      %187 = vmatprep.subr.mxu0 0.0
      %188 = vmatpush1.msra.mxu0 0.0
      %189 = vmatprep.subr.mxu0 0.0
      %190 = vmatpush1.msra.mxu0 0.0
      %191 = vmatprep.subr.mxu0 0.0
      %192 = vmatpush1.msra.mxu0 0.0
      %193 = vmatprep.subr.mxu0 0.0
      %194 = vmatpush1.msra.mxu0 0.0
      %195 = vmatprep.subr.mxu0 0.0
      %196 = vmatpush1.msra.mxu0 0.0
      %197 = vmatprep.subr.mxu0 0.0
      %198 = vmatpush1.msra.mxu0 0.0
      %199 = vmatprep.subr.mxu0 0.0
      %200 = vmatpush1.msra.mxu0 0.0
      %201 = vmatprep.subr.mxu0 0.0
      %202 = vmatpush1.msra.mxu0 0.0
      %203 = vmatprep.subr.mxu0 0.0
      %204 = vmatpush1.msra.mxu0 0.0
      %205 = vmatprep.subr.mxu0 0.0
      %206 = vmatpush1.msra.mxu0 0.0
      %207 = vmatprep.subr.mxu0 0.0
      %208 = vmatpush1.msra.mxu0 0.0
      %209 = vmatprep.subr.mxu0 0.0
      %210 = vmatpush1.msra.mxu0 0.0
      %211 = vmatprep.subr.mxu0 0.0
      %212 = vmatpush1.msra.mxu0 0.0
      %213 = vmatprep.subr.mxu0 0.0
      %214 = vmatpush1.msra.mxu0 0.0
      %215 = vmatprep.subr.mxu0 0.0
      %216 = vmatpush1.msra.mxu0 0.0
      %217 = vmatprep.subr.mxu0 0.0
      %218 = vmatpush1.msra.mxu0 0.0
      %219 = vmatprep.mubr.f32.mxu0 0.0
      %220 = vmatmul.mubr.f32.gmra.mrb[0].mxu0 %v150
      %v221 = vpop.f32.mrb[0].mxu0
      %v222 = vadd.f32 0.0, %v221
      %v223 = vpop.f32.mrb[0].mxu0
      %v224 = vadd.f32 0.0, %v223
      %225 = vmatprep.mubr.f32.mxu0 0.0
      %226 = vmatmul.mubr.f32.gmra.mrb[0].mxu0 %v153
      %v227 = vpop.f32.mrb[0].mxu0
      %v228 = vadd.f32 0.0, %v227
      %v229 = vpop.f32.mrb[0].mxu0
      %v230 = vadd.f32 0.0, %v229
      %231 = vdwg.mxu0
      %232 = vst [vmem:[%s143] sm:$0xff] %v222
      %233 = vst [vmem:[%s143 + $0x8] sm:$0xff] %v224
      %234 = vst [vmem:[%s143 + $0x10] sm:$0xff] %v228
      %235 = vst [vmem:[%s143 + $0x18] sm:$0xff] %v230
      %p236 = scmp.lt.s32.totalorder %s13, 1
      %s237 = scalar_select %p236, %s13, 1
      %s238 = smul.addr %s237, 4
      %s239 = smul.addr %s238, 8
      %s240 = scalar_lea.vmem %s2, %s239
      // Predicated region
      $region29: #{image_backbone_forward.23} parent=27 // pred_check
        %p241 = pneg %p78
      $region30: #{image_backbone_forward.23} parent=27 // pred_check_branch
        %243 = sbr.rel (%p241) target = $region32
      $region31: #{image_backbone_forward.23} parent=27 // pred_region
        _
      $region32: #{image_backbone_forward.23} parent=27 // pred_fallthru
        _
    $region28: #{image_backbone_forward.23} parent=5 // pred_fallthru
      _
    %p244 = scmp.le.s32.totalorder 2, %s8
    // Predicated region
    $region33: #{image_backbone_forward.23} parent=5 // pred_check
      %p245 = pneg %p244
    $region34: #{image_backbone_forward.23} parent=5 // pred_check_branch
      %247 = sbr.rel (%p245) target = $region36
    $region35: #{image_backbone_forward.23} parent=5 // pred_region
      %s248 = ssub.s32 %s8, 2
      // Predicated region
      $region37: #{image_backbone_forward.23} parent=35 // pred_check
        %p249 = pneg %p84
      $region38: #{image_backbone_forward.23} parent=35 // pred_check_branch
        %251 = sbr.rel (%p249) target = $region40
      $region39: #{image_backbone_forward.23} parent=35 // pred_region
        %p252 = scmp.lt.s32.totalorder %s14, 1
        %s253 = scalar_select %p252, %s14, 1
        %s254 = smul.addr %s253, 4
        %s255 = smul.addr %s254, 8
        %s256 = scalar_lea.vmem %s2, %s255
      $region40: #{image_backbone_forward.23} parent=35 // pred_fallthru
        _
    $region36: #{image_backbone_forward.23} parent=5 // pred_fallthru
      _
  $region6: #{image_backbone_forward.23} parent=0 // loop_footer
    %s12 = sadd.s32 1, %s8
  $region7: #{image_backbone_forward.23} parent=0 // loop_footer_branch
    %7 = sbr.rel target = $region3
  $region8: #{image_backbone_forward.23} parent=0 // loop_exit
    _

</llo_original>
